<compile_context>
chip_gen: v6e
topology: v6e:2x2x1
jax: 0.10.0
libtpu: 0.0.40
codegen_flags: <defaults>
</compile_context>

<pallas_src>
import functools

import numpy as np
import jax
import jax.numpy as jnp
from jax.experimental import pallas as pl
from jax.experimental.pallas import tpu as pltpu


def egnn_kernel(h_ref, x_ref,
                w_in_ref, b_in_ref,
                w_sd_ref, w_rad_ref, e_const_ref,
                we2_ref, be2_ref, watt_ref, batt_ref,
                wc1a_ref, bc1_ref, wc2_ref,
                wn1h_ref, wn1a_ref, bn1_ref, wn2_ref, bn2_ref,
                w_out_ref, b_out_ref,
                wm1_ref, bm1_ref, wm2_ref, bm2_ref,
                out_ref, *, attention, use_bf16):
    f32 = jnp.float32
    cdt = jnp.bfloat16 if use_bf16 else f32          # storage dtype of hot edge temps
    G, N, Fin = h_ref.shape
    H = w_in_ref.shape[1]
    L = we2_ref.shape[0]

    def mm(a, w):
        # Hot-path MXU matmul; weights are pre-cast host-side when use_bf16.
        return jnp.dot(a.astype(cdt), w, preferred_element_type=f32)

    def sigmoid(x):
        # exp + approx reciprocal -> EUP slot instead of a full-precision divide.
        return pl.reciprocal(1.0 + jnp.exp(-x), approx=True)

    def silu(x):
        return x * sigmoid(x)

    h = h_ref[...].astype(f32).reshape(G * N, Fin)
    coord = x_ref[...].astype(f32)                                   # (G, N, 3)

    # embedding_in (f32: feeds the residual path)
    h = jnp.dot(h, w_in_ref[...], preferred_element_type=f32) + b_in_ref[...]

    inv_deg = 1.0 / float(max(N - 1, 1))        # coords_agg='mean'; guard N==1

    for l in range(L):                          # L is small -> keep unrolled
        # ---- radial = ||c_i - c_j||^2 via batched Gram matrix (MXU) ----
        sq = jnp.sum(coord * coord, axis=-1, keepdims=True)           # (G, N, 1)
        gram = jax.lax.dot_general(coord, coord,
                                   dimension_numbers=(((2,), (2,)), ((0,), (0,))),
                                   preferred_element_type=f32)         # (G, N, N)
        radial = jnp.maximum(sq + jnp.swapaxes(sq, 1, 2) - 2.0 * gram, 0.0)

        # ---- edge model: fused src/dst projection, then dense (G,N,N,H) messages ----
        sd = jnp.dot(h, w_sd_ref[l], preferred_element_type=f32)       # (G*N, 2H) f32
        sd3 = sd.reshape(G, N, 2 * H)
        src = sd3[:, :, :H]                                            # (G, N, H)
        dst = sd3[:, :, H:]                                            # (G, N, H)
        w_rad = w_rad_ref[l].reshape(1, 1, 1, H)
        const = e_const_ref[l].reshape(1, 1, 1, H)                     # edge_attr==1 term + bias

        pre = (src[:, :, None, :] + dst[:, None, :, :]
               + radial[:, :, :, None] * w_rad + const)                # (G, N, N, H) f32
        m1 = silu(pre).astype(cdt).reshape(G * N * N, H)
        m2 = silu(mm(m1, we2_ref[l]) + be2_ref[l]).astype(cdt)         # (G*N*N, H)

        # ---- fused coord-gate (wc1) + attention (watt) projection: one MXU pass ----
        P = mm(m2, wc1a_ref[l])                                         # (GNN, H[+1]) f32
        if attention:
            gate = sigmoid(P[:, H:H + 1] + batt_ref[l])                 # (GNN, 1) per-row scalar
            ch = silu(gate * P[:, :H] + bc1_ref[l])                     # == silu((m2*gate)@wc1 + bc1)
            m_agg = gate * m2.astype(f32)                               # gated messages for node agg
        else:
            ch = silu(P + bc1_ref[l])
            m_agg = m2.astype(f32)

        # ---- self-edge (i == i) messages (radial exactly 0), for diagonal subtraction ----
        pre_d = sd[:, :H] + sd[:, H:] + e_const_ref[l]                  # (G*N, H)
        m2d = silu(mm(silu(pre_d).astype(cdt), we2_ref[l]) + be2_ref[l]).astype(cdt)
        if attention:
            md = m2d.astype(f32) * sigmoid(mm(m2d, watt_ref[l]) + batt_ref[l])
        else:
            md = m2d.astype(f32)

        # ---- coordinate model: phi squeezed to (G,N,N); pcoord as batched MXU matmul ----
        phi = mm(ch.astype(cdt), wc2_ref[l]).reshape(G, N, N)           # (G, N, N)
        rowsum = jnp.sum(phi, axis=2, keepdims=True)                    # (G, N, 1) lane reduce
        pcoord = jax.lax.dot_general(phi, coord,
                                     dimension_numbers=(((2,), (1,)), ((0,), (0,))),
                                     preferred_element_type=f32)        # (G, N, 3)
        # sum_j (c_i - c_j) * phi_ij == c_i * rowsum_i - sum_j phi_ij c_j (diag cancels exactly)
        coord = coord + (coord * rowsum - pcoord) * inv_deg

        # ---- node model (residual); agg = sum_j m_ij - m_ii ----
        agg = (m_agg.reshape(G, N, N, H).sum(axis=2)
               - md.reshape(G, N, H)).reshape(G * N, H)                 # (G*N, H)
        nh = silu(mm(h, wn1h_ref[l]) + mm(agg, wn1a_ref[l]) + bn1_ref[l])
        h = h + mm(nh, wn2_ref[l]) + bn2_ref[l]

    # embedding_out
    h = jnp.dot(h, w_out_ref[...], preferred_element_type=f32) + b_out_ref[...]

    # scatter_mean over each graph's nodes + classifier MLP (all G graphs at once)
    pooled = jnp.mean(h.reshape(G, N, H), axis=1)                      # (G, H)
    z = jnp.maximum(jnp.dot(pooled, wm1_ref[...],
                            preferred_element_type=f32) + bm1_ref[...], 0.0)
    logits = jnp.dot(z, wm2_ref[...], preferred_element_type=f32) + bm2_ref[...]
    out_ref[0] = logits                                                # (G, O)


def _derived_params(params, *, attention, use_bf16):
    """Host-side weight re-packing: fused src/dst, split radial/const, fused
    [wc1 | watt], split wn1 halves, bf16 pre-cast of the hot-path weights."""
    H = params["w_in"].shape[1]
    we1 = params["we1"]                                   # (L, 2H+2, H)
    be1 = params["be1"]                                   # (L, 1, H)
    w_sd = jnp.concatenate([we1[:, :H, :], we1[:, H:2 * H, :]], axis=2)   # (L, H, 2H)
    w_rad = we1[:, 2 * H:2 * H + 1, :]                    # (L, 1, H)
    e_const = we1[:, 2 * H + 1:2 * H + 2, :] + be1        # (L, 1, H): edge_attr==1 weight + bias
    wc2_col = jnp.swapaxes(params["wc2"], 1, 2)           # (L, H, 1)
    watt = params["watt"]                                 # (L, H, 1)
    if attention:
        wc1a = jnp.concatenate([params["wc1"], watt], axis=2)            # (L, H, H+1)
    else:
        wc1a = params["wc1"]                                              # (L, H, H)
    wn1h = params["wn1"][:, :H, :]                        # (L, H, H)  (h half)
    wn1a = params["wn1"][:, H:, :]                        # (L, H, H)  (agg half)

    def cast(w):  # hot-path weights -> bf16 host-side (no per-step VPU casts)
        return w.astype(jnp.bfloat16) if use_bf16 else w

    return [params["w_in"], params["b_in"],
            w_sd, w_rad, e_const,
            cast(params["we2"]), params["be2"], cast(watt), params["batt"],
            cast(wc1a), params["bc1"], cast(wc2_col),
            cast(wn1h), cast(wn1a), params["bn1"], cast(params["wn2"]), params["bn2"],
            params["w_out"], params["b_out"],
            params["wm1"], params["bm1"], params["wm2"], params["bm2"]]


def egnn_residue_classifier(h, x, batch_size, params, *, attention=True,
                            use_bf16=True, max_graphs_per_step=64):
    B, N, Fin = h.shape
    assert B == batch_size
    H = params["w_in"].shape[1]
    O = params["wm2"].shape[1]
    plist = _derived_params(params, attention=attention, use_bf16=use_bf16)

    MiB = 1024 * 1024
    # Generation-aware VMEM budget: ~48 MiB scoped on v7x (64 MiB physical),
    # ~96 MiB on v5e/v6e (128 MiB physical); headroom for double-buffered I/O
    # blocks and compiler scratch.
    try:
        vmem_cap = int(getattr(pltpu.get_tpu_info(), "vmem_capacity_bytes", 64 * MiB))
    except Exception:
        vmem_cap = 64 * MiB
    vmem_limit = int(max(32 * MiB, min(vmem_cap - 16 * MiB, (vmem_cap * 3) // 4)))

    weight_bytes = sum(int(p.size) * p.dtype.itemsize for p in plist)
    # ~10 live (N,N,H)-wide edge temps per graph (pre/m1/m2/P/gate/m_agg/phi + pipeline slack)
    per_graph = 10 * N * N * H * (3 if use_bf16 else 4)
    budget = max(vmem_limit - weight_bytes - 4 * MiB, per_graph)
    g_budget = max(1, budget // per_graph)
    # keep >= 2 grid steps so ("parallel",) can use both v7x TensorCores
    G = int(min(g_budget, max(1, pl.cdiv(B, 2)), max_graphs_per_step))
    steps = int(pl.cdiv(B, G))
    B_pad = steps * G
    if B_pad != B:  # pad with zero graphs (finite garbage, sliced off below)
        h = jnp.concatenate([h, jnp.zeros((B_pad - B, N, Fin), h.dtype)], axis=0)
        x = jnp.concatenate([x, jnp.zeros((B_pad - B, N, 3), x.dtype)], axis=0)

    in_specs = [
        pl.BlockSpec((G, N, Fin), lambda b: (b, 0, 0)),
        pl.BlockSpec((G, N, 3), lambda b: (b, 0, 0)),
    ]
    # weights: full array every grid step
    in_specs += [pl.BlockSpec(p.shape, (lambda b, nd=p.ndim: (0,) * nd)) for p in plist]

    out = pl.pallas_call(
        functools.partial(egnn_kernel, attention=attention, use_bf16=use_bf16),
        out_shape=jax.ShapeDtypeStruct((steps, G, O), jnp.float32),
        grid=(steps,),
        in_specs=in_specs,
        out_specs=pl.BlockSpec((1, G, O), lambda b: (b, 0, 0)),
        compiler_params=pltpu.CompilerParams(
            dimension_semantics=("parallel",),
            vmem_limit_bytes=vmem_limit),
    )(h, x, *plist)
    return out.reshape(B_pad, O)[:B]


# ---------------- deterministic parameter init ----------------
def init_params(key, in_nf, H, out_nf, L):
    keys = iter(jax.random.split(key, 13 * L + 16))

    def u(shape, fan_in, scale=None):
        s = float(scale) if scale is not None else 1.0 / float(np.sqrt(fan_in))
        return jax.random.uniform(next(keys), shape, jnp.float32, -s, s)

    def stack(fn):
        return jnp.stack([fn() for _ in range(L)], axis=0)

    P = {}
    P["w_in"] = u((in_nf, H), in_nf)
    P["b_in"] = u((1, H), in_nf)
    P["we1"] = stack(lambda: u((2 * H + 2, H), 2 * H + 2))
    P["be1"] = stack(lambda: u((1, H), 2 * H + 2))
    P["we2"] = stack(lambda: u((H, H), H))
    P["be2"] = stack(lambda: u((1, H), H))
    P["watt"] = stack(lambda: u((H, 1), H))
    P["batt"] = stack(lambda: u((1, 1), H))
    P["wc1"] = stack(lambda: u((H, H), H))
    P["bc1"] = stack(lambda: u((1, H), H))
    # coord output layer: xavier_uniform gain=0.001 emulation, no bias, stored (1, H)
    P["wc2"] = stack(lambda: u((1, H), H, scale=1e-3))
    P["wn1"] = stack(lambda: u((2 * H, H), 2 * H))
    P["bn1"] = stack(lambda: u((1, H), 2 * H))
    P["wn2"] = stack(lambda: u((H, H), H))
    P["bn2"] = stack(lambda: u((1, H), H))
    P["w_out"] = u((H, H), H)
    P["b_out"] = u((1, H), H)
    P["wm1"] = u((H, H), H)
    P["bm1"] = u((1, H), H)
    P["wm2"] = u((H, out_nf), H)
    P["bm2"] = u((1, out_nf), H)
    return P


# ---------------- pure-JAX reference (edge-list form, like PyTorch) ----------------
def reference_forward(h_all, x_all, P, n_layers, attention):
    B, N, _ = h_all.shape
    H = P["w_in"].shape[1]
    rows_np = np.repeat(np.arange(N), N)
    cols_np = np.tile(np.arange(N), N)
    keep = rows_np != cols_np
    rows = jnp.asarray(rows_np[keep])
    cols = jnp.asarray(cols_np[keep])
    E = int(rows.shape[0])
    silu = jax.nn.silu

    def one_graph(hg, xg):
        h = hg @ P["w_in"] + P["b_in"][0]
        coord = xg
        for l in range(n_layers):
            cd = coord[rows] - coord[cols]
            radial = jnp.sum(cd * cd, axis=1, keepdims=True)
            e_in = jnp.concatenate(
                [h[rows], h[cols], radial, jnp.ones((E, 1), jnp.float32)], axis=1)
            m = silu(e_in @ P["we1"][l] + P["be1"][l][0])
            m = silu(m @ P["we2"][l] + P["be2"][l][0])
            if attention:
                m = m * jax.nn.sigmoid(m @ P["watt"][l] + P["batt"][l][0])
            ch = silu(m @ P["wc1"][l] + P["bc1"][l][0])
            phi = ch @ P["wc2"][l].reshape(H, 1)                 # (E, 1)
            agg_x = jnp.zeros((N, 3), jnp.float32).at[rows].add(cd * phi) / (N - 1)
            coord = coord + agg_x
            agg_m = jnp.zeros((N, H), jnp.float32).at[rows].add(m)
            nin = jnp.concatenate([h, agg_m], axis=1)
            nh = silu(nin @ P["wn1"][l] + P["bn1"][l][0])
            h = h + nh @ P["wn2"][l] + P["bn2"][l][0]
        h = h @ P["w_out"] + P["b_out"][0]
        pooled = jnp.mean(h, axis=0)
        z = jnp.maximum(pooled @ P["wm1"] + P["bm1"][0], 0.0)
        return z @ P["wm2"] + P["bm2"][0]

    with jax.default_matmul_precision("highest"):
        return jax.vmap(one_graph)(h_all, x_all)


if __name__ == "__main__":
    # small shapes consistent with the module
    B, N = 2, 8
    in_node_nf, hidden_nf, out_node_nf = 16, 32, 20
    n_layers, attention = 3, True

    key = jax.random.PRNGKey(0)
    kh, kx, kp = jax.random.split(key, 3)
    h = jax.random.normal(kh, (B, N, in_node_nf), jnp.float32)
    x = jax.random.normal(kx, (B, N, 3), jnp.float32)
    params = init_params(kp, in_node_nf, hidden_nf, out_node_nf, n_layers)

    out = egnn_residue_classifier(h, x, B, params, attention=attention)
    out = jax.block_until_ready(out)

    ref = jax.block_until_ready(reference_forward(h, x, params, n_layers, attention))
    np.testing.assert_allclose(np.asarray(out), np.asarray(ref), rtol=2e-2, atol=2e-2)

    print("KERNEL_OK")
</pallas_src>

<mosaic_0001>
module attributes {stable_mosaic.version = 11 : i64} {
  func.func @egnn_kernel(%arg0: i32, %arg1: memref<1x8x16xf32, #tpu.memory_space<vmem>>, %arg2: memref<1x8x3xf32, #tpu.memory_space<vmem>>, %arg3: memref<16x32xf32, #tpu.memory_space<vmem>>, %arg4: memref<1x32xf32, #tpu.memory_space<vmem>>, %arg5: memref<3x32x64xf32, #tpu.memory_space<vmem>>, %arg6: memref<3x1x32xf32, #tpu.memory_space<vmem>>, %arg7: memref<3x1x32xf32, #tpu.memory_space<vmem>>, %arg8: memref<3x32x32xbf16, #tpu.memory_space<vmem>>, %arg9: memref<3x1x32xf32, #tpu.memory_space<vmem>>, %arg10: memref<3x32x1xbf16, #tpu.memory_space<vmem>>, %arg11: memref<3x1x1xf32, #tpu.memory_space<vmem>>, %arg12: memref<3x32x33xbf16, #tpu.memory_space<vmem>>, %arg13: memref<3x1x32xf32, #tpu.memory_space<vmem>>, %arg14: memref<3x32x1xbf16, #tpu.memory_space<vmem>>, %arg15: memref<3x32x32xbf16, #tpu.memory_space<vmem>>, %arg16: memref<3x32x32xbf16, #tpu.memory_space<vmem>>, %arg17: memref<3x1x32xf32, #tpu.memory_space<vmem>>, %arg18: memref<3x32x32xbf16, #tpu.memory_space<vmem>>, %arg19: memref<3x1x32xf32, #tpu.memory_space<vmem>>, %arg20: memref<32x32xf32, #tpu.memory_space<vmem>>, %arg21: memref<1x32xf32, #tpu.memory_space<vmem>>, %arg22: memref<32x32xf32, #tpu.memory_space<vmem>>, %arg23: memref<1x32xf32, #tpu.memory_space<vmem>>, %arg24: memref<32x20xf32, #tpu.memory_space<vmem>>, %arg25: memref<1x20xf32, #tpu.memory_space<vmem>>, %arg26: memref<1x1x20xf32, #tpu.memory_space<vmem>>) attributes {dimension_semantics = [#tpu.dimension_semantics<parallel>], iteration_bounds = array<i64: 2>, scalar_prefetch = 0 : i64, scratch_operands = 0 : i64, tpu.core_type = #tpu.core_type<tc>, window_params = [{transform_indices = @transform_0, window_bounds = array<i64: 1, 8, 16>}, {transform_indices = @transform_1, window_bounds = array<i64: 1, 8, 3>}, {pipeline_mode = #tpu.pipeline_mode<synchronous>, transform_indices = @transform_2, window_bounds = array<i64: 16, 32>}, {pipeline_mode = #tpu.pipeline_mode<synchronous>, transform_indices = @transform_3, window_bounds = array<i64: 1, 32>}, {pipeline_mode = #tpu.pipeline_mode<synchronous>, transform_indices = @transform_4, window_bounds = array<i64: 3, 32, 64>}, {pipeline_mode = #tpu.pipeline_mode<synchronous>, transform_indices = @transform_5, window_bounds = array<i64: 3, 1, 32>}, {pipeline_mode = #tpu.pipeline_mode<synchronous>, transform_indices = @transform_6, window_bounds = array<i64: 3, 1, 32>}, {pipeline_mode = #tpu.pipeline_mode<synchronous>, transform_indices = @transform_7, window_bounds = array<i64: 3, 32, 32>}, {pipeline_mode = #tpu.pipeline_mode<synchronous>, transform_indices = @transform_8, window_bounds = array<i64: 3, 1, 32>}, {pipeline_mode = #tpu.pipeline_mode<synchronous>, transform_indices = @transform_9, window_bounds = array<i64: 3, 32, 1>}, {pipeline_mode = #tpu.pipeline_mode<synchronous>, transform_indices = @transform_10, window_bounds = array<i64: 3, 1, 1>}, {pipeline_mode = #tpu.pipeline_mode<synchronous>, transform_indices = @transform_11, window_bounds = array<i64: 3, 32, 33>}, {pipeline_mode = #tpu.pipeline_mode<synchronous>, transform_indices = @transform_12, window_bounds = array<i64: 3, 1, 32>}, {pipeline_mode = #tpu.pipeline_mode<synchronous>, transform_indices = @transform_13, window_bounds = array<i64: 3, 32, 1>}, {pipeline_mode = #tpu.pipeline_mode<synchronous>, transform_indices = @transform_14, window_bounds = array<i64: 3, 32, 32>}, {pipeline_mode = #tpu.pipeline_mode<synchronous>, transform_indices = @transform_15, window_bounds = array<i64: 3, 32, 32>}, {pipeline_mode = #tpu.pipeline_mode<synchronous>, transform_indices = @transform_16, window_bounds = array<i64: 3, 1, 32>}, {pipeline_mode = #tpu.pipeline_mode<synchronous>, transform_indices = @transform_17, window_bounds = array<i64: 3, 32, 32>}, {pipeline_mode = #tpu.pipeline_mode<synchronous>, transform_indices = @transform_18, window_bounds = array<i64: 3, 1, 32>}, {pipeline_mode = #tpu.pipeline_mode<synchronous>, transform_indices = @transform_19, window_bounds = array<i64: 32, 32>}, {pipeline_mode = #tpu.pipeline_mode<synchronous>, transform_indices = @transform_20, window_bounds = array<i64: 1, 32>}, {pipeline_mode = #tpu.pipeline_mode<synchronous>, transform_indices = @transform_21, window_bounds = array<i64: 32, 32>}, {pipeline_mode = #tpu.pipeline_mode<synchronous>, transform_indices = @transform_22, window_bounds = array<i64: 1, 32>}, {pipeline_mode = #tpu.pipeline_mode<synchronous>, transform_indices = @transform_23, window_bounds = array<i64: 32, 20>}, {pipeline_mode = #tpu.pipeline_mode<synchronous>, transform_indices = @transform_24, window_bounds = array<i64: 1, 20>}, {transform_indices = @transform_25, window_bounds = array<i64: 1, 1, 20>}]} {
    %c0 = arith.constant 0 : index
    %c0_0 = arith.constant 0 : index
    %c0_1 = arith.constant 0 : index
    %0 = vector.load %arg1[%c0, %c0_0, %c0_1] : memref<1x8x16xf32, #tpu.memory_space<vmem>>, vector<1x8x16xf32>
    %1 = vector.shape_cast %0 : vector<1x8x16xf32> to vector<8x16xf32>
    %c0_2 = arith.constant 0 : index
    %c0_3 = arith.constant 0 : index
    %c0_4 = arith.constant 0 : index
    %2 = vector.load %arg2[%c0_2, %c0_3, %c0_4] : memref<1x8x3xf32, #tpu.memory_space<vmem>>, vector<1x8x3xf32>
    %c0_5 = arith.constant 0 : index
    %c0_6 = arith.constant 0 : index
    %3 = vector.load %arg3[%c0_5, %c0_6] : memref<16x32xf32, #tpu.memory_space<vmem>>, vector<16x32xf32>
    %cst = arith.constant dense<0.000000e+00> : vector<8x32xf32>
    %4 = tpu.matmul %1, %3, %cst {dimension_numbers = #tpu.dot_dimension_numbers<[1], [0], [0], [1], [0, 0, 1, 1], [], []>} : vector<8x16xf32>, vector<16x32xf32>, vector<8x32xf32> -> vector<8x32xf32>
    %c0_7 = arith.constant 0 : index
    %c0_8 = arith.constant 0 : index
    %5 = vector.load %arg4[%c0_7, %c0_8] : memref<1x32xf32, #tpu.memory_space<vmem>>, vector<1x32xf32>
    %6 = vector.broadcast %5 : vector<1x32xf32> to vector<8x32xf32>
    %7 = arith.addf %4, %6 : vector<8x32xf32>
    %8 = arith.mulf %2, %2 : vector<1x8x3xf32>
    %cst_9 = arith.constant dense<0.000000e+00> : vector<1x8xf32>
    %9 = vector.multi_reduction <add>, %8, %cst_9 [2] : vector<1x8x3xf32> to vector<1x8xf32>
    %10 = vector.shape_cast %9 : vector<1x8xf32> to vector<1x8x1xf32>
    %cst_10 = arith.constant dense<0.000000e+00> : vector<1x8x8xf32>
    %11 = tpu.matmul %2, %2, %cst_10 {dimension_numbers = #tpu.dot_dimension_numbers<[2], [2], [1], [1], [0, 0, 0, 1, 1, 1], [0], [0]>} : vector<1x8x3xf32>, vector<1x8x3xf32>, vector<1x8x8xf32> -> vector<1x8x8xf32>
    %12 = tpu.transpose %10, [0, 2, 1] : vector<1x8x1xf32> -> vector<1x1x8xf32>
    %13 = vector.broadcast %10 : vector<1x8x1xf32> to vector<1x8x8xf32>
    %14 = vector.broadcast %12 : vector<1x1x8xf32> to vector<1x8x8xf32>
    %15 = arith.addf %13, %14 : vector<1x8x8xf32>
    %cst_11 = arith.constant 2.000000e+00 : f32
    %16 = vector.broadcast %cst_11 : f32 to vector<1x8x8xf32>
    %17 = arith.mulf %16, %11 : vector<1x8x8xf32>
    %18 = arith.subf %15, %17 : vector<1x8x8xf32>
    %cst_12 = arith.constant 0.000000e+00 : f32
    %19 = vector.broadcast %cst_12 : f32 to vector<1x8x8xf32>
    %20 = arith.maximumf %18, %19 : vector<1x8x8xf32>
    %c0_13 = arith.constant 0 : index
    %c0_14 = arith.constant 0 : index
    %c0_15 = arith.constant 0 : index
    %21 = vector.load %arg5[%c0_13, %c0_14, %c0_15] : memref<3x32x64xf32, #tpu.memory_space<vmem>>, vector<1x32x64xf32>
    %22 = vector.shape_cast %21 : vector<1x32x64xf32> to vector<32x64xf32>
    %cst_16 = arith.constant dense<0.000000e+00> : vector<8x64xf32>
    %23 = tpu.matmul %7, %22, %cst_16 {dimension_numbers = #tpu.dot_dimension_numbers<[1], [0], [0], [1], [0, 0, 1, 1], [], []>} : vector<8x32xf32>, vector<32x64xf32>, vector<8x64xf32> -> vector<8x64xf32>
    %24 = vector.shape_cast %23 : vector<8x64xf32> to vector<1x8x64xf32>
    %25 = vector.extract_strided_slice %24 {offsets = [0, 0, 0], sizes = [1, 8, 32], strides = [1, 1, 1]} : vector<1x8x64xf32> to vector<1x8x32xf32>
    %26 = vector.extract_strided_slice %24 {offsets = [0, 0, 32], sizes = [1, 8, 32], strides = [1, 1, 1]} : vector<1x8x64xf32> to vector<1x8x32xf32>
    %c0_17 = arith.constant 0 : index
    %c0_18 = arith.constant 0 : index
    %c0_19 = arith.constant 0 : index
    %27 = vector.load %arg6[%c0_17, %c0_18, %c0_19] : memref<3x1x32xf32, #tpu.memory_space<vmem>>, vector<1x1x32xf32>
    %28 = vector.shape_cast %27 : vector<1x1x32xf32> to vector<1x32xf32>
    %29 = vector.shape_cast %28 : vector<1x32xf32> to vector<1x1x1x32xf32>
    %c0_20 = arith.constant 0 : index
    %c0_21 = arith.constant 0 : index
    %c0_22 = arith.constant 0 : index
    %30 = vector.load %arg7[%c0_20, %c0_21, %c0_22] : memref<3x1x32xf32, #tpu.memory_space<vmem>>, vector<1x1x32xf32>
    %31 = vector.shape_cast %30 : vector<1x1x32xf32> to vector<1x32xf32>
    %32 = vector.shape_cast %31 : vector<1x32xf32> to vector<1x1x1x32xf32>
    %33 = vector.shape_cast %25 : vector<1x8x32xf32> to vector<1x8x1x32xf32>
    %34 = vector.shape_cast %26 : vector<1x8x32xf32> to vector<1x1x8x32xf32>
    %35 = vector.broadcast %33 : vector<1x8x1x32xf32> to vector<1x8x8x32xf32>
    %36 = vector.broadcast %34 : vector<1x1x8x32xf32> to vector<1x8x8x32xf32>
    %37 = arith.addf %35, %36 : vector<1x8x8x32xf32>
    %38 = vector.shape_cast %20 : vector<1x8x8xf32> to vector<1x8x8x1xf32>
    %39 = vector.broadcast %38 : vector<1x8x8x1xf32> to vector<1x8x8x32xf32>
    %40 = vector.broadcast %29 : vector<1x1x1x32xf32> to vector<1x8x8x32xf32>
    %41 = arith.mulf %39, %40 : vector<1x8x8x32xf32>
    %42 = arith.addf %37, %41 : vector<1x8x8x32xf32>
    %43 = vector.broadcast %32 : vector<1x1x1x32xf32> to vector<1x8x8x32xf32>
    %44 = arith.addf %42, %43 : vector<1x8x8x32xf32>
    %cst_23 = arith.constant 0.000000e+00 : f32
    %45 = vector.broadcast %cst_23 : f32 to vector<1x8x8x32xf32>
    %46 = arith.subf %45, %44 : vector<1x8x8x32xf32>
    %47 = math.exp %46 : vector<1x8x8x32xf32>
    %cst_24 = arith.constant 1.000000e+00 : f32
    %48 = vector.broadcast %cst_24 : f32 to vector<1x8x8x32xf32>
    %49 = arith.addf %48, %47 : vector<1x8x8x32xf32>
    %50 = tpu.reciprocal %49 {approx = true} : vector<1x8x8x32xf32> -> vector<1x8x8x32xf32>
    %51 = arith.mulf %44, %50 : vector<1x8x8x32xf32>
    %52 = arith.truncf %51 : vector<1x8x8x32xf32> to vector<1x8x8x32xbf16>
    %53 = vector.shape_cast %52 : vector<1x8x8x32xbf16> to vector<64x32xbf16>
    %c0_25 = arith.constant 0 : index
    %c0_26 = arith.constant 0 : index
    %c0_27 = arith.constant 0 : index
    %54 = vector.load %arg8[%c0_25, %c0_26, %c0_27] : memref<3x32x32xbf16, #tpu.memory_space<vmem>>, vector<1x32x32xbf16>
    %55 = vector.shape_cast %54 : vector<1x32x32xbf16> to vector<32x32xbf16>
    %cst_28 = arith.constant dense<0.000000e+00> : vector<64x32xf32>
    %56 = tpu.matmul %53, %55, %cst_28 {dimension_numbers = #tpu.dot_dimension_numbers<[1], [0], [0], [1], [0, 0, 1, 1], [], []>} : vector<64x32xbf16>, vector<32x32xbf16>, vector<64x32xf32> -> vector<64x32xf32>
    %c0_29 = arith.constant 0 : index
    %c0_30 = arith.constant 0 : index
    %c0_31 = arith.constant 0 : index
    %57 = vector.load %arg9[%c0_29, %c0_30, %c0_31] : memref<3x1x32xf32, #tpu.memory_space<vmem>>, vector<1x1x32xf32>
    %58 = vector.shape_cast %57 : vector<1x1x32xf32> to vector<1x32xf32>
    %59 = vector.broadcast %58 : vector<1x32xf32> to vector<64x32xf32>
    %60 = arith.addf %56, %59 : vector<64x32xf32>
    %cst_32 = arith.constant 0.000000e+00 : f32
    %61 = vector.broadcast %cst_32 : f32 to vector<64x32xf32>
    %62 = arith.subf %61, %60 : vector<64x32xf32>
    %63 = math.exp %62 : vector<64x32xf32>
    %cst_33 = arith.constant 1.000000e+00 : f32
    %64 = vector.broadcast %cst_33 : f32 to vector<64x32xf32>
    %65 = arith.addf %64, %63 : vector<64x32xf32>
    %66 = tpu.reciprocal %65 {approx = true} : vector<64x32xf32> -> vector<64x32xf32>
    %67 = arith.mulf %60, %66 : vector<64x32xf32>
    %68 = arith.truncf %67 : vector<64x32xf32> to vector<64x32xbf16>
    %c0_34 = arith.constant 0 : index
    %c0_35 = arith.constant 0 : index
    %c0_36 = arith.constant 0 : index
    %69 = vector.load %arg12[%c0_34, %c0_35, %c0_36] : memref<3x32x33xbf16, #tpu.memory_space<vmem>>, vector<1x32x33xbf16>
    %70 = vector.shape_cast %69 : vector<1x32x33xbf16> to vector<32x33xbf16>
    %cst_37 = arith.constant dense<0.000000e+00> : vector<64x33xf32>
    %71 = tpu.matmul %68, %70, %cst_37 {dimension_numbers = #tpu.dot_dimension_numbers<[1], [0], [0], [1], [0, 0, 1, 1], [], []>} : vector<64x32xbf16>, vector<32x33xbf16>, vector<64x33xf32> -> vector<64x33xf32>
    %72 = vector.extract_strided_slice %71 {offsets = [0, 32], sizes = [64, 1], strides = [1, 1]} : vector<64x33xf32> to vector<64x1xf32>
    %c0_38 = arith.constant 0 : index
    %c0_39 = arith.constant 0 : index
    %c0_40 = arith.constant 0 : index
    %73 = vector.load %arg11[%c0_38, %c0_39, %c0_40] : memref<3x1x1xf32, #tpu.memory_space<vmem>>, vector<1x1x1xf32>
    %74 = vector.shape_cast %73 : vector<1x1x1xf32> to vector<1x1xf32>
    %75 = vector.broadcast %74 : vector<1x1xf32> to vector<64x1xf32>
    %76 = arith.addf %72, %75 : vector<64x1xf32>
    %cst_41 = arith.constant 0.000000e+00 : f32
    %77 = vector.broadcast %cst_41 : f32 to vector<64x1xf32>
    %78 = arith.subf %77, %76 : vector<64x1xf32>
    %79 = math.exp %78 : vector<64x1xf32>
    %cst_42 = arith.constant 1.000000e+00 : f32
    %80 = vector.broadcast %cst_42 : f32 to vector<64x1xf32>
    %81 = arith.addf %80, %79 : vector<64x1xf32>
    %82 = tpu.reciprocal %81 {approx = true} : vector<64x1xf32> -> vector<64x1xf32>
    %83 = vector.extract_strided_slice %71 {offsets = [0, 0], sizes = [64, 32], strides = [1, 1]} : vector<64x33xf32> to vector<64x32xf32>
    %84 = vector.broadcast %82 : vector<64x1xf32> to vector<64x32xf32>
    %85 = arith.mulf %84, %83 : vector<64x32xf32>
    %c0_43 = arith.constant 0 : index
    %c0_44 = arith.constant 0 : index
    %c0_45 = arith.constant 0 : index
    %86 = vector.load %arg13[%c0_43, %c0_44, %c0_45] : memref<3x1x32xf32, #tpu.memory_space<vmem>>, vector<1x1x32xf32>
    %87 = vector.shape_cast %86 : vector<1x1x32xf32> to vector<1x32xf32>
    %88 = vector.broadcast %87 : vector<1x32xf32> to vector<64x32xf32>
    %89 = arith.addf %85, %88 : vector<64x32xf32>
    %cst_46 = arith.constant 0.000000e+00 : f32
    %90 = vector.broadcast %cst_46 : f32 to vector<64x32xf32>
    %91 = arith.subf %90, %89 : vector<64x32xf32>
    %92 = math.exp %91 : vector<64x32xf32>
    %cst_47 = arith.constant 1.000000e+00 : f32
    %93 = vector.broadcast %cst_47 : f32 to vector<64x32xf32>
    %94 = arith.addf %93, %92 : vector<64x32xf32>
    %95 = tpu.reciprocal %94 {approx = true} : vector<64x32xf32> -> vector<64x32xf32>
    %96 = arith.mulf %89, %95 : vector<64x32xf32>
    %97 = arith.extf %68 : vector<64x32xbf16> to vector<64x32xf32>
    %98 = vector.broadcast %82 : vector<64x1xf32> to vector<64x32xf32>
    %99 = arith.mulf %98, %97 : vector<64x32xf32>
    %100 = vector.extract_strided_slice %23 {offsets = [0, 0], sizes = [8, 32], strides = [1, 1]} : vector<8x64xf32> to vector<8x32xf32>
    %101 = vector.extract_strided_slice %23 {offsets = [0, 32], sizes = [8, 32], strides = [1, 1]} : vector<8x64xf32> to vector<8x32xf32>
    %102 = arith.addf %100, %101 : vector<8x32xf32>
    %c0_48 = arith.constant 0 : index
    %c0_49 = arith.constant 0 : index
    %c0_50 = arith.constant 0 : index
    %103 = vector.load %arg7[%c0_48, %c0_49, %c0_50] : memref<3x1x32xf32, #tpu.memory_space<vmem>>, vector<1x1x32xf32>
    %104 = vector.shape_cast %103 : vector<1x1x32xf32> to vector<1x32xf32>
    %105 = vector.broadcast %104 : vector<1x32xf32> to vector<8x32xf32>
    %106 = arith.addf %102, %105 : vector<8x32xf32>
    %cst_51 = arith.constant 0.000000e+00 : f32
    %107 = vector.broadcast %cst_51 : f32 to vector<8x32xf32>
    %108 = arith.subf %107, %106 : vector<8x32xf32>
    %109 = math.exp %108 : vector<8x32xf32>
    %cst_52 = arith.constant 1.000000e+00 : f32
    %110 = vector.broadcast %cst_52 : f32 to vector<8x32xf32>
    %111 = arith.addf %110, %109 : vector<8x32xf32>
    %112 = tpu.reciprocal %111 {approx = true} : vector<8x32xf32> -> vector<8x32xf32>
    %113 = arith.mulf %106, %112 : vector<8x32xf32>
    %114 = arith.truncf %113 : vector<8x32xf32> to vector<8x32xbf16>
    %c0_53 = arith.constant 0 : index
    %c0_54 = arith.constant 0 : index
    %c0_55 = arith.constant 0 : index
    %115 = vector.load %arg8[%c0_53, %c0_54, %c0_55] : memref<3x32x32xbf16, #tpu.memory_space<vmem>>, vector<1x32x32xbf16>
    %116 = vector.shape_cast %115 : vector<1x32x32xbf16> to vector<32x32xbf16>
    %cst_56 = arith.constant dense<0.000000e+00> : vector<8x32xf32>
    %117 = tpu.matmul %114, %116, %cst_56 {dimension_numbers = #tpu.dot_dimension_numbers<[1], [0], [0], [1], [0, 0, 1, 1], [], []>} : vector<8x32xbf16>, vector<32x32xbf16>, vector<8x32xf32> -> vector<8x32xf32>
    %c0_57 = arith.constant 0 : index
    %c0_58 = arith.constant 0 : index
    %c0_59 = arith.constant 0 : index
    %118 = vector.load %arg9[%c0_57, %c0_58, %c0_59] : memref<3x1x32xf32, #tpu.memory_space<vmem>>, vector<1x1x32xf32>
    %119 = vector.shape_cast %118 : vector<1x1x32xf32> to vector<1x32xf32>
    %120 = vector.broadcast %119 : vector<1x32xf32> to vector<8x32xf32>
    %121 = arith.addf %117, %120 : vector<8x32xf32>
    %cst_60 = arith.constant 0.000000e+00 : f32
    %122 = vector.broadcast %cst_60 : f32 to vector<8x32xf32>
    %123 = arith.subf %122, %121 : vector<8x32xf32>
    %124 = math.exp %123 : vector<8x32xf32>
    %cst_61 = arith.constant 1.000000e+00 : f32
    %125 = vector.broadcast %cst_61 : f32 to vector<8x32xf32>
    %126 = arith.addf %125, %124 : vector<8x32xf32>
    %127 = tpu.reciprocal %126 {approx = true} : vector<8x32xf32> -> vector<8x32xf32>
    %128 = arith.mulf %121, %127 : vector<8x32xf32>
    %129 = arith.truncf %128 : vector<8x32xf32> to vector<8x32xbf16>
    %130 = arith.extf %129 : vector<8x32xbf16> to vector<8x32xf32>
    %c0_62 = arith.constant 0 : index
    %c0_63 = arith.constant 0 : index
    %c0_64 = arith.constant 0 : index
    %131 = vector.load %arg10[%c0_62, %c0_63, %c0_64] : memref<3x32x1xbf16, #tpu.memory_space<vmem>>, vector<1x32x1xbf16>
    %132 = vector.shape_cast %131 : vector<1x32x1xbf16> to vector<32x1xbf16>
    %cst_65 = arith.constant dense<0.000000e+00> : vector<8x1xf32>
    %133 = tpu.matmul %129, %132, %cst_65 {dimension_numbers = #tpu.dot_dimension_numbers<[1], [0], [0], [1], [0, 0, 1, 1], [], []>} : vector<8x32xbf16>, vector<32x1xbf16>, vector<8x1xf32> -> vector<8x1xf32>
    %c0_66 = arith.constant 0 : index
    %c0_67 = arith.constant 0 : index
    %c0_68 = arith.constant 0 : index
    %134 = vector.load %arg11[%c0_66, %c0_67, %c0_68] : memref<3x1x1xf32, #tpu.memory_space<vmem>>, vector<1x1x1xf32>
    %135 = vector.shape_cast %134 : vector<1x1x1xf32> to vector<1x1xf32>
    %136 = vector.broadcast %135 : vector<1x1xf32> to vector<8x1xf32>
    %137 = arith.addf %133, %136 : vector<8x1xf32>
    %cst_69 = arith.constant 0.000000e+00 : f32
    %138 = vector.broadcast %cst_69 : f32 to vector<8x1xf32>
    %139 = arith.subf %138, %137 : vector<8x1xf32>
    %140 = math.exp %139 : vector<8x1xf32>
    %cst_70 = arith.constant 1.000000e+00 : f32
    %141 = vector.broadcast %cst_70 : f32 to vector<8x1xf32>
    %142 = arith.addf %141, %140 : vector<8x1xf32>
    %143 = tpu.reciprocal %142 {approx = true} : vector<8x1xf32> -> vector<8x1xf32>
    %144 = vector.broadcast %143 : vector<8x1xf32> to vector<8x32xf32>
    %145 = arith.mulf %130, %144 : vector<8x32xf32>
    %146 = arith.truncf %96 : vector<64x32xf32> to vector<64x32xbf16>
    %c0_71 = arith.constant 0 : index
    %c0_72 = arith.constant 0 : index
    %c0_73 = arith.constant 0 : index
    %147 = vector.load %arg14[%c0_71, %c0_72, %c0_73] : memref<3x32x1xbf16, #tpu.memory_space<vmem>>, vector<1x32x1xbf16>
    %148 = vector.shape_cast %147 : vector<1x32x1xbf16> to vector<32x1xbf16>
    %cst_74 = arith.constant dense<0.000000e+00> : vector<64x1xf32>
    %149 = tpu.matmul %146, %148, %cst_74 {dimension_numbers = #tpu.dot_dimension_numbers<[1], [0], [0], [1], [0, 0, 1, 1], [], []>} : vector<64x32xbf16>, vector<32x1xbf16>, vector<64x1xf32> -> vector<64x1xf32>
    %150 = vector.shape_cast %149 : vector<64x1xf32> to vector<1x8x8xf32>
    %cst_75 = arith.constant dense<0.000000e+00> : vector<1x8xf32>
    %151 = vector.multi_reduction <add>, %150, %cst_75 [2] : vector<1x8x8xf32> to vector<1x8xf32>
    %152 = vector.shape_cast %151 : vector<1x8xf32> to vector<1x8x1xf32>
    %cst_76 = arith.constant dense<0.000000e+00> : vector<1x8x3xf32>
    %153 = tpu.matmul %150, %2, %cst_76 {dimension_numbers = #tpu.dot_dimension_numbers<[2], [1], [1], [2], [0, 0, 0, 1, 1, 2], [0], [0]>} : vector<1x8x8xf32>, vector<1x8x3xf32>, vector<1x8x3xf32> -> vector<1x8x3xf32>
    %154 = vector.broadcast %152 : vector<1x8x1xf32> to vector<1x8x3xf32>
    %155 = arith.mulf %2, %154 : vector<1x8x3xf32>
    %156 = arith.subf %155, %153 : vector<1x8x3xf32>
    %cst_77 = arith.constant 0.142857149 : f32
    %157 = vector.broadcast %cst_77 : f32 to vector<1x8x3xf32>
    %158 = arith.mulf %156, %157 : vector<1x8x3xf32>
    %159 = arith.addf %2, %158 : vector<1x8x3xf32>
    %160 = vector.shape_cast %99 : vector<64x32xf32> to vector<1x8x8x32xf32>
    %cst_78 = arith.constant dense<0.000000e+00> : vector<1x8x32xf32>
    %161 = vector.multi_reduction <add>, %160, %cst_78 [2] : vector<1x8x8x32xf32> to vector<1x8x32xf32>
    %162 = vector.shape_cast %145 : vector<8x32xf32> to vector<1x8x32xf32>
    %163 = arith.subf %161, %162 : vector<1x8x32xf32>
    %164 = vector.shape_cast %163 : vector<1x8x32xf32> to vector<8x32xf32>
    %c0_79 = arith.constant 0 : index
    %c0_80 = arith.constant 0 : index
    %c0_81 = arith.constant 0 : index
    %165 = vector.load %arg15[%c0_79, %c0_80, %c0_81] : memref<3x32x32xbf16, #tpu.memory_space<vmem>>, vector<1x32x32xbf16>
    %166 = vector.shape_cast %165 : vector<1x32x32xbf16> to vector<32x32xbf16>
    %167 = arith.truncf %7 : vector<8x32xf32> to vector<8x32xbf16>
    %cst_82 = arith.constant dense<0.000000e+00> : vector<8x32xf32>
    %168 = tpu.matmul %167, %166, %cst_82 {dimension_numbers = #tpu.dot_dimension_numbers<[1], [0], [0], [1], [0, 0, 1, 1], [], []>} : vector<8x32xbf16>, vector<32x32xbf16>, vector<8x32xf32> -> vector<8x32xf32>
    %c0_83 = arith.constant 0 : index
    %c0_84 = arith.constant 0 : index
    %c0_85 = arith.constant 0 : index
    %169 = vector.load %arg16[%c0_83, %c0_84, %c0_85] : memref<3x32x32xbf16, #tpu.memory_space<vmem>>, vector<1x32x32xbf16>
    %170 = vector.shape_cast %169 : vector<1x32x32xbf16> to vector<32x32xbf16>
    %171 = arith.truncf %164 : vector<8x32xf32> to vector<8x32xbf16>
    %cst_86 = arith.constant dense<0.000000e+00> : vector<8x32xf32>
    %172 = tpu.matmul %171, %170, %cst_86 {dimension_numbers = #tpu.dot_dimension_numbers<[1], [0], [0], [1], [0, 0, 1, 1], [], []>} : vector<8x32xbf16>, vector<32x32xbf16>, vector<8x32xf32> -> vector<8x32xf32>
    %173 = arith.addf %168, %172 : vector<8x32xf32>
    %c0_87 = arith.constant 0 : index
    %c0_88 = arith.constant 0 : index
    %c0_89 = arith.constant 0 : index
    %174 = vector.load %arg17[%c0_87, %c0_88, %c0_89] : memref<3x1x32xf32, #tpu.memory_space<vmem>>, vector<1x1x32xf32>
    %175 = vector.shape_cast %174 : vector<1x1x32xf32> to vector<1x32xf32>
    %176 = vector.broadcast %175 : vector<1x32xf32> to vector<8x32xf32>
    %177 = arith.addf %173, %176 : vector<8x32xf32>
    %cst_90 = arith.constant 0.000000e+00 : f32
    %178 = vector.broadcast %cst_90 : f32 to vector<8x32xf32>
    %179 = arith.subf %178, %177 : vector<8x32xf32>
    %180 = math.exp %179 : vector<8x32xf32>
    %cst_91 = arith.constant 1.000000e+00 : f32
    %181 = vector.broadcast %cst_91 : f32 to vector<8x32xf32>
    %182 = arith.addf %181, %180 : vector<8x32xf32>
    %183 = tpu.reciprocal %182 {approx = true} : vector<8x32xf32> -> vector<8x32xf32>
    %184 = arith.mulf %177, %183 : vector<8x32xf32>
    %c0_92 = arith.constant 0 : index
    %c0_93 = arith.constant 0 : index
    %c0_94 = arith.constant 0 : index
    %185 = vector.load %arg18[%c0_92, %c0_93, %c0_94] : memref<3x32x32xbf16, #tpu.memory_space<vmem>>, vector<1x32x32xbf16>
    %186 = vector.shape_cast %185 : vector<1x32x32xbf16> to vector<32x32xbf16>
    %187 = arith.truncf %184 : vector<8x32xf32> to vector<8x32xbf16>
    %cst_95 = arith.constant dense<0.000000e+00> : vector<8x32xf32>
    %188 = tpu.matmul %187, %186, %cst_95 {dimension_numbers = #tpu.dot_dimension_numbers<[1], [0], [0], [1], [0, 0, 1, 1], [], []>} : vector<8x32xbf16>, vector<32x32xbf16>, vector<8x32xf32> -> vector<8x32xf32>
    %189 = arith.addf %7, %188 : vector<8x32xf32>
    %c0_96 = arith.constant 0 : index
    %c0_97 = arith.constant 0 : index
    %c0_98 = arith.constant 0 : index
    %190 = vector.load %arg19[%c0_96, %c0_97, %c0_98] : memref<3x1x32xf32, #tpu.memory_space<vmem>>, vector<1x1x32xf32>
    %191 = vector.shape_cast %190 : vector<1x1x32xf32> to vector<1x32xf32>
    %192 = vector.broadcast %191 : vector<1x32xf32> to vector<8x32xf32>
    %193 = arith.addf %189, %192 : vector<8x32xf32>
    %194 = arith.mulf %159, %159 : vector<1x8x3xf32>
    %cst_99 = arith.constant dense<0.000000e+00> : vector<1x8xf32>
    %195 = vector.multi_reduction <add>, %194, %cst_99 [2] : vector<1x8x3xf32> to vector<1x8xf32>
    %196 = vector.shape_cast %195 : vector<1x8xf32> to vector<1x8x1xf32>
    %cst_100 = arith.constant dense<0.000000e+00> : vector<1x8x8xf32>
    %197 = tpu.matmul %159, %159, %cst_100 {dimension_numbers = #tpu.dot_dimension_numbers<[2], [2], [1], [1], [0, 0, 0, 1, 1, 1], [0], [0]>} : vector<1x8x3xf32>, vector<1x8x3xf32>, vector<1x8x8xf32> -> vector<1x8x8xf32>
    %198 = tpu.transpose %196, [0, 2, 1] : vector<1x8x1xf32> -> vector<1x1x8xf32>
    %199 = vector.broadcast %196 : vector<1x8x1xf32> to vector<1x8x8xf32>
    %200 = vector.broadcast %198 : vector<1x1x8xf32> to vector<1x8x8xf32>
    %201 = arith.addf %199, %200 : vector<1x8x8xf32>
    %cst_101 = arith.constant 2.000000e+00 : f32
    %202 = vector.broadcast %cst_101 : f32 to vector<1x8x8xf32>
    %203 = arith.mulf %202, %197 : vector<1x8x8xf32>
    %204 = arith.subf %201, %203 : vector<1x8x8xf32>
    %cst_102 = arith.constant 0.000000e+00 : f32
    %205 = vector.broadcast %cst_102 : f32 to vector<1x8x8xf32>
    %206 = arith.maximumf %204, %205 : vector<1x8x8xf32>
    %c1 = arith.constant 1 : index
    %c0_103 = arith.constant 0 : index
    %c0_104 = arith.constant 0 : index
    %207 = vector.load %arg5[%c1, %c0_103, %c0_104] : memref<3x32x64xf32, #tpu.memory_space<vmem>>, vector<1x32x64xf32>
    %208 = vector.shape_cast %207 : vector<1x32x64xf32> to vector<32x64xf32>
    %cst_105 = arith.constant dense<0.000000e+00> : vector<8x64xf32>
    %209 = tpu.matmul %193, %208, %cst_105 {dimension_numbers = #tpu.dot_dimension_numbers<[1], [0], [0], [1], [0, 0, 1, 1], [], []>} : vector<8x32xf32>, vector<32x64xf32>, vector<8x64xf32> -> vector<8x64xf32>
    %210 = vector.shape_cast %209 : vector<8x64xf32> to vector<1x8x64xf32>
    %211 = vector.extract_strided_slice %210 {offsets = [0, 0, 0], sizes = [1, 8, 32], strides = [1, 1, 1]} : vector<1x8x64xf32> to vector<1x8x32xf32>
    %212 = vector.extract_strided_slice %210 {offsets = [0, 0, 32], sizes = [1, 8, 32], strides = [1, 1, 1]} : vector<1x8x64xf32> to vector<1x8x32xf32>
    %c1_106 = arith.constant 1 : index
    %c0_107 = arith.constant 0 : index
    %c0_108 = arith.constant 0 : index
    %213 = vector.load %arg6[%c1_106, %c0_107, %c0_108] : memref<3x1x32xf32, #tpu.memory_space<vmem>>, vector<1x1x32xf32>
    %214 = vector.shape_cast %213 : vector<1x1x32xf32> to vector<1x32xf32>
    %215 = vector.shape_cast %214 : vector<1x32xf32> to vector<1x1x1x32xf32>
    %c1_109 = arith.constant 1 : index
    %c0_110 = arith.constant 0 : index
    %c0_111 = arith.constant 0 : index
    %216 = vector.load %arg7[%c1_109, %c0_110, %c0_111] : memref<3x1x32xf32, #tpu.memory_space<vmem>>, vector<1x1x32xf32>
    %217 = vector.shape_cast %216 : vector<1x1x32xf32> to vector<1x32xf32>
    %218 = vector.shape_cast %217 : vector<1x32xf32> to vector<1x1x1x32xf32>
    %219 = vector.shape_cast %211 : vector<1x8x32xf32> to vector<1x8x1x32xf32>
    %220 = vector.shape_cast %212 : vector<1x8x32xf32> to vector<1x1x8x32xf32>
    %221 = vector.broadcast %219 : vector<1x8x1x32xf32> to vector<1x8x8x32xf32>
    %222 = vector.broadcast %220 : vector<1x1x8x32xf32> to vector<1x8x8x32xf32>
    %223 = arith.addf %221, %222 : vector<1x8x8x32xf32>
    %224 = vector.shape_cast %206 : vector<1x8x8xf32> to vector<1x8x8x1xf32>
    %225 = vector.broadcast %224 : vector<1x8x8x1xf32> to vector<1x8x8x32xf32>
    %226 = vector.broadcast %215 : vector<1x1x1x32xf32> to vector<1x8x8x32xf32>
    %227 = arith.mulf %225, %226 : vector<1x8x8x32xf32>
    %228 = arith.addf %223, %227 : vector<1x8x8x32xf32>
    %229 = vector.broadcast %218 : vector<1x1x1x32xf32> to vector<1x8x8x32xf32>
    %230 = arith.addf %228, %229 : vector<1x8x8x32xf32>
    %cst_112 = arith.constant 0.000000e+00 : f32
    %231 = vector.broadcast %cst_112 : f32 to vector<1x8x8x32xf32>
    %232 = arith.subf %231, %230 : vector<1x8x8x32xf32>
    %233 = math.exp %232 : vector<1x8x8x32xf32>
    %cst_113 = arith.constant 1.000000e+00 : f32
    %234 = vector.broadcast %cst_113 : f32 to vector<1x8x8x32xf32>
    %235 = arith.addf %234, %233 : vector<1x8x8x32xf32>
    %236 = tpu.reciprocal %235 {approx = true} : vector<1x8x8x32xf32> -> vector<1x8x8x32xf32>
    %237 = arith.mulf %230, %236 : vector<1x8x8x32xf32>
    %238 = arith.truncf %237 : vector<1x8x8x32xf32> to vector<1x8x8x32xbf16>
    %239 = vector.shape_cast %238 : vector<1x8x8x32xbf16> to vector<64x32xbf16>
    %c1_114 = arith.constant 1 : index
    %c0_115 = arith.constant 0 : index
    %c0_116 = arith.constant 0 : index
    %240 = vector.load %arg8[%c1_114, %c0_115, %c0_116] : memref<3x32x32xbf16, #tpu.memory_space<vmem>>, vector<1x32x32xbf16>
    %241 = vector.shape_cast %240 : vector<1x32x32xbf16> to vector<32x32xbf16>
    %cst_117 = arith.constant dense<0.000000e+00> : vector<64x32xf32>
    %242 = tpu.matmul %239, %241, %cst_117 {dimension_numbers = #tpu.dot_dimension_numbers<[1], [0], [0], [1], [0, 0, 1, 1], [], []>} : vector<64x32xbf16>, vector<32x32xbf16>, vector<64x32xf32> -> vector<64x32xf32>
    %c1_118 = arith.constant 1 : index
    %c0_119 = arith.constant 0 : index
    %c0_120 = arith.constant 0 : index
    %243 = vector.load %arg9[%c1_118, %c0_119, %c0_120] : memref<3x1x32xf32, #tpu.memory_space<vmem>>, vector<1x1x32xf32>
    %244 = vector.shape_cast %243 : vector<1x1x32xf32> to vector<1x32xf32>
    %245 = vector.broadcast %244 : vector<1x32xf32> to vector<64x32xf32>
    %246 = arith.addf %242, %245 : vector<64x32xf32>
    %cst_121 = arith.constant 0.000000e+00 : f32
    %247 = vector.broadcast %cst_121 : f32 to vector<64x32xf32>
    %248 = arith.subf %247, %246 : vector<64x32xf32>
    %249 = math.exp %248 : vector<64x32xf32>
    %cst_122 = arith.constant 1.000000e+00 : f32
    %250 = vector.broadcast %cst_122 : f32 to vector<64x32xf32>
    %251 = arith.addf %250, %249 : vector<64x32xf32>
    %252 = tpu.reciprocal %251 {approx = true} : vector<64x32xf32> -> vector<64x32xf32>
    %253 = arith.mulf %246, %252 : vector<64x32xf32>
    %254 = arith.truncf %253 : vector<64x32xf32> to vector<64x32xbf16>
    %c1_123 = arith.constant 1 : index
    %c0_124 = arith.constant 0 : index
    %c0_125 = arith.constant 0 : index
    %255 = vector.load %arg12[%c1_123, %c0_124, %c0_125] : memref<3x32x33xbf16, #tpu.memory_space<vmem>>, vector<1x32x33xbf16>
    %256 = vector.shape_cast %255 : vector<1x32x33xbf16> to vector<32x33xbf16>
    %cst_126 = arith.constant dense<0.000000e+00> : vector<64x33xf32>
    %257 = tpu.matmul %254, %256, %cst_126 {dimension_numbers = #tpu.dot_dimension_numbers<[1], [0], [0], [1], [0, 0, 1, 1], [], []>} : vector<64x32xbf16>, vector<32x33xbf16>, vector<64x33xf32> -> vector<64x33xf32>
    %258 = vector.extract_strided_slice %257 {offsets = [0, 32], sizes = [64, 1], strides = [1, 1]} : vector<64x33xf32> to vector<64x1xf32>
    %c1_127 = arith.constant 1 : index
    %c0_128 = arith.constant 0 : index
    %c0_129 = arith.constant 0 : index
    %259 = vector.load %arg11[%c1_127, %c0_128, %c0_129] : memref<3x1x1xf32, #tpu.memory_space<vmem>>, vector<1x1x1xf32>
    %260 = vector.shape_cast %259 : vector<1x1x1xf32> to vector<1x1xf32>
    %261 = vector.broadcast %260 : vector<1x1xf32> to vector<64x1xf32>
    %262 = arith.addf %258, %261 : vector<64x1xf32>
    %cst_130 = arith.constant 0.000000e+00 : f32
    %263 = vector.broadcast %cst_130 : f32 to vector<64x1xf32>
    %264 = arith.subf %263, %262 : vector<64x1xf32>
    %265 = math.exp %264 : vector<64x1xf32>
    %cst_131 = arith.constant 1.000000e+00 : f32
    %266 = vector.broadcast %cst_131 : f32 to vector<64x1xf32>
    %267 = arith.addf %266, %265 : vector<64x1xf32>
    %268 = tpu.reciprocal %267 {approx = true} : vector<64x1xf32> -> vector<64x1xf32>
    %269 = vector.extract_strided_slice %257 {offsets = [0, 0], sizes = [64, 32], strides = [1, 1]} : vector<64x33xf32> to vector<64x32xf32>
    %270 = vector.broadcast %268 : vector<64x1xf32> to vector<64x32xf32>
    %271 = arith.mulf %270, %269 : vector<64x32xf32>
    %c1_132 = arith.constant 1 : index
    %c0_133 = arith.constant 0 : index
    %c0_134 = arith.constant 0 : index
    %272 = vector.load %arg13[%c1_132, %c0_133, %c0_134] : memref<3x1x32xf32, #tpu.memory_space<vmem>>, vector<1x1x32xf32>
    %273 = vector.shape_cast %272 : vector<1x1x32xf32> to vector<1x32xf32>
    %274 = vector.broadcast %273 : vector<1x32xf32> to vector<64x32xf32>
    %275 = arith.addf %271, %274 : vector<64x32xf32>
    %cst_135 = arith.constant 0.000000e+00 : f32
    %276 = vector.broadcast %cst_135 : f32 to vector<64x32xf32>
    %277 = arith.subf %276, %275 : vector<64x32xf32>
    %278 = math.exp %277 : vector<64x32xf32>
    %cst_136 = arith.constant 1.000000e+00 : f32
    %279 = vector.broadcast %cst_136 : f32 to vector<64x32xf32>
    %280 = arith.addf %279, %278 : vector<64x32xf32>
    %281 = tpu.reciprocal %280 {approx = true} : vector<64x32xf32> -> vector<64x32xf32>
    %282 = arith.mulf %275, %281 : vector<64x32xf32>
    %283 = arith.extf %254 : vector<64x32xbf16> to vector<64x32xf32>
    %284 = vector.broadcast %268 : vector<64x1xf32> to vector<64x32xf32>
    %285 = arith.mulf %284, %283 : vector<64x32xf32>
    %286 = vector.extract_strided_slice %209 {offsets = [0, 0], sizes = [8, 32], strides = [1, 1]} : vector<8x64xf32> to vector<8x32xf32>
    %287 = vector.extract_strided_slice %209 {offsets = [0, 32], sizes = [8, 32], strides = [1, 1]} : vector<8x64xf32> to vector<8x32xf32>
    %288 = arith.addf %286, %287 : vector<8x32xf32>
    %c1_137 = arith.constant 1 : index
    %c0_138 = arith.constant 0 : index
    %c0_139 = arith.constant 0 : index
    %289 = vector.load %arg7[%c1_137, %c0_138, %c0_139] : memref<3x1x32xf32, #tpu.memory_space<vmem>>, vector<1x1x32xf32>
    %290 = vector.shape_cast %289 : vector<1x1x32xf32> to vector<1x32xf32>
    %291 = vector.broadcast %290 : vector<1x32xf32> to vector<8x32xf32>
    %292 = arith.addf %288, %291 : vector<8x32xf32>
    %cst_140 = arith.constant 0.000000e+00 : f32
    %293 = vector.broadcast %cst_140 : f32 to vector<8x32xf32>
    %294 = arith.subf %293, %292 : vector<8x32xf32>
    %295 = math.exp %294 : vector<8x32xf32>
    %cst_141 = arith.constant 1.000000e+00 : f32
    %296 = vector.broadcast %cst_141 : f32 to vector<8x32xf32>
    %297 = arith.addf %296, %295 : vector<8x32xf32>
    %298 = tpu.reciprocal %297 {approx = true} : vector<8x32xf32> -> vector<8x32xf32>
    %299 = arith.mulf %292, %298 : vector<8x32xf32>
    %300 = arith.truncf %299 : vector<8x32xf32> to vector<8x32xbf16>
    %c1_142 = arith.constant 1 : index
    %c0_143 = arith.constant 0 : index
    %c0_144 = arith.constant 0 : index
    %301 = vector.load %arg8[%c1_142, %c0_143, %c0_144] : memref<3x32x32xbf16, #tpu.memory_space<vmem>>, vector<1x32x32xbf16>
    %302 = vector.shape_cast %301 : vector<1x32x32xbf16> to vector<32x32xbf16>
    %cst_145 = arith.constant dense<0.000000e+00> : vector<8x32xf32>
    %303 = tpu.matmul %300, %302, %cst_145 {dimension_numbers = #tpu.dot_dimension_numbers<[1], [0], [0], [1], [0, 0, 1, 1], [], []>} : vector<8x32xbf16>, vector<32x32xbf16>, vector<8x32xf32> -> vector<8x32xf32>
    %c1_146 = arith.constant 1 : index
    %c0_147 = arith.constant 0 : index
    %c0_148 = arith.constant 0 : index
    %304 = vector.load %arg9[%c1_146, %c0_147, %c0_148] : memref<3x1x32xf32, #tpu.memory_space<vmem>>, vector<1x1x32xf32>
    %305 = vector.shape_cast %304 : vector<1x1x32xf32> to vector<1x32xf32>
    %306 = vector.broadcast %305 : vector<1x32xf32> to vector<8x32xf32>
    %307 = arith.addf %303, %306 : vector<8x32xf32>
    %cst_149 = arith.constant 0.000000e+00 : f32
    %308 = vector.broadcast %cst_149 : f32 to vector<8x32xf32>
    %309 = arith.subf %308, %307 : vector<8x32xf32>
    %310 = math.exp %309 : vector<8x32xf32>
    %cst_150 = arith.constant 1.000000e+00 : f32
    %311 = vector.broadcast %cst_150 : f32 to vector<8x32xf32>
    %312 = arith.addf %311, %310 : vector<8x32xf32>
    %313 = tpu.reciprocal %312 {approx = true} : vector<8x32xf32> -> vector<8x32xf32>
    %314 = arith.mulf %307, %313 : vector<8x32xf32>
    %315 = arith.truncf %314 : vector<8x32xf32> to vector<8x32xbf16>
    %316 = arith.extf %315 : vector<8x32xbf16> to vector<8x32xf32>
    %c1_151 = arith.constant 1 : index
    %c0_152 = arith.constant 0 : index
    %c0_153 = arith.constant 0 : index
    %317 = vector.load %arg10[%c1_151, %c0_152, %c0_153] : memref<3x32x1xbf16, #tpu.memory_space<vmem>>, vector<1x32x1xbf16>
    %318 = vector.shape_cast %317 : vector<1x32x1xbf16> to vector<32x1xbf16>
    %cst_154 = arith.constant dense<0.000000e+00> : vector<8x1xf32>
    %319 = tpu.matmul %315, %318, %cst_154 {dimension_numbers = #tpu.dot_dimension_numbers<[1], [0], [0], [1], [0, 0, 1, 1], [], []>} : vector<8x32xbf16>, vector<32x1xbf16>, vector<8x1xf32> -> vector<8x1xf32>
    %c1_155 = arith.constant 1 : index
    %c0_156 = arith.constant 0 : index
    %c0_157 = arith.constant 0 : index
    %320 = vector.load %arg11[%c1_155, %c0_156, %c0_157] : memref<3x1x1xf32, #tpu.memory_space<vmem>>, vector<1x1x1xf32>
    %321 = vector.shape_cast %320 : vector<1x1x1xf32> to vector<1x1xf32>
    %322 = vector.broadcast %321 : vector<1x1xf32> to vector<8x1xf32>
    %323 = arith.addf %319, %322 : vector<8x1xf32>
    %cst_158 = arith.constant 0.000000e+00 : f32
    %324 = vector.broadcast %cst_158 : f32 to vector<8x1xf32>
    %325 = arith.subf %324, %323 : vector<8x1xf32>
    %326 = math.exp %325 : vector<8x1xf32>
    %cst_159 = arith.constant 1.000000e+00 : f32
    %327 = vector.broadcast %cst_159 : f32 to vector<8x1xf32>
    %328 = arith.addf %327, %326 : vector<8x1xf32>
    %329 = tpu.reciprocal %328 {approx = true} : vector<8x1xf32> -> vector<8x1xf32>
    %330 = vector.broadcast %329 : vector<8x1xf32> to vector<8x32xf32>
    %331 = arith.mulf %316, %330 : vector<8x32xf32>
    %332 = arith.truncf %282 : vector<64x32xf32> to vector<64x32xbf16>
    %c1_160 = arith.constant 1 : index
    %c0_161 = arith.constant 0 : index
    %c0_162 = arith.constant 0 : index
    %333 = vector.load %arg14[%c1_160, %c0_161, %c0_162] : memref<3x32x1xbf16, #tpu.memory_space<vmem>>, vector<1x32x1xbf16>
    %334 = vector.shape_cast %333 : vector<1x32x1xbf16> to vector<32x1xbf16>
    %cst_163 = arith.constant dense<0.000000e+00> : vector<64x1xf32>
    %335 = tpu.matmul %332, %334, %cst_163 {dimension_numbers = #tpu.dot_dimension_numbers<[1], [0], [0], [1], [0, 0, 1, 1], [], []>} : vector<64x32xbf16>, vector<32x1xbf16>, vector<64x1xf32> -> vector<64x1xf32>
    %336 = vector.shape_cast %335 : vector<64x1xf32> to vector<1x8x8xf32>
    %cst_164 = arith.constant dense<0.000000e+00> : vector<1x8xf32>
    %337 = vector.multi_reduction <add>, %336, %cst_164 [2] : vector<1x8x8xf32> to vector<1x8xf32>
    %338 = vector.shape_cast %337 : vector<1x8xf32> to vector<1x8x1xf32>
    %cst_165 = arith.constant dense<0.000000e+00> : vector<1x8x3xf32>
    %339 = tpu.matmul %336, %159, %cst_165 {dimension_numbers = #tpu.dot_dimension_numbers<[2], [1], [1], [2], [0, 0, 0, 1, 1, 2], [0], [0]>} : vector<1x8x8xf32>, vector<1x8x3xf32>, vector<1x8x3xf32> -> vector<1x8x3xf32>
    %340 = vector.broadcast %338 : vector<1x8x1xf32> to vector<1x8x3xf32>
    %341 = arith.mulf %159, %340 : vector<1x8x3xf32>
    %342 = arith.subf %341, %339 : vector<1x8x3xf32>
    %cst_166 = arith.constant 0.142857149 : f32
    %343 = vector.broadcast %cst_166 : f32 to vector<1x8x3xf32>
    %344 = arith.mulf %342, %343 : vector<1x8x3xf32>
    %345 = arith.addf %159, %344 : vector<1x8x3xf32>
    %346 = vector.shape_cast %285 : vector<64x32xf32> to vector<1x8x8x32xf32>
    %cst_167 = arith.constant dense<0.000000e+00> : vector<1x8x32xf32>
    %347 = vector.multi_reduction <add>, %346, %cst_167 [2] : vector<1x8x8x32xf32> to vector<1x8x32xf32>
    %348 = vector.shape_cast %331 : vector<8x32xf32> to vector<1x8x32xf32>
    %349 = arith.subf %347, %348 : vector<1x8x32xf32>
    %350 = vector.shape_cast %349 : vector<1x8x32xf32> to vector<8x32xf32>
    %c1_168 = arith.constant 1 : index
    %c0_169 = arith.constant 0 : index
    %c0_170 = arith.constant 0 : index
    %351 = vector.load %arg15[%c1_168, %c0_169, %c0_170] : memref<3x32x32xbf16, #tpu.memory_space<vmem>>, vector<1x32x32xbf16>
    %352 = vector.shape_cast %351 : vector<1x32x32xbf16> to vector<32x32xbf16>
    %353 = arith.truncf %193 : vector<8x32xf32> to vector<8x32xbf16>
    %cst_171 = arith.constant dense<0.000000e+00> : vector<8x32xf32>
    %354 = tpu.matmul %353, %352, %cst_171 {dimension_numbers = #tpu.dot_dimension_numbers<[1], [0], [0], [1], [0, 0, 1, 1], [], []>} : vector<8x32xbf16>, vector<32x32xbf16>, vector<8x32xf32> -> vector<8x32xf32>
    %c1_172 = arith.constant 1 : index
    %c0_173 = arith.constant 0 : index
    %c0_174 = arith.constant 0 : index
    %355 = vector.load %arg16[%c1_172, %c0_173, %c0_174] : memref<3x32x32xbf16, #tpu.memory_space<vmem>>, vector<1x32x32xbf16>
    %356 = vector.shape_cast %355 : vector<1x32x32xbf16> to vector<32x32xbf16>
    %357 = arith.truncf %350 : vector<8x32xf32> to vector<8x32xbf16>
    %cst_175 = arith.constant dense<0.000000e+00> : vector<8x32xf32>
    %358 = tpu.matmul %357, %356, %cst_175 {dimension_numbers = #tpu.dot_dimension_numbers<[1], [0], [0], [1], [0, 0, 1, 1], [], []>} : vector<8x32xbf16>, vector<32x32xbf16>, vector<8x32xf32> -> vector<8x32xf32>
    %359 = arith.addf %354, %358 : vector<8x32xf32>
    %c1_176 = arith.constant 1 : index
    %c0_177 = arith.constant 0 : index
    %c0_178 = arith.constant 0 : index
    %360 = vector.load %arg17[%c1_176, %c0_177, %c0_178] : memref<3x1x32xf32, #tpu.memory_space<vmem>>, vector<1x1x32xf32>
    %361 = vector.shape_cast %360 : vector<1x1x32xf32> to vector<1x32xf32>
    %362 = vector.broadcast %361 : vector<1x32xf32> to vector<8x32xf32>
    %363 = arith.addf %359, %362 : vector<8x32xf32>
    %cst_179 = arith.constant 0.000000e+00 : f32
    %364 = vector.broadcast %cst_179 : f32 to vector<8x32xf32>
    %365 = arith.subf %364, %363 : vector<8x32xf32>
    %366 = math.exp %365 : vector<8x32xf32>
    %cst_180 = arith.constant 1.000000e+00 : f32
    %367 = vector.broadcast %cst_180 : f32 to vector<8x32xf32>
    %368 = arith.addf %367, %366 : vector<8x32xf32>
    %369 = tpu.reciprocal %368 {approx = true} : vector<8x32xf32> -> vector<8x32xf32>
    %370 = arith.mulf %363, %369 : vector<8x32xf32>
    %c1_181 = arith.constant 1 : index
    %c0_182 = arith.constant 0 : index
    %c0_183 = arith.constant 0 : index
    %371 = vector.load %arg18[%c1_181, %c0_182, %c0_183] : memref<3x32x32xbf16, #tpu.memory_space<vmem>>, vector<1x32x32xbf16>
    %372 = vector.shape_cast %371 : vector<1x32x32xbf16> to vector<32x32xbf16>
    %373 = arith.truncf %370 : vector<8x32xf32> to vector<8x32xbf16>
    %cst_184 = arith.constant dense<0.000000e+00> : vector<8x32xf32>
    %374 = tpu.matmul %373, %372, %cst_184 {dimension_numbers = #tpu.dot_dimension_numbers<[1], [0], [0], [1], [0, 0, 1, 1], [], []>} : vector<8x32xbf16>, vector<32x32xbf16>, vector<8x32xf32> -> vector<8x32xf32>
    %375 = arith.addf %193, %374 : vector<8x32xf32>
    %c1_185 = arith.constant 1 : index
    %c0_186 = arith.constant 0 : index
    %c0_187 = arith.constant 0 : index
    %376 = vector.load %arg19[%c1_185, %c0_186, %c0_187] : memref<3x1x32xf32, #tpu.memory_space<vmem>>, vector<1x1x32xf32>
    %377 = vector.shape_cast %376 : vector<1x1x32xf32> to vector<1x32xf32>
    %378 = vector.broadcast %377 : vector<1x32xf32> to vector<8x32xf32>
    %379 = arith.addf %375, %378 : vector<8x32xf32>
    %380 = arith.mulf %345, %345 : vector<1x8x3xf32>
    %cst_188 = arith.constant dense<0.000000e+00> : vector<1x8xf32>
    %381 = vector.multi_reduction <add>, %380, %cst_188 [2] : vector<1x8x3xf32> to vector<1x8xf32>
    %382 = vector.shape_cast %381 : vector<1x8xf32> to vector<1x8x1xf32>
    %cst_189 = arith.constant dense<0.000000e+00> : vector<1x8x8xf32>
    %383 = tpu.matmul %345, %345, %cst_189 {dimension_numbers = #tpu.dot_dimension_numbers<[2], [2], [1], [1], [0, 0, 0, 1, 1, 1], [0], [0]>} : vector<1x8x3xf32>, vector<1x8x3xf32>, vector<1x8x8xf32> -> vector<1x8x8xf32>
    %384 = tpu.transpose %382, [0, 2, 1] : vector<1x8x1xf32> -> vector<1x1x8xf32>
    %385 = vector.broadcast %382 : vector<1x8x1xf32> to vector<1x8x8xf32>
    %386 = vector.broadcast %384 : vector<1x1x8xf32> to vector<1x8x8xf32>
    %387 = arith.addf %385, %386 : vector<1x8x8xf32>
    %cst_190 = arith.constant 2.000000e+00 : f32
    %388 = vector.broadcast %cst_190 : f32 to vector<1x8x8xf32>
    %389 = arith.mulf %388, %383 : vector<1x8x8xf32>
    %390 = arith.subf %387, %389 : vector<1x8x8xf32>
    %cst_191 = arith.constant 0.000000e+00 : f32
    %391 = vector.broadcast %cst_191 : f32 to vector<1x8x8xf32>
    %392 = arith.maximumf %390, %391 : vector<1x8x8xf32>
    %c2 = arith.constant 2 : index
    %c0_192 = arith.constant 0 : index
    %c0_193 = arith.constant 0 : index
    %393 = vector.load %arg5[%c2, %c0_192, %c0_193] : memref<3x32x64xf32, #tpu.memory_space<vmem>>, vector<1x32x64xf32>
    %394 = vector.shape_cast %393 : vector<1x32x64xf32> to vector<32x64xf32>
    %cst_194 = arith.constant dense<0.000000e+00> : vector<8x64xf32>
    %395 = tpu.matmul %379, %394, %cst_194 {dimension_numbers = #tpu.dot_dimension_numbers<[1], [0], [0], [1], [0, 0, 1, 1], [], []>} : vector<8x32xf32>, vector<32x64xf32>, vector<8x64xf32> -> vector<8x64xf32>
    %396 = vector.shape_cast %395 : vector<8x64xf32> to vector<1x8x64xf32>
    %397 = vector.extract_strided_slice %396 {offsets = [0, 0, 0], sizes = [1, 8, 32], strides = [1, 1, 1]} : vector<1x8x64xf32> to vector<1x8x32xf32>
    %398 = vector.extract_strided_slice %396 {offsets = [0, 0, 32], sizes = [1, 8, 32], strides = [1, 1, 1]} : vector<1x8x64xf32> to vector<1x8x32xf32>
    %c2_195 = arith.constant 2 : index
    %c0_196 = arith.constant 0 : index
    %c0_197 = arith.constant 0 : index
    %399 = vector.load %arg6[%c2_195, %c0_196, %c0_197] : memref<3x1x32xf32, #tpu.memory_space<vmem>>, vector<1x1x32xf32>
    %400 = vector.shape_cast %399 : vector<1x1x32xf32> to vector<1x32xf32>
    %401 = vector.shape_cast %400 : vector<1x32xf32> to vector<1x1x1x32xf32>
    %c2_198 = arith.constant 2 : index
    %c0_199 = arith.constant 0 : index
    %c0_200 = arith.constant 0 : index
    %402 = vector.load %arg7[%c2_198, %c0_199, %c0_200] : memref<3x1x32xf32, #tpu.memory_space<vmem>>, vector<1x1x32xf32>
    %403 = vector.shape_cast %402 : vector<1x1x32xf32> to vector<1x32xf32>
    %404 = vector.shape_cast %403 : vector<1x32xf32> to vector<1x1x1x32xf32>
    %405 = vector.shape_cast %397 : vector<1x8x32xf32> to vector<1x8x1x32xf32>
    %406 = vector.shape_cast %398 : vector<1x8x32xf32> to vector<1x1x8x32xf32>
    %407 = vector.broadcast %405 : vector<1x8x1x32xf32> to vector<1x8x8x32xf32>
    %408 = vector.broadcast %406 : vector<1x1x8x32xf32> to vector<1x8x8x32xf32>
    %409 = arith.addf %407, %408 : vector<1x8x8x32xf32>
    %410 = vector.shape_cast %392 : vector<1x8x8xf32> to vector<1x8x8x1xf32>
    %411 = vector.broadcast %410 : vector<1x8x8x1xf32> to vector<1x8x8x32xf32>
    %412 = vector.broadcast %401 : vector<1x1x1x32xf32> to vector<1x8x8x32xf32>
    %413 = arith.mulf %411, %412 : vector<1x8x8x32xf32>
    %414 = arith.addf %409, %413 : vector<1x8x8x32xf32>
    %415 = vector.broadcast %404 : vector<1x1x1x32xf32> to vector<1x8x8x32xf32>
    %416 = arith.addf %414, %415 : vector<1x8x8x32xf32>
    %cst_201 = arith.constant 0.000000e+00 : f32
    %417 = vector.broadcast %cst_201 : f32 to vector<1x8x8x32xf32>
    %418 = arith.subf %417, %416 : vector<1x8x8x32xf32>
    %419 = math.exp %418 : vector<1x8x8x32xf32>
    %cst_202 = arith.constant 1.000000e+00 : f32
    %420 = vector.broadcast %cst_202 : f32 to vector<1x8x8x32xf32>
    %421 = arith.addf %420, %419 : vector<1x8x8x32xf32>
    %422 = tpu.reciprocal %421 {approx = true} : vector<1x8x8x32xf32> -> vector<1x8x8x32xf32>
    %423 = arith.mulf %416, %422 : vector<1x8x8x32xf32>
    %424 = arith.truncf %423 : vector<1x8x8x32xf32> to vector<1x8x8x32xbf16>
    %425 = vector.shape_cast %424 : vector<1x8x8x32xbf16> to vector<64x32xbf16>
    %c2_203 = arith.constant 2 : index
    %c0_204 = arith.constant 0 : index
    %c0_205 = arith.constant 0 : index
    %426 = vector.load %arg8[%c2_203, %c0_204, %c0_205] : memref<3x32x32xbf16, #tpu.memory_space<vmem>>, vector<1x32x32xbf16>
    %427 = vector.shape_cast %426 : vector<1x32x32xbf16> to vector<32x32xbf16>
    %cst_206 = arith.constant dense<0.000000e+00> : vector<64x32xf32>
    %428 = tpu.matmul %425, %427, %cst_206 {dimension_numbers = #tpu.dot_dimension_numbers<[1], [0], [0], [1], [0, 0, 1, 1], [], []>} : vector<64x32xbf16>, vector<32x32xbf16>, vector<64x32xf32> -> vector<64x32xf32>
    %c2_207 = arith.constant 2 : index
    %c0_208 = arith.constant 0 : index
    %c0_209 = arith.constant 0 : index
    %429 = vector.load %arg9[%c2_207, %c0_208, %c0_209] : memref<3x1x32xf32, #tpu.memory_space<vmem>>, vector<1x1x32xf32>
    %430 = vector.shape_cast %429 : vector<1x1x32xf32> to vector<1x32xf32>
    %431 = vector.broadcast %430 : vector<1x32xf32> to vector<64x32xf32>
    %432 = arith.addf %428, %431 : vector<64x32xf32>
    %cst_210 = arith.constant 0.000000e+00 : f32
    %433 = vector.broadcast %cst_210 : f32 to vector<64x32xf32>
    %434 = arith.subf %433, %432 : vector<64x32xf32>
    %435 = math.exp %434 : vector<64x32xf32>
    %cst_211 = arith.constant 1.000000e+00 : f32
    %436 = vector.broadcast %cst_211 : f32 to vector<64x32xf32>
    %437 = arith.addf %436, %435 : vector<64x32xf32>
    %438 = tpu.reciprocal %437 {approx = true} : vector<64x32xf32> -> vector<64x32xf32>
    %439 = arith.mulf %432, %438 : vector<64x32xf32>
    %440 = arith.truncf %439 : vector<64x32xf32> to vector<64x32xbf16>
    %c2_212 = arith.constant 2 : index
    %c0_213 = arith.constant 0 : index
    %c0_214 = arith.constant 0 : index
    %441 = vector.load %arg12[%c2_212, %c0_213, %c0_214] : memref<3x32x33xbf16, #tpu.memory_space<vmem>>, vector<1x32x33xbf16>
    %442 = vector.shape_cast %441 : vector<1x32x33xbf16> to vector<32x33xbf16>
    %cst_215 = arith.constant dense<0.000000e+00> : vector<64x33xf32>
    %443 = tpu.matmul %440, %442, %cst_215 {dimension_numbers = #tpu.dot_dimension_numbers<[1], [0], [0], [1], [0, 0, 1, 1], [], []>} : vector<64x32xbf16>, vector<32x33xbf16>, vector<64x33xf32> -> vector<64x33xf32>
    %444 = vector.extract_strided_slice %443 {offsets = [0, 32], sizes = [64, 1], strides = [1, 1]} : vector<64x33xf32> to vector<64x1xf32>
    %c2_216 = arith.constant 2 : index
    %c0_217 = arith.constant 0 : index
    %c0_218 = arith.constant 0 : index
    %445 = vector.load %arg11[%c2_216, %c0_217, %c0_218] : memref<3x1x1xf32, #tpu.memory_space<vmem>>, vector<1x1x1xf32>
    %446 = vector.shape_cast %445 : vector<1x1x1xf32> to vector<1x1xf32>
    %447 = vector.broadcast %446 : vector<1x1xf32> to vector<64x1xf32>
    %448 = arith.addf %444, %447 : vector<64x1xf32>
    %cst_219 = arith.constant 0.000000e+00 : f32
    %449 = vector.broadcast %cst_219 : f32 to vector<64x1xf32>
    %450 = arith.subf %449, %448 : vector<64x1xf32>
    %451 = math.exp %450 : vector<64x1xf32>
    %cst_220 = arith.constant 1.000000e+00 : f32
    %452 = vector.broadcast %cst_220 : f32 to vector<64x1xf32>
    %453 = arith.addf %452, %451 : vector<64x1xf32>
    %454 = tpu.reciprocal %453 {approx = true} : vector<64x1xf32> -> vector<64x1xf32>
    %455 = arith.extf %440 : vector<64x32xbf16> to vector<64x32xf32>
    %456 = vector.broadcast %454 : vector<64x1xf32> to vector<64x32xf32>
    %457 = arith.mulf %456, %455 : vector<64x32xf32>
    %458 = vector.extract_strided_slice %395 {offsets = [0, 0], sizes = [8, 32], strides = [1, 1]} : vector<8x64xf32> to vector<8x32xf32>
    %459 = vector.extract_strided_slice %395 {offsets = [0, 32], sizes = [8, 32], strides = [1, 1]} : vector<8x64xf32> to vector<8x32xf32>
    %460 = arith.addf %458, %459 : vector<8x32xf32>
    %c2_221 = arith.constant 2 : index
    %c0_222 = arith.constant 0 : index
    %c0_223 = arith.constant 0 : index
    %461 = vector.load %arg7[%c2_221, %c0_222, %c0_223] : memref<3x1x32xf32, #tpu.memory_space<vmem>>, vector<1x1x32xf32>
    %462 = vector.shape_cast %461 : vector<1x1x32xf32> to vector<1x32xf32>
    %463 = vector.broadcast %462 : vector<1x32xf32> to vector<8x32xf32>
    %464 = arith.addf %460, %463 : vector<8x32xf32>
    %cst_224 = arith.constant 0.000000e+00 : f32
    %465 = vector.broadcast %cst_224 : f32 to vector<8x32xf32>
    %466 = arith.subf %465, %464 : vector<8x32xf32>
    %467 = math.exp %466 : vector<8x32xf32>
    %cst_225 = arith.constant 1.000000e+00 : f32
    %468 = vector.broadcast %cst_225 : f32 to vector<8x32xf32>
    %469 = arith.addf %468, %467 : vector<8x32xf32>
    %470 = tpu.reciprocal %469 {approx = true} : vector<8x32xf32> -> vector<8x32xf32>
    %471 = arith.mulf %464, %470 : vector<8x32xf32>
    %472 = arith.truncf %471 : vector<8x32xf32> to vector<8x32xbf16>
    %c2_226 = arith.constant 2 : index
    %c0_227 = arith.constant 0 : index
    %c0_228 = arith.constant 0 : index
    %473 = vector.load %arg8[%c2_226, %c0_227, %c0_228] : memref<3x32x32xbf16, #tpu.memory_space<vmem>>, vector<1x32x32xbf16>
    %474 = vector.shape_cast %473 : vector<1x32x32xbf16> to vector<32x32xbf16>
    %cst_229 = arith.constant dense<0.000000e+00> : vector<8x32xf32>
    %475 = tpu.matmul %472, %474, %cst_229 {dimension_numbers = #tpu.dot_dimension_numbers<[1], [0], [0], [1], [0, 0, 1, 1], [], []>} : vector<8x32xbf16>, vector<32x32xbf16>, vector<8x32xf32> -> vector<8x32xf32>
    %c2_230 = arith.constant 2 : index
    %c0_231 = arith.constant 0 : index
    %c0_232 = arith.constant 0 : index
    %476 = vector.load %arg9[%c2_230, %c0_231, %c0_232] : memref<3x1x32xf32, #tpu.memory_space<vmem>>, vector<1x1x32xf32>
    %477 = vector.shape_cast %476 : vector<1x1x32xf32> to vector<1x32xf32>
    %478 = vector.broadcast %477 : vector<1x32xf32> to vector<8x32xf32>
    %479 = arith.addf %475, %478 : vector<8x32xf32>
    %cst_233 = arith.constant 0.000000e+00 : f32
    %480 = vector.broadcast %cst_233 : f32 to vector<8x32xf32>
    %481 = arith.subf %480, %479 : vector<8x32xf32>
    %482 = math.exp %481 : vector<8x32xf32>
    %cst_234 = arith.constant 1.000000e+00 : f32
    %483 = vector.broadcast %cst_234 : f32 to vector<8x32xf32>
    %484 = arith.addf %483, %482 : vector<8x32xf32>
    %485 = tpu.reciprocal %484 {approx = true} : vector<8x32xf32> -> vector<8x32xf32>
    %486 = arith.mulf %479, %485 : vector<8x32xf32>
    %487 = arith.truncf %486 : vector<8x32xf32> to vector<8x32xbf16>
    %488 = arith.extf %487 : vector<8x32xbf16> to vector<8x32xf32>
    %c2_235 = arith.constant 2 : index
    %c0_236 = arith.constant 0 : index
    %c0_237 = arith.constant 0 : index
    %489 = vector.load %arg10[%c2_235, %c0_236, %c0_237] : memref<3x32x1xbf16, #tpu.memory_space<vmem>>, vector<1x32x1xbf16>
    %490 = vector.shape_cast %489 : vector<1x32x1xbf16> to vector<32x1xbf16>
    %cst_238 = arith.constant dense<0.000000e+00> : vector<8x1xf32>
    %491 = tpu.matmul %487, %490, %cst_238 {dimension_numbers = #tpu.dot_dimension_numbers<[1], [0], [0], [1], [0, 0, 1, 1], [], []>} : vector<8x32xbf16>, vector<32x1xbf16>, vector<8x1xf32> -> vector<8x1xf32>
    %c2_239 = arith.constant 2 : index
    %c0_240 = arith.constant 0 : index
    %c0_241 = arith.constant 0 : index
    %492 = vector.load %arg11[%c2_239, %c0_240, %c0_241] : memref<3x1x1xf32, #tpu.memory_space<vmem>>, vector<1x1x1xf32>
    %493 = vector.shape_cast %492 : vector<1x1x1xf32> to vector<1x1xf32>
    %494 = vector.broadcast %493 : vector<1x1xf32> to vector<8x1xf32>
    %495 = arith.addf %491, %494 : vector<8x1xf32>
    %cst_242 = arith.constant 0.000000e+00 : f32
    %496 = vector.broadcast %cst_242 : f32 to vector<8x1xf32>
    %497 = arith.subf %496, %495 : vector<8x1xf32>
    %498 = math.exp %497 : vector<8x1xf32>
    %cst_243 = arith.constant 1.000000e+00 : f32
    %499 = vector.broadcast %cst_243 : f32 to vector<8x1xf32>
    %500 = arith.addf %499, %498 : vector<8x1xf32>
    %501 = tpu.reciprocal %500 {approx = true} : vector<8x1xf32> -> vector<8x1xf32>
    %502 = vector.broadcast %501 : vector<8x1xf32> to vector<8x32xf32>
    %503 = arith.mulf %488, %502 : vector<8x32xf32>
    %504 = vector.shape_cast %457 : vector<64x32xf32> to vector<1x8x8x32xf32>
    %cst_244 = arith.constant dense<0.000000e+00> : vector<1x8x32xf32>
    %505 = vector.multi_reduction <add>, %504, %cst_244 [2] : vector<1x8x8x32xf32> to vector<1x8x32xf32>
    %506 = vector.shape_cast %503 : vector<8x32xf32> to vector<1x8x32xf32>
    %507 = arith.subf %505, %506 : vector<1x8x32xf32>
    %508 = vector.shape_cast %507 : vector<1x8x32xf32> to vector<8x32xf32>
    %c2_245 = arith.constant 2 : index
    %c0_246 = arith.constant 0 : index
    %c0_247 = arith.constant 0 : index
    %509 = vector.load %arg15[%c2_245, %c0_246, %c0_247] : memref<3x32x32xbf16, #tpu.memory_space<vmem>>, vector<1x32x32xbf16>
    %510 = vector.shape_cast %509 : vector<1x32x32xbf16> to vector<32x32xbf16>
    %511 = arith.truncf %379 : vector<8x32xf32> to vector<8x32xbf16>
    %cst_248 = arith.constant dense<0.000000e+00> : vector<8x32xf32>
    %512 = tpu.matmul %511, %510, %cst_248 {dimension_numbers = #tpu.dot_dimension_numbers<[1], [0], [0], [1], [0, 0, 1, 1], [], []>} : vector<8x32xbf16>, vector<32x32xbf16>, vector<8x32xf32> -> vector<8x32xf32>
    %c2_249 = arith.constant 2 : index
    %c0_250 = arith.constant 0 : index
    %c0_251 = arith.constant 0 : index
    %513 = vector.load %arg16[%c2_249, %c0_250, %c0_251] : memref<3x32x32xbf16, #tpu.memory_space<vmem>>, vector<1x32x32xbf16>
    %514 = vector.shape_cast %513 : vector<1x32x32xbf16> to vector<32x32xbf16>
    %515 = arith.truncf %508 : vector<8x32xf32> to vector<8x32xbf16>
    %cst_252 = arith.constant dense<0.000000e+00> : vector<8x32xf32>
    %516 = tpu.matmul %515, %514, %cst_252 {dimension_numbers = #tpu.dot_dimension_numbers<[1], [0], [0], [1], [0, 0, 1, 1], [], []>} : vector<8x32xbf16>, vector<32x32xbf16>, vector<8x32xf32> -> vector<8x32xf32>
    %517 = arith.addf %512, %516 : vector<8x32xf32>
    %c2_253 = arith.constant 2 : index
    %c0_254 = arith.constant 0 : index
    %c0_255 = arith.constant 0 : index
    %518 = vector.load %arg17[%c2_253, %c0_254, %c0_255] : memref<3x1x32xf32, #tpu.memory_space<vmem>>, vector<1x1x32xf32>
    %519 = vector.shape_cast %518 : vector<1x1x32xf32> to vector<1x32xf32>
    %520 = vector.broadcast %519 : vector<1x32xf32> to vector<8x32xf32>
    %521 = arith.addf %517, %520 : vector<8x32xf32>
    %cst_256 = arith.constant 0.000000e+00 : f32
    %522 = vector.broadcast %cst_256 : f32 to vector<8x32xf32>
    %523 = arith.subf %522, %521 : vector<8x32xf32>
    %524 = math.exp %523 : vector<8x32xf32>
    %cst_257 = arith.constant 1.000000e+00 : f32
    %525 = vector.broadcast %cst_257 : f32 to vector<8x32xf32>
    %526 = arith.addf %525, %524 : vector<8x32xf32>
    %527 = tpu.reciprocal %526 {approx = true} : vector<8x32xf32> -> vector<8x32xf32>
    %528 = arith.mulf %521, %527 : vector<8x32xf32>
    %c2_258 = arith.constant 2 : index
    %c0_259 = arith.constant 0 : index
    %c0_260 = arith.constant 0 : index
    %529 = vector.load %arg18[%c2_258, %c0_259, %c0_260] : memref<3x32x32xbf16, #tpu.memory_space<vmem>>, vector<1x32x32xbf16>
    %530 = vector.shape_cast %529 : vector<1x32x32xbf16> to vector<32x32xbf16>
    %531 = arith.truncf %528 : vector<8x32xf32> to vector<8x32xbf16>
    %cst_261 = arith.constant dense<0.000000e+00> : vector<8x32xf32>
    %532 = tpu.matmul %531, %530, %cst_261 {dimension_numbers = #tpu.dot_dimension_numbers<[1], [0], [0], [1], [0, 0, 1, 1], [], []>} : vector<8x32xbf16>, vector<32x32xbf16>, vector<8x32xf32> -> vector<8x32xf32>
    %533 = arith.addf %379, %532 : vector<8x32xf32>
    %c2_262 = arith.constant 2 : index
    %c0_263 = arith.constant 0 : index
    %c0_264 = arith.constant 0 : index
    %534 = vector.load %arg19[%c2_262, %c0_263, %c0_264] : memref<3x1x32xf32, #tpu.memory_space<vmem>>, vector<1x1x32xf32>
    %535 = vector.shape_cast %534 : vector<1x1x32xf32> to vector<1x32xf32>
    %536 = vector.broadcast %535 : vector<1x32xf32> to vector<8x32xf32>
    %537 = arith.addf %533, %536 : vector<8x32xf32>
    %c0_265 = arith.constant 0 : index
    %c0_266 = arith.constant 0 : index
    %538 = vector.load %arg20[%c0_265, %c0_266] : memref<32x32xf32, #tpu.memory_space<vmem>>, vector<32x32xf32>
    %cst_267 = arith.constant dense<0.000000e+00> : vector<8x32xf32>
    %539 = tpu.matmul %537, %538, %cst_267 {dimension_numbers = #tpu.dot_dimension_numbers<[1], [0], [0], [1], [0, 0, 1, 1], [], []>} : vector<8x32xf32>, vector<32x32xf32>, vector<8x32xf32> -> vector<8x32xf32>
    %c0_268 = arith.constant 0 : index
    %c0_269 = arith.constant 0 : index
    %540 = vector.load %arg21[%c0_268, %c0_269] : memref<1x32xf32, #tpu.memory_space<vmem>>, vector<1x32xf32>
    %541 = vector.broadcast %540 : vector<1x32xf32> to vector<8x32xf32>
    %542 = arith.addf %539, %541 : vector<8x32xf32>
    %543 = vector.shape_cast %542 : vector<8x32xf32> to vector<1x8x32xf32>
    %cst_270 = arith.constant dense<0.000000e+00> : vector<1x32xf32>
    %544 = vector.multi_reduction <add>, %543, %cst_270 [1] : vector<1x8x32xf32> to vector<1x32xf32>
    %cst_271 = arith.constant 8.000000e+00 : f32
    %545 = vector.broadcast %cst_271 : f32 to vector<1x32xf32>
    %546 = arith.divf %544, %545 : vector<1x32xf32>
    %c0_272 = arith.constant 0 : index
    %c0_273 = arith.constant 0 : index
    %547 = vector.load %arg22[%c0_272, %c0_273] : memref<32x32xf32, #tpu.memory_space<vmem>>, vector<32x32xf32>
    %cst_274 = arith.constant dense<0.000000e+00> : vector<1x32xf32>
    %548 = tpu.matmul %546, %547, %cst_274 {dimension_numbers = #tpu.dot_dimension_numbers<[1], [0], [0], [1], [0, 0, 1, 1], [], []>} : vector<1x32xf32>, vector<32x32xf32>, vector<1x32xf32> -> vector<1x32xf32>
    %c0_275 = arith.constant 0 : index
    %c0_276 = arith.constant 0 : index
    %549 = vector.load %arg23[%c0_275, %c0_276] : memref<1x32xf32, #tpu.memory_space<vmem>>, vector<1x32xf32>
    %550 = arith.addf %548, %549 : vector<1x32xf32>
    %cst_277 = arith.constant 0.000000e+00 : f32
    %551 = vector.broadcast %cst_277 : f32 to vector<1x32xf32>
    %552 = arith.maximumf %550, %551 : vector<1x32xf32>
    %c0_278 = arith.constant 0 : index
    %c0_279 = arith.constant 0 : index
    %553 = vector.load %arg24[%c0_278, %c0_279] : memref<32x20xf32, #tpu.memory_space<vmem>>, vector<32x20xf32>
    %cst_280 = arith.constant dense<0.000000e+00> : vector<1x20xf32>
    %554 = tpu.matmul %552, %553, %cst_280 {dimension_numbers = #tpu.dot_dimension_numbers<[1], [0], [0], [1], [0, 0, 1, 1], [], []>} : vector<1x32xf32>, vector<32x20xf32>, vector<1x20xf32> -> vector<1x20xf32>
    %c0_281 = arith.constant 0 : index
    %c0_282 = arith.constant 0 : index
    %555 = vector.load %arg25[%c0_281, %c0_282] : memref<1x20xf32, #tpu.memory_space<vmem>>, vector<1x20xf32>
    %556 = arith.addf %554, %555 : vector<1x20xf32>
    %c0_283 = arith.constant 0 : index
    %c0_284 = arith.constant 0 : index
    %c0_285 = arith.constant 0 : index
    %557 = vector.load %arg26[%c0_283, %c0_284, %c0_285] : memref<1x1x20xf32, #tpu.memory_space<vmem>>, vector<1x1x20xf32>
    %558 = vector.shape_cast %557 : vector<1x1x20xf32> to vector<1x20xf32>
    %559 = vector.shape_cast %556 : vector<1x20xf32> to vector<1x1x20xf32>
    tpu.vector_store %arg26[%c0_283, %c0_284, %c0_285], %559 {strides = array<i32>} : memref<1x1x20xf32, #tpu.memory_space<vmem>>, vector<1x1x20xf32>,
    return
  }
  func.func @transform_0(%arg0: i32) -> (i32, i32, i32) {
    %c0_i32 = arith.constant 0 : i32
    %c0_i32_0 = arith.constant 0 : i32
    %c0_i32_1 = arith.constant 0 : i32
    return %arg0, %c0_i32, %c0_i32_0 : i32, i32, i32
  }
  func.func @transform_1(%arg0: i32) -> (i32, i32, i32) {
    %c0_i32 = arith.constant 0 : i32
    %c0_i32_0 = arith.constant 0 : i32
    %c0_i32_1 = arith.constant 0 : i32
    return %arg0, %c0_i32, %c0_i32_0 : i32, i32, i32
  }
  func.func @transform_2(%arg0: i32) -> (i32, i32) {
    %c0_i32 = arith.constant 0 : i32
    %c0_i32_0 = arith.constant 0 : i32
    %c0_i32_1 = arith.constant 0 : i32
    return %c0_i32, %c0_i32_0 : i32, i32
  }
  func.func @transform_3(%arg0: i32) -> (i32, i32) {
    %c0_i32 = arith.constant 0 : i32
    %c0_i32_0 = arith.constant 0 : i32
    %c0_i32_1 = arith.constant 0 : i32
    return %c0_i32, %c0_i32_0 : i32, i32
  }
  func.func @transform_4(%arg0: i32) -> (i32, i32, i32) {
    %c0_i32 = arith.constant 0 : i32
    %c0_i32_0 = arith.constant 0 : i32
    %c0_i32_1 = arith.constant 0 : i32
    %c0_i32_2 = arith.constant 0 : i32
    return %c0_i32, %c0_i32_0, %c0_i32_1 : i32, i32, i32
  }
  func.func @transform_5(%arg0: i32) -> (i32, i32, i32) {
    %c0_i32 = arith.constant 0 : i32
    %c0_i32_0 = arith.constant 0 : i32
    %c0_i32_1 = arith.constant 0 : i32
    %c0_i32_2 = arith.constant 0 : i32
    return %c0_i32, %c0_i32_0, %c0_i32_1 : i32, i32, i32
  }
  func.func @transform_6(%arg0: i32) -> (i32, i32, i32) {
    %c0_i32 = arith.constant 0 : i32
    %c0_i32_0 = arith.constant 0 : i32
    %c0_i32_1 = arith.constant 0 : i32
    %c0_i32_2 = arith.constant 0 : i32
    return %c0_i32, %c0_i32_0, %c0_i32_1 : i32, i32, i32
  }
  func.func @transform_7(%arg0: i32) -> (i32, i32, i32) {
    %c0_i32 = arith.constant 0 : i32
    %c0_i32_0 = arith.constant 0 : i32
    %c0_i32_1 = arith.constant 0 : i32
    %c0_i32_2 = arith.constant 0 : i32
    return %c0_i32, %c0_i32_0, %c0_i32_1 : i32, i32, i32
  }
  func.func @transform_8(%arg0: i32) -> (i32, i32, i32) {
    %c0_i32 = arith.constant 0 : i32
    %c0_i32_0 = arith.constant 0 : i32
    %c0_i32_1 = arith.constant 0 : i32
    %c0_i32_2 = arith.constant 0 : i32
    return %c0_i32, %c0_i32_0, %c0_i32_1 : i32, i32, i32
  }
  func.func @transform_9(%arg0: i32) -> (i32, i32, i32) {
    %c0_i32 = arith.constant 0 : i32
    %c0_i32_0 = arith.constant 0 : i32
    %c0_i32_1 = arith.constant 0 : i32
    %c0_i32_2 = arith.constant 0 : i32
    return %c0_i32, %c0_i32_0, %c0_i32_1 : i32, i32, i32
  }
  func.func @transform_10(%arg0: i32) -> (i32, i32, i32) {
    %c0_i32 = arith.constant 0 : i32
    %c0_i32_0 = arith.constant 0 : i32
    %c0_i32_1 = arith.constant 0 : i32
    %c0_i32_2 = arith.constant 0 : i32
    return %c0_i32, %c0_i32_0, %c0_i32_1 : i32, i32, i32
  }
  func.func @transform_11(%arg0: i32) -> (i32, i32, i32) {
    %c0_i32 = arith.constant 0 : i32
    %c0_i32_0 = arith.constant 0 : i32
    %c0_i32_1 = arith.constant 0 : i32
    %c0_i32_2 = arith.constant 0 : i32
    return %c0_i32, %c0_i32_0, %c0_i32_1 : i32, i32, i32
  }
  func.func @transform_12(%arg0: i32) -> (i32, i32, i32) {
    %c0_i32 = arith.constant 0 : i32
    %c0_i32_0 = arith.constant 0 : i32
    %c0_i32_1 = arith.constant 0 : i32
    %c0_i32_2 = arith.constant 0 : i32
    return %c0_i32, %c0_i32_0, %c0_i32_1 : i32, i32, i32
  }
  func.func @transform_13(%arg0: i32) -> (i32, i32, i32) {
    %c0_i32 = arith.constant 0 : i32
    %c0_i32_0 = arith.constant 0 : i32
    %c0_i32_1 = arith.constant 0 : i32
    %c0_i32_2 = arith.constant 0 : i32
    return %c0_i32, %c0_i32_0, %c0_i32_1 : i32, i32, i32
  }
  func.func @transform_14(%arg0: i32) -> (i32, i32, i32) {
    %c0_i32 = arith.constant 0 : i32
    %c0_i32_0 = arith.constant 0 : i32
    %c0_i32_1 = arith.constant 0 : i32
    %c0_i32_2 = arith.constant 0 : i32
    return %c0_i32, %c0_i32_0, %c0_i32_1 : i32, i32, i32
  }
  func.func @transform_15(%arg0: i32) -> (i32, i32, i32) {
    %c0_i32 = arith.constant 0 : i32
    %c0_i32_0 = arith.constant 0 : i32
    %c0_i32_1 = arith.constant 0 : i32
    %c0_i32_2 = arith.constant 0 : i32
    return %c0_i32, %c0_i32_0, %c0_i32_1 : i32, i32, i32
  }
  func.func @transform_16(%arg0: i32) -> (i32, i32, i32) {
    %c0_i32 = arith.constant 0 : i32
    %c0_i32_0 = arith.constant 0 : i32
    %c0_i32_1 = arith.constant 0 : i32
    %c0_i32_2 = arith.constant 0 : i32
    return %c0_i32, %c0_i32_0, %c0_i32_1 : i32, i32, i32
  }
  func.func @transform_17(%arg0: i32) -> (i32, i32, i32) {
    %c0_i32 = arith.constant 0 : i32
    %c0_i32_0 = arith.constant 0 : i32
    %c0_i32_1 = arith.constant 0 : i32
    %c0_i32_2 = arith.constant 0 : i32
    return %c0_i32, %c0_i32_0, %c0_i32_1 : i32, i32, i32
  }
  func.func @transform_18(%arg0: i32) -> (i32, i32, i32) {
    %c0_i32 = arith.constant 0 : i32
    %c0_i32_0 = arith.constant 0 : i32
    %c0_i32_1 = arith.constant 0 : i32
    %c0_i32_2 = arith.constant 0 : i32
    return %c0_i32, %c0_i32_0, %c0_i32_1 : i32, i32, i32
  }
  func.func @transform_19(%arg0: i32) -> (i32, i32) {
    %c0_i32 = arith.constant 0 : i32
    %c0_i32_0 = arith.constant 0 : i32
    %c0_i32_1 = arith.constant 0 : i32
    return %c0_i32, %c0_i32_0 : i32, i32
  }
  func.func @transform_20(%arg0: i32) -> (i32, i32) {
    %c0_i32 = arith.constant 0 : i32
    %c0_i32_0 = arith.constant 0 : i32
    %c0_i32_1 = arith.constant 0 : i32
    return %c0_i32, %c0_i32_0 : i32, i32
  }
  func.func @transform_21(%arg0: i32) -> (i32, i32) {
    %c0_i32 = arith.constant 0 : i32
    %c0_i32_0 = arith.constant 0 : i32
    %c0_i32_1 = arith.constant 0 : i32
    return %c0_i32, %c0_i32_0 : i32, i32
  }
  func.func @transform_22(%arg0: i32) -> (i32, i32) {
    %c0_i32 = arith.constant 0 : i32
    %c0_i32_0 = arith.constant 0 : i32
    %c0_i32_1 = arith.constant 0 : i32
    return %c0_i32, %c0_i32_0 : i32, i32
  }
  func.func @transform_23(%arg0: i32) -> (i32, i32) {
    %c0_i32 = arith.constant 0 : i32
    %c0_i32_0 = arith.constant 0 : i32
    %c0_i32_1 = arith.constant 0 : i32
    return %c0_i32, %c0_i32_0 : i32, i32
  }
  func.func @transform_24(%arg0: i32) -> (i32, i32) {
    %c0_i32 = arith.constant 0 : i32
    %c0_i32_0 = arith.constant 0 : i32
    %c0_i32_1 = arith.constant 0 : i32
    return %c0_i32, %c0_i32_0 : i32, i32
  }
  func.func @transform_25(%arg0: i32) -> (i32, i32, i32) {
    %c0_i32 = arith.constant 0 : i32
    %c0_i32_0 = arith.constant 0 : i32
    %c0_i32_1 = arith.constant 0 : i32
    return %arg0, %c0_i32, %c0_i32_0 : i32, i32, i32
  }
}

</mosaic_0001>

<llo_original>
// kernel: tpu_custom_call.1
$region0: #{tpu_custom_call.1}
  #allocation0 [shape = 'u32[]', space=smem, size = 0x4, offset = 0x4, fixed_abs, tag = 'smem constant byte address 0x4 - core index']
  #allocation1 [shape = 'u32[144,128]{1,0:T(1,128)}', space=vmem, size = 0x12000, scoped, tag = 'internal scratch']
  %s0 = inlined_call_operand.hbm [shape: f32[2,8,16], index: 0, kind: input, shape index: {}]
  %s1 = inlined_call_operand.vmem [shape: f32[2,8,3], index: 1, kind: input, shape index: {}]
  %s2 = inlined_call_operand.hbm [shape: f32[16,32], index: 2, kind: input, shape index: {}]
  %s3 = inlined_call_operand.hbm [shape: f32[1,32], index: 3, kind: input, shape index: {}]
  %s4 = inlined_call_operand.vmem [shape: f32[3,32,64], index: 4, kind: input, shape index: {}]
  %s5 = inlined_call_operand.hbm [shape: f32[3,1,32], index: 5, kind: input, shape index: {}]
  %s6 = inlined_call_operand.hbm [shape: f32[3,1,32], index: 6, kind: input, shape index: {}]
  %s7 = inlined_call_operand.vmem [shape: bf16[3,32,32], index: 7, kind: input, shape index: {}]
  %s8 = inlined_call_operand.hbm [shape: f32[3,1,32], index: 8, kind: input, shape index: {}]
  %s9 = inlined_call_operand.vmem [shape: bf16[3,32,1], index: 9, kind: input, shape index: {}]
  %s10 = inlined_call_operand.vmem [shape: f32[3,1,1], index: 10, kind: input, shape index: {}]
  %s11 = inlined_call_operand.vmem [shape: bf16[3,32,33], index: 11, kind: input, shape index: {}]
  %s12 = inlined_call_operand.hbm [shape: f32[3,1,32], index: 12, kind: input, shape index: {}]
  %s13 = inlined_call_operand.vmem [shape: bf16[3,32,1], index: 13, kind: input, shape index: {}]
  %s14 = inlined_call_operand.hbm [shape: bf16[3,32,32], index: 14, kind: input, shape index: {}]
  %s15 = inlined_call_operand.hbm [shape: bf16[3,32,32], index: 15, kind: input, shape index: {}]
  %s16 = inlined_call_operand.hbm [shape: f32[3,1,32], index: 16, kind: input, shape index: {}]
  %s17 = inlined_call_operand.hbm [shape: bf16[3,32,32], index: 17, kind: input, shape index: {}]
  %s18 = inlined_call_operand.hbm [shape: f32[3,1,32], index: 18, kind: input, shape index: {}]
  %s19 = inlined_call_operand.hbm [shape: f32[32,32], index: 19, kind: input, shape index: {}]
  %s20 = inlined_call_operand.vmem [shape: f32[1,32], index: 20, kind: input, shape index: {}]
  %s21 = inlined_call_operand.hbm [shape: f32[32,32], index: 21, kind: input, shape index: {}]
  %s22 = inlined_call_operand.vmem [shape: f32[1,32], index: 22, kind: input, shape index: {}]
  %s23 = inlined_call_operand.vmem [shape: f32[32,20], index: 23, kind: input, shape index: {}]
  %s24 = inlined_call_operand.vmem [shape: f32[1,20], index: 24, kind: input, shape index: {}]
  %s25 = inlined_call_operand.hbm [shape: f32[2,1,20], index: 25, kind: output, shape index: {}]
  %s26 = sld [smem:[#allocation0]]
  $region189: #{tpu_custom_call.1} parent=0
    _
  %s28 = ssub.s32 1, %s26
  %s29 = scalar_select 0, %s28, %s26
  $region1: #{tpu_custom_call.1} parent=0
    #allocation2 [shape = 'u8[8192]{0}', space=vmem, size = 0x2000, scoped, tag = 'input window, operand 0']
    #allocation3 [shape = 's32[2]{0}', space=sflag, size = 0x8, scoped, tag = 'scoped memory for tpu_custom_call.1']
    #allocation4 [shape = 's32[2]{0}', space=sflag, size = 0x8, scoped, tag = 'scoped memory for tpu_custom_call.1']
    #allocation5 [shape = 'u8[8192]{0}', space=vmem, size = 0x2000, scoped, tag = 'input window, operand 2, single buffered']
    #allocation6 [shape = 's32[1]{0}', space=sflag, size = 0x4, scoped, tag = 'scoped memory for tpu_custom_call.1']
    #allocation7 [shape = 'u8[512]{0}', space=vmem, size = 0x400, scoped, tag = 'input window, operand 3, single buffered']
    #allocation8 [shape = 'u8[1536]{0}', space=vmem, size = 0x800, scoped, tag = 'input window, operand 5, single buffered']
    #allocation9 [shape = 's32[1]{0}', space=sflag, size = 0x4, scoped, tag = 'scoped memory for tpu_custom_call.1']
    #allocation10 [shape = 'u8[1536]{0}', space=vmem, size = 0x800, scoped, tag = 'input window, operand 6, single buffered']
    #allocation11 [shape = 'u8[1536]{0}', space=vmem, size = 0x800, scoped, tag = 'input window, operand 8, single buffered']
    #allocation12 [shape = 's32[1]{0}', space=sflag, size = 0x4, scoped, tag = 'scoped memory for tpu_custom_call.1']
    #allocation13 [shape = 'u8[1536]{0}', space=vmem, size = 0x800, scoped, tag = 'input window, operand 12, single buffered']
    #allocation14 [shape = 'u8[24576]{0}', space=vmem, size = 0x6000, scoped, tag = 'input window, operand 14, single buffered']
    #allocation15 [shape = 's32[1]{0}', space=sflag, size = 0x4, scoped, tag = 'scoped memory for tpu_custom_call.1']
    #allocation16 [shape = 'u8[24576]{0}', space=vmem, size = 0x6000, scoped, tag = 'input window, operand 15, single buffered']
    #allocation17 [shape = 'u8[1536]{0}', space=vmem, size = 0x800, scoped, tag = 'input window, operand 16, single buffered']
    #allocation18 [shape = 's32[1]{0}', space=sflag, size = 0x4, scoped, tag = 'scoped memory for tpu_custom_call.1']
    #allocation19 [shape = 'u8[24576]{0}', space=vmem, size = 0x6000, scoped, tag = 'input window, operand 17, single buffered']
    #allocation20 [shape = 'u8[1536]{0}', space=vmem, size = 0x800, scoped, tag = 'input window, operand 18, single buffered']
    #allocation21 [shape = 's32[1]{0}', space=sflag, size = 0x4, scoped, tag = 'scoped memory for tpu_custom_call.1']
    #allocation22 [shape = 'u8[16384]{0}', space=vmem, size = 0x4000, scoped, tag = 'input window, operand 19, single buffered']
    #allocation23 [shape = 'u8[16384]{0}', space=vmem, size = 0x4000, scoped, tag = 'input window, operand 21, single buffered']
    #allocation24 [shape = 's32[1]{0}', space=sflag, size = 0x4, scoped, tag = 'scoped memory for tpu_custom_call.1']
    #allocation25 [shape = 'u8[1024]{0}', space=vmem, size = 0x400, scoped, tag = 'output window, operand 0']
    %30 = vsyncpa [#allocation3], 0
    %s31 = scalar_lea.sflag [#allocation3], 1
    %32 = vsyncpa %s31, 0
    %33 = vsyncpa [#allocation6], 0
    %34 = vsyncpa [#allocation9], 0
    %35 = vsyncpa [#allocation12], 0
    %36 = vsyncpa [#allocation15], 0
    %37 = vsyncpa [#allocation18], 0
    %38 = vsyncpa [#allocation21], 0
    %39 = vsyncpa [#allocation24], 0
    %40 = vsyncpa [#allocation4], 0
    %s41 = scalar_lea.sflag [#allocation4], 1
    %42 = vsyncpa %s41, 0
    loop: start=0, step=1, limit=4
    $region2: #{tpu_custom_call.1} parent=1 // loop_pre_header
      _
    $region3: #{tpu_custom_call.1} parent=1 // loop_header
      %s44 = sphi 0, %s48
      %p45 = scmp.ge.s32.totalorder %s44, 4
      %s54 = sphi 0, %s56
      %s57 = sphi 0, %s54
      %s58 = sphi 0, %s57
      %s74 = sphi 0, %s58
      %s80 = sphi 0, %s82
      %s83 = sphi 0, %s80
      %s84 = sphi 0, %s83
      %s100 = sphi 0, %s84
      %s104 = sphi 0, %s104
      %s106 = sphi 0, %s104
      %s107 = sphi 0, %s106
      %s121 = sphi 0, %s107
      %s125 = sphi 0, %s125
      %s127 = sphi 0, %s125
      %s128 = sphi 0, %s127
      %s142 = sphi 0, %s128
      %s146 = sphi 0, %s146
      %s148 = sphi 0, %s146
      %s149 = sphi 0, %s148
      %s163 = sphi 0, %s149
      %s167 = sphi 0, %s167
      %s169 = sphi 0, %s167
      %s170 = sphi 0, %s169
      %s184 = sphi 0, %s170
      %s188 = sphi 0, %s188
      %s190 = sphi 0, %s188
      %s191 = sphi 0, %s190
      %s205 = sphi 0, %s191
      %s209 = sphi 0, %s209
      %s211 = sphi 0, %s209
      %s212 = sphi 0, %s211
      %s226 = sphi 0, %s212
      %s230 = sphi 0, %s230
      %s232 = sphi 0, %s230
      %s233 = sphi 0, %s232
      %s247 = sphi 0, %s233
      %s251 = sphi 0, %s251
      %s253 = sphi 0, %s251
      %s254 = sphi 0, %s253
      %s268 = sphi 0, %s254
      %s272 = sphi 0, %s272
      %s274 = sphi 0, %s272
      %s275 = sphi 0, %s274
      %s289 = sphi 0, %s275
      %s293 = sphi 0, %s293
      %s295 = sphi 0, %s293
      %s296 = sphi 0, %s295
      %s310 = sphi 0, %s296
      %s314 = sphi 0, %s314
      %s316 = sphi 0, %s314
      %s317 = sphi 0, %s316
      %s331 = sphi 0, %s317
      %s335 = sphi 0, %s335
      %s337 = sphi 0, %s335
      %s338 = sphi 0, %s337
      %s352 = sphi 0, %s338
      %s356 = sphi 0, %s356
      %s358 = sphi 0, %s356
      %s359 = sphi 0, %s358
      %s373 = sphi 0, %s359
      %s377 = sphi 0, %s377
      %s379 = sphi 0, %s377
      %s380 = sphi 0, %s379
      %s394 = sphi 0, %s380
      %s398 = sphi 0, %s398
      %s400 = sphi 0, %s398
      %s401 = sphi 0, %s400
      %s415 = sphi 0, %s401
      %s419 = sphi 0, %s419
      %s421 = sphi 0, %s419
      %s422 = sphi 0, %s421
      %s436 = sphi 0, %s422
      %s440 = sphi 0, %s440
      %s442 = sphi 0, %s440
      %s443 = sphi 0, %s442
      %s457 = sphi 0, %s443
      %s461 = sphi 0, %s461
      %s463 = sphi 0, %s461
      %s464 = sphi 0, %s463
      %s478 = sphi 0, %s464
      %s482 = sphi 0, %s482
      %s484 = sphi 0, %s482
      %s485 = sphi 0, %s484
      %s499 = sphi 0, %s485
      %s503 = sphi 0, %s503
      %s505 = sphi 0, %s503
      %s506 = sphi 0, %s505
      %s520 = sphi 0, %s506
      %s524 = sphi 0, %s524
      %s526 = sphi 0, %s524
      %s527 = sphi 0, %s526
      %s541 = sphi 0, %s527
      %s545 = sphi 0, %s545
      %s547 = sphi 0, %s545
      %s548 = sphi 0, %s547
      %s562 = sphi 0, %s548
      %s566 = sphi 0, %s566
      %s568 = sphi 0, %s566
      %s569 = sphi 0, %s568
      %s583 = sphi 0, %s569
      %s589 = sphi 0, %s591
      %s592 = sphi 0, %s589
      %s593 = sphi 0, %s592
      %s609 = sphi 0, %s593
    $region4: #{tpu_custom_call.1} parent=1 // loop_header_branch
      %47 = sbr.rel (%p45) target = $region8
    $region5: #{tpu_custom_call.1} parent=1 // loop_body
      %s49 = ssub.s32 %s44, 1
      %s50 = ssub.s32 %s44, 2
      %s51 = sadd.s32 %s44, 1
      %s52 = ssub.s32 %s44, %s51
      %p53 = scmp.eq.s32.totalorder %s52, 0
      %s55 = sadd.s32 %s54, 1
      %s56 = scalar_select %p53, %s54, %s55
      %p59 = pneg %p53
      %p60 = scmp.eq.s32.totalorder %s44, 1
      %p61 = por %p59, %p60
      %p62 = scmp.ne.s32.totalorder %s54, %s57
      %p63 = scmp.eq.s32.totalorder %s44, 0
      %p64 = por %p62, %p63
      %p65 = scmp.ne.s32.totalorder %s54, %s57
      %p66 = scmp.eq.s32.totalorder %s49, 1
      %p67 = por %p65, %p66
      %p68 = scmp.ne.s32.totalorder %s57, %s58
      %p69 = scmp.eq.s32.totalorder %s49, 0
      %p70 = por %p68, %p69
      %p71 = scmp.ne.s32.totalorder %s57, %s58
      %p72 = scmp.eq.s32.totalorder %s50, 1
      %p73 = por %p71, %p72
      %p75 = scmp.ne.s32.totalorder %s58, %s74
      %p76 = scmp.eq.s32.totalorder %s50, 0
      %p77 = por %p75, %p76
      %s78 = ssub.s32 %s44, %s51
      %p79 = scmp.eq.s32.totalorder %s78, 0
      %s81 = sadd.s32 %s80, 1
      %s82 = scalar_select %p79, %s80, %s81
      %p85 = pneg %p79
      %p86 = scmp.eq.s32.totalorder %s44, 1
      %p87 = por %p85, %p86
      %p88 = scmp.ne.s32.totalorder %s80, %s83
      %p89 = scmp.eq.s32.totalorder %s44, 0
      %p90 = por %p88, %p89
      %p91 = scmp.ne.s32.totalorder %s80, %s83
      %p92 = scmp.eq.s32.totalorder %s49, 1
      %p93 = por %p91, %p92
      %p94 = scmp.ne.s32.totalorder %s83, %s84
      %p95 = scmp.eq.s32.totalorder %s49, 0
      %p96 = por %p94, %p95
      %p97 = scmp.ne.s32.totalorder %s83, %s84
      %p98 = scmp.eq.s32.totalorder %s50, 1
      %p99 = por %p97, %p98
      %p101 = scmp.ne.s32.totalorder %s84, %s100
      %p102 = scmp.eq.s32.totalorder %s50, 0
      %p103 = por %p101, %p102
      %s105 = sadd.s32 %s104, 1
      %p108 = scmp.eq.s32.totalorder %s44, 1
      %p109 = scmp.ne.s32.totalorder %s104, %s106
      %p110 = scmp.eq.s32.totalorder %s44, 0
      %p111 = por %p109, %p110
      %p112 = scmp.ne.s32.totalorder %s104, %s106
      %p113 = scmp.eq.s32.totalorder %s49, 1
      %p114 = por %p112, %p113
      %p115 = scmp.ne.s32.totalorder %s106, %s107
      %p116 = scmp.eq.s32.totalorder %s49, 0
      %p117 = por %p115, %p116
      %p118 = scmp.ne.s32.totalorder %s106, %s107
      %p119 = scmp.eq.s32.totalorder %s50, 1
      %p120 = por %p118, %p119
      %p122 = scmp.ne.s32.totalorder %s107, %s121
      %p123 = scmp.eq.s32.totalorder %s50, 0
      %p124 = por %p122, %p123
      %s126 = sadd.s32 %s125, 1
      %p129 = scmp.eq.s32.totalorder %s44, 1
      %p130 = scmp.ne.s32.totalorder %s125, %s127
      %p131 = scmp.eq.s32.totalorder %s44, 0
      %p132 = por %p130, %p131
      %p133 = scmp.ne.s32.totalorder %s125, %s127
      %p134 = scmp.eq.s32.totalorder %s49, 1
      %p135 = por %p133, %p134
      %p136 = scmp.ne.s32.totalorder %s127, %s128
      %p137 = scmp.eq.s32.totalorder %s49, 0
      %p138 = por %p136, %p137
      %p139 = scmp.ne.s32.totalorder %s127, %s128
      %p140 = scmp.eq.s32.totalorder %s50, 1
      %p141 = por %p139, %p140
      %p143 = scmp.ne.s32.totalorder %s128, %s142
      %p144 = scmp.eq.s32.totalorder %s50, 0
      %p145 = por %p143, %p144
      %s147 = sadd.s32 %s146, 1
      %p150 = scmp.eq.s32.totalorder %s44, 1
      %p151 = scmp.ne.s32.totalorder %s146, %s148
      %p152 = scmp.eq.s32.totalorder %s44, 0
      %p153 = por %p151, %p152
      %p154 = scmp.ne.s32.totalorder %s146, %s148
      %p155 = scmp.eq.s32.totalorder %s49, 1
      %p156 = por %p154, %p155
      %p157 = scmp.ne.s32.totalorder %s148, %s149
      %p158 = scmp.eq.s32.totalorder %s49, 0
      %p159 = por %p157, %p158
      %p160 = scmp.ne.s32.totalorder %s148, %s149
      %p161 = scmp.eq.s32.totalorder %s50, 1
      %p162 = por %p160, %p161
      %p164 = scmp.ne.s32.totalorder %s149, %s163
      %p165 = scmp.eq.s32.totalorder %s50, 0
      %p166 = por %p164, %p165
      %s168 = sadd.s32 %s167, 1
      %p171 = scmp.eq.s32.totalorder %s44, 1
      %p172 = scmp.ne.s32.totalorder %s167, %s169
      %p173 = scmp.eq.s32.totalorder %s44, 0
      %p174 = por %p172, %p173
      %p175 = scmp.ne.s32.totalorder %s167, %s169
      %p176 = scmp.eq.s32.totalorder %s49, 1
      %p177 = por %p175, %p176
      %p178 = scmp.ne.s32.totalorder %s169, %s170
      %p179 = scmp.eq.s32.totalorder %s49, 0
      %p180 = por %p178, %p179
      %p181 = scmp.ne.s32.totalorder %s169, %s170
      %p182 = scmp.eq.s32.totalorder %s50, 1
      %p183 = por %p181, %p182
      %p185 = scmp.ne.s32.totalorder %s170, %s184
      %p186 = scmp.eq.s32.totalorder %s50, 0
      %p187 = por %p185, %p186
      %s189 = sadd.s32 %s188, 1
      %p192 = scmp.eq.s32.totalorder %s44, 1
      %p193 = scmp.ne.s32.totalorder %s188, %s190
      %p194 = scmp.eq.s32.totalorder %s44, 0
      %p195 = por %p193, %p194
      %p196 = scmp.ne.s32.totalorder %s188, %s190
      %p197 = scmp.eq.s32.totalorder %s49, 1
      %p198 = por %p196, %p197
      %p199 = scmp.ne.s32.totalorder %s190, %s191
      %p200 = scmp.eq.s32.totalorder %s49, 0
      %p201 = por %p199, %p200
      %p202 = scmp.ne.s32.totalorder %s190, %s191
      %p203 = scmp.eq.s32.totalorder %s50, 1
      %p204 = por %p202, %p203
      %p206 = scmp.ne.s32.totalorder %s191, %s205
      %p207 = scmp.eq.s32.totalorder %s50, 0
      %p208 = por %p206, %p207
      %s210 = sadd.s32 %s209, 1
      %p213 = scmp.eq.s32.totalorder %s44, 1
      %p214 = scmp.ne.s32.totalorder %s209, %s211
      %p215 = scmp.eq.s32.totalorder %s44, 0
      %p216 = por %p214, %p215
      %p217 = scmp.ne.s32.totalorder %s209, %s211
      %p218 = scmp.eq.s32.totalorder %s49, 1
      %p219 = por %p217, %p218
      %p220 = scmp.ne.s32.totalorder %s211, %s212
      %p221 = scmp.eq.s32.totalorder %s49, 0
      %p222 = por %p220, %p221
      %p223 = scmp.ne.s32.totalorder %s211, %s212
      %p224 = scmp.eq.s32.totalorder %s50, 1
      %p225 = por %p223, %p224
      %p227 = scmp.ne.s32.totalorder %s212, %s226
      %p228 = scmp.eq.s32.totalorder %s50, 0
      %p229 = por %p227, %p228
      %s231 = sadd.s32 %s230, 1
      %p234 = scmp.eq.s32.totalorder %s44, 1
      %p235 = scmp.ne.s32.totalorder %s230, %s232
      %p236 = scmp.eq.s32.totalorder %s44, 0
      %p237 = por %p235, %p236
      %p238 = scmp.ne.s32.totalorder %s230, %s232
      %p239 = scmp.eq.s32.totalorder %s49, 1
      %p240 = por %p238, %p239
      %p241 = scmp.ne.s32.totalorder %s232, %s233
      %p242 = scmp.eq.s32.totalorder %s49, 0
      %p243 = por %p241, %p242
      %p244 = scmp.ne.s32.totalorder %s232, %s233
      %p245 = scmp.eq.s32.totalorder %s50, 1
      %p246 = por %p244, %p245
      %p248 = scmp.ne.s32.totalorder %s233, %s247
      %p249 = scmp.eq.s32.totalorder %s50, 0
      %p250 = por %p248, %p249
      %s252 = sadd.s32 %s251, 1
      %p255 = scmp.eq.s32.totalorder %s44, 1
      %p256 = scmp.ne.s32.totalorder %s251, %s253
      %p257 = scmp.eq.s32.totalorder %s44, 0
      %p258 = por %p256, %p257
      %p259 = scmp.ne.s32.totalorder %s251, %s253
      %p260 = scmp.eq.s32.totalorder %s49, 1
      %p261 = por %p259, %p260
      %p262 = scmp.ne.s32.totalorder %s253, %s254
      %p263 = scmp.eq.s32.totalorder %s49, 0
      %p264 = por %p262, %p263
      %p265 = scmp.ne.s32.totalorder %s253, %s254
      %p266 = scmp.eq.s32.totalorder %s50, 1
      %p267 = por %p265, %p266
      %p269 = scmp.ne.s32.totalorder %s254, %s268
      %p270 = scmp.eq.s32.totalorder %s50, 0
      %p271 = por %p269, %p270
      %s273 = sadd.s32 %s272, 1
      %p276 = scmp.eq.s32.totalorder %s44, 1
      %p277 = scmp.ne.s32.totalorder %s272, %s274
      %p278 = scmp.eq.s32.totalorder %s44, 0
      %p279 = por %p277, %p278
      %p280 = scmp.ne.s32.totalorder %s272, %s274
      %p281 = scmp.eq.s32.totalorder %s49, 1
      %p282 = por %p280, %p281
      %p283 = scmp.ne.s32.totalorder %s274, %s275
      %p284 = scmp.eq.s32.totalorder %s49, 0
      %p285 = por %p283, %p284
      %p286 = scmp.ne.s32.totalorder %s274, %s275
      %p287 = scmp.eq.s32.totalorder %s50, 1
      %p288 = por %p286, %p287
      %p290 = scmp.ne.s32.totalorder %s275, %s289
      %p291 = scmp.eq.s32.totalorder %s50, 0
      %p292 = por %p290, %p291
      %s294 = sadd.s32 %s293, 1
      %p297 = scmp.eq.s32.totalorder %s44, 1
      %p298 = scmp.ne.s32.totalorder %s293, %s295
      %p299 = scmp.eq.s32.totalorder %s44, 0
      %p300 = por %p298, %p299
      %p301 = scmp.ne.s32.totalorder %s293, %s295
      %p302 = scmp.eq.s32.totalorder %s49, 1
      %p303 = por %p301, %p302
      %p304 = scmp.ne.s32.totalorder %s295, %s296
      %p305 = scmp.eq.s32.totalorder %s49, 0
      %p306 = por %p304, %p305
      %p307 = scmp.ne.s32.totalorder %s295, %s296
      %p308 = scmp.eq.s32.totalorder %s50, 1
      %p309 = por %p307, %p308
      %p311 = scmp.ne.s32.totalorder %s296, %s310
      %p312 = scmp.eq.s32.totalorder %s50, 0
      %p313 = por %p311, %p312
      %s315 = sadd.s32 %s314, 1
      %p318 = scmp.eq.s32.totalorder %s44, 1
      %p319 = scmp.ne.s32.totalorder %s314, %s316
      %p320 = scmp.eq.s32.totalorder %s44, 0
      %p321 = por %p319, %p320
      %p322 = scmp.ne.s32.totalorder %s314, %s316
      %p323 = scmp.eq.s32.totalorder %s49, 1
      %p324 = por %p322, %p323
      %p325 = scmp.ne.s32.totalorder %s316, %s317
      %p326 = scmp.eq.s32.totalorder %s49, 0
      %p327 = por %p325, %p326
      %p328 = scmp.ne.s32.totalorder %s316, %s317
      %p329 = scmp.eq.s32.totalorder %s50, 1
      %p330 = por %p328, %p329
      %p332 = scmp.ne.s32.totalorder %s317, %s331
      %p333 = scmp.eq.s32.totalorder %s50, 0
      %p334 = por %p332, %p333
      %s336 = sadd.s32 %s335, 1
      %p339 = scmp.eq.s32.totalorder %s44, 1
      %p340 = scmp.ne.s32.totalorder %s335, %s337
      %p341 = scmp.eq.s32.totalorder %s44, 0
      %p342 = por %p340, %p341
      %p343 = scmp.ne.s32.totalorder %s335, %s337
      %p344 = scmp.eq.s32.totalorder %s49, 1
      %p345 = por %p343, %p344
      %p346 = scmp.ne.s32.totalorder %s337, %s338
      %p347 = scmp.eq.s32.totalorder %s49, 0
      %p348 = por %p346, %p347
      %p349 = scmp.ne.s32.totalorder %s337, %s338
      %p350 = scmp.eq.s32.totalorder %s50, 1
      %p351 = por %p349, %p350
      %p353 = scmp.ne.s32.totalorder %s338, %s352
      %p354 = scmp.eq.s32.totalorder %s50, 0
      %p355 = por %p353, %p354
      %s357 = sadd.s32 %s356, 1
      %p360 = scmp.eq.s32.totalorder %s44, 1
      %p361 = scmp.ne.s32.totalorder %s356, %s358
      %p362 = scmp.eq.s32.totalorder %s44, 0
      %p363 = por %p361, %p362
      %p364 = scmp.ne.s32.totalorder %s356, %s358
      %p365 = scmp.eq.s32.totalorder %s49, 1
      %p366 = por %p364, %p365
      %p367 = scmp.ne.s32.totalorder %s358, %s359
      %p368 = scmp.eq.s32.totalorder %s49, 0
      %p369 = por %p367, %p368
      %p370 = scmp.ne.s32.totalorder %s358, %s359
      %p371 = scmp.eq.s32.totalorder %s50, 1
      %p372 = por %p370, %p371
      %p374 = scmp.ne.s32.totalorder %s359, %s373
      %p375 = scmp.eq.s32.totalorder %s50, 0
      %p376 = por %p374, %p375
      %s378 = sadd.s32 %s377, 1
      %p381 = scmp.eq.s32.totalorder %s44, 1
      %p382 = scmp.ne.s32.totalorder %s377, %s379
      %p383 = scmp.eq.s32.totalorder %s44, 0
      %p384 = por %p382, %p383
      %p385 = scmp.ne.s32.totalorder %s377, %s379
      %p386 = scmp.eq.s32.totalorder %s49, 1
      %p387 = por %p385, %p386
      %p388 = scmp.ne.s32.totalorder %s379, %s380
      %p389 = scmp.eq.s32.totalorder %s49, 0
      %p390 = por %p388, %p389
      %p391 = scmp.ne.s32.totalorder %s379, %s380
      %p392 = scmp.eq.s32.totalorder %s50, 1
      %p393 = por %p391, %p392
      %p395 = scmp.ne.s32.totalorder %s380, %s394
      %p396 = scmp.eq.s32.totalorder %s50, 0
      %p397 = por %p395, %p396
      %s399 = sadd.s32 %s398, 1
      %p402 = scmp.eq.s32.totalorder %s44, 1
      %p403 = scmp.ne.s32.totalorder %s398, %s400
      %p404 = scmp.eq.s32.totalorder %s44, 0
      %p405 = por %p403, %p404
      %p406 = scmp.ne.s32.totalorder %s398, %s400
      %p407 = scmp.eq.s32.totalorder %s49, 1
      %p408 = por %p406, %p407
      %p409 = scmp.ne.s32.totalorder %s400, %s401
      %p410 = scmp.eq.s32.totalorder %s49, 0
      %p411 = por %p409, %p410
      %p412 = scmp.ne.s32.totalorder %s400, %s401
      %p413 = scmp.eq.s32.totalorder %s50, 1
      %p414 = por %p412, %p413
      %p416 = scmp.ne.s32.totalorder %s401, %s415
      %p417 = scmp.eq.s32.totalorder %s50, 0
      %p418 = por %p416, %p417
      %s420 = sadd.s32 %s419, 1
      %p423 = scmp.eq.s32.totalorder %s44, 1
      %p424 = scmp.ne.s32.totalorder %s419, %s421
      %p425 = scmp.eq.s32.totalorder %s44, 0
      %p426 = por %p424, %p425
      %p427 = scmp.ne.s32.totalorder %s419, %s421
      %p428 = scmp.eq.s32.totalorder %s49, 1
      %p429 = por %p427, %p428
      %p430 = scmp.ne.s32.totalorder %s421, %s422
      %p431 = scmp.eq.s32.totalorder %s49, 0
      %p432 = por %p430, %p431
      %p433 = scmp.ne.s32.totalorder %s421, %s422
      %p434 = scmp.eq.s32.totalorder %s50, 1
      %p435 = por %p433, %p434
      %p437 = scmp.ne.s32.totalorder %s422, %s436
      %p438 = scmp.eq.s32.totalorder %s50, 0
      %p439 = por %p437, %p438
      %s441 = sadd.s32 %s440, 1
      %p444 = scmp.eq.s32.totalorder %s44, 1
      %p445 = scmp.ne.s32.totalorder %s440, %s442
      %p446 = scmp.eq.s32.totalorder %s44, 0
      %p447 = por %p445, %p446
      %p448 = scmp.ne.s32.totalorder %s440, %s442
      %p449 = scmp.eq.s32.totalorder %s49, 1
      %p450 = por %p448, %p449
      %p451 = scmp.ne.s32.totalorder %s442, %s443
      %p452 = scmp.eq.s32.totalorder %s49, 0
      %p453 = por %p451, %p452
      %p454 = scmp.ne.s32.totalorder %s442, %s443
      %p455 = scmp.eq.s32.totalorder %s50, 1
      %p456 = por %p454, %p455
      %p458 = scmp.ne.s32.totalorder %s443, %s457
      %p459 = scmp.eq.s32.totalorder %s50, 0
      %p460 = por %p458, %p459
      %s462 = sadd.s32 %s461, 1
      %p465 = scmp.eq.s32.totalorder %s44, 1
      %p466 = scmp.ne.s32.totalorder %s461, %s463
      %p467 = scmp.eq.s32.totalorder %s44, 0
      %p468 = por %p466, %p467
      %p469 = scmp.ne.s32.totalorder %s461, %s463
      %p470 = scmp.eq.s32.totalorder %s49, 1
      %p471 = por %p469, %p470
      %p472 = scmp.ne.s32.totalorder %s463, %s464
      %p473 = scmp.eq.s32.totalorder %s49, 0
      %p474 = por %p472, %p473
      %p475 = scmp.ne.s32.totalorder %s463, %s464
      %p476 = scmp.eq.s32.totalorder %s50, 1
      %p477 = por %p475, %p476
      %p479 = scmp.ne.s32.totalorder %s464, %s478
      %p480 = scmp.eq.s32.totalorder %s50, 0
      %p481 = por %p479, %p480
      %s483 = sadd.s32 %s482, 1
      %p486 = scmp.eq.s32.totalorder %s44, 1
      %p487 = scmp.ne.s32.totalorder %s482, %s484
      %p488 = scmp.eq.s32.totalorder %s44, 0
      %p489 = por %p487, %p488
      %p490 = scmp.ne.s32.totalorder %s482, %s484
      %p491 = scmp.eq.s32.totalorder %s49, 1
      %p492 = por %p490, %p491
      %p493 = scmp.ne.s32.totalorder %s484, %s485
      %p494 = scmp.eq.s32.totalorder %s49, 0
      %p495 = por %p493, %p494
      %p496 = scmp.ne.s32.totalorder %s484, %s485
      %p497 = scmp.eq.s32.totalorder %s50, 1
      %p498 = por %p496, %p497
      %p500 = scmp.ne.s32.totalorder %s485, %s499
      %p501 = scmp.eq.s32.totalorder %s50, 0
      %p502 = por %p500, %p501
      %s504 = sadd.s32 %s503, 1
      %p507 = scmp.eq.s32.totalorder %s44, 1
      %p508 = scmp.ne.s32.totalorder %s503, %s505
      %p509 = scmp.eq.s32.totalorder %s44, 0
      %p510 = por %p508, %p509
      %p511 = scmp.ne.s32.totalorder %s503, %s505
      %p512 = scmp.eq.s32.totalorder %s49, 1
      %p513 = por %p511, %p512
      %p514 = scmp.ne.s32.totalorder %s505, %s506
      %p515 = scmp.eq.s32.totalorder %s49, 0
      %p516 = por %p514, %p515
      %p517 = scmp.ne.s32.totalorder %s505, %s506
      %p518 = scmp.eq.s32.totalorder %s50, 1
      %p519 = por %p517, %p518
      %p521 = scmp.ne.s32.totalorder %s506, %s520
      %p522 = scmp.eq.s32.totalorder %s50, 0
      %p523 = por %p521, %p522
      %s525 = sadd.s32 %s524, 1
      %p528 = scmp.eq.s32.totalorder %s44, 1
      %p529 = scmp.ne.s32.totalorder %s524, %s526
      %p530 = scmp.eq.s32.totalorder %s44, 0
      %p531 = por %p529, %p530
      %p532 = scmp.ne.s32.totalorder %s524, %s526
      %p533 = scmp.eq.s32.totalorder %s49, 1
      %p534 = por %p532, %p533
      %p535 = scmp.ne.s32.totalorder %s526, %s527
      %p536 = scmp.eq.s32.totalorder %s49, 0
      %p537 = por %p535, %p536
      %p538 = scmp.ne.s32.totalorder %s526, %s527
      %p539 = scmp.eq.s32.totalorder %s50, 1
      %p540 = por %p538, %p539
      %p542 = scmp.ne.s32.totalorder %s527, %s541
      %p543 = scmp.eq.s32.totalorder %s50, 0
      %p544 = por %p542, %p543
      %s546 = sadd.s32 %s545, 1
      %p549 = scmp.eq.s32.totalorder %s44, 1
      %p550 = scmp.ne.s32.totalorder %s545, %s547
      %p551 = scmp.eq.s32.totalorder %s44, 0
      %p552 = por %p550, %p551
      %p553 = scmp.ne.s32.totalorder %s545, %s547
      %p554 = scmp.eq.s32.totalorder %s49, 1
      %p555 = por %p553, %p554
      %p556 = scmp.ne.s32.totalorder %s547, %s548
      %p557 = scmp.eq.s32.totalorder %s49, 0
      %p558 = por %p556, %p557
      %p559 = scmp.ne.s32.totalorder %s547, %s548
      %p560 = scmp.eq.s32.totalorder %s50, 1
      %p561 = por %p559, %p560
      %p563 = scmp.ne.s32.totalorder %s548, %s562
      %p564 = scmp.eq.s32.totalorder %s50, 0
      %p565 = por %p563, %p564
      %s567 = sadd.s32 %s566, 1
      %p570 = scmp.eq.s32.totalorder %s44, 1
      %p571 = scmp.ne.s32.totalorder %s566, %s568
      %p572 = scmp.eq.s32.totalorder %s44, 0
      %p573 = por %p571, %p572
      %p574 = scmp.ne.s32.totalorder %s566, %s568
      %p575 = scmp.eq.s32.totalorder %s49, 1
      %p576 = por %p574, %p575
      %p577 = scmp.ne.s32.totalorder %s568, %s569
      %p578 = scmp.eq.s32.totalorder %s49, 0
      %p579 = por %p577, %p578
      %p580 = scmp.ne.s32.totalorder %s568, %s569
      %p581 = scmp.eq.s32.totalorder %s50, 1
      %p582 = por %p580, %p581
      %p584 = scmp.ne.s32.totalorder %s569, %s583
      %p585 = scmp.eq.s32.totalorder %s50, 0
      %p586 = por %p584, %p585
      %s587 = ssub.s32 %s44, %s51
      %p588 = scmp.eq.s32.totalorder %s587, 0
      %s590 = sadd.s32 %s589, 1
      %s591 = scalar_select %p588, %s589, %s590
      %p594 = pneg %p588
      %p595 = scmp.eq.s32.totalorder %s44, 1
      %p596 = por %p594, %p595
      %p597 = scmp.ne.s32.totalorder %s589, %s592
      %p598 = scmp.eq.s32.totalorder %s44, 0
      %p599 = por %p597, %p598
      %p600 = scmp.ne.s32.totalorder %s589, %s592
      %p601 = scmp.eq.s32.totalorder %s49, 1
      %p602 = por %p600, %p601
      %p603 = scmp.ne.s32.totalorder %s592, %s593
      %p604 = scmp.eq.s32.totalorder %s49, 0
      %p605 = por %p603, %p604
      %p606 = scmp.ne.s32.totalorder %s592, %s593
      %p607 = scmp.eq.s32.totalorder %s50, 1
      %p608 = por %p606, %p607
      %p610 = scmp.ne.s32.totalorder %s593, %s609
      %p611 = scmp.eq.s32.totalorder %s50, 0
      %p612 = por %p610, %p611
      %p613 = scmp.le.s32.totalorder 1, %s44
      %p614 = scmp.lt.s32.totalorder %s44, 3
      %p615 = pnand %p613, %p614
      %p616 = pneg %p615
      // Predicated region
      $region9: #{tpu_custom_call.1} parent=5 // pred_check
        _
      $region10: #{tpu_custom_call.1} parent=5 // pred_check_branch
        %618 = sbr.rel (%p615) target = $region12
      $region11: #{tpu_custom_call.1} parent=5 // pred_region
        %s619 = ssub.s32 %s44, 1
        // Predicated region
        $region13: #{tpu_custom_call.1} parent=11 // pred_check
          %p620 = pneg %p117
        $region14: #{tpu_custom_call.1} parent=11 // pred_check_branch
          %622 = sbr.rel (%p620) target = $region16
        $region15: #{tpu_custom_call.1} parent=11 // pred_region
          %s624 = ssub.s32 256, 256
          %625 = vsyncadd [#allocation6], %s624
          %s626 = sshll.u32 [#allocation5], 4
          %s627 = int_to_ptr.vmem [resolvable:$true] %s626
          %632 = dma.hbm_to_vmem [thread:$0]  %s2, 256, %s627, [#allocation6], 128, 128, 8
        $region16: #{tpu_custom_call.1} parent=11 // pred_fallthru
          _
        // Predicated region
        $region17: #{tpu_custom_call.1} parent=11 // pred_check
          %p633 = pneg %p138
        $region18: #{tpu_custom_call.1} parent=11 // pred_check_branch
          %635 = sbr.rel (%p633) target = $region20
        $region19: #{tpu_custom_call.1} parent=11 // pred_region
          %s637 = ssub.s32 16, 16
          %638 = vsyncadd [#allocation6], %s637
          %s640 = sshll.u32 [#allocation7], 4
          %s641 = int_to_ptr.vmem [resolvable:$true] %s640
          %643 = dma.hbm_to_vmem [thread:$0]  %s3, 16, %s641, [#allocation6]
        $region20: #{tpu_custom_call.1} parent=11 // pred_fallthru
          _
        // Predicated region
        $region21: #{tpu_custom_call.1} parent=11 // pred_check
          %p644 = pneg %p159
        $region22: #{tpu_custom_call.1} parent=11 // pred_check_branch
          %646 = sbr.rel (%p644) target = $region24
        $region23: #{tpu_custom_call.1} parent=11 // pred_region
          _
        $region24: #{tpu_custom_call.1} parent=11 // pred_fallthru
          _
        // Predicated region
        $region25: #{tpu_custom_call.1} parent=11 // pred_check
          %p647 = pneg %p180
        $region26: #{tpu_custom_call.1} parent=11 // pred_check_branch
          %649 = sbr.rel (%p647) target = $region28
        $region27: #{tpu_custom_call.1} parent=11 // pred_region
          %s651 = ssub.s32 48, 48
          %652 = vsyncadd [#allocation9], %s651
          %s653 = sshll.u32 [#allocation8], 4
          %s654 = int_to_ptr.vmem [resolvable:$true] %s653
          %659 = dma.hbm_to_vmem [thread:$0]  %s5, 48, %s654, [#allocation9], 16, 16, 1
        $region28: #{tpu_custom_call.1} parent=11 // pred_fallthru
          _
        // Predicated region
        $region29: #{tpu_custom_call.1} parent=11 // pred_check
          %p660 = pneg %p201
        $region30: #{tpu_custom_call.1} parent=11 // pred_check_branch
          %662 = sbr.rel (%p660) target = $region32
        $region31: #{tpu_custom_call.1} parent=11 // pred_region
          %s664 = ssub.s32 48, 48
          %665 = vsyncadd [#allocation9], %s664
          %s666 = sshll.u32 [#allocation10], 4
          %s667 = int_to_ptr.vmem [resolvable:$true] %s666
          %672 = dma.hbm_to_vmem [thread:$0]  %s6, 48, %s667, [#allocation9], 16, 16, 1
        $region32: #{tpu_custom_call.1} parent=11 // pred_fallthru
          _
        // Predicated region
        $region33: #{tpu_custom_call.1} parent=11 // pred_check
          %p673 = pneg %p222
        $region34: #{tpu_custom_call.1} parent=11 // pred_check_branch
          %675 = sbr.rel (%p673) target = $region36
        $region35: #{tpu_custom_call.1} parent=11 // pred_region
          _
        $region36: #{tpu_custom_call.1} parent=11 // pred_fallthru
          _
        // Predicated region
        $region37: #{tpu_custom_call.1} parent=11 // pred_check
          %p676 = pneg %p243
        $region38: #{tpu_custom_call.1} parent=11 // pred_check_branch
          %678 = sbr.rel (%p676) target = $region40
        $region39: #{tpu_custom_call.1} parent=11 // pred_region
          %s680 = ssub.s32 48, 48
          %681 = vsyncadd [#allocation12], %s680
          %s682 = sshll.u32 [#allocation11], 4
          %s683 = int_to_ptr.vmem [resolvable:$true] %s682
          %688 = dma.hbm_to_vmem [thread:$0]  %s8, 48, %s683, [#allocation12], 16, 16, 1
        $region40: #{tpu_custom_call.1} parent=11 // pred_fallthru
          _
        // Predicated region
        $region41: #{tpu_custom_call.1} parent=11 // pred_check
          %p689 = pneg %p264
        $region42: #{tpu_custom_call.1} parent=11 // pred_check_branch
          %691 = sbr.rel (%p689) target = $region44
        $region43: #{tpu_custom_call.1} parent=11 // pred_region
          _
        $region44: #{tpu_custom_call.1} parent=11 // pred_fallthru
          _
        // Predicated region
        $region45: #{tpu_custom_call.1} parent=11 // pred_check
          %p692 = pneg %p285
        $region46: #{tpu_custom_call.1} parent=11 // pred_check_branch
          %694 = sbr.rel (%p692) target = $region48
        $region47: #{tpu_custom_call.1} parent=11 // pred_region
          _
        $region48: #{tpu_custom_call.1} parent=11 // pred_fallthru
          _
        // Predicated region
        $region49: #{tpu_custom_call.1} parent=11 // pred_check
          %p695 = pneg %p306
        $region50: #{tpu_custom_call.1} parent=11 // pred_check_branch
          %697 = sbr.rel (%p695) target = $region52
        $region51: #{tpu_custom_call.1} parent=11 // pred_region
          _
        $region52: #{tpu_custom_call.1} parent=11 // pred_fallthru
          _
        // Predicated region
        $region53: #{tpu_custom_call.1} parent=11 // pred_check
          %p698 = pneg %p327
        $region54: #{tpu_custom_call.1} parent=11 // pred_check_branch
          %700 = sbr.rel (%p698) target = $region56
        $region55: #{tpu_custom_call.1} parent=11 // pred_region
          %s702 = ssub.s32 48, 48
          %703 = vsyncadd [#allocation12], %s702
          %s704 = sshll.u32 [#allocation13], 4
          %s705 = int_to_ptr.vmem [resolvable:$true] %s704
          %710 = dma.hbm_to_vmem [thread:$0]  %s12, 48, %s705, [#allocation12], 16, 16, 1
        $region56: #{tpu_custom_call.1} parent=11 // pred_fallthru
          _
        // Predicated region
        $region57: #{tpu_custom_call.1} parent=11 // pred_check
          %p711 = pneg %p348
        $region58: #{tpu_custom_call.1} parent=11 // pred_check_branch
          %713 = sbr.rel (%p711) target = $region60
        $region59: #{tpu_custom_call.1} parent=11 // pred_region
          _
        $region60: #{tpu_custom_call.1} parent=11 // pred_fallthru
          _
        // Predicated region
        $region61: #{tpu_custom_call.1} parent=11 // pred_check
          %p714 = pneg %p369
        $region62: #{tpu_custom_call.1} parent=11 // pred_check_branch
          %716 = sbr.rel (%p714) target = $region64
        $region63: #{tpu_custom_call.1} parent=11 // pred_region
          %s718 = ssub.s32 768, 768
          %719 = vsyncadd [#allocation15], %s718
          %s720 = sshll.u32 [#allocation14], 4
          %s721 = int_to_ptr.vmem [resolvable:$true] %s720
          %726 = dma.hbm_to_vmem [thread:$0]  %s14, 768, %s721, [#allocation15], 64, 64, 4
        $region64: #{tpu_custom_call.1} parent=11 // pred_fallthru
          _
        // Predicated region
        $region65: #{tpu_custom_call.1} parent=11 // pred_check
          %p727 = pneg %p390
        $region66: #{tpu_custom_call.1} parent=11 // pred_check_branch
          %729 = sbr.rel (%p727) target = $region68
        $region67: #{tpu_custom_call.1} parent=11 // pred_region
          %s731 = ssub.s32 768, 768
          %732 = vsyncadd [#allocation15], %s731
          %s733 = sshll.u32 [#allocation16], 4
          %s734 = int_to_ptr.vmem [resolvable:$true] %s733
          %739 = dma.hbm_to_vmem [thread:$0]  %s15, 768, %s734, [#allocation15], 64, 64, 4
        $region68: #{tpu_custom_call.1} parent=11 // pred_fallthru
          _
        // Predicated region
        $region69: #{tpu_custom_call.1} parent=11 // pred_check
          %p740 = pneg %p411
        $region70: #{tpu_custom_call.1} parent=11 // pred_check_branch
          %742 = sbr.rel (%p740) target = $region72
        $region71: #{tpu_custom_call.1} parent=11 // pred_region
          %s744 = ssub.s32 48, 48
          %745 = vsyncadd [#allocation18], %s744
          %s746 = sshll.u32 [#allocation17], 4
          %s747 = int_to_ptr.vmem [resolvable:$true] %s746
          %752 = dma.hbm_to_vmem [thread:$0]  %s16, 48, %s747, [#allocation18], 16, 16, 1
        $region72: #{tpu_custom_call.1} parent=11 // pred_fallthru
          _
        // Predicated region
        $region73: #{tpu_custom_call.1} parent=11 // pred_check
          %p753 = pneg %p432
        $region74: #{tpu_custom_call.1} parent=11 // pred_check_branch
          %755 = sbr.rel (%p753) target = $region76
        $region75: #{tpu_custom_call.1} parent=11 // pred_region
          %s757 = ssub.s32 768, 768
          %758 = vsyncadd [#allocation18], %s757
          %s759 = sshll.u32 [#allocation19], 4
          %s760 = int_to_ptr.vmem [resolvable:$true] %s759
          %765 = dma.hbm_to_vmem [thread:$0]  %s17, 768, %s760, [#allocation18], 64, 64, 4
        $region76: #{tpu_custom_call.1} parent=11 // pred_fallthru
          _
        // Predicated region
        $region77: #{tpu_custom_call.1} parent=11 // pred_check
          %p766 = pneg %p453
        $region78: #{tpu_custom_call.1} parent=11 // pred_check_branch
          %768 = sbr.rel (%p766) target = $region80
        $region79: #{tpu_custom_call.1} parent=11 // pred_region
          %s770 = ssub.s32 48, 48
          %771 = vsyncadd [#allocation21], %s770
          %s772 = sshll.u32 [#allocation20], 4
          %s773 = int_to_ptr.vmem [resolvable:$true] %s772
          %778 = dma.hbm_to_vmem [thread:$0]  %s18, 48, %s773, [#allocation21], 16, 16, 1
        $region80: #{tpu_custom_call.1} parent=11 // pred_fallthru
          _
        // Predicated region
        $region81: #{tpu_custom_call.1} parent=11 // pred_check
          %p779 = pneg %p474
        $region82: #{tpu_custom_call.1} parent=11 // pred_check_branch
          %781 = sbr.rel (%p779) target = $region84
        $region83: #{tpu_custom_call.1} parent=11 // pred_region
          %s783 = ssub.s32 512, 512
          %784 = vsyncadd [#allocation21], %s783
          %s785 = sshll.u32 [#allocation22], 4
          %s786 = int_to_ptr.vmem [resolvable:$true] %s785
          %791 = dma.hbm_to_vmem [thread:$0]  %s19, 512, %s786, [#allocation21], 128, 128, 8
        $region84: #{tpu_custom_call.1} parent=11 // pred_fallthru
          _
        // Predicated region
        $region85: #{tpu_custom_call.1} parent=11 // pred_check
          %p792 = pneg %p495
        $region86: #{tpu_custom_call.1} parent=11 // pred_check_branch
          %794 = sbr.rel (%p792) target = $region88
        $region87: #{tpu_custom_call.1} parent=11 // pred_region
          _
        $region88: #{tpu_custom_call.1} parent=11 // pred_fallthru
          _
        // Predicated region
        $region89: #{tpu_custom_call.1} parent=11 // pred_check
          %p795 = pneg %p516
        $region90: #{tpu_custom_call.1} parent=11 // pred_check_branch
          %797 = sbr.rel (%p795) target = $region92
        $region91: #{tpu_custom_call.1} parent=11 // pred_region
          %s799 = ssub.s32 512, 512
          %800 = vsyncadd [#allocation24], %s799
          %s801 = sshll.u32 [#allocation23], 4
          %s802 = int_to_ptr.vmem [resolvable:$true] %s801
          %807 = dma.hbm_to_vmem [thread:$0]  %s21, 512, %s802, [#allocation24], 128, 128, 8
        $region92: #{tpu_custom_call.1} parent=11 // pred_fallthru
          _
        // Predicated region
        $region93: #{tpu_custom_call.1} parent=11 // pred_check
          %p808 = pneg %p537
        $region94: #{tpu_custom_call.1} parent=11 // pred_check_branch
          %810 = sbr.rel (%p808) target = $region96
        $region95: #{tpu_custom_call.1} parent=11 // pred_region
          _
        $region96: #{tpu_custom_call.1} parent=11 // pred_fallthru
          _
        // Predicated region
        $region97: #{tpu_custom_call.1} parent=11 // pred_check
          %p811 = pneg %p558
        $region98: #{tpu_custom_call.1} parent=11 // pred_check_branch
          %813 = sbr.rel (%p811) target = $region100
        $region99: #{tpu_custom_call.1} parent=11 // pred_region
          _
        $region100: #{tpu_custom_call.1} parent=11 // pred_fallthru
          _
        // Predicated region
        $region101: #{tpu_custom_call.1} parent=11 // pred_check
          %p814 = pneg %p579
        $region102: #{tpu_custom_call.1} parent=11 // pred_check_branch
          %816 = sbr.rel (%p814) target = $region104
        $region103: #{tpu_custom_call.1} parent=11 // pred_region
          _
        $region104: #{tpu_custom_call.1} parent=11 // pred_fallthru
          _
      $region12: #{tpu_custom_call.1} parent=5 // pred_fallthru
        _
      %p817 = scmp.lt.s32.totalorder %s44, 2
      // Predicated region
      $region105: #{tpu_custom_call.1} parent=5 // pred_check
        %p818 = pneg %p817
      $region106: #{tpu_custom_call.1} parent=5 // pred_check_branch
        %820 = sbr.rel (%p818) target = $region108
      $region107: #{tpu_custom_call.1} parent=5 // pred_region
        // Predicated region
        $region109: #{tpu_custom_call.1} parent=107 // pred_check
          %p821 = pneg %p64
        $region110: #{tpu_custom_call.1} parent=107 // pred_check_branch
          %823 = sbr.rel (%p821) target = $region112
        $region111: #{tpu_custom_call.1} parent=107 // pred_region
          %s824 = sand.u32 %s54, 1
          %s825 = scalar_lea.sflag [#allocation3], %s824
          %s826 = sand.u32 %s54, 1
          %s827 = smul.addr %s826, 8
          %s828 = scalar_lea.vmem [#allocation2], %s827
          %s830 = ssub.s32 128, 128
          %831 = vsyncadd %s825, %s830
          %s832 = smul.addr %s44, 128
          %s833 = scalar_lea.hbm %s0, %s832
          %s835 = sshll.u32 %s828, 4
          %s836 = int_to_ptr.vmem [resolvable:$true] %s835
          %838 = dma.hbm_to_vmem [thread:$0]  %s833, 128, %s836, %s825
        $region112: #{tpu_custom_call.1} parent=107 // pred_fallthru
          _
        // Predicated region
        $region113: #{tpu_custom_call.1} parent=107 // pred_check
          %p839 = pneg %p90
        $region114: #{tpu_custom_call.1} parent=107 // pred_check_branch
          %841 = sbr.rel (%p839) target = $region116
        $region115: #{tpu_custom_call.1} parent=107 // pred_region
          %p842 = scmp.lt.s32.totalorder %s44, 1
          %s843 = scalar_select %p842, %s44, 1
          %s844 = smul.addr %s843, 8
          %s845 = scalar_lea.vmem %s1, %s844
        $region116: #{tpu_custom_call.1} parent=107 // pred_fallthru
          _
      $region108: #{tpu_custom_call.1} parent=5 // pred_fallthru
        _
      %p846 = scmp.le.s32.totalorder 1, %s44
      %p847 = scmp.lt.s32.totalorder %s44, 3
      %p848 = pnand %p846, %p847
      %p849 = pneg %p848
      // Predicated region
      $region117: #{tpu_custom_call.1} parent=5 // pred_check
        _
      $region118: #{tpu_custom_call.1} parent=5 // pred_check_branch
        %851 = sbr.rel (%p848) target = $region120
      $region119: #{tpu_custom_call.1} parent=5 // pred_region
        %s852 = ssub.s32 %s44, 1
        %s853 = sand.u32 %s57, 1
        %s854 = scalar_lea.sflag [#allocation3], %s853
        %s855 = sand.u32 %s57, 1
        %s856 = smul.addr %s855, 8
        %s857 = scalar_lea.vmem [#allocation2], %s856
        // Predicated region
        $region121: #{tpu_custom_call.1} parent=119 // pred_check
          %p858 = pneg %p70
        $region122: #{tpu_custom_call.1} parent=119 // pred_check_branch
          %860 = sbr.rel (%p858) target = $region124
        $region123: #{tpu_custom_call.1} parent=119 // pred_region
          %861 = dma.done %s854, 128
        $region124: #{tpu_custom_call.1} parent=119 // pred_fallthru
          _
        // Predicated region
        $region125: #{tpu_custom_call.1} parent=119 // pred_check
          %p862 = pneg %p117
        $region126: #{tpu_custom_call.1} parent=119 // pred_check_branch
          %864 = sbr.rel (%p862) target = $region128
        $region127: #{tpu_custom_call.1} parent=119 // pred_region
          %865 = dma.done [#allocation6], 256
        $region128: #{tpu_custom_call.1} parent=119 // pred_fallthru
          _
        // Predicated region
        $region129: #{tpu_custom_call.1} parent=119 // pred_check
          %p866 = pneg %p138
        $region130: #{tpu_custom_call.1} parent=119 // pred_check_branch
          %868 = sbr.rel (%p866) target = $region132
        $region131: #{tpu_custom_call.1} parent=119 // pred_region
          %869 = dma.done [#allocation6], 16
        $region132: #{tpu_custom_call.1} parent=119 // pred_fallthru
          _
        // Predicated region
        $region133: #{tpu_custom_call.1} parent=119 // pred_check
          %p870 = pneg %p180
        $region134: #{tpu_custom_call.1} parent=119 // pred_check_branch
          %872 = sbr.rel (%p870) target = $region136
        $region135: #{tpu_custom_call.1} parent=119 // pred_region
          %873 = dma.done [#allocation9], 48
        $region136: #{tpu_custom_call.1} parent=119 // pred_fallthru
          _
        // Predicated region
        $region137: #{tpu_custom_call.1} parent=119 // pred_check
          %p874 = pneg %p201
        $region138: #{tpu_custom_call.1} parent=119 // pred_check_branch
          %876 = sbr.rel (%p874) target = $region140
        $region139: #{tpu_custom_call.1} parent=119 // pred_region
          %877 = dma.done [#allocation9], 48
        $region140: #{tpu_custom_call.1} parent=119 // pred_fallthru
          _
        // Predicated region
        $region141: #{tpu_custom_call.1} parent=119 // pred_check
          %p878 = pneg %p243
        $region142: #{tpu_custom_call.1} parent=119 // pred_check_branch
          %880 = sbr.rel (%p878) target = $region144
        $region143: #{tpu_custom_call.1} parent=119 // pred_region
          %881 = dma.done [#allocation12], 48
        $region144: #{tpu_custom_call.1} parent=119 // pred_fallthru
          _
        // Predicated region
        $region145: #{tpu_custom_call.1} parent=119 // pred_check
          %p882 = pneg %p327
        $region146: #{tpu_custom_call.1} parent=119 // pred_check_branch
          %884 = sbr.rel (%p882) target = $region148
        $region147: #{tpu_custom_call.1} parent=119 // pred_region
          %885 = dma.done [#allocation12], 48
        $region148: #{tpu_custom_call.1} parent=119 // pred_fallthru
          _
        // Predicated region
        $region149: #{tpu_custom_call.1} parent=119 // pred_check
          %p886 = pneg %p369
        $region150: #{tpu_custom_call.1} parent=119 // pred_check_branch
          %888 = sbr.rel (%p886) target = $region152
        $region151: #{tpu_custom_call.1} parent=119 // pred_region
          %889 = dma.done [#allocation15], 768
        $region152: #{tpu_custom_call.1} parent=119 // pred_fallthru
          _
        // Predicated region
        $region153: #{tpu_custom_call.1} parent=119 // pred_check
          %p890 = pneg %p390
        $region154: #{tpu_custom_call.1} parent=119 // pred_check_branch
          %892 = sbr.rel (%p890) target = $region156
        $region155: #{tpu_custom_call.1} parent=119 // pred_region
          %893 = dma.done [#allocation15], 768
        $region156: #{tpu_custom_call.1} parent=119 // pred_fallthru
          _
        // Predicated region
        $region157: #{tpu_custom_call.1} parent=119 // pred_check
          %p894 = pneg %p411
        $region158: #{tpu_custom_call.1} parent=119 // pred_check_branch
          %896 = sbr.rel (%p894) target = $region160
        $region159: #{tpu_custom_call.1} parent=119 // pred_region
          %897 = dma.done [#allocation18], 48
        $region160: #{tpu_custom_call.1} parent=119 // pred_fallthru
          _
        // Predicated region
        $region161: #{tpu_custom_call.1} parent=119 // pred_check
          %p898 = pneg %p432
        $region162: #{tpu_custom_call.1} parent=119 // pred_check_branch
          %900 = sbr.rel (%p898) target = $region164
        $region163: #{tpu_custom_call.1} parent=119 // pred_region
          %901 = dma.done [#allocation18], 768
        $region164: #{tpu_custom_call.1} parent=119 // pred_fallthru
          _
        // Predicated region
        $region165: #{tpu_custom_call.1} parent=119 // pred_check
          %p902 = pneg %p453
        $region166: #{tpu_custom_call.1} parent=119 // pred_check_branch
          %904 = sbr.rel (%p902) target = $region168
        $region167: #{tpu_custom_call.1} parent=119 // pred_region
          %905 = dma.done [#allocation21], 48
        $region168: #{tpu_custom_call.1} parent=119 // pred_fallthru
          _
        // Predicated region
        $region169: #{tpu_custom_call.1} parent=119 // pred_check
          %p906 = pneg %p474
        $region170: #{tpu_custom_call.1} parent=119 // pred_check_branch
          %908 = sbr.rel (%p906) target = $region172
        $region171: #{tpu_custom_call.1} parent=119 // pred_region
          %909 = dma.done [#allocation21], 512
        $region172: #{tpu_custom_call.1} parent=119 // pred_fallthru
          _
        // Predicated region
        $region173: #{tpu_custom_call.1} parent=119 // pred_check
          %p910 = pneg %p516
        $region174: #{tpu_custom_call.1} parent=119 // pred_check_branch
          %912 = sbr.rel (%p910) target = $region176
        $region175: #{tpu_custom_call.1} parent=119 // pred_region
          %913 = dma.done [#allocation24], 512
        $region176: #{tpu_custom_call.1} parent=119 // pred_fallthru
          _
        %s914 = sand.u32 %s57, 1
        %s915 = scalar_lea.sflag [#allocation3], %s914
        %s916 = sand.u32 %s57, 1
        %s917 = smul.addr %s916, 8
        %s918 = scalar_lea.vmem [#allocation2], %s917
        %p919 = pneg %p70
        %p920 = pneg %p67
        %p921 = scmp.lt.s32.totalorder %s49, 1
        %s922 = scalar_select %p921, %s49, 1
        %s923 = smul.addr %s922, 8
        %s924 = scalar_lea.vmem %s1, %s923
        %p925 = pneg %p96
        %p926 = pneg %p93
        %p927 = pneg %p117
        %p928 = pneg %p114
        %p929 = pneg %p138
        %p930 = pneg %p135
        %p931 = pneg %p159
        %p932 = pneg %p156
        %p933 = pneg %p180
        %p934 = pneg %p177
        %p935 = pneg %p201
        %p936 = pneg %p198
        %p937 = pneg %p222
        %p938 = pneg %p219
        %p939 = pneg %p243
        %p940 = pneg %p240
        %p941 = pneg %p264
        %p942 = pneg %p261
        %p943 = pneg %p285
        %p944 = pneg %p282
        %p945 = pneg %p306
        %p946 = pneg %p303
        %p947 = pneg %p327
        %p948 = pneg %p324
        %p949 = pneg %p348
        %p950 = pneg %p345
        %p951 = pneg %p369
        %p952 = pneg %p366
        %p953 = pneg %p390
        %p954 = pneg %p387
        %p955 = pneg %p411
        %p956 = pneg %p408
        %p957 = pneg %p432
        %p958 = pneg %p429
        %p959 = pneg %p453
        %p960 = pneg %p450
        %p961 = pneg %p474
        %p962 = pneg %p471
        %p963 = pneg %p495
        %p964 = pneg %p492
        %p965 = pneg %p516
        %p966 = pneg %p513
        %p967 = pneg %p537
        %p968 = pneg %p534
        %p969 = pneg %p558
        %p970 = pneg %p555
        %p971 = pneg %p579
        %p972 = pneg %p576
        %p973 = pneg %p605
        %p974 = pneg %p602
        %s975 = sand.u32 %s592, 1
        %s976 = scalar_lea.sflag [#allocation4], %s975
        %s977 = sand.u32 %s592, 1
        %s978 = scalar_lea.vmem [#allocation25], %s977
        %p979 = scmp.lt.s32.totalorder %s49, 1
        %s980 = scalar_select %p979, %s49, 1
        %s981 = smul.addr %s980, 8
        %s982 = scalar_lea.vmem %s1, %s981
        %v984 = vld [vmem:[%s857] sm:$0xff]
        %v985 = vld [vmem:[%s982] sm:$0xff]
        %v986 = vld [vmem:[#allocation5] sm:$0xff]
        %v987 = vld [vmem:[#allocation5 + $0x8] sm:$0xff]
        %v988 = vld [vmem:[#allocation7] sm:$0x1]
        %v990 = vlaneseq
        %v991 = vshrl.u32 %v990, 7
        %v992 = vsub.s32 0, %v991
        %v993 = vrot.slane %v988, %v992
        %vm995 = vcmask 130048
        %v997 = vsel %vm995, %v984, 0
        %999 = vmatprep.subr.mxu0 0.0
        %1000 = vmatpush1.msra.mxu0 0.0
        %1001 = vmatprep.subr.mxu0 0.0
        %1002 = vmatpush1.msra.mxu0 0.0
        %1003 = vmatprep.subr.mxu0 0.0
        %1004 = vmatpush1.msra.mxu0 0.0
        %1005 = vmatprep.subr.mxu0 0.0
        %1006 = vmatpush1.msra.mxu0 0.0
        %1007 = vmatprep.subr.mxu0 0.0
        %1008 = vmatpush1.msra.mxu0 0.0
        %1009 = vmatprep.subr.mxu0 0.0
        %1010 = vmatpush1.msra.mxu0 0.0
        %1011 = vmatprep.subr.mxu0 0.0
        %1012 = vmatpush1.msra.mxu0 0.0
        %1013 = vmatprep.subr.mxu0 0.0
        %1014 = vmatpush1.msra.mxu0 0.0
        %1015 = vmatprep.subr.mxu0 0.0
        %1016 = vmatpush1.msra.mxu0 0.0
        %1017 = vmatprep.subr.mxu0 0.0
        %1018 = vmatpush1.msra.mxu0 0.0
        %1019 = vmatprep.subr.mxu0 0.0
        %1020 = vmatpush1.msra.mxu0 0.0
        %1021 = vmatprep.subr.mxu0 0.0
        %1022 = vmatpush1.msra.mxu0 0.0
        %1023 = vmatprep.subr.mxu0 0.0
        %1024 = vmatpush1.msra.mxu0 0.0
        %1025 = vmatprep.subr.mxu0 0.0
        %1026 = vmatpush1.msra.mxu0 0.0
        %1027 = vmatprep.subr.mxu0 0.0
        %1028 = vmatpush1.msra.mxu0 %v987
        %1029 = vmatprep.subr.mxu0 0.0
        %1030 = vmatpush1.msra.mxu0 %v986
        %1031 = vmatprep.subr.mxu0 0.0
        %1032 = vmatpush2.msra.mxu0 0.0
        %1033 = vmatprep.subr.mxu0 0.0
        %1034 = vmatpush2.msra.mxu0 0.0
        %1035 = vmatprep.subr.mxu0 0.0
        %1036 = vmatpush2.msra.mxu0 0.0
        %1037 = vmatprep.subr.mxu0 0.0
        %1038 = vmatpush2.msra.mxu0 0.0
        %1039 = vmatprep.subr.mxu0 0.0
        %1040 = vmatpush2.msra.mxu0 0.0
        %1041 = vmatprep.subr.mxu0 0.0
        %1042 = vmatpush2.msra.mxu0 0.0
        %1043 = vmatprep.subr.mxu0 0.0
        %1044 = vmatpush2.msra.mxu0 0.0
        %1045 = vmatprep.subr.mxu0 0.0
        %1046 = vmatpush2.msra.mxu0 0.0
        %1047 = vmatprep.subr.mxu0 0.0
        %1048 = vmatpush2.msra.mxu0 0.0
        %1049 = vmatprep.subr.mxu0 0.0
        %1050 = vmatpush2.msra.mxu0 0.0
        %1051 = vmatprep.subr.mxu0 0.0
        %1052 = vmatpush2.msra.mxu0 0.0
        %1053 = vmatprep.subr.mxu0 0.0
        %1054 = vmatpush2.msra.mxu0 0.0
        %1055 = vmatprep.subr.mxu0 0.0
        %1056 = vmatpush2.msra.mxu0 0.0
        %1057 = vmatprep.subr.mxu0 0.0
        %1058 = vmatpush2.msra.mxu0 0.0
        %1059 = vmatprep.subr.mxu0 0.0
        %1060 = vmatpush2.msra.mxu0 0.0
        %1061 = vmatprep.subr.mxu0 0.0
        %1062 = vmatpush2.msra.mxu0 0.0
        %1063 = vmatprep.mubr.f32.mxu0 0.0
        %1064 = vmatmul.mubr.f32.gmra.mxu0 %v997
        %v1065 = vpop.f32.mrf.mxu0
        %v1066 = vadd.f32 %v993, %v1065
        %v1067 = vpop.f32.mrf.mxu0
        %1068 = vdwg.mxu0
        %v1069 = vmul.f32 %v985, %v985
        %vm1070 = vcmask 23552
        %v1071 = vsel %vm1070, %v1069, 0.0
        %1072 = vadd.xlane.f32.xlu0 %v1071
        %v1073 = vpop.xlane.xlu0 %1072
        %v1075 = vsel %vm1070, %v985, 0
        %1077 = vmatprep.subr.mxu0 0.0
        %1078 = vmatpush1.xpose.msra.mxu0 0.0
        %1079 = vmatprep.subr.mxu0 0.0
        %1080 = vmatpush1.xpose.msra.mxu0 0.0
        %1081 = vmatprep.subr.mxu0 0.0
        %1082 = vmatpush1.xpose.msra.mxu0 0.0
        %1083 = vmatprep.subr.mxu0 0.0
        %1084 = vmatpush1.xpose.msra.mxu0 0.0
        %1085 = vmatprep.subr.mxu0 0.0
        %1086 = vmatpush1.xpose.msra.mxu0 0.0
        %1087 = vmatprep.subr.mxu0 0.0
        %1088 = vmatpush1.xpose.msra.mxu0 0.0
        %1089 = vmatprep.subr.mxu0 0.0
        %1090 = vmatpush1.xpose.msra.mxu0 0.0
        %1091 = vmatprep.subr.mxu0 0.0
        %1092 = vmatpush1.xpose.msra.mxu0 0.0
        %1093 = vmatprep.subr.mxu0 0.0
        %1094 = vmatpush1.xpose.msra.mxu0 0.0
        %1095 = vmatprep.subr.mxu0 0.0
        %1096 = vmatpush1.xpose.msra.mxu0 0.0
        %1097 = vmatprep.subr.mxu0 0.0
        %1098 = vmatpush1.xpose.msra.mxu0 0.0
        %1099 = vmatprep.subr.mxu0 0.0
        %1100 = vmatpush1.xpose.msra.mxu0 0.0
        %1101 = vmatprep.subr.mxu0 0.0
        %1102 = vmatpush1.xpose.msra.mxu0 0.0
        %1103 = vmatprep.subr.mxu0 0.0
        %1104 = vmatpush1.xpose.msra.mxu0 0.0
        %1105 = vmatprep.subr.mxu0 0.0
        %1106 = vmatpush1.xpose.msra.mxu0 0.0
        %1107 = vmatprep.subr.mxu0 0.0
        %1108 = vmatpush1.xpose.msra.mxu0 %v1075
        %1109 = vmatprep.subr.mxu0 0.0
        %1110 = vmatpush2.xpose.msra.mxu0 0.0
        %1111 = vmatprep.subr.mxu0 0.0
        %1112 = vmatpush2.xpose.msra.mxu0 0.0
        %1113 = vmatprep.subr.mxu0 0.0
        %1114 = vmatpush2.xpose.msra.mxu0 0.0
        %1115 = vmatprep.subr.mxu0 0.0
        %1116 = vmatpush2.xpose.msra.mxu0 0.0
        %1117 = vmatprep.subr.mxu0 0.0
        %1118 = vmatpush2.xpose.msra.mxu0 0.0
        %1119 = vmatprep.subr.mxu0 0.0
        %1120 = vmatpush2.xpose.msra.mxu0 0.0
        %1121 = vmatprep.subr.mxu0 0.0
        %1122 = vmatpush2.xpose.msra.mxu0 0.0
        %1123 = vmatprep.subr.mxu0 0.0
        %1124 = vmatpush2.xpose.msra.mxu0 0.0
        %1125 = vmatprep.subr.mxu0 0.0
        %1126 = vmatpush2.xpose.msra.mxu0 0.0
        %1127 = vmatprep.subr.mxu0 0.0
        %1128 = vmatpush2.xpose.msra.mxu0 0.0
        %1129 = vmatprep.subr.mxu0 0.0
        %1130 = vmatpush2.xpose.msra.mxu0 0.0
        %1131 = vmatprep.subr.mxu0 0.0
        %1132 = vmatpush2.xpose.msra.mxu0 0.0
        %1133 = vmatprep.subr.mxu0 0.0
        %1134 = vmatpush2.xpose.msra.mxu0 0.0
        %1135 = vmatprep.subr.mxu0 0.0
        %1136 = vmatpush2.xpose.msra.mxu0 0.0
        %1137 = vmatprep.subr.mxu0 0.0
        %1138 = vmatpush2.xpose.msra.mxu0 0.0
        %1139 = vmatprep.subr.mxu0 0.0
        %1140 = vmatpush2.xpose.msra.mxu0 0.0
        %1141 = vmatprep.mubr.f32.mxu0 0.0
        %1142 = vmatmul.mubr.f32.gmra.mxu0 %v1075
        %v1143 = vpop.f32.mrf.mxu0
        %v1144 = vadd.f32 0.0, %v1143
        %v1145 = vpop.f32.mrf.mxu0
        %1146 = vdwg.mxu0
        %1147 = vxpose.xlu0.b32.start [1/16] %v1073, 128
        %1148 = vxpose.xlu0.b32.cont [2/16] 0.0, 128
        %1149 = vxpose.xlu0.b32.cont [3/16] 0.0, 128
        %1150 = vxpose.xlu0.b32.cont [4/16] 0.0, 128
        %1151 = vxpose.xlu0.b32.cont [5/16] 0.0, 128
        %1152 = vxpose.xlu0.b32.cont [6/16] 0.0, 128
        %1153 = vxpose.xlu0.b32.cont [7/16] 0.0, 128
        %1154 = vxpose.xlu0.b32.cont [8/16] 0.0, 128
        %1155 = vxpose.xlu0.b32.cont [9/16] 0.0, 128
        %1156 = vxpose.xlu0.b32.cont [10/16] 0.0, 128
        %1157 = vxpose.xlu0.b32.cont [11/16] 0.0, 128
        %1158 = vxpose.xlu0.b32.cont [12/16] 0.0, 128
        %1159 = vxpose.xlu0.b32.cont [13/16] 0.0, 128
        %1160 = vxpose.xlu0.b32.cont [14/16] 0.0, 128
        %1161 = vxpose.xlu0.b32.cont [15/16] 0.0, 128
        %1162 = vxpose.xlu0.b32.end [16/16] 0.0, 128
        %v1163 = vpop.trf.xlu0
        %v1164 = vpop.trf.xlu0
        %v1165 = vpop.trf.xlu0
        %v1166 = vpop.trf.xlu0
        %v1167 = vpop.trf.xlu0
        %v1168 = vpop.trf.xlu0
        %v1169 = vpop.trf.xlu0
        %v1170 = vpop.trf.xlu0
        %v1171 = vpop.trf.xlu0
        %v1172 = vpop.trf.xlu0
        %v1173 = vpop.trf.xlu0
        %v1174 = vpop.trf.xlu0
        %v1175 = vpop.trf.xlu0
        %v1176 = vpop.trf.xlu0
        %v1177 = vpop.trf.xlu0
        %v1178 = vpop.trf.xlu0
        %v1179 = vlaneseq
        %v1180 = vshrl.u32 %v1179, 7
        %v1181 = vsub.s32 0, %v1180
        %v1182 = vrot.slane %v1163, %v1181
        %v1183 = vadd.f32 %v1073, %v1182
        %v1184 = vmul.f32 %v1144, 2.0
        %v1185 = vsub.f32 %v1183, %v1184
        %v1186 = vmax.f32 %v1185, 0.0
        %v1187 = vld [vmem:[%s4] sm:$0xff]
        %v1188 = vld [vmem:[%s4 + $0x8] sm:$0xff]
        %v1189 = vld [vmem:[%s4 + $0x10] sm:$0xff]
        %v1190 = vld [vmem:[%s4 + $0x18] sm:$0xff]
        %vm1191 = vcmask 261120
        %v1193 = vsel %vm1191, %v1066, 0
        %1195 = vmatprep.subr.mxu0 0.0
        %1196 = vmatpush1.msra.mxu0 0.0
        %1197 = vmatprep.subr.mxu0 0.0
        %1198 = vmatpush1.msra.mxu0 0.0
        %1199 = vmatprep.subr.mxu0 0.0
        %1200 = vmatpush1.msra.mxu0 0.0
        %1201 = vmatprep.subr.mxu0 0.0
        %1202 = vmatpush1.msra.mxu0 0.0
        %1203 = vmatprep.subr.mxu0 0.0
        %1204 = vmatpush1.msra.mxu0 0.0
        %1205 = vmatprep.subr.mxu0 0.0
        %1206 = vmatpush1.msra.mxu0 0.0
        %1207 = vmatprep.subr.mxu0 0.0
        %1208 = vmatpush1.msra.mxu0 0.0
        %1209 = vmatprep.subr.mxu0 0.0
        %1210 = vmatpush1.msra.mxu0 0.0
        %1211 = vmatprep.subr.mxu0 0.0
        %1212 = vmatpush1.msra.mxu0 0.0
        %1213 = vmatprep.subr.mxu0 0.0
        %1214 = vmatpush1.msra.mxu0 0.0
        %1215 = vmatprep.subr.mxu0 0.0
        %1216 = vmatpush1.msra.mxu0 0.0
        %1217 = vmatprep.subr.mxu0 0.0
        %1218 = vmatpush1.msra.mxu0 0.0
        %1219 = vmatprep.subr.mxu0 0.0
        %1220 = vmatpush1.msra.mxu0 %v1190
        %1221 = vmatprep.subr.mxu0 0.0
        %1222 = vmatpush1.msra.mxu0 %v1189
        %1223 = vmatprep.subr.mxu0 0.0
        %1224 = vmatpush1.msra.mxu0 %v1188
        %1225 = vmatprep.subr.mxu0 0.0
        %1226 = vmatpush1.msra.mxu0 %v1187
        %1227 = vmatprep.subr.mxu0 0.0
        %1228 = vmatpush2.msra.mxu0 0.0
        %1229 = vmatprep.subr.mxu0 0.0
        %1230 = vmatpush2.msra.mxu0 0.0
        %1231 = vmatprep.subr.mxu0 0.0
        %1232 = vmatpush2.msra.mxu0 0.0
        %1233 = vmatprep.subr.mxu0 0.0
        %1234 = vmatpush2.msra.mxu0 0.0
        %1235 = vmatprep.subr.mxu0 0.0
        %1236 = vmatpush2.msra.mxu0 0.0
        %1237 = vmatprep.subr.mxu0 0.0
        %1238 = vmatpush2.msra.mxu0 0.0
        %1239 = vmatprep.subr.mxu0 0.0
        %1240 = vmatpush2.msra.mxu0 0.0
        %1241 = vmatprep.subr.mxu0 0.0
        %1242 = vmatpush2.msra.mxu0 0.0
        %1243 = vmatprep.subr.mxu0 0.0
        %1244 = vmatpush2.msra.mxu0 0.0
        %1245 = vmatprep.subr.mxu0 0.0
        %1246 = vmatpush2.msra.mxu0 0.0
        %1247 = vmatprep.subr.mxu0 0.0
        %1248 = vmatpush2.msra.mxu0 0.0
        %1249 = vmatprep.subr.mxu0 0.0
        %1250 = vmatpush2.msra.mxu0 0.0
        %1251 = vmatprep.subr.mxu0 0.0
        %1252 = vmatpush2.msra.mxu0 0.0
        %1253 = vmatprep.subr.mxu0 0.0
        %1254 = vmatpush2.msra.mxu0 0.0
        %1255 = vmatprep.subr.mxu0 0.0
        %1256 = vmatpush2.msra.mxu0 0.0
        %1257 = vmatprep.subr.mxu0 0.0
        %1258 = vmatpush2.msra.mxu0 0.0
        %1259 = vmatprep.mubr.f32.mxu0 0.0
        %1260 = vmatmul.mubr.f32.gmra.mxu0 %v1193
        %v1261 = vpop.f32.mrf.mxu0
        %v1262 = vadd.f32 0.0, %v1261
        %v1263 = vpop.f32.mrf.mxu0
        %1264 = vdwg.mxu0
        %v1265 = vld [vmem:[#allocation8] sm:$0x1]
        %v1266 = vld [vmem:[#allocation10] sm:$0x1]
        %v1268 = vcombine.high %v1262, %v1262
        %v1270 = vunpack.c.l.s4 1966171168
        %v1271 = vunpack.c.0.s8 %v1270
        %v1272 = vlaneseq
        %v1273 = vshrl.u32 %v1272, 7
        %v1274 = vsub.s32 %v1271, %v1273
        %v1275 = vrot.slane %v1262, %v1274
        %v1277 = vunpack.c.l.s4 1966171168
        %v1278 = vunpack.c.0.s8 %v1277
        %v1279 = vlaneseq
        %v1280 = vshrl.u32 %v1279, 7
        %v1281 = vsub.s32 %v1278, %v1280
        %v1282 = vrot.slane %v1268, %v1281
        %v1283 = vcombine.high %v1275, %v1275
        %v1284 = vcombine.high %v1282, %v1282
        %v1286 = vunpack.c.l.s4 1966171168
        %v1287 = vunpack.c.0.s8 %v1286
        %v1288 = vlaneseq
        %v1289 = vshrl.u32 %v1288, 7
        %v1290 = vsub.s32 %v1287, %v1289
        %v1291 = vrot.slane %v1275, %v1290
        %v1293 = vunpack.c.l.s4 1966171168
        %v1294 = vunpack.c.0.s8 %v1293
        %v1295 = vlaneseq
        %v1296 = vshrl.u32 %v1295, 7
        %v1297 = vsub.s32 %v1294, %v1296
        %v1298 = vrot.slane %v1282, %v1297
        %v1300 = vunpack.c.l.s4 1966171168
        %v1301 = vunpack.c.0.s8 %v1300
        %v1302 = vlaneseq
        %v1303 = vshrl.u32 %v1302, 7
        %v1304 = vsub.s32 %v1301, %v1303
        %v1305 = vrot.slane %v1283, %v1304
        %v1307 = vunpack.c.l.s4 1966171168
        %v1308 = vunpack.c.0.s8 %v1307
        %v1309 = vlaneseq
        %v1310 = vshrl.u32 %v1309, 7
        %v1311 = vsub.s32 %v1308, %v1310
        %v1312 = vrot.slane %v1284, %v1311
        %v1313 = vcombine.high %v1291, %v1291
        %v1314 = vcombine.high %v1298, %v1298
        %v1315 = vcombine.high %v1305, %v1305
        %v1316 = vcombine.high %v1312, %v1312
        %v1317 = vlaneseq
        %v1318 = vshrl.u32 %v1317, 7
        %v1319 = vsub.s32 0, %v1318
        %v1320 = vrot.slane %v1291, %v1319
        %v1321 = vlaneseq
        %v1322 = vshrl.u32 %v1321, 7
        %v1323 = vsub.s32 0, %v1322
        %v1324 = vrot.slane %v1305, %v1323
        %v1325 = vlaneseq
        %v1326 = vshrl.u32 %v1325, 7
        %v1327 = vsub.s32 0, %v1326
        %v1328 = vrot.slane %v1313, %v1327
        %v1329 = vlaneseq
        %v1330 = vshrl.u32 %v1329, 7
        %v1331 = vsub.s32 0, %v1330
        %v1332 = vrot.slane %v1315, %v1331
        %v1333 = vlaneseq
        %v1334 = vshrl.u32 %v1333, 7
        %v1335 = vsub.s32 0, %v1334
        %v1336 = vrot.slane %v1298, %v1335
        %v1337 = vlaneseq
        %v1338 = vshrl.u32 %v1337, 7
        %v1339 = vsub.s32 0, %v1338
        %v1340 = vrot.slane %v1312, %v1339
        %v1341 = vlaneseq
        %v1342 = vshrl.u32 %v1341, 7
        %v1343 = vsub.s32 0, %v1342
        %v1344 = vrot.slane %v1314, %v1343
        %v1345 = vlaneseq
        %v1346 = vshrl.u32 %v1345, 7
        %v1347 = vsub.s32 0, %v1346
        %v1348 = vrot.slane %v1316, %v1347
        %1357 = vrot.lane.b32.xlu0 %v1262, 96
        %v1358 = vpop.permute.xlu0 %1357
        %v1360 = vadd.f32 %v1320, %v1358
        %v1361 = vadd.f32 %v1324, %v1358
        %v1362 = vadd.f32 %v1328, %v1358
        %v1363 = vadd.f32 %v1332, %v1358
        %v1364 = vadd.f32 %v1336, %v1358
        %v1365 = vadd.f32 %v1340, %v1358
        %v1366 = vadd.f32 %v1344, %v1358
        %v1367 = vadd.f32 %v1348, %v1358
        %v1368 = vlaneseq
        %v1369 = vshrl.u32 %v1368, 7
        %v1370 = vsub.s32 0, %v1369
        %v1371 = vrot.slane %v1186, %v1370
        %1373 = vbcast.lane.b32.xlu0 %v1371, 256
        %v1374 = vpop.permute.xlu0 %1373
        %v1375 = vlaneseq
        %v1376 = vshrl.u32 %v1375, 7
        %v1377 = vsub.s32 1, %v1376
        %v1378 = vrot.slane %v1186, %v1377
        %1380 = vbcast.lane.b32.xlu0 %v1378, 256
        %v1381 = vpop.permute.xlu0 %1380
        %v1382 = vlaneseq
        %v1383 = vshrl.u32 %v1382, 7
        %v1384 = vsub.s32 2, %v1383
        %v1385 = vrot.slane %v1186, %v1384
        %1387 = vbcast.lane.b32.xlu0 %v1385, 256
        %v1388 = vpop.permute.xlu0 %1387
        %v1389 = vlaneseq
        %v1390 = vshrl.u32 %v1389, 7
        %v1391 = vsub.s32 3, %v1390
        %v1392 = vrot.slane %v1186, %v1391
        %1394 = vbcast.lane.b32.xlu0 %v1392, 256
        %v1395 = vpop.permute.xlu0 %1394
        %v1396 = vlaneseq
        %v1397 = vshrl.u32 %v1396, 7
        %v1398 = vsub.s32 4, %v1397
        %v1399 = vrot.slane %v1186, %v1398
        %1401 = vbcast.lane.b32.xlu0 %v1399, 256
        %v1402 = vpop.permute.xlu0 %1401
        %v1403 = vlaneseq
        %v1404 = vshrl.u32 %v1403, 7
        %v1405 = vsub.s32 5, %v1404
        %v1406 = vrot.slane %v1186, %v1405
        %1408 = vbcast.lane.b32.xlu0 %v1406, 256
        %v1409 = vpop.permute.xlu0 %1408
        %v1410 = vlaneseq
        %v1411 = vshrl.u32 %v1410, 7
        %v1412 = vsub.s32 6, %v1411
        %v1413 = vrot.slane %v1186, %v1412
        %1415 = vbcast.lane.b32.xlu0 %v1413, 256
        %v1416 = vpop.permute.xlu0 %1415
        %v1417 = vlaneseq
        %v1418 = vshrl.u32 %v1417, 7
        %v1419 = vsub.s32 7, %v1418
        %v1420 = vrot.slane %v1186, %v1419
        %1422 = vbcast.lane.b32.xlu0 %v1420, 256
        %v1423 = vpop.permute.xlu0 %1422
        %v1425 = vlaneseq
        %v1426 = vshrl.u32 %v1425, 7
        %v1427 = vsub.s32 0, %v1426
        %v1428 = vrot.slane %v1265, %v1427
        %v1430 = vmul.f32 %v1374, %v1428
        %v1431 = vmul.f32 %v1381, %v1428
        %v1432 = vmul.f32 %v1388, %v1428
        %v1433 = vmul.f32 %v1395, %v1428
        %v1434 = vmul.f32 %v1402, %v1428
        %v1435 = vmul.f32 %v1409, %v1428
        %v1436 = vmul.f32 %v1416, %v1428
        %v1437 = vmul.f32 %v1423, %v1428
        %v1438 = vadd.f32 %v1360, %v1430
        %v1439 = vadd.f32 %v1361, %v1431
        %v1440 = vadd.f32 %v1362, %v1432
        %v1441 = vadd.f32 %v1363, %v1433
        %v1442 = vadd.f32 %v1364, %v1434
        %v1443 = vadd.f32 %v1365, %v1435
        %v1444 = vadd.f32 %v1366, %v1436
        %v1445 = vadd.f32 %v1367, %v1437
        %v1447 = vlaneseq
        %v1448 = vshrl.u32 %v1447, 7
        %v1449 = vsub.s32 0, %v1448
        %v1450 = vrot.slane %v1266, %v1449
        %v1452 = vadd.f32 %v1438, %v1450
        %v1453 = vadd.f32 %v1439, %v1450
        %v1454 = vadd.f32 %v1440, %v1450
        %v1455 = vadd.f32 %v1441, %v1450
        %v1456 = vadd.f32 %v1442, %v1450
        %v1457 = vadd.f32 %v1443, %v1450
        %v1458 = vadd.f32 %v1444, %v1450
        %v1459 = vadd.f32 %v1445, %v1450
        %v1460 = vsub.f32 0.0, %v1452
        %v1461 = vsub.f32 0.0, %v1453
        %v1462 = vsub.f32 0.0, %v1454
        %v1463 = vsub.f32 0.0, %v1455
        %v1464 = vsub.f32 0.0, %v1456
        %v1465 = vsub.f32 0.0, %v1457
        %v1466 = vsub.f32 0.0, %v1458
        %v1467 = vsub.f32 0.0, %v1459
        %v1468 = vmul.f32 %v1460, 1.442695
        %v1469 = vpow.pop %v1468
        %v1470 = vmul.f32 %v1461, 1.442695
        %v1471 = vpow.pop %v1470
        %v1472 = vmul.f32 %v1462, 1.442695
        %v1473 = vpow.pop %v1472
        %v1474 = vmul.f32 %v1463, 1.442695
        %v1475 = vpow.pop %v1474
        %v1476 = vmul.f32 %v1464, 1.442695
        %v1477 = vpow.pop %v1476
        %v1478 = vmul.f32 %v1465, 1.442695
        %v1479 = vpow.pop %v1478
        %v1480 = vmul.f32 %v1466, 1.442695
        %v1481 = vpow.pop %v1480
        %v1482 = vmul.f32 %v1467, 1.442695
        %v1483 = vpow.pop %v1482
        %v1484 = vadd.f32 %v1469, 1.0
        %v1485 = vadd.f32 %v1471, 1.0
        %v1486 = vadd.f32 %v1473, 1.0
        %v1487 = vadd.f32 %v1475, 1.0
        %v1488 = vadd.f32 %v1477, 1.0
        %v1489 = vadd.f32 %v1479, 1.0
        %v1490 = vadd.f32 %v1481, 1.0
        %v1491 = vadd.f32 %v1483, 1.0
        %v1492 = vrcp.pop %v1484
        %v1493 = vrcp.pop %v1485
        %v1494 = vrcp.pop %v1486
        %v1495 = vrcp.pop %v1487
        %v1496 = vrcp.pop %v1488
        %v1497 = vrcp.pop %v1489
        %v1498 = vrcp.pop %v1490
        %v1499 = vrcp.pop %v1491
        %v1500 = vmul.f32 %v1452, %v1492
        %v1501 = vmul.f32 %v1453, %v1493
        %v1502 = vmul.f32 %v1454, %v1494
        %v1503 = vmul.f32 %v1455, %v1495
        %v1504 = vmul.f32 %v1456, %v1496
        %v1505 = vmul.f32 %v1457, %v1497
        %v1506 = vmul.f32 %v1458, %v1498
        %v1507 = vmul.f32 %v1459, %v1499
        %v1508 = vpack.c.bf16 %v1500, %v1500
        %v1509 = vpack.c.bf16 %v1501, %v1501
        %v1510 = vpack.c.bf16 %v1502, %v1502
        %v1511 = vpack.c.bf16 %v1503, %v1503
        %v1512 = vpack.c.bf16 %v1504, %v1504
        %v1513 = vpack.c.bf16 %v1505, %v1505
        %v1514 = vpack.c.bf16 %v1506, %v1506
        %v1515 = vpack.c.bf16 %v1507, %v1507
        %v1516 = vld [vmem:[%s7] sm:$0xf]
        %v1517 = vld [vmem:[%s7 + $0x4] sm:$0xf]
        %v1518 = vld [vmem:[%s7 + $0x8] sm:$0xf]
        %v1519 = vld [vmem:[%s7 + $0xc] sm:$0xf]
        %v1520 = vld [vmem:[#allocation11] sm:$0x1]
        %v1522 = vlaneseq
        %v1523 = vshrl.u32 %v1522, 7
        %v1524 = vsub.s32 0, %v1523
        %v1525 = vrot.slane %v1520, %v1524
        %v1535 = vunpack.c.l.b16 %v1508
        %v1536 = vunpack.c.l.b16 %v1509
        %v1537 = vunpack.c.l.b16 %v1510
        %v1538 = vunpack.c.l.b16 %v1511
        %v1539 = vunpack.c.l.b16 %v1512
        %v1540 = vunpack.c.l.b16 %v1513
        %v1541 = vunpack.c.l.b16 %v1514
        %v1542 = vunpack.c.l.b16 %v1515
        %v1543 = vpack.c.b16 %v1536, %v1535
        %v1544 = vpack.c.b16 %v1538, %v1537
        %v1545 = vpack.c.b16 %v1540, %v1539
        %v1546 = vpack.c.b16 %v1542, %v1541
        %v1551 = vunpack.c.l.b16 %v1516
        %v1552 = vunpack.c.l.b16 %v1517
        %v1553 = vunpack.c.l.b16 %v1518
        %v1554 = vunpack.c.l.b16 %v1519
        %v1555 = vpack.c.b16 %v1552, %v1551
        %v1556 = vpack.c.b16 %v1554, %v1553
        %v1560 = vsel %vm1191, %v1543, 0
        %v1563 = vsel %vm1191, %v1544, 0
        %v1566 = vsel %vm1191, %v1545, 0
        %v1569 = vsel %vm1191, %v1546, 0
        %1571 = vmatprep.subr.bf16.mxu0 0
        %1572 = vmatpush1.bf16.msra.mxu0 0
        %1573 = vmatprep.subr.bf16.mxu0 0
        %1574 = vmatpush1.bf16.msra.mxu0 0
        %1575 = vmatprep.subr.bf16.mxu0 0
        %1576 = vmatpush1.bf16.msra.mxu0 0
        %1577 = vmatprep.subr.bf16.mxu0 0
        %1578 = vmatpush1.bf16.msra.mxu0 0
        %1579 = vmatprep.subr.bf16.mxu0 0
        %1580 = vmatpush1.bf16.msra.mxu0 0
        %1581 = vmatprep.subr.bf16.mxu0 0
        %1582 = vmatpush1.bf16.msra.mxu0 0
        %1583 = vmatprep.subr.bf16.mxu0 0
        %1584 = vmatpush1.bf16.msra.mxu0 %v1556
        %1585 = vmatprep.subr.bf16.mxu0 0
        %1586 = vmatpush1.bf16.msra.mxu0 %v1555
        %1587 = vmatprep.subr.bf16.mxu0 0
        %1588 = vmatpush2.bf16.msra.mxu0 0
        %1589 = vmatprep.subr.bf16.mxu0 0
        %1590 = vmatpush2.bf16.msra.mxu0 0
        %1591 = vmatprep.subr.bf16.mxu0 0
        %1592 = vmatpush2.bf16.msra.mxu0 0
        %1593 = vmatprep.subr.bf16.mxu0 0
        %1594 = vmatpush2.bf16.msra.mxu0 0
        %1595 = vmatprep.subr.bf16.mxu0 0
        %1596 = vmatpush2.bf16.msra.mxu0 0
        %1597 = vmatprep.subr.bf16.mxu0 0
        %1598 = vmatpush2.bf16.msra.mxu0 0
        %1599 = vmatprep.subr.bf16.mxu0 0
        %1600 = vmatpush2.bf16.msra.mxu0 0
        %1601 = vmatprep.subr.bf16.mxu0 0
        %1602 = vmatpush2.bf16.msra.mxu0 0
        %1603 = vmatprep.mubr.bf16.mxu0 0
        %1604 = vmatmul.mubr.bf16.gmra.mxu0 %v1560
        %v1605 = vpop.f32.mrf.mxu0
        %v1606 = vadd.f32 %v1525, %v1605
        %v1607 = vpop.f32.mrf.mxu0
        %v1608 = vpop.f32.mrf.mxu0
        %v1609 = vadd.f32 %v1525, %v1608
        %v1610 = vpop.f32.mrf.mxu0
        %1611 = vmatprep.mubr.bf16.mxu0 0
        %1612 = vmatmul.mubr.bf16.gmra.mxu0 %v1563
        %v1613 = vpop.f32.mrf.mxu0
        %v1614 = vadd.f32 %v1525, %v1613
        %v1615 = vpop.f32.mrf.mxu0
        %v1616 = vpop.f32.mrf.mxu0
        %v1617 = vadd.f32 %v1525, %v1616
        %v1618 = vpop.f32.mrf.mxu0
        %1619 = vmatprep.mubr.bf16.mxu0 0
        %1620 = vmatmul.mubr.bf16.gmra.mxu0 %v1566
        %v1621 = vpop.f32.mrf.mxu0
        %v1622 = vadd.f32 %v1525, %v1621
        %v1623 = vpop.f32.mrf.mxu0
        %v1624 = vpop.f32.mrf.mxu0
        %v1625 = vadd.f32 %v1525, %v1624
        %v1626 = vpop.f32.mrf.mxu0
        %1627 = vmatprep.mubr.bf16.mxu0 0
        %1628 = vmatmul.mubr.bf16.gmra.mxu0 %v1569
        %v1629 = vpop.f32.mrf.mxu0
        %v1630 = vadd.f32 %v1525, %v1629
        %v1631 = vpop.f32.mrf.mxu0
        %v1632 = vpop.f32.mrf.mxu0
        %v1633 = vadd.f32 %v1525, %v1632
        %v1634 = vpop.f32.mrf.mxu0
        %1635 = vdwg.mxu0
        %v1636 = vsub.f32 0.0, %v1606
        %v1637 = vsub.f32 0.0, %v1609
        %v1638 = vsub.f32 0.0, %v1614
        %v1639 = vsub.f32 0.0, %v1617
        %v1640 = vsub.f32 0.0, %v1622
        %v1641 = vsub.f32 0.0, %v1625
        %v1642 = vsub.f32 0.0, %v1630
        %v1643 = vsub.f32 0.0, %v1633
        %v1644 = vmul.f32 %v1636, 1.442695
        %v1645 = vpow.pop %v1644
        %v1646 = vmul.f32 %v1637, 1.442695
        %v1647 = vpow.pop %v1646
        %v1648 = vmul.f32 %v1638, 1.442695
        %v1649 = vpow.pop %v1648
        %v1650 = vmul.f32 %v1639, 1.442695
        %v1651 = vpow.pop %v1650
        %v1652 = vmul.f32 %v1640, 1.442695
        %v1653 = vpow.pop %v1652
        %v1654 = vmul.f32 %v1641, 1.442695
        %v1655 = vpow.pop %v1654
        %v1656 = vmul.f32 %v1642, 1.442695
        %v1657 = vpow.pop %v1656
        %v1658 = vmul.f32 %v1643, 1.442695
        %v1659 = vpow.pop %v1658
        %v1660 = vadd.f32 %v1645, 1.0
        %v1661 = vadd.f32 %v1647, 1.0
        %v1662 = vadd.f32 %v1649, 1.0
        %v1663 = vadd.f32 %v1651, 1.0
        %v1664 = vadd.f32 %v1653, 1.0
        %v1665 = vadd.f32 %v1655, 1.0
        %v1666 = vadd.f32 %v1657, 1.0
        %v1667 = vadd.f32 %v1659, 1.0
        %v1668 = vrcp.pop %v1660
        %v1669 = vrcp.pop %v1661
        %v1670 = vrcp.pop %v1662
        %v1671 = vrcp.pop %v1663
        %v1672 = vrcp.pop %v1664
        %v1673 = vrcp.pop %v1665
        %v1674 = vrcp.pop %v1666
        %v1675 = vrcp.pop %v1667
        %v1676 = vmul.f32 %v1606, %v1668
        %v1677 = vmul.f32 %v1609, %v1669
        %v1678 = vmul.f32 %v1614, %v1670
        %v1679 = vmul.f32 %v1617, %v1671
        %v1680 = vmul.f32 %v1622, %v1672
        %v1681 = vmul.f32 %v1625, %v1673
        %v1682 = vmul.f32 %v1630, %v1674
        %v1683 = vmul.f32 %v1633, %v1675
        %v1684 = vpack.c.bf16 %v1677, %v1676
        %v1685 = vpack.c.bf16 %v1679, %v1678
        %v1686 = vpack.c.bf16 %v1681, %v1680
        %v1687 = vpack.c.bf16 %v1683, %v1682
        %v1688 = vld [vmem:[%s11] sm:$0xf]
        %v1689 = vld [vmem:[%s11 + $0x4] sm:$0xf]
        %v1690 = vld [vmem:[%s11 + $0x8] sm:$0xf]
        %v1691 = vld [vmem:[%s11 + $0xc] sm:$0xf]
        %v1696 = vunpack.c.l.b16 %v1688
        %v1697 = vunpack.c.l.b16 %v1689
        %v1698 = vunpack.c.l.b16 %v1690
        %v1699 = vunpack.c.l.b16 %v1691
        %v1700 = vpack.c.b16 %v1697, %v1696
        %v1701 = vpack.c.b16 %v1699, %v1698
        %v1705 = vsel %vm1191, %v1684, 0
        %v1708 = vsel %vm1191, %v1685, 0
        %v1711 = vsel %vm1191, %v1686, 0
        %v1714 = vsel %vm1191, %v1687, 0
        %1716 = vmatprep.subr.bf16.mxu0 0
        %1717 = vmatpush1.bf16.msra.mxu0 0
        %1718 = vmatprep.subr.bf16.mxu0 0
        %1719 = vmatpush1.bf16.msra.mxu0 0
        %1720 = vmatprep.subr.bf16.mxu0 0
        %1721 = vmatpush1.bf16.msra.mxu0 0
        %1722 = vmatprep.subr.bf16.mxu0 0
        %1723 = vmatpush1.bf16.msra.mxu0 0
        %1724 = vmatprep.subr.bf16.mxu0 0
        %1725 = vmatpush1.bf16.msra.mxu0 0
        %1726 = vmatprep.subr.bf16.mxu0 0
        %1727 = vmatpush1.bf16.msra.mxu0 0
        %1728 = vmatprep.subr.bf16.mxu0 0
        %1729 = vmatpush1.bf16.msra.mxu0 %v1701
        %1730 = vmatprep.subr.bf16.mxu0 0
        %1731 = vmatpush1.bf16.msra.mxu0 %v1700
        %1732 = vmatprep.subr.bf16.mxu0 0
        %1733 = vmatpush2.bf16.msra.mxu0 0
        %1734 = vmatprep.subr.bf16.mxu0 0
        %1735 = vmatpush2.bf16.msra.mxu0 0
        %1736 = vmatprep.subr.bf16.mxu0 0
        %1737 = vmatpush2.bf16.msra.mxu0 0
        %1738 = vmatprep.subr.bf16.mxu0 0
        %1739 = vmatpush2.bf16.msra.mxu0 0
        %1740 = vmatprep.subr.bf16.mxu0 0
        %1741 = vmatpush2.bf16.msra.mxu0 0
        %1742 = vmatprep.subr.bf16.mxu0 0
        %1743 = vmatpush2.bf16.msra.mxu0 0
        %1744 = vmatprep.subr.bf16.mxu0 0
        %1745 = vmatpush2.bf16.msra.mxu0 0
        %1746 = vmatprep.subr.bf16.mxu0 0
        %1747 = vmatpush2.bf16.msra.mxu0 0
        %1748 = vmatprep.mubr.bf16.mxu0 0
        %1749 = vmatmul.mubr.bf16.gmra.mxu0 %v1705
        %v1750 = vpop.f32.mrf.mxu0
        %v1751 = vadd.f32 0.0, %v1750
        %v1752 = vpop.f32.mrf.mxu0
        %v1753 = vpop.f32.mrf.mxu0
        %v1754 = vadd.f32 0.0, %v1753
        %v1755 = vpop.f32.mrf.mxu0
        %1756 = vmatprep.mubr.bf16.mxu0 0
        %1757 = vmatmul.mubr.bf16.gmra.mxu0 %v1708
        %v1758 = vpop.f32.mrf.mxu0
        %v1759 = vadd.f32 0.0, %v1758
        %v1760 = vpop.f32.mrf.mxu0
        %v1761 = vpop.f32.mrf.mxu0
        %v1762 = vadd.f32 0.0, %v1761
        %v1763 = vpop.f32.mrf.mxu0
        %1764 = vmatprep.mubr.bf16.mxu0 0
        %1765 = vmatmul.mubr.bf16.gmra.mxu0 %v1711
        %v1766 = vpop.f32.mrf.mxu0
        %v1767 = vadd.f32 0.0, %v1766
        %v1768 = vpop.f32.mrf.mxu0
        %v1769 = vpop.f32.mrf.mxu0
        %v1770 = vadd.f32 0.0, %v1769
        %v1771 = vpop.f32.mrf.mxu0
        %1772 = vmatprep.mubr.bf16.mxu0 0
        %1773 = vmatmul.mubr.bf16.gmra.mxu0 %v1714
        %v1774 = vpop.f32.mrf.mxu0
        %v1775 = vadd.f32 0.0, %v1774
        %v1776 = vpop.f32.mrf.mxu0
        %v1777 = vpop.f32.mrf.mxu0
        %v1778 = vadd.f32 0.0, %v1777
        %v1779 = vpop.f32.mrf.mxu0
        %1780 = vdwg.mxu0
        %v1781 = vld [vmem:[%s10] sm:$0x1]
        %v1783 = vlaneseq
        %v1784 = vshrl.u32 %v1783, 7
        %v1785 = vsub.s32 0, %v1784
        %v1786 = vrot.slane %v1781, %v1785
        %1787 = vrot.lane.b32.xlu0 %v1786, 32
        %v1788 = vpop.permute.xlu0 %1787
        %v1790 = vadd.f32 %v1751, %v1788
        %v1791 = vadd.f32 %v1754, %v1788
        %v1792 = vadd.f32 %v1759, %v1788
        %v1793 = vadd.f32 %v1762, %v1788
        %v1794 = vadd.f32 %v1767, %v1788
        %v1795 = vadd.f32 %v1770, %v1788
        %v1796 = vadd.f32 %v1775, %v1788
        %v1797 = vadd.f32 %v1778, %v1788
        %v1798 = vsub.f32 0.0, %v1790
        %v1799 = vsub.f32 0.0, %v1791
        %v1800 = vsub.f32 0.0, %v1792
        %v1801 = vsub.f32 0.0, %v1793
        %v1802 = vsub.f32 0.0, %v1794
        %v1803 = vsub.f32 0.0, %v1795
        %v1804 = vsub.f32 0.0, %v1796
        %v1805 = vsub.f32 0.0, %v1797
        %v1806 = vmul.f32 %v1798, 1.442695
        %v1807 = vpow.pop %v1806
        %v1808 = vmul.f32 %v1799, 1.442695
        %v1809 = vpow.pop %v1808
        %v1810 = vmul.f32 %v1800, 1.442695
        %v1811 = vpow.pop %v1810
        %v1812 = vmul.f32 %v1801, 1.442695
        %v1813 = vpow.pop %v1812
        %v1814 = vmul.f32 %v1802, 1.442695
        %v1815 = vpow.pop %v1814
        %v1816 = vmul.f32 %v1803, 1.442695
        %v1817 = vpow.pop %v1816
        %v1818 = vmul.f32 %v1804, 1.442695
        %v1819 = vpow.pop %v1818
        %v1820 = vmul.f32 %v1805, 1.442695
        %v1821 = vpow.pop %v1820
        %v1822 = vadd.f32 %v1807, 1.0
        %v1823 = vadd.f32 %v1809, 1.0
        %v1824 = vadd.f32 %v1811, 1.0
        %v1825 = vadd.f32 %v1813, 1.0
        %v1826 = vadd.f32 %v1815, 1.0
        %v1827 = vadd.f32 %v1817, 1.0
        %v1828 = vadd.f32 %v1819, 1.0
        %v1829 = vadd.f32 %v1821, 1.0
        %v1830 = vrcp.pop %v1822
        %v1831 = vrcp.pop %v1823
        %v1832 = vrcp.pop %v1824
        %v1833 = vrcp.pop %v1825
        %v1834 = vrcp.pop %v1826
        %v1835 = vrcp.pop %v1827
        %v1836 = vrcp.pop %v1828
        %v1837 = vrcp.pop %v1829
        %1839 = vset.pattern.permute.xlu0 32
        %1840 = vperm.xlu0 %1839, %v1830
        %v1841 = vpop.permute.xlu0 %1840
        %1844 = vset.pattern.permute.xlu0 32
        %1845 = vperm.xlu0 %1844, %v1831
        %v1846 = vpop.permute.xlu0 %1845
        %1849 = vset.pattern.permute.xlu0 32
        %1850 = vperm.xlu0 %1849, %v1832
        %v1851 = vpop.permute.xlu0 %1850
        %1854 = vset.pattern.permute.xlu0 32
        %1855 = vperm.xlu0 %1854, %v1833
        %v1856 = vpop.permute.xlu0 %1855
        %1859 = vset.pattern.permute.xlu0 32
        %1860 = vperm.xlu0 %1859, %v1834
        %v1861 = vpop.permute.xlu0 %1860
        %1864 = vset.pattern.permute.xlu0 32
        %1865 = vperm.xlu0 %1864, %v1835
        %v1866 = vpop.permute.xlu0 %1865
        %1869 = vset.pattern.permute.xlu0 32
        %1870 = vperm.xlu0 %1869, %v1836
        %v1871 = vpop.permute.xlu0 %1870
        %1874 = vset.pattern.permute.xlu0 32
        %1875 = vperm.xlu0 %1874, %v1837
        %v1876 = vpop.permute.xlu0 %1875
        %v1878 = vmul.f32 %v1841, %v1751
        %v1879 = vmul.f32 %v1846, %v1754
        %v1880 = vmul.f32 %v1851, %v1759
        %v1881 = vmul.f32 %v1856, %v1762
        %v1882 = vmul.f32 %v1861, %v1767
        %v1883 = vmul.f32 %v1866, %v1770
        %v1884 = vmul.f32 %v1871, %v1775
        %v1885 = vmul.f32 %v1876, %v1778
        %v1886 = vld [vmem:[#allocation13] sm:$0x1]
        %v1888 = vlaneseq
        %v1889 = vshrl.u32 %v1888, 7
        %v1890 = vsub.s32 0, %v1889
        %v1891 = vrot.slane %v1886, %v1890
        %v1893 = vadd.f32 %v1878, %v1891
        %v1894 = vadd.f32 %v1879, %v1891
        %v1895 = vadd.f32 %v1880, %v1891
        %v1896 = vadd.f32 %v1881, %v1891
        %v1897 = vadd.f32 %v1882, %v1891
        %v1898 = vadd.f32 %v1883, %v1891
        %v1899 = vadd.f32 %v1884, %v1891
        %v1900 = vadd.f32 %v1885, %v1891
        %v1901 = vsub.f32 0.0, %v1893
        %v1902 = vsub.f32 0.0, %v1894
        %v1903 = vsub.f32 0.0, %v1895
        %v1904 = vsub.f32 0.0, %v1896
        %v1905 = vsub.f32 0.0, %v1897
        %v1906 = vsub.f32 0.0, %v1898
        %v1907 = vsub.f32 0.0, %v1899
        %v1908 = vsub.f32 0.0, %v1900
        %v1909 = vmul.f32 %v1901, 1.442695
        %v1910 = vpow.pop %v1909
        %v1911 = vmul.f32 %v1902, 1.442695
        %v1912 = vpow.pop %v1911
        %v1913 = vmul.f32 %v1903, 1.442695
        %v1914 = vpow.pop %v1913
        %v1915 = vmul.f32 %v1904, 1.442695
        %v1916 = vpow.pop %v1915
        %v1917 = vmul.f32 %v1905, 1.442695
        %v1918 = vpow.pop %v1917
        %v1919 = vmul.f32 %v1906, 1.442695
        %v1920 = vpow.pop %v1919
        %v1921 = vmul.f32 %v1907, 1.442695
        %v1922 = vpow.pop %v1921
        %v1923 = vmul.f32 %v1908, 1.442695
        %v1924 = vpow.pop %v1923
        %v1925 = vadd.f32 %v1910, 1.0
        %v1926 = vadd.f32 %v1912, 1.0
        %v1927 = vadd.f32 %v1914, 1.0
        %v1928 = vadd.f32 %v1916, 1.0
        %v1929 = vadd.f32 %v1918, 1.0
        %v1930 = vadd.f32 %v1920, 1.0
        %v1931 = vadd.f32 %v1922, 1.0
        %v1932 = vadd.f32 %v1924, 1.0
        %v1933 = vrcp.pop %v1925
        %v1934 = vrcp.pop %v1926
        %v1935 = vrcp.pop %v1927
        %v1936 = vrcp.pop %v1928
        %v1937 = vrcp.pop %v1929
        %v1938 = vrcp.pop %v1930
        %v1939 = vrcp.pop %v1931
        %v1940 = vrcp.pop %v1932
        %v1941 = vmul.f32 %v1893, %v1933
        %v1942 = vmul.f32 %v1894, %v1934
        %v1943 = vmul.f32 %v1895, %v1935
        %v1944 = vmul.f32 %v1896, %v1936
        %v1945 = vmul.f32 %v1897, %v1937
        %v1946 = vmul.f32 %v1898, %v1938
        %v1947 = vmul.f32 %v1899, %v1939
        %v1948 = vmul.f32 %v1900, %v1940
        %v1949 = vunpack.c.l.bf16 %v1684
        %v1950 = vunpack.c.h.bf16 %v1684
        %v1951 = vunpack.c.l.bf16 %v1685
        %v1952 = vunpack.c.h.bf16 %v1685
        %v1953 = vunpack.c.l.bf16 %v1686
        %v1954 = vunpack.c.h.bf16 %v1686
        %v1955 = vunpack.c.l.bf16 %v1687
        %v1956 = vunpack.c.h.bf16 %v1687
        %v1957 = vmul.f32 %v1841, %v1949
        %v1958 = vmul.f32 %v1846, %v1950
        %v1959 = vmul.f32 %v1851, %v1951
        %v1960 = vmul.f32 %v1856, %v1952
        %v1961 = vmul.f32 %v1861, %v1953
        %v1962 = vmul.f32 %v1866, %v1954
        %v1963 = vmul.f32 %v1871, %v1955
        %v1964 = vmul.f32 %v1876, %v1956
        %v1965 = vadd.f32 %v1262, %v1358
        %v1966 = vadd.f32 %v1965, %v1450
        %v1967 = vsub.f32 0.0, %v1966
        %v1968 = vmul.f32 %v1967, 1.442695
        %v1969 = vpow.pop %v1968
        %v1970 = vadd.f32 %v1969, 1.0
        %v1971 = vrcp.pop %v1970
        %v1972 = vmul.f32 %v1966, %v1971
        %v1973 = vpack.c.bf16 %v1972, %v1972
        %v1975 = vsel %vm1191, %v1973, 0
        %1977 = vmatprep.subr.bf16.mxu0 0
        %1978 = vmatpush1.bf16.msra.mxu0 0
        %1979 = vmatprep.subr.bf16.mxu0 0
        %1980 = vmatpush1.bf16.msra.mxu0 0
        %1981 = vmatprep.subr.bf16.mxu0 0
        %1982 = vmatpush1.bf16.msra.mxu0 0
        %1983 = vmatprep.subr.bf16.mxu0 0
        %1984 = vmatpush1.bf16.msra.mxu0 0
        %1985 = vmatprep.subr.bf16.mxu0 0
        %1986 = vmatpush1.bf16.msra.mxu0 0
        %1987 = vmatprep.subr.bf16.mxu0 0
        %1988 = vmatpush1.bf16.msra.mxu0 0
        %1989 = vmatprep.subr.bf16.mxu0 0
        %1990 = vmatpush1.bf16.msra.mxu0 %v1556
        %1991 = vmatprep.subr.bf16.mxu0 0
        %1992 = vmatpush1.bf16.msra.mxu0 %v1555
        %1993 = vmatprep.subr.bf16.mxu0 0
        %1994 = vmatpush2.bf16.msra.mxu0 0
        %1995 = vmatprep.subr.bf16.mxu0 0
        %1996 = vmatpush2.bf16.msra.mxu0 0
        %1997 = vmatprep.subr.bf16.mxu0 0
        %1998 = vmatpush2.bf16.msra.mxu0 0
        %1999 = vmatprep.subr.bf16.mxu0 0
        %2000 = vmatpush2.bf16.msra.mxu0 0
        %2001 = vmatprep.subr.bf16.mxu0 0
        %2002 = vmatpush2.bf16.msra.mxu0 0
        %2003 = vmatprep.subr.bf16.mxu0 0
        %2004 = vmatpush2.bf16.msra.mxu0 0
        %2005 = vmatprep.subr.bf16.mxu0 0
        %2006 = vmatpush2.bf16.msra.mxu0 0
        %2007 = vmatprep.subr.bf16.mxu0 0
        %2008 = vmatpush2.bf16.msra.mxu0 0
        %2009 = vmatprep.mubr.bf16.mxu0 0
        %2010 = vmatmul.mubr.bf16.gmra.mxu0 %v1975
        %v2011 = vpop.f32.mrf.mxu0
        %v2012 = vadd.f32 %v1525, %v2011
        %v2013 = vpop.f32.mrf.mxu0
        %v2014 = vpop.f32.mrf.mxu0
        %v2015 = vpop.f32.mrf.mxu0
        %2016 = vdwg.mxu0
        %v2017 = vsub.f32 0.0, %v2012
        %v2018 = vmul.f32 %v2017, 1.442695
        %v2019 = vpow.pop %v2018
        %v2020 = vadd.f32 %v2019, 1.0
        %v2021 = vrcp.pop %v2020
        %v2022 = vmul.f32 %v2012, %v2021
        %v2023 = vpack.c.bf16 %v2022, %v2022
        %v2024 = vunpack.c.l.bf16 %v2023
        %v2025 = vld [vmem:[%s9] sm:$0xf]
        %v2026 = vld [vmem:[%s9 + $0x4] sm:$0xf]
        %v2027 = vld [vmem:[%s9 + $0x8] sm:$0xf]
        %v2028 = vld [vmem:[%s9 + $0xc] sm:$0xf]
        %v2034 = vunpack.c.l.b16 %v2025
        %v2035 = vunpack.c.l.b16 %v2026
        %v2036 = vunpack.c.l.b16 %v2027
        %v2037 = vunpack.c.l.b16 %v2028
        %v2038 = vpack.c.b16 %v2035, %v2034
        %v2039 = vpack.c.b16 %v2037, %v2036
        %v2043 = vsel %vm1191, %v2023, 0
        %2045 = vmatprep.subr.bf16.mxu0 0
        %2046 = vmatpush1.bf16.msra.mxu0 0
        %2047 = vmatprep.subr.bf16.mxu0 0
        %2048 = vmatpush1.bf16.msra.mxu0 0
        %2049 = vmatprep.subr.bf16.mxu0 0
        %2050 = vmatpush1.bf16.msra.mxu0 0
        %2051 = vmatprep.subr.bf16.mxu0 0
        %2052 = vmatpush1.bf16.msra.mxu0 0
        %2053 = vmatprep.subr.bf16.mxu0 0
        %2054 = vmatpush1.bf16.msra.mxu0 0
        %2055 = vmatprep.subr.bf16.mxu0 0
        %2056 = vmatpush1.bf16.msra.mxu0 0
        %2057 = vmatprep.subr.bf16.mxu0 0
        %2058 = vmatpush1.bf16.msra.mxu0 %v2039
        %2059 = vmatprep.subr.bf16.mxu0 0
        %2060 = vmatpush1.bf16.msra.mxu0 %v2038
        %2061 = vmatprep.subr.bf16.mxu0 0
        %2062 = vmatpush2.bf16.msra.mxu0 0
        %2063 = vmatprep.subr.bf16.mxu0 0
        %2064 = vmatpush2.bf16.msra.mxu0 0
        %2065 = vmatprep.subr.bf16.mxu0 0
        %2066 = vmatpush2.bf16.msra.mxu0 0
        %2067 = vmatprep.subr.bf16.mxu0 0
        %2068 = vmatpush2.bf16.msra.mxu0 0
        %2069 = vmatprep.subr.bf16.mxu0 0
        %2070 = vmatpush2.bf16.msra.mxu0 0
        %2071 = vmatprep.subr.bf16.mxu0 0
        %2072 = vmatpush2.bf16.msra.mxu0 0
        %2073 = vmatprep.subr.bf16.mxu0 0
        %2074 = vmatpush2.bf16.msra.mxu0 0
        %2075 = vmatprep.subr.bf16.mxu0 0
        %2076 = vmatpush2.bf16.msra.mxu0 0
        %2077 = vmatprep.mubr.bf16.mxu0 0
        %2078 = vmatmul.mubr.bf16.gmra.mxu0 %v2043
        %v2079 = vpop.f32.mrf.mxu0
        %v2080 = vadd.f32 %v1786, %v2079
        %v2081 = vpop.f32.mrf.mxu0
        %v2082 = vpop.f32.mrf.mxu0
        %v2083 = vpop.f32.mrf.mxu0
        %2084 = vdwg.mxu0
        %v2085 = vsub.f32 0.0, %v2080
        %v2086 = vmul.f32 %v2085, 1.442695
        %v2087 = vpow.pop %v2086
        %v2088 = vadd.f32 %v2087, 1.0
        %v2089 = vrcp.pop %v2088
        %2091 = vset.pattern.permute.xlu0 0
        %2092 = vperm.xlu0 %2091, %v2089
        %v2093 = vpop.permute.xlu0 %2092
        %v2095 = vmul.f32 %v2024, %v2093
        %v2096 = vpack.c.bf16 %v1942, %v1941
        %v2097 = vpack.c.bf16 %v1944, %v1943
        %v2098 = vpack.c.bf16 %v1946, %v1945
        %v2099 = vpack.c.bf16 %v1948, %v1947
        %v2100 = vld [vmem:[%s13] sm:$0xf]
        %v2101 = vld [vmem:[%s13 + $0x4] sm:$0xf]
        %v2102 = vld [vmem:[%s13 + $0x8] sm:$0xf]
        %v2103 = vld [vmem:[%s13 + $0xc] sm:$0xf]
        %v2108 = vunpack.c.l.b16 %v2100
        %v2109 = vunpack.c.l.b16 %v2101
        %v2110 = vunpack.c.l.b16 %v2102
        %v2111 = vunpack.c.l.b16 %v2103
        %v2112 = vpack.c.b16 %v2109, %v2108
        %v2113 = vpack.c.b16 %v2111, %v2110
        %v2117 = vsel %vm1191, %v2096, 0
        %v2120 = vsel %vm1191, %v2097, 0
        %v2123 = vsel %vm1191, %v2098, 0
        %v2126 = vsel %vm1191, %v2099, 0
        %2128 = vmatprep.subr.bf16.mxu0 0
        %2129 = vmatpush1.bf16.msra.mxu0 0
        %2130 = vmatprep.subr.bf16.mxu0 0
        %2131 = vmatpush1.bf16.msra.mxu0 0
        %2132 = vmatprep.subr.bf16.mxu0 0
        %2133 = vmatpush1.bf16.msra.mxu0 0
        %2134 = vmatprep.subr.bf16.mxu0 0
        %2135 = vmatpush1.bf16.msra.mxu0 0
        %2136 = vmatprep.subr.bf16.mxu0 0
        %2137 = vmatpush1.bf16.msra.mxu0 0
        %2138 = vmatprep.subr.bf16.mxu0 0
        %2139 = vmatpush1.bf16.msra.mxu0 0
        %2140 = vmatprep.subr.bf16.mxu0 0
        %2141 = vmatpush1.bf16.msra.mxu0 %v2113
        %2142 = vmatprep.subr.bf16.mxu0 0
        %2143 = vmatpush1.bf16.msra.mxu0 %v2112
        %2144 = vmatprep.subr.bf16.mxu0 0
        %2145 = vmatpush2.bf16.msra.mxu0 0
        %2146 = vmatprep.subr.bf16.mxu0 0
        %2147 = vmatpush2.bf16.msra.mxu0 0
        %2148 = vmatprep.subr.bf16.mxu0 0
        %2149 = vmatpush2.bf16.msra.mxu0 0
        %2150 = vmatprep.subr.bf16.mxu0 0
        %2151 = vmatpush2.bf16.msra.mxu0 0
        %2152 = vmatprep.subr.bf16.mxu0 0
        %2153 = vmatpush2.bf16.msra.mxu0 0
        %2154 = vmatprep.subr.bf16.mxu0 0
        %2155 = vmatpush2.bf16.msra.mxu0 0
        %2156 = vmatprep.subr.bf16.mxu0 0
        %2157 = vmatpush2.bf16.msra.mxu0 0
        %2158 = vmatprep.subr.bf16.mxu0 0
        %2159 = vmatpush2.bf16.msra.mxu0 0
        %2160 = vmatprep.mubr.bf16.mxu0 0
        %2161 = vmatmul.mubr.bf16.gmra.mxu0 %v2117
        %v2162 = vpop.f32.mrf.mxu0
        %v2163 = vadd.f32 0.0, %v2162
        %v2164 = vpop.f32.mrf.mxu0
        %v2165 = vpop.f32.mrf.mxu0
        %v2166 = vadd.f32 0.0, %v2165
        %v2167 = vpop.f32.mrf.mxu0
        %2168 = vmatprep.mubr.bf16.mxu0 0
        %2169 = vmatmul.mubr.bf16.gmra.mxu0 %v2120
        %v2170 = vpop.f32.mrf.mxu0
        %v2171 = vadd.f32 0.0, %v2170
        %v2172 = vpop.f32.mrf.mxu0
        %v2173 = vpop.f32.mrf.mxu0
        %v2174 = vadd.f32 0.0, %v2173
        %v2175 = vpop.f32.mrf.mxu0
        %2176 = vmatprep.mubr.bf16.mxu0 0
        %2177 = vmatmul.mubr.bf16.gmra.mxu0 %v2123
        %v2178 = vpop.f32.mrf.mxu0
        %v2179 = vadd.f32 0.0, %v2178
        %v2180 = vpop.f32.mrf.mxu0
        %v2181 = vpop.f32.mrf.mxu0
        %v2182 = vadd.f32 0.0, %v2181
        %v2183 = vpop.f32.mrf.mxu0
        %2184 = vmatprep.mubr.bf16.mxu0 0
        %2185 = vmatmul.mubr.bf16.gmra.mxu0 %v2126
        %v2186 = vpop.f32.mrf.mxu0
        %v2187 = vadd.f32 0.0, %v2186
        %v2188 = vpop.f32.mrf.mxu0
        %v2189 = vpop.f32.mrf.mxu0
        %v2190 = vadd.f32 0.0, %v2189
        %v2191 = vpop.f32.mrf.mxu0
        %2192 = vdwg.mxu0
        %2201 = vset.pattern.permute.xlu0 0
        %2202 = vperm.xlu0 %2201, %v2163
        %v2203 = vpop.permute.xlu0 %2202
        %2204 = vset.pattern.permute.xlu0 0
        %2205 = vperm.xlu0 %2204, %v2166
        %v2206 = vpop.permute.xlu0 %2205
        %2207 = vset.pattern.permute.xlu0 0
        %2208 = vperm.xlu0 %2207, %v2171
        %v2209 = vpop.permute.xlu0 %2208
        %2210 = vset.pattern.permute.xlu0 0
        %2211 = vperm.xlu0 %2210, %v2174
        %v2212 = vpop.permute.xlu0 %2211
        %2213 = vset.pattern.permute.xlu0 0
        %2214 = vperm.xlu0 %2213, %v2179
        %v2215 = vpop.permute.xlu0 %2214
        %2216 = vset.pattern.permute.xlu0 0
        %2217 = vperm.xlu0 %2216, %v2182
        %v2218 = vpop.permute.xlu0 %2217
        %2219 = vset.pattern.permute.xlu0 0
        %2220 = vperm.xlu0 %2219, %v2187
        %v2221 = vpop.permute.xlu0 %2220
        %2222 = vset.pattern.permute.xlu0 0
        %2223 = vperm.xlu0 %2222, %v2190
        %v2224 = vpop.permute.xlu0 %2223
        %v2225 = vlaneseq
        %v2226 = vand.u32 %v2225, 127
        %v2227 = vlaneseq
        %v2228 = vshrl.u32 %v2227, 7
        %v2229 = vsub.s32 %v2226, %v2228
        %v2230 = vrot.slane %v2203, %v2229
        %v2231 = vlaneseq
        %v2232 = vshrl.u32 %v2231, 7
        %v2233 = vsub.s32 %v2226, %v2232
        %v2234 = vrot.slane %v2206, %v2233
        %v2235 = vlaneseq
        %v2236 = vshrl.u32 %v2235, 7
        %v2237 = vsub.s32 %v2226, %v2236
        %v2238 = vrot.slane %v2209, %v2237
        %v2239 = vlaneseq
        %v2240 = vshrl.u32 %v2239, 7
        %v2241 = vsub.s32 %v2226, %v2240
        %v2242 = vrot.slane %v2212, %v2241
        %v2243 = vlaneseq
        %v2244 = vshrl.u32 %v2243, 7
        %v2245 = vsub.s32 %v2226, %v2244
        %v2246 = vrot.slane %v2215, %v2245
        %v2247 = vlaneseq
        %v2248 = vshrl.u32 %v2247, 7
        %v2249 = vsub.s32 %v2226, %v2248
        %v2250 = vrot.slane %v2218, %v2249
        %v2251 = vlaneseq
        %v2252 = vshrl.u32 %v2251, 7
        %v2253 = vsub.s32 %v2226, %v2252
        %v2254 = vrot.slane %v2221, %v2253
        %v2255 = vlaneseq
        %v2256 = vshrl.u32 %v2255, 7
        %v2257 = vsub.s32 %v2226, %v2256
        %v2258 = vrot.slane %v2224, %v2257
        %vm2259 = vcmask 1041409
        %v2260 = vsel %vm2259, %v2234, %v2230
        %vm2261 = vcmask 1042434
        %v2262 = vsel %vm2261, %v2238, %v2260
        %vm2263 = vcmask 1043459
        %v2264 = vsel %vm2263, %v2242, %v2262
        %vm2265 = vcmask 1044484
        %v2266 = vsel %vm2265, %v2246, %v2264
        %vm2267 = vcmask 1045509
        %v2268 = vsel %vm2267, %v2250, %v2266
        %vm2269 = vcmask 1046534
        %v2270 = vsel %vm2269, %v2254, %v2268
        %vm2271 = vcmask 1047559
        %v2272 = vsel %vm2271, %v2258, %v2270
        %vm2274 = vcmask 64512
        %v2275 = vsel %vm2274, %v2272, 0.0
        %2276 = vadd.xlane.f32.xlu0 %v2275
        %v2277 = vpop.xlane.xlu0 %2276
        %v2278 = vsel %vm2274, %v2272, 0
        %2280 = vmatprep.subr.mxu0 0.0
        %2281 = vmatpush1.msra.mxu0 0.0
        %2282 = vmatprep.subr.mxu0 0.0
        %2283 = vmatpush1.msra.mxu0 0.0
        %2284 = vmatprep.subr.mxu0 0.0
        %2285 = vmatpush1.msra.mxu0 0.0
        %2286 = vmatprep.subr.mxu0 0.0
        %2287 = vmatpush1.msra.mxu0 0.0
        %2288 = vmatprep.subr.mxu0 0.0
        %2289 = vmatpush1.msra.mxu0 0.0
        %2290 = vmatprep.subr.mxu0 0.0
        %2291 = vmatpush1.msra.mxu0 0.0
        %2292 = vmatprep.subr.mxu0 0.0
        %2293 = vmatpush1.msra.mxu0 0.0
        %2294 = vmatprep.subr.mxu0 0.0
        %2295 = vmatpush1.msra.mxu0 0.0
        %2296 = vmatprep.subr.mxu0 0.0
        %2297 = vmatpush1.msra.mxu0 0.0
        %2298 = vmatprep.subr.mxu0 0.0
        %2299 = vmatpush1.msra.mxu0 0.0
        %2300 = vmatprep.subr.mxu0 0.0
        %2301 = vmatpush1.msra.mxu0 0.0
        %2302 = vmatprep.subr.mxu0 0.0
        %2303 = vmatpush1.msra.mxu0 0.0
        %2304 = vmatprep.subr.mxu0 0.0
        %2305 = vmatpush1.msra.mxu0 0.0
        %2306 = vmatprep.subr.mxu0 0.0
        %2307 = vmatpush1.msra.mxu0 0.0
        %2308 = vmatprep.subr.mxu0 0.0
        %2309 = vmatpush1.msra.mxu0 0.0
        %2310 = vmatprep.subr.mxu0 0.0
        %2311 = vmatpush1.msra.mxu0 %v985
        %2312 = vmatprep.subr.mxu0 0.0
        %2313 = vmatpush2.msra.mxu0 0.0
        %2314 = vmatprep.subr.mxu0 0.0
        %2315 = vmatpush2.msra.mxu0 0.0
        %2316 = vmatprep.subr.mxu0 0.0
        %2317 = vmatpush2.msra.mxu0 0.0
        %2318 = vmatprep.subr.mxu0 0.0
        %2319 = vmatpush2.msra.mxu0 0.0
        %2320 = vmatprep.subr.mxu0 0.0
        %2321 = vmatpush2.msra.mxu0 0.0
        %2322 = vmatprep.subr.mxu0 0.0
        %2323 = vmatpush2.msra.mxu0 0.0
        %2324 = vmatprep.subr.mxu0 0.0
        %2325 = vmatpush2.msra.mxu0 0.0
        %2326 = vmatprep.subr.mxu0 0.0
        %2327 = vmatpush2.msra.mxu0 0.0
        %2328 = vmatprep.subr.mxu0 0.0
        %2329 = vmatpush2.msra.mxu0 0.0
        %2330 = vmatprep.subr.mxu0 0.0
        %2331 = vmatpush2.msra.mxu0 0.0
        %2332 = vmatprep.subr.mxu0 0.0
        %2333 = vmatpush2.msra.mxu0 0.0
        %2334 = vmatprep.subr.mxu0 0.0
        %2335 = vmatpush2.msra.mxu0 0.0
        %2336 = vmatprep.subr.mxu0 0.0
        %2337 = vmatpush2.msra.mxu0 0.0
        %2338 = vmatprep.subr.mxu0 0.0
        %2339 = vmatpush2.msra.mxu0 0.0
        %2340 = vmatprep.subr.mxu0 0.0
        %2341 = vmatpush2.msra.mxu0 0.0
        %2342 = vmatprep.subr.mxu0 0.0
        %2343 = vmatpush2.msra.mxu0 0.0
        %2344 = vmatprep.mubr.f32.mxu0 0.0
        %2345 = vmatmul.mubr.f32.gmra.mxu0 %v2278
        %v2346 = vpop.f32.mrf.mxu0
        %v2347 = vadd.f32 0.0, %v2346
        %v2348 = vpop.f32.mrf.mxu0
        %2349 = vdwg.mxu0
        %v2350 = vmul.f32 %v985, %v2277
        %v2351 = vsub.f32 %v2350, %v2347
        %v2352 = vmul.f32 %v2351, 0.14285715
        %v2353 = vadd.f32 %v985, %v2352
        %v2354 = vsel %vm1191, %v1957, 0.0
        %v2355 = vrot.slane %v2354, 4
        %v2356 = vadd.f32 %v2354, %v2355
        %v2357 = vrot.slane %v2356, 2
        %v2358 = vadd.f32 %v2356, %v2357
        %v2359 = vrot.slane %v2358, 1
        %v2360 = vadd.f32 %v2358, %v2359
        %v2361 = vsel %vm1191, %v1958, 0.0
        %v2362 = vrot.slane %v2361, 4
        %v2363 = vadd.f32 %v2361, %v2362
        %v2364 = vrot.slane %v2363, 2
        %v2365 = vadd.f32 %v2363, %v2364
        %v2366 = vrot.slane %v2365, 1
        %v2367 = vadd.f32 %v2365, %v2366
        %v2368 = vsel %vm1191, %v1959, 0.0
        %v2369 = vrot.slane %v2368, 4
        %v2370 = vadd.f32 %v2368, %v2369
        %v2371 = vrot.slane %v2370, 2
        %v2372 = vadd.f32 %v2370, %v2371
        %v2373 = vrot.slane %v2372, 1
        %v2374 = vadd.f32 %v2372, %v2373
        %v2375 = vsel %vm1191, %v1960, 0.0
        %v2376 = vrot.slane %v2375, 4
        %v2377 = vadd.f32 %v2375, %v2376
        %v2378 = vrot.slane %v2377, 2
        %v2379 = vadd.f32 %v2377, %v2378
        %v2380 = vrot.slane %v2379, 1
        %v2381 = vadd.f32 %v2379, %v2380
        %v2382 = vsel %vm1191, %v1961, 0.0
        %v2383 = vrot.slane %v2382, 4
        %v2384 = vadd.f32 %v2382, %v2383
        %v2385 = vrot.slane %v2384, 2
        %v2386 = vadd.f32 %v2384, %v2385
        %v2387 = vrot.slane %v2386, 1
        %v2388 = vadd.f32 %v2386, %v2387
        %v2389 = vsel %vm1191, %v1962, 0.0
        %v2390 = vrot.slane %v2389, 4
        %v2391 = vadd.f32 %v2389, %v2390
        %v2392 = vrot.slane %v2391, 2
        %v2393 = vadd.f32 %v2391, %v2392
        %v2394 = vrot.slane %v2393, 1
        %v2395 = vadd.f32 %v2393, %v2394
        %v2396 = vsel %vm1191, %v1963, 0.0
        %v2397 = vrot.slane %v2396, 4
        %v2398 = vadd.f32 %v2396, %v2397
        %v2399 = vrot.slane %v2398, 2
        %v2400 = vadd.f32 %v2398, %v2399
        %v2401 = vrot.slane %v2400, 1
        %v2402 = vadd.f32 %v2400, %v2401
        %v2403 = vsel %vm1191, %v1964, 0.0
        %v2404 = vrot.slane %v2403, 4
        %v2405 = vadd.f32 %v2403, %v2404
        %v2406 = vrot.slane %v2405, 2
        %v2407 = vadd.f32 %v2405, %v2406
        %v2408 = vrot.slane %v2407, 1
        %v2409 = vadd.f32 %v2407, %v2408
        %v2411 = vrot.slane %v2095, 1
        %v2412 = vrot.slane %v2095, 2
        %v2413 = vrot.slane %v2095, 3
        %v2414 = vrot.slane %v2095, 4
        %v2415 = vrot.slane %v2095, 5
        %v2416 = vrot.slane %v2095, 6
        %v2417 = vrot.slane %v2095, 7
        %v2426 = vsub.f32 %v2360, %v2095
        %v2427 = vsub.f32 %v2367, %v2411
        %v2428 = vsub.f32 %v2374, %v2412
        %v2429 = vsub.f32 %v2381, %v2413
        %v2430 = vsub.f32 %v2388, %v2414
        %v2431 = vsub.f32 %v2395, %v2415
        %v2432 = vsub.f32 %v2402, %v2416
        %v2433 = vsub.f32 %v2409, %v2417
        %v2434 = vld [vmem:[#allocation14] sm:$0xf]
        %v2435 = vld [vmem:[#allocation14 + $0x4] sm:$0xf]
        %v2436 = vld [vmem:[#allocation14 + $0x8] sm:$0xf]
        %v2437 = vld [vmem:[#allocation14 + $0xc] sm:$0xf]
        %v2438 = vpack.c.bf16 %v1066, %v1066
        %v2439 = vld [vmem:[#allocation16] sm:$0xf]
        %v2440 = vld [vmem:[#allocation16 + $0x4] sm:$0xf]
        %v2441 = vld [vmem:[#allocation16 + $0x8] sm:$0xf]
        %v2442 = vld [vmem:[#allocation16 + $0xc] sm:$0xf]
        %v2443 = vpack.c.bf16 %v2426, %v2426
        %v2444 = vpack.c.bf16 %v2427, %v2427
        %v2445 = vpack.c.bf16 %v2428, %v2428
        %v2446 = vpack.c.bf16 %v2429, %v2429
        %v2447 = vpack.c.bf16 %v2430, %v2430
        %v2448 = vpack.c.bf16 %v2431, %v2431
        %v2449 = vpack.c.bf16 %v2432, %v2432
        %v2450 = vpack.c.bf16 %v2433, %v2433
        %v2459 = vunpack.c.l.b16 %v2443
        %v2460 = vunpack.c.l.b16 %v2444
        %v2461 = vunpack.c.l.b16 %v2445
        %v2462 = vunpack.c.l.b16 %v2446
        %v2463 = vunpack.c.l.b16 %v2447
        %v2464 = vunpack.c.l.b16 %v2448
        %v2465 = vunpack.c.l.b16 %v2449
        %v2466 = vunpack.c.l.b16 %v2450
        %v2467 = vrot.slane %v2460, 7
        %v2468 = vsel %vm2259, %v2467, %v2459
        %v2469 = vrot.slane %v2461, 6
        %v2470 = vsel %vm2261, %v2469, %v2468
        %v2471 = vrot.slane %v2462, 5
        %v2472 = vsel %vm2263, %v2471, %v2470
        %v2473 = vrot.slane %v2463, 4
        %v2474 = vsel %vm2265, %v2473, %v2472
        %v2475 = vrot.slane %v2464, 3
        %v2476 = vsel %vm2267, %v2475, %v2474
        %v2477 = vrot.slane %v2465, 2
        %v2478 = vsel %vm2269, %v2477, %v2476
        %v2479 = vrot.slane %v2466, 1
        %v2480 = vsel %vm2271, %v2479, %v2478
        %v2481 = vpack.c.b16 %v2480, %v2480
        %v2486 = vunpack.c.l.b16 %v2439
        %v2487 = vunpack.c.l.b16 %v2440
        %v2488 = vunpack.c.l.b16 %v2441
        %v2489 = vunpack.c.l.b16 %v2442
        %v2490 = vpack.c.b16 %v2487, %v2486
        %v2491 = vpack.c.b16 %v2489, %v2488
        %v2495 = vsel %vm1191, %v2481, 0
        %2497 = vmatprep.subr.bf16.mxu0 0
        %2498 = vmatpush1.bf16.msra.mxu0 0
        %2499 = vmatprep.subr.bf16.mxu0 0
        %2500 = vmatpush1.bf16.msra.mxu0 0
        %2501 = vmatprep.subr.bf16.mxu0 0
        %2502 = vmatpush1.bf16.msra.mxu0 0
        %2503 = vmatprep.subr.bf16.mxu0 0
        %2504 = vmatpush1.bf16.msra.mxu0 0
        %2505 = vmatprep.subr.bf16.mxu0 0
        %2506 = vmatpush1.bf16.msra.mxu0 0
        %2507 = vmatprep.subr.bf16.mxu0 0
        %2508 = vmatpush1.bf16.msra.mxu0 0
        %2509 = vmatprep.subr.bf16.mxu0 0
        %2510 = vmatpush1.bf16.msra.mxu0 %v2491
        %2511 = vmatprep.subr.bf16.mxu0 0
        %2512 = vmatpush1.bf16.msra.mxu0 %v2490
        %2513 = vmatprep.subr.bf16.mxu0 0
        %2514 = vmatpush2.bf16.msra.mxu0 0
        %2515 = vmatprep.subr.bf16.mxu0 0
        %2516 = vmatpush2.bf16.msra.mxu0 0
        %2517 = vmatprep.subr.bf16.mxu0 0
        %2518 = vmatpush2.bf16.msra.mxu0 0
        %2519 = vmatprep.subr.bf16.mxu0 0
        %2520 = vmatpush2.bf16.msra.mxu0 0
        %2521 = vmatprep.subr.bf16.mxu0 0
        %2522 = vmatpush2.bf16.msra.mxu0 0
        %2523 = vmatprep.subr.bf16.mxu0 0
        %2524 = vmatpush2.bf16.msra.mxu0 0
        %2525 = vmatprep.subr.bf16.mxu0 0
        %2526 = vmatpush2.bf16.msra.mxu0 0
        %2527 = vmatprep.subr.bf16.mxu0 0
        %2528 = vmatpush2.bf16.msra.mxu0 0
        %2529 = vmatprep.mubr.bf16.mxu0 0
        %2530 = vmatmul.mubr.bf16.gmra.mxu0 %v2495
        %v2531 = vpop.f32.mrf.mxu0
        %v2532 = vadd.f32 0.0, %v2531
        %v2533 = vpop.f32.mrf.mxu0
        %v2534 = vpop.f32.mrf.mxu0
        %v2535 = vpop.f32.mrf.mxu0
        %2536 = vdwg.mxu0
        %v2541 = vunpack.c.l.b16 %v2434
        %v2542 = vunpack.c.l.b16 %v2435
        %v2543 = vunpack.c.l.b16 %v2436
        %v2544 = vunpack.c.l.b16 %v2437
        %v2545 = vpack.c.b16 %v2542, %v2541
        %v2546 = vpack.c.b16 %v2544, %v2543
        %v2550 = vsel %vm1191, %v2438, 0
        %2552 = vmatprep.subr.bf16.mxu0 0
        %2553 = vmatpush1.bf16.msra.mxu0 0
        %2554 = vmatprep.subr.bf16.mxu0 0
        %2555 = vmatpush1.bf16.msra.mxu0 0
        %2556 = vmatprep.subr.bf16.mxu0 0
        %2557 = vmatpush1.bf16.msra.mxu0 0
        %2558 = vmatprep.subr.bf16.mxu0 0
        %2559 = vmatpush1.bf16.msra.mxu0 0
        %2560 = vmatprep.subr.bf16.mxu0 0
        %2561 = vmatpush1.bf16.msra.mxu0 0
        %2562 = vmatprep.subr.bf16.mxu0 0
        %2563 = vmatpush1.bf16.msra.mxu0 0
        %2564 = vmatprep.subr.bf16.mxu0 0
        %2565 = vmatpush1.bf16.msra.mxu0 %v2546
        %2566 = vmatprep.subr.bf16.mxu0 0
        %2567 = vmatpush1.bf16.msra.mxu0 %v2545
        %2568 = vmatprep.subr.bf16.mxu0 0
        %2569 = vmatpush2.bf16.msra.mxu0 0
        %2570 = vmatprep.subr.bf16.mxu0 0
        %2571 = vmatpush2.bf16.msra.mxu0 0
        %2572 = vmatprep.subr.bf16.mxu0 0
        %2573 = vmatpush2.bf16.msra.mxu0 0
        %2574 = vmatprep.subr.bf16.mxu0 0
        %2575 = vmatpush2.bf16.msra.mxu0 0
        %2576 = vmatprep.subr.bf16.mxu0 0
        %2577 = vmatpush2.bf16.msra.mxu0 0
        %2578 = vmatprep.subr.bf16.mxu0 0
        %2579 = vmatpush2.bf16.msra.mxu0 0
        %2580 = vmatprep.subr.bf16.mxu0 0
        %2581 = vmatpush2.bf16.msra.mxu0 0
        %2582 = vmatprep.subr.bf16.mxu0 0
        %2583 = vmatpush2.bf16.msra.mxu0 0
        %2584 = vmatprep.mubr.bf16.mxu0 0
        %2585 = vmatmul.mubr.bf16.gmra.mxu0 %v2550
        %v2586 = vpop.f32.mrf.mxu0
        %v2587 = vadd.f32 %v2532, %v2586
        %v2588 = vpop.f32.mrf.mxu0
        %v2589 = vpop.f32.mrf.mxu0
        %v2590 = vpop.f32.mrf.mxu0
        %2591 = vdwg.mxu0
        %v2592 = vld [vmem:[#allocation17] sm:$0x1]
        %v2594 = vlaneseq
        %v2595 = vshrl.u32 %v2594, 7
        %v2596 = vsub.s32 0, %v2595
        %v2597 = vrot.slane %v2592, %v2596
        %v2599 = vadd.f32 %v2587, %v2597
        %v2600 = vsub.f32 0.0, %v2599
        %v2601 = vmul.f32 %v2600, 1.442695
        %v2602 = vpow.pop %v2601
        %v2603 = vadd.f32 %v2602, 1.0
        %v2604 = vrcp.pop %v2603
        %v2605 = vmul.f32 %v2599, %v2604
        %v2606 = vld [vmem:[#allocation19] sm:$0xf]
        %v2607 = vld [vmem:[#allocation19 + $0x4] sm:$0xf]
        %v2608 = vld [vmem:[#allocation19 + $0x8] sm:$0xf]
        %v2609 = vld [vmem:[#allocation19 + $0xc] sm:$0xf]
        %v2610 = vpack.c.bf16 %v2605, %v2605
        %v2615 = vunpack.c.l.b16 %v2606
        %v2616 = vunpack.c.l.b16 %v2607
        %v2617 = vunpack.c.l.b16 %v2608
        %v2618 = vunpack.c.l.b16 %v2609
        %v2619 = vpack.c.b16 %v2616, %v2615
        %v2620 = vpack.c.b16 %v2618, %v2617
        %v2624 = vsel %vm1191, %v2610, 0
        %2626 = vmatprep.subr.bf16.mxu0 0
        %2627 = vmatpush1.bf16.msra.mxu0 0
        %2628 = vmatprep.subr.bf16.mxu0 0
        %2629 = vmatpush1.bf16.msra.mxu0 0
        %2630 = vmatprep.subr.bf16.mxu0 0
        %2631 = vmatpush1.bf16.msra.mxu0 0
        %2632 = vmatprep.subr.bf16.mxu0 0
        %2633 = vmatpush1.bf16.msra.mxu0 0
        %2634 = vmatprep.subr.bf16.mxu0 0
        %2635 = vmatpush1.bf16.msra.mxu0 0
        %2636 = vmatprep.subr.bf16.mxu0 0
        %2637 = vmatpush1.bf16.msra.mxu0 0
        %2638 = vmatprep.subr.bf16.mxu0 0
        %2639 = vmatpush1.bf16.msra.mxu0 %v2620
        %2640 = vmatprep.subr.bf16.mxu0 0
        %2641 = vmatpush1.bf16.msra.mxu0 %v2619
        %2642 = vmatprep.subr.bf16.mxu0 0
        %2643 = vmatpush2.bf16.msra.mxu0 0
        %2644 = vmatprep.subr.bf16.mxu0 0
        %2645 = vmatpush2.bf16.msra.mxu0 0
        %2646 = vmatprep.subr.bf16.mxu0 0
        %2647 = vmatpush2.bf16.msra.mxu0 0
        %2648 = vmatprep.subr.bf16.mxu0 0
        %2649 = vmatpush2.bf16.msra.mxu0 0
        %2650 = vmatprep.subr.bf16.mxu0 0
        %2651 = vmatpush2.bf16.msra.mxu0 0
        %2652 = vmatprep.subr.bf16.mxu0 0
        %2653 = vmatpush2.bf16.msra.mxu0 0
        %2654 = vmatprep.subr.bf16.mxu0 0
        %2655 = vmatpush2.bf16.msra.mxu0 0
        %2656 = vmatprep.subr.bf16.mxu0 0
        %2657 = vmatpush2.bf16.msra.mxu0 0
        %2658 = vmatprep.mubr.bf16.mxu0 0
        %2659 = vmatmul.mubr.bf16.gmra.mxu0 %v2624
        %v2660 = vpop.f32.mrf.mxu0
        %v2661 = vadd.f32 0.0, %v2660
        %v2662 = vpop.f32.mrf.mxu0
        %v2663 = vpop.f32.mrf.mxu0
        %v2664 = vpop.f32.mrf.mxu0
        %2665 = vdwg.mxu0
        %v2666 = vadd.f32 %v1066, %v2661
        %v2667 = vld [vmem:[#allocation20] sm:$0x1]
        %v2669 = vlaneseq
        %v2670 = vshrl.u32 %v2669, 7
        %v2671 = vsub.s32 0, %v2670
        %v2672 = vrot.slane %v2667, %v2671
        %v2674 = vadd.f32 %v2666, %v2672
        %v2675 = vmul.f32 %v2353, %v2353
        %v2676 = vsel %vm1070, %v2675, 0.0
        %2677 = vadd.xlane.f32.xlu0 %v2676
        %v2678 = vpop.xlane.xlu0 %2677
        %v2680 = vsel %vm1070, %v2353, 0
        %2682 = vmatprep.subr.mxu0 0.0
        %2683 = vmatpush1.xpose.msra.mxu0 0.0
        %2684 = vmatprep.subr.mxu0 0.0
        %2685 = vmatpush1.xpose.msra.mxu0 0.0
        %2686 = vmatprep.subr.mxu0 0.0
        %2687 = vmatpush1.xpose.msra.mxu0 0.0
        %2688 = vmatprep.subr.mxu0 0.0
        %2689 = vmatpush1.xpose.msra.mxu0 0.0
        %2690 = vmatprep.subr.mxu0 0.0
        %2691 = vmatpush1.xpose.msra.mxu0 0.0
        %2692 = vmatprep.subr.mxu0 0.0
        %2693 = vmatpush1.xpose.msra.mxu0 0.0
        %2694 = vmatprep.subr.mxu0 0.0
        %2695 = vmatpush1.xpose.msra.mxu0 0.0
        %2696 = vmatprep.subr.mxu0 0.0
        %2697 = vmatpush1.xpose.msra.mxu0 0.0
        %2698 = vmatprep.subr.mxu0 0.0
        %2699 = vmatpush1.xpose.msra.mxu0 0.0
        %2700 = vmatprep.subr.mxu0 0.0
        %2701 = vmatpush1.xpose.msra.mxu0 0.0
        %2702 = vmatprep.subr.mxu0 0.0
        %2703 = vmatpush1.xpose.msra.mxu0 0.0
        %2704 = vmatprep.subr.mxu0 0.0
        %2705 = vmatpush1.xpose.msra.mxu0 0.0
        %2706 = vmatprep.subr.mxu0 0.0
        %2707 = vmatpush1.xpose.msra.mxu0 0.0
        %2708 = vmatprep.subr.mxu0 0.0
        %2709 = vmatpush1.xpose.msra.mxu0 0.0
        %2710 = vmatprep.subr.mxu0 0.0
        %2711 = vmatpush1.xpose.msra.mxu0 0.0
        %2712 = vmatprep.subr.mxu0 0.0
        %2713 = vmatpush1.xpose.msra.mxu0 %v2680
        %2714 = vmatprep.subr.mxu0 0.0
        %2715 = vmatpush2.xpose.msra.mxu0 0.0
        %2716 = vmatprep.subr.mxu0 0.0
        %2717 = vmatpush2.xpose.msra.mxu0 0.0
        %2718 = vmatprep.subr.mxu0 0.0
        %2719 = vmatpush2.xpose.msra.mxu0 0.0
        %2720 = vmatprep.subr.mxu0 0.0
        %2721 = vmatpush2.xpose.msra.mxu0 0.0
        %2722 = vmatprep.subr.mxu0 0.0
        %2723 = vmatpush2.xpose.msra.mxu0 0.0
        %2724 = vmatprep.subr.mxu0 0.0
        %2725 = vmatpush2.xpose.msra.mxu0 0.0
        %2726 = vmatprep.subr.mxu0 0.0
        %2727 = vmatpush2.xpose.msra.mxu0 0.0
        %2728 = vmatprep.subr.mxu0 0.0
        %2729 = vmatpush2.xpose.msra.mxu0 0.0
        %2730 = vmatprep.subr.mxu0 0.0
        %2731 = vmatpush2.xpose.msra.mxu0 0.0
        %2732 = vmatprep.subr.mxu0 0.0
        %2733 = vmatpush2.xpose.msra.mxu0 0.0
        %2734 = vmatprep.subr.mxu0 0.0
        %2735 = vmatpush2.xpose.msra.mxu0 0.0
        %2736 = vmatprep.subr.mxu0 0.0
        %2737 = vmatpush2.xpose.msra.mxu0 0.0
        %2738 = vmatprep.subr.mxu0 0.0
        %2739 = vmatpush2.xpose.msra.mxu0 0.0
        %2740 = vmatprep.subr.mxu0 0.0
        %2741 = vmatpush2.xpose.msra.mxu0 0.0
        %2742 = vmatprep.subr.mxu0 0.0
        %2743 = vmatpush2.xpose.msra.mxu0 0.0
        %2744 = vmatprep.subr.mxu0 0.0
        %2745 = vmatpush2.xpose.msra.mxu0 0.0
        %2746 = vmatprep.mubr.f32.mxu0 0.0
        %2747 = vmatmul.mubr.f32.gmra.mxu0 %v2680
        %v2748 = vpop.f32.mrf.mxu0
        %v2749 = vadd.f32 0.0, %v2748
        %v2750 = vpop.f32.mrf.mxu0
        %2751 = vdwg.mxu0
        %2752 = vxpose.xlu0.b32.start [1/16] %v2678, 128
        %2753 = vxpose.xlu0.b32.cont [2/16] 0.0, 128
        %2754 = vxpose.xlu0.b32.cont [3/16] 0.0, 128
        %2755 = vxpose.xlu0.b32.cont [4/16] 0.0, 128
        %2756 = vxpose.xlu0.b32.cont [5/16] 0.0, 128
        %2757 = vxpose.xlu0.b32.cont [6/16] 0.0, 128
        %2758 = vxpose.xlu0.b32.cont [7/16] 0.0, 128
        %2759 = vxpose.xlu0.b32.cont [8/16] 0.0, 128
        %2760 = vxpose.xlu0.b32.cont [9/16] 0.0, 128
        %2761 = vxpose.xlu0.b32.cont [10/16] 0.0, 128
        %2762 = vxpose.xlu0.b32.cont [11/16] 0.0, 128
        %2763 = vxpose.xlu0.b32.cont [12/16] 0.0, 128
        %2764 = vxpose.xlu0.b32.cont [13/16] 0.0, 128
        %2765 = vxpose.xlu0.b32.cont [14/16] 0.0, 128
        %2766 = vxpose.xlu0.b32.cont [15/16] 0.0, 128
        %2767 = vxpose.xlu0.b32.end [16/16] 0.0, 128
        %v2768 = vpop.trf.xlu0
        %v2769 = vpop.trf.xlu0
        %v2770 = vpop.trf.xlu0
        %v2771 = vpop.trf.xlu0
        %v2772 = vpop.trf.xlu0
        %v2773 = vpop.trf.xlu0
        %v2774 = vpop.trf.xlu0
        %v2775 = vpop.trf.xlu0
        %v2776 = vpop.trf.xlu0
        %v2777 = vpop.trf.xlu0
        %v2778 = vpop.trf.xlu0
        %v2779 = vpop.trf.xlu0
        %v2780 = vpop.trf.xlu0
        %v2781 = vpop.trf.xlu0
        %v2782 = vpop.trf.xlu0
        %v2783 = vpop.trf.xlu0
        %v2784 = vlaneseq
        %v2785 = vshrl.u32 %v2784, 7
        %v2786 = vsub.s32 0, %v2785
        %v2787 = vrot.slane %v2768, %v2786
        %v2788 = vadd.f32 %v2678, %v2787
        %v2789 = vmul.f32 %v2749, 2.0
        %v2790 = vsub.f32 %v2788, %v2789
        %v2791 = vmax.f32 %v2790, 0.0
        %s2792 = scalar_lea.vmem %s4, 32
        %v2793 = vld [vmem:[%s2792] sm:$0xff]
        %v2794 = vld [vmem:[%s2792 + $0x8] sm:$0xff]
        %v2795 = vld [vmem:[%s2792 + $0x10] sm:$0xff]
        %v2796 = vld [vmem:[%s2792 + $0x18] sm:$0xff]
        %v2798 = vsel %vm1191, %v2674, 0
        %2800 = vmatprep.subr.mxu0 0.0
        %2801 = vmatpush1.msra.mxu0 0.0
        %2802 = vmatprep.subr.mxu0 0.0
        %2803 = vmatpush1.msra.mxu0 0.0
        %2804 = vmatprep.subr.mxu0 0.0
        %2805 = vmatpush1.msra.mxu0 0.0
        %2806 = vmatprep.subr.mxu0 0.0
        %2807 = vmatpush1.msra.mxu0 0.0
        %2808 = vmatprep.subr.mxu0 0.0
        %2809 = vmatpush1.msra.mxu0 0.0
        %2810 = vmatprep.subr.mxu0 0.0
        %2811 = vmatpush1.msra.mxu0 0.0
        %2812 = vmatprep.subr.mxu0 0.0
        %2813 = vmatpush1.msra.mxu0 0.0
        %2814 = vmatprep.subr.mxu0 0.0
        %2815 = vmatpush1.msra.mxu0 0.0
        %2816 = vmatprep.subr.mxu0 0.0
        %2817 = vmatpush1.msra.mxu0 0.0
        %2818 = vmatprep.subr.mxu0 0.0
        %2819 = vmatpush1.msra.mxu0 0.0
        %2820 = vmatprep.subr.mxu0 0.0
        %2821 = vmatpush1.msra.mxu0 0.0
        %2822 = vmatprep.subr.mxu0 0.0
        %2823 = vmatpush1.msra.mxu0 0.0
        %2824 = vmatprep.subr.mxu0 0.0
        %2825 = vmatpush1.msra.mxu0 %v2796
        %2826 = vmatprep.subr.mxu0 0.0
        %2827 = vmatpush1.msra.mxu0 %v2795
        %2828 = vmatprep.subr.mxu0 0.0
        %2829 = vmatpush1.msra.mxu0 %v2794
        %2830 = vmatprep.subr.mxu0 0.0
        %2831 = vmatpush1.msra.mxu0 %v2793
        %2832 = vmatprep.subr.mxu0 0.0
        %2833 = vmatpush2.msra.mxu0 0.0
        %2834 = vmatprep.subr.mxu0 0.0
        %2835 = vmatpush2.msra.mxu0 0.0
        %2836 = vmatprep.subr.mxu0 0.0
        %2837 = vmatpush2.msra.mxu0 0.0
        %2838 = vmatprep.subr.mxu0 0.0
        %2839 = vmatpush2.msra.mxu0 0.0
        %2840 = vmatprep.subr.mxu0 0.0
        %2841 = vmatpush2.msra.mxu0 0.0
        %2842 = vmatprep.subr.mxu0 0.0
        %2843 = vmatpush2.msra.mxu0 0.0
        %2844 = vmatprep.subr.mxu0 0.0
        %2845 = vmatpush2.msra.mxu0 0.0
        %2846 = vmatprep.subr.mxu0 0.0
        %2847 = vmatpush2.msra.mxu0 0.0
        %2848 = vmatprep.subr.mxu0 0.0
        %2849 = vmatpush2.msra.mxu0 0.0
        %2850 = vmatprep.subr.mxu0 0.0
        %2851 = vmatpush2.msra.mxu0 0.0
        %2852 = vmatprep.subr.mxu0 0.0
        %2853 = vmatpush2.msra.mxu0 0.0
        %2854 = vmatprep.subr.mxu0 0.0
        %2855 = vmatpush2.msra.mxu0 0.0
        %2856 = vmatprep.subr.mxu0 0.0
        %2857 = vmatpush2.msra.mxu0 0.0
        %2858 = vmatprep.subr.mxu0 0.0
        %2859 = vmatpush2.msra.mxu0 0.0
        %2860 = vmatprep.subr.mxu0 0.0
        %2861 = vmatpush2.msra.mxu0 0.0
        %2862 = vmatprep.subr.mxu0 0.0
        %2863 = vmatpush2.msra.mxu0 0.0
        %2864 = vmatprep.mubr.f32.mxu0 0.0
        %2865 = vmatmul.mubr.f32.gmra.mxu0 %v2798
        %v2866 = vpop.f32.mrf.mxu0
        %v2867 = vadd.f32 0.0, %v2866
        %v2868 = vpop.f32.mrf.mxu0
        %2869 = vdwg.mxu0
        %s2870 = scalar_lea.vmem [#allocation8], 1
        %v2871 = vld [vmem:[%s2870] sm:$0x1]
        %s2872 = scalar_lea.vmem [#allocation10], 1
        %v2873 = vld [vmem:[%s2872] sm:$0x1]
        %v2875 = vcombine.high %v2867, %v2867
        %v2877 = vunpack.c.l.s4 1966171168
        %v2878 = vunpack.c.0.s8 %v2877
        %v2879 = vlaneseq
        %v2880 = vshrl.u32 %v2879, 7
        %v2881 = vsub.s32 %v2878, %v2880
        %v2882 = vrot.slane %v2867, %v2881
        %v2884 = vunpack.c.l.s4 1966171168
        %v2885 = vunpack.c.0.s8 %v2884
        %v2886 = vlaneseq
        %v2887 = vshrl.u32 %v2886, 7
        %v2888 = vsub.s32 %v2885, %v2887
        %v2889 = vrot.slane %v2875, %v2888
        %v2890 = vcombine.high %v2882, %v2882
        %v2891 = vcombine.high %v2889, %v2889
        %v2893 = vunpack.c.l.s4 1966171168
        %v2894 = vunpack.c.0.s8 %v2893
        %v2895 = vlaneseq
        %v2896 = vshrl.u32 %v2895, 7
        %v2897 = vsub.s32 %v2894, %v2896
        %v2898 = vrot.slane %v2882, %v2897
        %v2900 = vunpack.c.l.s4 1966171168
        %v2901 = vunpack.c.0.s8 %v2900
        %v2902 = vlaneseq
        %v2903 = vshrl.u32 %v2902, 7
        %v2904 = vsub.s32 %v2901, %v2903
        %v2905 = vrot.slane %v2889, %v2904
        %v2907 = vunpack.c.l.s4 1966171168
        %v2908 = vunpack.c.0.s8 %v2907
        %v2909 = vlaneseq
        %v2910 = vshrl.u32 %v2909, 7
        %v2911 = vsub.s32 %v2908, %v2910
        %v2912 = vrot.slane %v2890, %v2911
        %v2914 = vunpack.c.l.s4 1966171168
        %v2915 = vunpack.c.0.s8 %v2914
        %v2916 = vlaneseq
        %v2917 = vshrl.u32 %v2916, 7
        %v2918 = vsub.s32 %v2915, %v2917
        %v2919 = vrot.slane %v2891, %v2918
        %v2920 = vcombine.high %v2898, %v2898
        %v2921 = vcombine.high %v2905, %v2905
        %v2922 = vcombine.high %v2912, %v2912
        %v2923 = vcombine.high %v2919, %v2919
        %v2924 = vlaneseq
        %v2925 = vshrl.u32 %v2924, 7
        %v2926 = vsub.s32 0, %v2925
        %v2927 = vrot.slane %v2898, %v2926
        %v2928 = vlaneseq
        %v2929 = vshrl.u32 %v2928, 7
        %v2930 = vsub.s32 0, %v2929
        %v2931 = vrot.slane %v2912, %v2930
        %v2932 = vlaneseq
        %v2933 = vshrl.u32 %v2932, 7
        %v2934 = vsub.s32 0, %v2933
        %v2935 = vrot.slane %v2920, %v2934
        %v2936 = vlaneseq
        %v2937 = vshrl.u32 %v2936, 7
        %v2938 = vsub.s32 0, %v2937
        %v2939 = vrot.slane %v2922, %v2938
        %v2940 = vlaneseq
        %v2941 = vshrl.u32 %v2940, 7
        %v2942 = vsub.s32 0, %v2941
        %v2943 = vrot.slane %v2905, %v2942
        %v2944 = vlaneseq
        %v2945 = vshrl.u32 %v2944, 7
        %v2946 = vsub.s32 0, %v2945
        %v2947 = vrot.slane %v2919, %v2946
        %v2948 = vlaneseq
        %v2949 = vshrl.u32 %v2948, 7
        %v2950 = vsub.s32 0, %v2949
        %v2951 = vrot.slane %v2921, %v2950
        %v2952 = vlaneseq
        %v2953 = vshrl.u32 %v2952, 7
        %v2954 = vsub.s32 0, %v2953
        %v2955 = vrot.slane %v2923, %v2954
        %2964 = vrot.lane.b32.xlu0 %v2867, 96
        %v2965 = vpop.permute.xlu0 %2964
        %v2967 = vadd.f32 %v2927, %v2965
        %v2968 = vadd.f32 %v2931, %v2965
        %v2969 = vadd.f32 %v2935, %v2965
        %v2970 = vadd.f32 %v2939, %v2965
        %v2971 = vadd.f32 %v2943, %v2965
        %v2972 = vadd.f32 %v2947, %v2965
        %v2973 = vadd.f32 %v2951, %v2965
        %v2974 = vadd.f32 %v2955, %v2965
        %v2975 = vlaneseq
        %v2976 = vshrl.u32 %v2975, 7
        %v2977 = vsub.s32 0, %v2976
        %v2978 = vrot.slane %v2791, %v2977
        %2980 = vbcast.lane.b32.xlu0 %v2978, 256
        %v2981 = vpop.permute.xlu0 %2980
        %v2982 = vlaneseq
        %v2983 = vshrl.u32 %v2982, 7
        %v2984 = vsub.s32 1, %v2983
        %v2985 = vrot.slane %v2791, %v2984
        %2987 = vbcast.lane.b32.xlu0 %v2985, 256
        %v2988 = vpop.permute.xlu0 %2987
        %v2989 = vlaneseq
        %v2990 = vshrl.u32 %v2989, 7
        %v2991 = vsub.s32 2, %v2990
        %v2992 = vrot.slane %v2791, %v2991
        %2994 = vbcast.lane.b32.xlu0 %v2992, 256
        %v2995 = vpop.permute.xlu0 %2994
        %v2996 = vlaneseq
        %v2997 = vshrl.u32 %v2996, 7
        %v2998 = vsub.s32 3, %v2997
        %v2999 = vrot.slane %v2791, %v2998
        %3001 = vbcast.lane.b32.xlu0 %v2999, 256
        %v3002 = vpop.permute.xlu0 %3001
        %v3003 = vlaneseq
        %v3004 = vshrl.u32 %v3003, 7
        %v3005 = vsub.s32 4, %v3004
        %v3006 = vrot.slane %v2791, %v3005
        %3008 = vbcast.lane.b32.xlu0 %v3006, 256
        %v3009 = vpop.permute.xlu0 %3008
        %v3010 = vlaneseq
        %v3011 = vshrl.u32 %v3010, 7
        %v3012 = vsub.s32 5, %v3011
        %v3013 = vrot.slane %v2791, %v3012
        %3015 = vbcast.lane.b32.xlu0 %v3013, 256
        %v3016 = vpop.permute.xlu0 %3015
        %v3017 = vlaneseq
        %v3018 = vshrl.u32 %v3017, 7
        %v3019 = vsub.s32 6, %v3018
        %v3020 = vrot.slane %v2791, %v3019
        %3022 = vbcast.lane.b32.xlu0 %v3020, 256
        %v3023 = vpop.permute.xlu0 %3022
        %v3024 = vlaneseq
        %v3025 = vshrl.u32 %v3024, 7
        %v3026 = vsub.s32 7, %v3025
        %v3027 = vrot.slane %v2791, %v3026
        %3029 = vbcast.lane.b32.xlu0 %v3027, 256
        %v3030 = vpop.permute.xlu0 %3029
        %v3032 = vlaneseq
        %v3033 = vshrl.u32 %v3032, 7
        %v3034 = vsub.s32 0, %v3033
        %v3035 = vrot.slane %v2871, %v3034
        %v3037 = vmul.f32 %v2981, %v3035
        %v3038 = vmul.f32 %v2988, %v3035
        %v3039 = vmul.f32 %v2995, %v3035
        %v3040 = vmul.f32 %v3002, %v3035
        %v3041 = vmul.f32 %v3009, %v3035
        %v3042 = vmul.f32 %v3016, %v3035
        %v3043 = vmul.f32 %v3023, %v3035
        %v3044 = vmul.f32 %v3030, %v3035
        %v3045 = vadd.f32 %v2967, %v3037
        %v3046 = vadd.f32 %v2968, %v3038
        %v3047 = vadd.f32 %v2969, %v3039
        %v3048 = vadd.f32 %v2970, %v3040
        %v3049 = vadd.f32 %v2971, %v3041
        %v3050 = vadd.f32 %v2972, %v3042
        %v3051 = vadd.f32 %v2973, %v3043
        %v3052 = vadd.f32 %v2974, %v3044
        %v3054 = vlaneseq
        %v3055 = vshrl.u32 %v3054, 7
        %v3056 = vsub.s32 0, %v3055
        %v3057 = vrot.slane %v2873, %v3056
        %v3059 = vadd.f32 %v3045, %v3057
        %v3060 = vadd.f32 %v3046, %v3057
        %v3061 = vadd.f32 %v3047, %v3057
        %v3062 = vadd.f32 %v3048, %v3057
        %v3063 = vadd.f32 %v3049, %v3057
        %v3064 = vadd.f32 %v3050, %v3057
        %v3065 = vadd.f32 %v3051, %v3057
        %v3066 = vadd.f32 %v3052, %v3057
        %v3067 = vsub.f32 0.0, %v3059
        %v3068 = vsub.f32 0.0, %v3060
        %v3069 = vsub.f32 0.0, %v3061
        %v3070 = vsub.f32 0.0, %v3062
        %v3071 = vsub.f32 0.0, %v3063
        %v3072 = vsub.f32 0.0, %v3064
        %v3073 = vsub.f32 0.0, %v3065
        %v3074 = vsub.f32 0.0, %v3066
        %v3075 = vmul.f32 %v3067, 1.442695
        %v3076 = vpow.pop %v3075
        %v3077 = vmul.f32 %v3068, 1.442695
        %v3078 = vpow.pop %v3077
        %v3079 = vmul.f32 %v3069, 1.442695
        %v3080 = vpow.pop %v3079
        %v3081 = vmul.f32 %v3070, 1.442695
        %v3082 = vpow.pop %v3081
        %v3083 = vmul.f32 %v3071, 1.442695
        %v3084 = vpow.pop %v3083
        %v3085 = vmul.f32 %v3072, 1.442695
        %v3086 = vpow.pop %v3085
        %v3087 = vmul.f32 %v3073, 1.442695
        %v3088 = vpow.pop %v3087
        %v3089 = vmul.f32 %v3074, 1.442695
        %v3090 = vpow.pop %v3089
        %v3091 = vadd.f32 %v3076, 1.0
        %v3092 = vadd.f32 %v3078, 1.0
        %v3093 = vadd.f32 %v3080, 1.0
        %v3094 = vadd.f32 %v3082, 1.0
        %v3095 = vadd.f32 %v3084, 1.0
        %v3096 = vadd.f32 %v3086, 1.0
        %v3097 = vadd.f32 %v3088, 1.0
        %v3098 = vadd.f32 %v3090, 1.0
        %v3099 = vrcp.pop %v3091
        %v3100 = vrcp.pop %v3092
        %v3101 = vrcp.pop %v3093
        %v3102 = vrcp.pop %v3094
        %v3103 = vrcp.pop %v3095
        %v3104 = vrcp.pop %v3096
        %v3105 = vrcp.pop %v3097
        %v3106 = vrcp.pop %v3098
        %v3107 = vmul.f32 %v3059, %v3099
        %v3108 = vmul.f32 %v3060, %v3100
        %v3109 = vmul.f32 %v3061, %v3101
        %v3110 = vmul.f32 %v3062, %v3102
        %v3111 = vmul.f32 %v3063, %v3103
        %v3112 = vmul.f32 %v3064, %v3104
        %v3113 = vmul.f32 %v3065, %v3105
        %v3114 = vmul.f32 %v3066, %v3106
        %v3115 = vpack.c.bf16 %v3107, %v3107
        %v3116 = vpack.c.bf16 %v3108, %v3108
        %v3117 = vpack.c.bf16 %v3109, %v3109
        %v3118 = vpack.c.bf16 %v3110, %v3110
        %v3119 = vpack.c.bf16 %v3111, %v3111
        %v3120 = vpack.c.bf16 %v3112, %v3112
        %v3121 = vpack.c.bf16 %v3113, %v3113
        %v3122 = vpack.c.bf16 %v3114, %v3114
        %s3123 = scalar_lea.vmem %s7, 16
        %v3124 = vld [vmem:[%s3123] sm:$0xf]
        %v3125 = vld [vmem:[%s3123 + $0x4] sm:$0xf]
        %v3126 = vld [vmem:[%s3123 + $0x8] sm:$0xf]
        %v3127 = vld [vmem:[%s3123 + $0xc] sm:$0xf]
        %s3128 = scalar_lea.vmem [#allocation11], 1
        %v3129 = vld [vmem:[%s3128] sm:$0x1]
        %v3131 = vlaneseq
        %v3132 = vshrl.u32 %v3131, 7
        %v3133 = vsub.s32 0, %v3132
        %v3134 = vrot.slane %v3129, %v3133
        %v3144 = vunpack.c.l.b16 %v3115
        %v3145 = vunpack.c.l.b16 %v3116
        %v3146 = vunpack.c.l.b16 %v3117
        %v3147 = vunpack.c.l.b16 %v3118
        %v3148 = vunpack.c.l.b16 %v3119
        %v3149 = vunpack.c.l.b16 %v3120
        %v3150 = vunpack.c.l.b16 %v3121
        %v3151 = vunpack.c.l.b16 %v3122
        %v3152 = vpack.c.b16 %v3145, %v3144
        %v3153 = vpack.c.b16 %v3147, %v3146
        %v3154 = vpack.c.b16 %v3149, %v3148
        %v3155 = vpack.c.b16 %v3151, %v3150
        %v3160 = vunpack.c.l.b16 %v3124
        %v3161 = vunpack.c.l.b16 %v3125
        %v3162 = vunpack.c.l.b16 %v3126
        %v3163 = vunpack.c.l.b16 %v3127
        %v3164 = vpack.c.b16 %v3161, %v3160
        %v3165 = vpack.c.b16 %v3163, %v3162
        %v3169 = vsel %vm1191, %v3152, 0
        %v3172 = vsel %vm1191, %v3153, 0
        %v3175 = vsel %vm1191, %v3154, 0
        %v3178 = vsel %vm1191, %v3155, 0
        %3180 = vmatprep.subr.bf16.mxu0 0
        %3181 = vmatpush1.bf16.msra.mxu0 0
        %3182 = vmatprep.subr.bf16.mxu0 0
        %3183 = vmatpush1.bf16.msra.mxu0 0
        %3184 = vmatprep.subr.bf16.mxu0 0
        %3185 = vmatpush1.bf16.msra.mxu0 0
        %3186 = vmatprep.subr.bf16.mxu0 0
        %3187 = vmatpush1.bf16.msra.mxu0 0
        %3188 = vmatprep.subr.bf16.mxu0 0
        %3189 = vmatpush1.bf16.msra.mxu0 0
        %3190 = vmatprep.subr.bf16.mxu0 0
        %3191 = vmatpush1.bf16.msra.mxu0 0
        %3192 = vmatprep.subr.bf16.mxu0 0
        %3193 = vmatpush1.bf16.msra.mxu0 %v3165
        %3194 = vmatprep.subr.bf16.mxu0 0
        %3195 = vmatpush1.bf16.msra.mxu0 %v3164
        %3196 = vmatprep.subr.bf16.mxu0 0
        %3197 = vmatpush2.bf16.msra.mxu0 0
        %3198 = vmatprep.subr.bf16.mxu0 0
        %3199 = vmatpush2.bf16.msra.mxu0 0
        %3200 = vmatprep.subr.bf16.mxu0 0
        %3201 = vmatpush2.bf16.msra.mxu0 0
        %3202 = vmatprep.subr.bf16.mxu0 0
        %3203 = vmatpush2.bf16.msra.mxu0 0
        %3204 = vmatprep.subr.bf16.mxu0 0
        %3205 = vmatpush2.bf16.msra.mxu0 0
        %3206 = vmatprep.subr.bf16.mxu0 0
        %3207 = vmatpush2.bf16.msra.mxu0 0
        %3208 = vmatprep.subr.bf16.mxu0 0
        %3209 = vmatpush2.bf16.msra.mxu0 0
        %3210 = vmatprep.subr.bf16.mxu0 0
        %3211 = vmatpush2.bf16.msra.mxu0 0
        %3212 = vmatprep.mubr.bf16.mxu0 0
        %3213 = vmatmul.mubr.bf16.gmra.mxu0 %v3169
        %v3214 = vpop.f32.mrf.mxu0
        %v3215 = vadd.f32 %v3134, %v3214
        %v3216 = vpop.f32.mrf.mxu0
        %v3217 = vpop.f32.mrf.mxu0
        %v3218 = vadd.f32 %v3134, %v3217
        %v3219 = vpop.f32.mrf.mxu0
        %3220 = vmatprep.mubr.bf16.mxu0 0
        %3221 = vmatmul.mubr.bf16.gmra.mxu0 %v3172
        %v3222 = vpop.f32.mrf.mxu0
        %v3223 = vadd.f32 %v3134, %v3222
        %v3224 = vpop.f32.mrf.mxu0
        %v3225 = vpop.f32.mrf.mxu0
        %v3226 = vadd.f32 %v3134, %v3225
        %v3227 = vpop.f32.mrf.mxu0
        %3228 = vmatprep.mubr.bf16.mxu0 0
        %3229 = vmatmul.mubr.bf16.gmra.mxu0 %v3175
        %v3230 = vpop.f32.mrf.mxu0
        %v3231 = vadd.f32 %v3134, %v3230
        %v3232 = vpop.f32.mrf.mxu0
        %v3233 = vpop.f32.mrf.mxu0
        %v3234 = vadd.f32 %v3134, %v3233
        %v3235 = vpop.f32.mrf.mxu0
        %3236 = vmatprep.mubr.bf16.mxu0 0
        %3237 = vmatmul.mubr.bf16.gmra.mxu0 %v3178
        %v3238 = vpop.f32.mrf.mxu0
        %v3239 = vadd.f32 %v3134, %v3238
        %v3240 = vpop.f32.mrf.mxu0
        %v3241 = vpop.f32.mrf.mxu0
        %v3242 = vadd.f32 %v3134, %v3241
        %v3243 = vpop.f32.mrf.mxu0
        %3244 = vdwg.mxu0
        %v3245 = vsub.f32 0.0, %v3215
        %v3246 = vsub.f32 0.0, %v3218
        %v3247 = vsub.f32 0.0, %v3223
        %v3248 = vsub.f32 0.0, %v3226
        %v3249 = vsub.f32 0.0, %v3231
        %v3250 = vsub.f32 0.0, %v3234
        %v3251 = vsub.f32 0.0, %v3239
        %v3252 = vsub.f32 0.0, %v3242
        %v3253 = vmul.f32 %v3245, 1.442695
        %v3254 = vpow.pop %v3253
        %v3255 = vmul.f32 %v3246, 1.442695
        %v3256 = vpow.pop %v3255
        %v3257 = vmul.f32 %v3247, 1.442695
        %v3258 = vpow.pop %v3257
        %v3259 = vmul.f32 %v3248, 1.442695
        %v3260 = vpow.pop %v3259
        %v3261 = vmul.f32 %v3249, 1.442695
        %v3262 = vpow.pop %v3261
        %v3263 = vmul.f32 %v3250, 1.442695
        %v3264 = vpow.pop %v3263
        %v3265 = vmul.f32 %v3251, 1.442695
        %v3266 = vpow.pop %v3265
        %v3267 = vmul.f32 %v3252, 1.442695
        %v3268 = vpow.pop %v3267
        %v3269 = vadd.f32 %v3254, 1.0
        %v3270 = vadd.f32 %v3256, 1.0
        %v3271 = vadd.f32 %v3258, 1.0
        %v3272 = vadd.f32 %v3260, 1.0
        %v3273 = vadd.f32 %v3262, 1.0
        %v3274 = vadd.f32 %v3264, 1.0
        %v3275 = vadd.f32 %v3266, 1.0
        %v3276 = vadd.f32 %v3268, 1.0
        %v3277 = vrcp.pop %v3269
        %v3278 = vrcp.pop %v3270
        %v3279 = vrcp.pop %v3271
        %v3280 = vrcp.pop %v3272
        %v3281 = vrcp.pop %v3273
        %v3282 = vrcp.pop %v3274
        %v3283 = vrcp.pop %v3275
        %v3284 = vrcp.pop %v3276
        %v3285 = vmul.f32 %v3215, %v3277
        %v3286 = vmul.f32 %v3218, %v3278
        %v3287 = vmul.f32 %v3223, %v3279
        %v3288 = vmul.f32 %v3226, %v3280
        %v3289 = vmul.f32 %v3231, %v3281
        %v3290 = vmul.f32 %v3234, %v3282
        %v3291 = vmul.f32 %v3239, %v3283
        %v3292 = vmul.f32 %v3242, %v3284
        %v3293 = vpack.c.bf16 %v3286, %v3285
        %v3294 = vpack.c.bf16 %v3288, %v3287
        %v3295 = vpack.c.bf16 %v3290, %v3289
        %v3296 = vpack.c.bf16 %v3292, %v3291
        %s3297 = scalar_lea.vmem %s11, 16
        %v3298 = vld [vmem:[%s3297] sm:$0xf]
        %v3299 = vld [vmem:[%s3297 + $0x4] sm:$0xf]
        %v3300 = vld [vmem:[%s3297 + $0x8] sm:$0xf]
        %v3301 = vld [vmem:[%s3297 + $0xc] sm:$0xf]
        %v3306 = vunpack.c.l.b16 %v3298
        %v3307 = vunpack.c.l.b16 %v3299
        %v3308 = vunpack.c.l.b16 %v3300
        %v3309 = vunpack.c.l.b16 %v3301
        %v3310 = vpack.c.b16 %v3307, %v3306
        %v3311 = vpack.c.b16 %v3309, %v3308
        %v3315 = vsel %vm1191, %v3293, 0
        %v3318 = vsel %vm1191, %v3294, 0
        %v3321 = vsel %vm1191, %v3295, 0
        %v3324 = vsel %vm1191, %v3296, 0
        %3326 = vmatprep.subr.bf16.mxu0 0
        %3327 = vmatpush1.bf16.msra.mxu0 0
        %3328 = vmatprep.subr.bf16.mxu0 0
        %3329 = vmatpush1.bf16.msra.mxu0 0
        %3330 = vmatprep.subr.bf16.mxu0 0
        %3331 = vmatpush1.bf16.msra.mxu0 0
        %3332 = vmatprep.subr.bf16.mxu0 0
        %3333 = vmatpush1.bf16.msra.mxu0 0
        %3334 = vmatprep.subr.bf16.mxu0 0
        %3335 = vmatpush1.bf16.msra.mxu0 0
        %3336 = vmatprep.subr.bf16.mxu0 0
        %3337 = vmatpush1.bf16.msra.mxu0 0
        %3338 = vmatprep.subr.bf16.mxu0 0
        %3339 = vmatpush1.bf16.msra.mxu0 %v3311
        %3340 = vmatprep.subr.bf16.mxu0 0
        %3341 = vmatpush1.bf16.msra.mxu0 %v3310
        %3342 = vmatprep.subr.bf16.mxu0 0
        %3343 = vmatpush2.bf16.msra.mxu0 0
        %3344 = vmatprep.subr.bf16.mxu0 0
        %3345 = vmatpush2.bf16.msra.mxu0 0
        %3346 = vmatprep.subr.bf16.mxu0 0
        %3347 = vmatpush2.bf16.msra.mxu0 0
        %3348 = vmatprep.subr.bf16.mxu0 0
        %3349 = vmatpush2.bf16.msra.mxu0 0
        %3350 = vmatprep.subr.bf16.mxu0 0
        %3351 = vmatpush2.bf16.msra.mxu0 0
        %3352 = vmatprep.subr.bf16.mxu0 0
        %3353 = vmatpush2.bf16.msra.mxu0 0
        %3354 = vmatprep.subr.bf16.mxu0 0
        %3355 = vmatpush2.bf16.msra.mxu0 0
        %3356 = vmatprep.subr.bf16.mxu0 0
        %3357 = vmatpush2.bf16.msra.mxu0 0
        %3358 = vmatprep.mubr.bf16.mxu0 0
        %3359 = vmatmul.mubr.bf16.gmra.mxu0 %v3315
        %v3360 = vpop.f32.mrf.mxu0
        %v3361 = vadd.f32 0.0, %v3360
        %v3362 = vpop.f32.mrf.mxu0
        %v3363 = vpop.f32.mrf.mxu0
        %v3364 = vadd.f32 0.0, %v3363
        %v3365 = vpop.f32.mrf.mxu0
        %3366 = vmatprep.mubr.bf16.mxu0 0
        %3367 = vmatmul.mubr.bf16.gmra.mxu0 %v3318
        %v3368 = vpop.f32.mrf.mxu0
        %v3369 = vadd.f32 0.0, %v3368
        %v3370 = vpop.f32.mrf.mxu0
        %v3371 = vpop.f32.mrf.mxu0
        %v3372 = vadd.f32 0.0, %v3371
        %v3373 = vpop.f32.mrf.mxu0
        %3374 = vmatprep.mubr.bf16.mxu0 0
        %3375 = vmatmul.mubr.bf16.gmra.mxu0 %v3321
        %v3376 = vpop.f32.mrf.mxu0
        %v3377 = vadd.f32 0.0, %v3376
        %v3378 = vpop.f32.mrf.mxu0
        %v3379 = vpop.f32.mrf.mxu0
        %v3380 = vadd.f32 0.0, %v3379
        %v3381 = vpop.f32.mrf.mxu0
        %3382 = vmatprep.mubr.bf16.mxu0 0
        %3383 = vmatmul.mubr.bf16.gmra.mxu0 %v3324
        %v3384 = vpop.f32.mrf.mxu0
        %v3385 = vadd.f32 0.0, %v3384
        %v3386 = vpop.f32.mrf.mxu0
        %v3387 = vpop.f32.mrf.mxu0
        %v3388 = vadd.f32 0.0, %v3387
        %v3389 = vpop.f32.mrf.mxu0
        %3390 = vdwg.mxu0
        %s3391 = scalar_lea.vmem %s10, 1
        %v3392 = vld [vmem:[%s3391] sm:$0x1]
        %v3394 = vlaneseq
        %v3395 = vshrl.u32 %v3394, 7
        %v3396 = vsub.s32 0, %v3395
        %v3397 = vrot.slane %v3392, %v3396
        %3398 = vrot.lane.b32.xlu0 %v3397, 32
        %v3399 = vpop.permute.xlu0 %3398
        %v3401 = vadd.f32 %v3361, %v3399
        %v3402 = vadd.f32 %v3364, %v3399
        %v3403 = vadd.f32 %v3369, %v3399
        %v3404 = vadd.f32 %v3372, %v3399
        %v3405 = vadd.f32 %v3377, %v3399
        %v3406 = vadd.f32 %v3380, %v3399
        %v3407 = vadd.f32 %v3385, %v3399
        %v3408 = vadd.f32 %v3388, %v3399
        %v3409 = vsub.f32 0.0, %v3401
        %v3410 = vsub.f32 0.0, %v3402
        %v3411 = vsub.f32 0.0, %v3403
        %v3412 = vsub.f32 0.0, %v3404
        %v3413 = vsub.f32 0.0, %v3405
        %v3414 = vsub.f32 0.0, %v3406
        %v3415 = vsub.f32 0.0, %v3407
        %v3416 = vsub.f32 0.0, %v3408
        %v3417 = vmul.f32 %v3409, 1.442695
        %v3418 = vpow.pop %v3417
        %v3419 = vmul.f32 %v3410, 1.442695
        %v3420 = vpow.pop %v3419
        %v3421 = vmul.f32 %v3411, 1.442695
        %v3422 = vpow.pop %v3421
        %v3423 = vmul.f32 %v3412, 1.442695
        %v3424 = vpow.pop %v3423
        %v3425 = vmul.f32 %v3413, 1.442695
        %v3426 = vpow.pop %v3425
        %v3427 = vmul.f32 %v3414, 1.442695
        %v3428 = vpow.pop %v3427
        %v3429 = vmul.f32 %v3415, 1.442695
        %v3430 = vpow.pop %v3429
        %v3431 = vmul.f32 %v3416, 1.442695
        %v3432 = vpow.pop %v3431
        %v3433 = vadd.f32 %v3418, 1.0
        %v3434 = vadd.f32 %v3420, 1.0
        %v3435 = vadd.f32 %v3422, 1.0
        %v3436 = vadd.f32 %v3424, 1.0
        %v3437 = vadd.f32 %v3426, 1.0
        %v3438 = vadd.f32 %v3428, 1.0
        %v3439 = vadd.f32 %v3430, 1.0
        %v3440 = vadd.f32 %v3432, 1.0
        %v3441 = vrcp.pop %v3433
        %v3442 = vrcp.pop %v3434
        %v3443 = vrcp.pop %v3435
        %v3444 = vrcp.pop %v3436
        %v3445 = vrcp.pop %v3437
        %v3446 = vrcp.pop %v3438
        %v3447 = vrcp.pop %v3439
        %v3448 = vrcp.pop %v3440
        %3450 = vset.pattern.permute.xlu0 32
        %3451 = vperm.xlu0 %3450, %v3441
        %v3452 = vpop.permute.xlu0 %3451
        %3455 = vset.pattern.permute.xlu0 32
        %3456 = vperm.xlu0 %3455, %v3442
        %v3457 = vpop.permute.xlu0 %3456
        %3460 = vset.pattern.permute.xlu0 32
        %3461 = vperm.xlu0 %3460, %v3443
        %v3462 = vpop.permute.xlu0 %3461
        %3465 = vset.pattern.permute.xlu0 32
        %3466 = vperm.xlu0 %3465, %v3444
        %v3467 = vpop.permute.xlu0 %3466
        %3470 = vset.pattern.permute.xlu0 32
        %3471 = vperm.xlu0 %3470, %v3445
        %v3472 = vpop.permute.xlu0 %3471
        %3475 = vset.pattern.permute.xlu0 32
        %3476 = vperm.xlu0 %3475, %v3446
        %v3477 = vpop.permute.xlu0 %3476
        %3480 = vset.pattern.permute.xlu0 32
        %3481 = vperm.xlu0 %3480, %v3447
        %v3482 = vpop.permute.xlu0 %3481
        %3485 = vset.pattern.permute.xlu0 32
        %3486 = vperm.xlu0 %3485, %v3448
        %v3487 = vpop.permute.xlu0 %3486
        %v3489 = vmul.f32 %v3452, %v3361
        %v3490 = vmul.f32 %v3457, %v3364
        %v3491 = vmul.f32 %v3462, %v3369
        %v3492 = vmul.f32 %v3467, %v3372
        %v3493 = vmul.f32 %v3472, %v3377
        %v3494 = vmul.f32 %v3477, %v3380
        %v3495 = vmul.f32 %v3482, %v3385
        %v3496 = vmul.f32 %v3487, %v3388
        %s3497 = scalar_lea.vmem [#allocation13], 1
        %v3498 = vld [vmem:[%s3497] sm:$0x1]
        %v3500 = vlaneseq
        %v3501 = vshrl.u32 %v3500, 7
        %v3502 = vsub.s32 0, %v3501
        %v3503 = vrot.slane %v3498, %v3502
        %v3505 = vadd.f32 %v3489, %v3503
        %v3506 = vadd.f32 %v3490, %v3503
        %v3507 = vadd.f32 %v3491, %v3503
        %v3508 = vadd.f32 %v3492, %v3503
        %v3509 = vadd.f32 %v3493, %v3503
        %v3510 = vadd.f32 %v3494, %v3503
        %v3511 = vadd.f32 %v3495, %v3503
        %v3512 = vadd.f32 %v3496, %v3503
        %v3513 = vsub.f32 0.0, %v3505
        %v3514 = vsub.f32 0.0, %v3506
        %v3515 = vsub.f32 0.0, %v3507
        %v3516 = vsub.f32 0.0, %v3508
        %v3517 = vsub.f32 0.0, %v3509
        %v3518 = vsub.f32 0.0, %v3510
        %v3519 = vsub.f32 0.0, %v3511
        %v3520 = vsub.f32 0.0, %v3512
        %v3521 = vmul.f32 %v3513, 1.442695
        %v3522 = vpow.pop %v3521
        %v3523 = vmul.f32 %v3514, 1.442695
        %v3524 = vpow.pop %v3523
        %v3525 = vmul.f32 %v3515, 1.442695
        %v3526 = vpow.pop %v3525
        %v3527 = vmul.f32 %v3516, 1.442695
        %v3528 = vpow.pop %v3527
        %v3529 = vmul.f32 %v3517, 1.442695
        %v3530 = vpow.pop %v3529
        %v3531 = vmul.f32 %v3518, 1.442695
        %v3532 = vpow.pop %v3531
        %v3533 = vmul.f32 %v3519, 1.442695
        %v3534 = vpow.pop %v3533
        %v3535 = vmul.f32 %v3520, 1.442695
        %v3536 = vpow.pop %v3535
        %v3537 = vadd.f32 %v3522, 1.0
        %v3538 = vadd.f32 %v3524, 1.0
        %v3539 = vadd.f32 %v3526, 1.0
        %v3540 = vadd.f32 %v3528, 1.0
        %v3541 = vadd.f32 %v3530, 1.0
        %v3542 = vadd.f32 %v3532, 1.0
        %v3543 = vadd.f32 %v3534, 1.0
        %v3544 = vadd.f32 %v3536, 1.0
        %v3545 = vrcp.pop %v3537
        %v3546 = vrcp.pop %v3538
        %v3547 = vrcp.pop %v3539
        %v3548 = vrcp.pop %v3540
        %v3549 = vrcp.pop %v3541
        %v3550 = vrcp.pop %v3542
        %v3551 = vrcp.pop %v3543
        %v3552 = vrcp.pop %v3544
        %v3553 = vmul.f32 %v3505, %v3545
        %v3554 = vmul.f32 %v3506, %v3546
        %v3555 = vmul.f32 %v3507, %v3547
        %v3556 = vmul.f32 %v3508, %v3548
        %v3557 = vmul.f32 %v3509, %v3549
        %v3558 = vmul.f32 %v3510, %v3550
        %v3559 = vmul.f32 %v3511, %v3551
        %v3560 = vmul.f32 %v3512, %v3552
        %v3561 = vunpack.c.l.bf16 %v3293
        %v3562 = vunpack.c.h.bf16 %v3293
        %v3563 = vunpack.c.l.bf16 %v3294
        %v3564 = vunpack.c.h.bf16 %v3294
        %v3565 = vunpack.c.l.bf16 %v3295
        %v3566 = vunpack.c.h.bf16 %v3295
        %v3567 = vunpack.c.l.bf16 %v3296
        %v3568 = vunpack.c.h.bf16 %v3296
        %v3569 = vmul.f32 %v3452, %v3561
        %v3570 = vmul.f32 %v3457, %v3562
        %v3571 = vmul.f32 %v3462, %v3563
        %v3572 = vmul.f32 %v3467, %v3564
        %v3573 = vmul.f32 %v3472, %v3565
        %v3574 = vmul.f32 %v3477, %v3566
        %v3575 = vmul.f32 %v3482, %v3567
        %v3576 = vmul.f32 %v3487, %v3568
        %v3577 = vadd.f32 %v2867, %v2965
        %v3578 = vadd.f32 %v3577, %v3057
        %v3579 = vsub.f32 0.0, %v3578
        %v3580 = vmul.f32 %v3579, 1.442695
        %v3581 = vpow.pop %v3580
        %v3582 = vadd.f32 %v3581, 1.0
        %v3583 = vrcp.pop %v3582
        %v3584 = vmul.f32 %v3578, %v3583
        %v3585 = vpack.c.bf16 %v3584, %v3584
        %v3587 = vsel %vm1191, %v3585, 0
        %3589 = vmatprep.subr.bf16.mxu0 0
        %3590 = vmatpush1.bf16.msra.mxu0 0
        %3591 = vmatprep.subr.bf16.mxu0 0
        %3592 = vmatpush1.bf16.msra.mxu0 0
        %3593 = vmatprep.subr.bf16.mxu0 0
        %3594 = vmatpush1.bf16.msra.mxu0 0
        %3595 = vmatprep.subr.bf16.mxu0 0
        %3596 = vmatpush1.bf16.msra.mxu0 0
        %3597 = vmatprep.subr.bf16.mxu0 0
        %3598 = vmatpush1.bf16.msra.mxu0 0
        %3599 = vmatprep.subr.bf16.mxu0 0
        %3600 = vmatpush1.bf16.msra.mxu0 0
        %3601 = vmatprep.subr.bf16.mxu0 0
        %3602 = vmatpush1.bf16.msra.mxu0 %v3165
        %3603 = vmatprep.subr.bf16.mxu0 0
        %3604 = vmatpush1.bf16.msra.mxu0 %v3164
        %3605 = vmatprep.subr.bf16.mxu0 0
        %3606 = vmatpush2.bf16.msra.mxu0 0
        %3607 = vmatprep.subr.bf16.mxu0 0
        %3608 = vmatpush2.bf16.msra.mxu0 0
        %3609 = vmatprep.subr.bf16.mxu0 0
        %3610 = vmatpush2.bf16.msra.mxu0 0
        %3611 = vmatprep.subr.bf16.mxu0 0
        %3612 = vmatpush2.bf16.msra.mxu0 0
        %3613 = vmatprep.subr.bf16.mxu0 0
        %3614 = vmatpush2.bf16.msra.mxu0 0
        %3615 = vmatprep.subr.bf16.mxu0 0
        %3616 = vmatpush2.bf16.msra.mxu0 0
        %3617 = vmatprep.subr.bf16.mxu0 0
        %3618 = vmatpush2.bf16.msra.mxu0 0
        %3619 = vmatprep.subr.bf16.mxu0 0
        %3620 = vmatpush2.bf16.msra.mxu0 0
        %3621 = vmatprep.mubr.bf16.mxu0 0
        %3622 = vmatmul.mubr.bf16.gmra.mxu0 %v3587
        %v3623 = vpop.f32.mrf.mxu0
        %v3624 = vadd.f32 %v3134, %v3623
        %v3625 = vpop.f32.mrf.mxu0
        %v3626 = vpop.f32.mrf.mxu0
        %v3627 = vpop.f32.mrf.mxu0
        %3628 = vdwg.mxu0
        %v3629 = vsub.f32 0.0, %v3624
        %v3630 = vmul.f32 %v3629, 1.442695
        %v3631 = vpow.pop %v3630
        %v3632 = vadd.f32 %v3631, 1.0
        %v3633 = vrcp.pop %v3632
        %v3634 = vmul.f32 %v3624, %v3633
        %v3635 = vpack.c.bf16 %v3634, %v3634
        %v3636 = vunpack.c.l.bf16 %v3635
        %s3637 = scalar_lea.vmem %s9, 16
        %v3638 = vld [vmem:[%s3637] sm:$0xf]
        %v3639 = vld [vmem:[%s3637 + $0x4] sm:$0xf]
        %v3640 = vld [vmem:[%s3637 + $0x8] sm:$0xf]
        %v3641 = vld [vmem:[%s3637 + $0xc] sm:$0xf]
        %v3647 = vunpack.c.l.b16 %v3638
        %v3648 = vunpack.c.l.b16 %v3639
        %v3649 = vunpack.c.l.b16 %v3640
        %v3650 = vunpack.c.l.b16 %v3641
        %v3651 = vpack.c.b16 %v3648, %v3647
        %v3652 = vpack.c.b16 %v3650, %v3649
        %v3656 = vsel %vm1191, %v3635, 0
        %3658 = vmatprep.subr.bf16.mxu0 0
        %3659 = vmatpush1.bf16.msra.mxu0 0
        %3660 = vmatprep.subr.bf16.mxu0 0
        %3661 = vmatpush1.bf16.msra.mxu0 0
        %3662 = vmatprep.subr.bf16.mxu0 0
        %3663 = vmatpush1.bf16.msra.mxu0 0
        %3664 = vmatprep.subr.bf16.mxu0 0
        %3665 = vmatpush1.bf16.msra.mxu0 0
        %3666 = vmatprep.subr.bf16.mxu0 0
        %3667 = vmatpush1.bf16.msra.mxu0 0
        %3668 = vmatprep.subr.bf16.mxu0 0
        %3669 = vmatpush1.bf16.msra.mxu0 0
        %3670 = vmatprep.subr.bf16.mxu0 0
        %3671 = vmatpush1.bf16.msra.mxu0 %v3652
        %3672 = vmatprep.subr.bf16.mxu0 0
        %3673 = vmatpush1.bf16.msra.mxu0 %v3651
        %3674 = vmatprep.subr.bf16.mxu0 0
        %3675 = vmatpush2.bf16.msra.mxu0 0
        %3676 = vmatprep.subr.bf16.mxu0 0
        %3677 = vmatpush2.bf16.msra.mxu0 0
        %3678 = vmatprep.subr.bf16.mxu0 0
        %3679 = vmatpush2.bf16.msra.mxu0 0
        %3680 = vmatprep.subr.bf16.mxu0 0
        %3681 = vmatpush2.bf16.msra.mxu0 0
        %3682 = vmatprep.subr.bf16.mxu0 0
        %3683 = vmatpush2.bf16.msra.mxu0 0
        %3684 = vmatprep.subr.bf16.mxu0 0
        %3685 = vmatpush2.bf16.msra.mxu0 0
        %3686 = vmatprep.subr.bf16.mxu0 0
        %3687 = vmatpush2.bf16.msra.mxu0 0
        %3688 = vmatprep.subr.bf16.mxu0 0
        %3689 = vmatpush2.bf16.msra.mxu0 0
        %3690 = vmatprep.mubr.bf16.mxu0 0
        %3691 = vmatmul.mubr.bf16.gmra.mxu0 %v3656
        %v3692 = vpop.f32.mrf.mxu0
        %v3693 = vadd.f32 %v3397, %v3692
        %v3694 = vpop.f32.mrf.mxu0
        %v3695 = vpop.f32.mrf.mxu0
        %v3696 = vpop.f32.mrf.mxu0
        %3697 = vdwg.mxu0
        %v3698 = vsub.f32 0.0, %v3693
        %v3699 = vmul.f32 %v3698, 1.442695
        %v3700 = vpow.pop %v3699
        %v3701 = vadd.f32 %v3700, 1.0
        %v3702 = vrcp.pop %v3701
        %3704 = vset.pattern.permute.xlu0 0
        %3705 = vperm.xlu0 %3704, %v3702
        %v3706 = vpop.permute.xlu0 %3705
        %v3708 = vmul.f32 %v3636, %v3706
        %v3709 = vpack.c.bf16 %v3554, %v3553
        %v3710 = vpack.c.bf16 %v3556, %v3555
        %v3711 = vpack.c.bf16 %v3558, %v3557
        %v3712 = vpack.c.bf16 %v3560, %v3559
        %s3713 = scalar_lea.vmem %s13, 16
        %v3714 = vld [vmem:[%s3713] sm:$0xf]
        %v3715 = vld [vmem:[%s3713 + $0x4] sm:$0xf]
        %v3716 = vld [vmem:[%s3713 + $0x8] sm:$0xf]
        %v3717 = vld [vmem:[%s3713 + $0xc] sm:$0xf]
        %v3722 = vunpack.c.l.b16 %v3714
        %v3723 = vunpack.c.l.b16 %v3715
        %v3724 = vunpack.c.l.b16 %v3716
        %v3725 = vunpack.c.l.b16 %v3717
        %v3726 = vpack.c.b16 %v3723, %v3722
        %v3727 = vpack.c.b16 %v3725, %v3724
        %v3731 = vsel %vm1191, %v3709, 0
        %v3734 = vsel %vm1191, %v3710, 0
        %v3737 = vsel %vm1191, %v3711, 0
        %v3740 = vsel %vm1191, %v3712, 0
        %3742 = vmatprep.subr.bf16.mxu0 0
        %3743 = vmatpush1.bf16.msra.mxu0 0
        %3744 = vmatprep.subr.bf16.mxu0 0
        %3745 = vmatpush1.bf16.msra.mxu0 0
        %3746 = vmatprep.subr.bf16.mxu0 0
        %3747 = vmatpush1.bf16.msra.mxu0 0
        %3748 = vmatprep.subr.bf16.mxu0 0
        %3749 = vmatpush1.bf16.msra.mxu0 0
        %3750 = vmatprep.subr.bf16.mxu0 0
        %3751 = vmatpush1.bf16.msra.mxu0 0
        %3752 = vmatprep.subr.bf16.mxu0 0
        %3753 = vmatpush1.bf16.msra.mxu0 0
        %3754 = vmatprep.subr.bf16.mxu0 0
        %3755 = vmatpush1.bf16.msra.mxu0 %v3727
        %3756 = vmatprep.subr.bf16.mxu0 0
        %3757 = vmatpush1.bf16.msra.mxu0 %v3726
        %3758 = vmatprep.subr.bf16.mxu0 0
        %3759 = vmatpush2.bf16.msra.mxu0 0
        %3760 = vmatprep.subr.bf16.mxu0 0
        %3761 = vmatpush2.bf16.msra.mxu0 0
        %3762 = vmatprep.subr.bf16.mxu0 0
        %3763 = vmatpush2.bf16.msra.mxu0 0
        %3764 = vmatprep.subr.bf16.mxu0 0
        %3765 = vmatpush2.bf16.msra.mxu0 0
        %3766 = vmatprep.subr.bf16.mxu0 0
        %3767 = vmatpush2.bf16.msra.mxu0 0
        %3768 = vmatprep.subr.bf16.mxu0 0
        %3769 = vmatpush2.bf16.msra.mxu0 0
        %3770 = vmatprep.subr.bf16.mxu0 0
        %3771 = vmatpush2.bf16.msra.mxu0 0
        %3772 = vmatprep.subr.bf16.mxu0 0
        %3773 = vmatpush2.bf16.msra.mxu0 0
        %3774 = vmatprep.mubr.bf16.mxu0 0
        %3775 = vmatmul.mubr.bf16.gmra.mxu0 %v3731
        %v3776 = vpop.f32.mrf.mxu0
        %v3777 = vadd.f32 0.0, %v3776
        %v3778 = vpop.f32.mrf.mxu0
        %v3779 = vpop.f32.mrf.mxu0
        %v3780 = vadd.f32 0.0, %v3779
        %v3781 = vpop.f32.mrf.mxu0
        %3782 = vmatprep.mubr.bf16.mxu0 0
        %3783 = vmatmul.mubr.bf16.gmra.mxu0 %v3734
        %v3784 = vpop.f32.mrf.mxu0
        %v3785 = vadd.f32 0.0, %v3784
        %v3786 = vpop.f32.mrf.mxu0
        %v3787 = vpop.f32.mrf.mxu0
        %v3788 = vadd.f32 0.0, %v3787
        %v3789 = vpop.f32.mrf.mxu0
        %3790 = vmatprep.mubr.bf16.mxu0 0
        %3791 = vmatmul.mubr.bf16.gmra.mxu0 %v3737
        %v3792 = vpop.f32.mrf.mxu0
        %v3793 = vadd.f32 0.0, %v3792
        %v3794 = vpop.f32.mrf.mxu0
        %v3795 = vpop.f32.mrf.mxu0
        %v3796 = vadd.f32 0.0, %v3795
        %v3797 = vpop.f32.mrf.mxu0
        %3798 = vmatprep.mubr.bf16.mxu0 0
        %3799 = vmatmul.mubr.bf16.gmra.mxu0 %v3740
        %v3800 = vpop.f32.mrf.mxu0
        %v3801 = vadd.f32 0.0, %v3800
        %v3802 = vpop.f32.mrf.mxu0
        %v3803 = vpop.f32.mrf.mxu0
        %v3804 = vadd.f32 0.0, %v3803
        %v3805 = vpop.f32.mrf.mxu0
        %3806 = vdwg.mxu0
        %3815 = vset.pattern.permute.xlu0 0
        %3816 = vperm.xlu0 %3815, %v3777
        %v3817 = vpop.permute.xlu0 %3816
        %3818 = vset.pattern.permute.xlu0 0
        %3819 = vperm.xlu0 %3818, %v3780
        %v3820 = vpop.permute.xlu0 %3819
        %3821 = vset.pattern.permute.xlu0 0
        %3822 = vperm.xlu0 %3821, %v3785
        %v3823 = vpop.permute.xlu0 %3822
        %3824 = vset.pattern.permute.xlu0 0
        %3825 = vperm.xlu0 %3824, %v3788
        %v3826 = vpop.permute.xlu0 %3825
        %3827 = vset.pattern.permute.xlu0 0
        %3828 = vperm.xlu0 %3827, %v3793
        %v3829 = vpop.permute.xlu0 %3828
        %3830 = vset.pattern.permute.xlu0 0
        %3831 = vperm.xlu0 %3830, %v3796
        %v3832 = vpop.permute.xlu0 %3831
        %3833 = vset.pattern.permute.xlu0 0
        %3834 = vperm.xlu0 %3833, %v3801
        %v3835 = vpop.permute.xlu0 %3834
        %3836 = vset.pattern.permute.xlu0 0
        %3837 = vperm.xlu0 %3836, %v3804
        %v3838 = vpop.permute.xlu0 %3837
        %v3839 = vlaneseq
        %v3840 = vshrl.u32 %v3839, 7
        %v3841 = vsub.s32 %v2226, %v3840
        %v3842 = vrot.slane %v3817, %v3841
        %v3843 = vlaneseq
        %v3844 = vshrl.u32 %v3843, 7
        %v3845 = vsub.s32 %v2226, %v3844
        %v3846 = vrot.slane %v3820, %v3845
        %v3847 = vlaneseq
        %v3848 = vshrl.u32 %v3847, 7
        %v3849 = vsub.s32 %v2226, %v3848
        %v3850 = vrot.slane %v3823, %v3849
        %v3851 = vlaneseq
        %v3852 = vshrl.u32 %v3851, 7
        %v3853 = vsub.s32 %v2226, %v3852
        %v3854 = vrot.slane %v3826, %v3853
        %v3855 = vlaneseq
        %v3856 = vshrl.u32 %v3855, 7
        %v3857 = vsub.s32 %v2226, %v3856
        %v3858 = vrot.slane %v3829, %v3857
        %v3859 = vlaneseq
        %v3860 = vshrl.u32 %v3859, 7
        %v3861 = vsub.s32 %v2226, %v3860
        %v3862 = vrot.slane %v3832, %v3861
        %v3863 = vlaneseq
        %v3864 = vshrl.u32 %v3863, 7
        %v3865 = vsub.s32 %v2226, %v3864
        %v3866 = vrot.slane %v3835, %v3865
        %v3867 = vlaneseq
        %v3868 = vshrl.u32 %v3867, 7
        %v3869 = vsub.s32 %v2226, %v3868
        %v3870 = vrot.slane %v3838, %v3869
        %v3871 = vsel %vm2259, %v3846, %v3842
        %v3872 = vsel %vm2261, %v3850, %v3871
        %v3873 = vsel %vm2263, %v3854, %v3872
        %v3874 = vsel %vm2265, %v3858, %v3873
        %v3875 = vsel %vm2267, %v3862, %v3874
        %v3876 = vsel %vm2269, %v3866, %v3875
        %v3877 = vsel %vm2271, %v3870, %v3876
        %v3879 = vsel %vm2274, %v3877, 0.0
        %3880 = vadd.xlane.f32.xlu0 %v3879
        %v3881 = vpop.xlane.xlu0 %3880
        %v3882 = vsel %vm2274, %v3877, 0
        %3884 = vmatprep.subr.mxu0 0.0
        %3885 = vmatpush1.msra.mxu0 0.0
        %3886 = vmatprep.subr.mxu0 0.0
        %3887 = vmatpush1.msra.mxu0 0.0
        %3888 = vmatprep.subr.mxu0 0.0
        %3889 = vmatpush1.msra.mxu0 0.0
        %3890 = vmatprep.subr.mxu0 0.0
        %3891 = vmatpush1.msra.mxu0 0.0
        %3892 = vmatprep.subr.mxu0 0.0
        %3893 = vmatpush1.msra.mxu0 0.0
        %3894 = vmatprep.subr.mxu0 0.0
        %3895 = vmatpush1.msra.mxu0 0.0
        %3896 = vmatprep.subr.mxu0 0.0
        %3897 = vmatpush1.msra.mxu0 0.0
        %3898 = vmatprep.subr.mxu0 0.0
        %3899 = vmatpush1.msra.mxu0 0.0
        %3900 = vmatprep.subr.mxu0 0.0
        %3901 = vmatpush1.msra.mxu0 0.0
        %3902 = vmatprep.subr.mxu0 0.0
        %3903 = vmatpush1.msra.mxu0 0.0
        %3904 = vmatprep.subr.mxu0 0.0
        %3905 = vmatpush1.msra.mxu0 0.0
        %3906 = vmatprep.subr.mxu0 0.0
        %3907 = vmatpush1.msra.mxu0 0.0
        %3908 = vmatprep.subr.mxu0 0.0
        %3909 = vmatpush1.msra.mxu0 0.0
        %3910 = vmatprep.subr.mxu0 0.0
        %3911 = vmatpush1.msra.mxu0 0.0
        %3912 = vmatprep.subr.mxu0 0.0
        %3913 = vmatpush1.msra.mxu0 0.0
        %3914 = vmatprep.subr.mxu0 0.0
        %3915 = vmatpush1.msra.mxu0 %v2353
        %3916 = vmatprep.subr.mxu0 0.0
        %3917 = vmatpush2.msra.mxu0 0.0
        %3918 = vmatprep.subr.mxu0 0.0
        %3919 = vmatpush2.msra.mxu0 0.0
        %3920 = vmatprep.subr.mxu0 0.0
        %3921 = vmatpush2.msra.mxu0 0.0
        %3922 = vmatprep.subr.mxu0 0.0
        %3923 = vmatpush2.msra.mxu0 0.0
        %3924 = vmatprep.subr.mxu0 0.0
        %3925 = vmatpush2.msra.mxu0 0.0
        %3926 = vmatprep.subr.mxu0 0.0
        %3927 = vmatpush2.msra.mxu0 0.0
        %3928 = vmatprep.subr.mxu0 0.0
        %3929 = vmatpush2.msra.mxu0 0.0
        %3930 = vmatprep.subr.mxu0 0.0
        %3931 = vmatpush2.msra.mxu0 0.0
        %3932 = vmatprep.subr.mxu0 0.0
        %3933 = vmatpush2.msra.mxu0 0.0
        %3934 = vmatprep.subr.mxu0 0.0
        %3935 = vmatpush2.msra.mxu0 0.0
        %3936 = vmatprep.subr.mxu0 0.0
        %3937 = vmatpush2.msra.mxu0 0.0
        %3938 = vmatprep.subr.mxu0 0.0
        %3939 = vmatpush2.msra.mxu0 0.0
        %3940 = vmatprep.subr.mxu0 0.0
        %3941 = vmatpush2.msra.mxu0 0.0
        %3942 = vmatprep.subr.mxu0 0.0
        %3943 = vmatpush2.msra.mxu0 0.0
        %3944 = vmatprep.subr.mxu0 0.0
        %3945 = vmatpush2.msra.mxu0 0.0
        %3946 = vmatprep.subr.mxu0 0.0
        %3947 = vmatpush2.msra.mxu0 0.0
        %3948 = vmatprep.mubr.f32.mxu0 0.0
        %3949 = vmatmul.mubr.f32.gmra.mxu0 %v3882
        %v3950 = vpop.f32.mrf.mxu0
        %v3951 = vadd.f32 0.0, %v3950
        %v3952 = vpop.f32.mrf.mxu0
        %3953 = vdwg.mxu0
        %v3954 = vmul.f32 %v2353, %v3881
        %v3955 = vsub.f32 %v3954, %v3951
        %v3956 = vmul.f32 %v3955, 0.14285715
        %v3957 = vadd.f32 %v2353, %v3956
        %v3958 = vsel %vm1191, %v3569, 0.0
        %v3959 = vrot.slane %v3958, 4
        %v3960 = vadd.f32 %v3958, %v3959
        %v3961 = vrot.slane %v3960, 2
        %v3962 = vadd.f32 %v3960, %v3961
        %v3963 = vrot.slane %v3962, 1
        %v3964 = vadd.f32 %v3962, %v3963
        %v3965 = vsel %vm1191, %v3570, 0.0
        %v3966 = vrot.slane %v3965, 4
        %v3967 = vadd.f32 %v3965, %v3966
        %v3968 = vrot.slane %v3967, 2
        %v3969 = vadd.f32 %v3967, %v3968
        %v3970 = vrot.slane %v3969, 1
        %v3971 = vadd.f32 %v3969, %v3970
        %v3972 = vsel %vm1191, %v3571, 0.0
        %v3973 = vrot.slane %v3972, 4
        %v3974 = vadd.f32 %v3972, %v3973
        %v3975 = vrot.slane %v3974, 2
        %v3976 = vadd.f32 %v3974, %v3975
        %v3977 = vrot.slane %v3976, 1
        %v3978 = vadd.f32 %v3976, %v3977
        %v3979 = vsel %vm1191, %v3572, 0.0
        %v3980 = vrot.slane %v3979, 4
        %v3981 = vadd.f32 %v3979, %v3980
        %v3982 = vrot.slane %v3981, 2
        %v3983 = vadd.f32 %v3981, %v3982
        %v3984 = vrot.slane %v3983, 1
        %v3985 = vadd.f32 %v3983, %v3984
        %v3986 = vsel %vm1191, %v3573, 0.0
        %v3987 = vrot.slane %v3986, 4
        %v3988 = vadd.f32 %v3986, %v3987
        %v3989 = vrot.slane %v3988, 2
        %v3990 = vadd.f32 %v3988, %v3989
        %v3991 = vrot.slane %v3990, 1
        %v3992 = vadd.f32 %v3990, %v3991
        %v3993 = vsel %vm1191, %v3574, 0.0
        %v3994 = vrot.slane %v3993, 4
        %v3995 = vadd.f32 %v3993, %v3994
        %v3996 = vrot.slane %v3995, 2
        %v3997 = vadd.f32 %v3995, %v3996
        %v3998 = vrot.slane %v3997, 1
        %v3999 = vadd.f32 %v3997, %v3998
        %v4000 = vsel %vm1191, %v3575, 0.0
        %v4001 = vrot.slane %v4000, 4
        %v4002 = vadd.f32 %v4000, %v4001
        %v4003 = vrot.slane %v4002, 2
        %v4004 = vadd.f32 %v4002, %v4003
        %v4005 = vrot.slane %v4004, 1
        %v4006 = vadd.f32 %v4004, %v4005
        %v4007 = vsel %vm1191, %v3576, 0.0
        %v4008 = vrot.slane %v4007, 4
        %v4009 = vadd.f32 %v4007, %v4008
        %v4010 = vrot.slane %v4009, 2
        %v4011 = vadd.f32 %v4009, %v4010
        %v4012 = vrot.slane %v4011, 1
        %v4013 = vadd.f32 %v4011, %v4012
        %v4015 = vrot.slane %v3708, 1
        %v4016 = vrot.slane %v3708, 2
        %v4017 = vrot.slane %v3708, 3
        %v4018 = vrot.slane %v3708, 4
        %v4019 = vrot.slane %v3708, 5
        %v4020 = vrot.slane %v3708, 6
        %v4021 = vrot.slane %v3708, 7
        %v4030 = vsub.f32 %v3964, %v3708
        %v4031 = vsub.f32 %v3971, %v4015
        %v4032 = vsub.f32 %v3978, %v4016
        %v4033 = vsub.f32 %v3985, %v4017
        %v4034 = vsub.f32 %v3992, %v4018
        %v4035 = vsub.f32 %v3999, %v4019
        %v4036 = vsub.f32 %v4006, %v4020
        %v4037 = vsub.f32 %v4013, %v4021
        %s4038 = scalar_lea.vmem [#allocation14], 16
        %v4039 = vld [vmem:[%s4038] sm:$0xf]
        %v4040 = vld [vmem:[%s4038 + $0x4] sm:$0xf]
        %v4041 = vld [vmem:[%s4038 + $0x8] sm:$0xf]
        %v4042 = vld [vmem:[%s4038 + $0xc] sm:$0xf]
        %v4043 = vpack.c.bf16 %v2674, %v2674
        %s4044 = scalar_lea.vmem [#allocation16], 16
        %v4045 = vld [vmem:[%s4044] sm:$0xf]
        %v4046 = vld [vmem:[%s4044 + $0x4] sm:$0xf]
        %v4047 = vld [vmem:[%s4044 + $0x8] sm:$0xf]
        %v4048 = vld [vmem:[%s4044 + $0xc] sm:$0xf]
        %v4049 = vpack.c.bf16 %v4030, %v4030
        %v4050 = vpack.c.bf16 %v4031, %v4031
        %v4051 = vpack.c.bf16 %v4032, %v4032
        %v4052 = vpack.c.bf16 %v4033, %v4033
        %v4053 = vpack.c.bf16 %v4034, %v4034
        %v4054 = vpack.c.bf16 %v4035, %v4035
        %v4055 = vpack.c.bf16 %v4036, %v4036
        %v4056 = vpack.c.bf16 %v4037, %v4037
        %v4065 = vunpack.c.l.b16 %v4049
        %v4066 = vunpack.c.l.b16 %v4050
        %v4067 = vunpack.c.l.b16 %v4051
        %v4068 = vunpack.c.l.b16 %v4052
        %v4069 = vunpack.c.l.b16 %v4053
        %v4070 = vunpack.c.l.b16 %v4054
        %v4071 = vunpack.c.l.b16 %v4055
        %v4072 = vunpack.c.l.b16 %v4056
        %v4073 = vrot.slane %v4066, 7
        %v4074 = vsel %vm2259, %v4073, %v4065
        %v4075 = vrot.slane %v4067, 6
        %v4076 = vsel %vm2261, %v4075, %v4074
        %v4077 = vrot.slane %v4068, 5
        %v4078 = vsel %vm2263, %v4077, %v4076
        %v4079 = vrot.slane %v4069, 4
        %v4080 = vsel %vm2265, %v4079, %v4078
        %v4081 = vrot.slane %v4070, 3
        %v4082 = vsel %vm2267, %v4081, %v4080
        %v4083 = vrot.slane %v4071, 2
        %v4084 = vsel %vm2269, %v4083, %v4082
        %v4085 = vrot.slane %v4072, 1
        %v4086 = vsel %vm2271, %v4085, %v4084
        %v4087 = vpack.c.b16 %v4086, %v4086
        %v4092 = vunpack.c.l.b16 %v4045
        %v4093 = vunpack.c.l.b16 %v4046
        %v4094 = vunpack.c.l.b16 %v4047
        %v4095 = vunpack.c.l.b16 %v4048
        %v4096 = vpack.c.b16 %v4093, %v4092
        %v4097 = vpack.c.b16 %v4095, %v4094
        %v4101 = vsel %vm1191, %v4087, 0
        %4103 = vmatprep.subr.bf16.mxu0 0
        %4104 = vmatpush1.bf16.msra.mxu0 0
        %4105 = vmatprep.subr.bf16.mxu0 0
        %4106 = vmatpush1.bf16.msra.mxu0 0
        %4107 = vmatprep.subr.bf16.mxu0 0
        %4108 = vmatpush1.bf16.msra.mxu0 0
        %4109 = vmatprep.subr.bf16.mxu0 0
        %4110 = vmatpush1.bf16.msra.mxu0 0
        %4111 = vmatprep.subr.bf16.mxu0 0
        %4112 = vmatpush1.bf16.msra.mxu0 0
        %4113 = vmatprep.subr.bf16.mxu0 0
        %4114 = vmatpush1.bf16.msra.mxu0 0
        %4115 = vmatprep.subr.bf16.mxu0 0
        %4116 = vmatpush1.bf16.msra.mxu0 %v4097
        %4117 = vmatprep.subr.bf16.mxu0 0
        %4118 = vmatpush1.bf16.msra.mxu0 %v4096
        %4119 = vmatprep.subr.bf16.mxu0 0
        %4120 = vmatpush2.bf16.msra.mxu0 0
        %4121 = vmatprep.subr.bf16.mxu0 0
        %4122 = vmatpush2.bf16.msra.mxu0 0
        %4123 = vmatprep.subr.bf16.mxu0 0
        %4124 = vmatpush2.bf16.msra.mxu0 0
        %4125 = vmatprep.subr.bf16.mxu0 0
        %4126 = vmatpush2.bf16.msra.mxu0 0
        %4127 = vmatprep.subr.bf16.mxu0 0
        %4128 = vmatpush2.bf16.msra.mxu0 0
        %4129 = vmatprep.subr.bf16.mxu0 0
        %4130 = vmatpush2.bf16.msra.mxu0 0
        %4131 = vmatprep.subr.bf16.mxu0 0
        %4132 = vmatpush2.bf16.msra.mxu0 0
        %4133 = vmatprep.subr.bf16.mxu0 0
        %4134 = vmatpush2.bf16.msra.mxu0 0
        %4135 = vmatprep.mubr.bf16.mxu0 0
        %4136 = vmatmul.mubr.bf16.gmra.mxu0 %v4101
        %v4137 = vpop.f32.mrf.mxu0
        %v4138 = vadd.f32 0.0, %v4137
        %v4139 = vpop.f32.mrf.mxu0
        %v4140 = vpop.f32.mrf.mxu0
        %v4141 = vpop.f32.mrf.mxu0
        %4142 = vdwg.mxu0
        %v4147 = vunpack.c.l.b16 %v4039
        %v4148 = vunpack.c.l.b16 %v4040
        %v4149 = vunpack.c.l.b16 %v4041
        %v4150 = vunpack.c.l.b16 %v4042
        %v4151 = vpack.c.b16 %v4148, %v4147
        %v4152 = vpack.c.b16 %v4150, %v4149
        %v4156 = vsel %vm1191, %v4043, 0
        %4158 = vmatprep.subr.bf16.mxu0 0
        %4159 = vmatpush1.bf16.msra.mxu0 0
        %4160 = vmatprep.subr.bf16.mxu0 0
        %4161 = vmatpush1.bf16.msra.mxu0 0
        %4162 = vmatprep.subr.bf16.mxu0 0
        %4163 = vmatpush1.bf16.msra.mxu0 0
        %4164 = vmatprep.subr.bf16.mxu0 0
        %4165 = vmatpush1.bf16.msra.mxu0 0
        %4166 = vmatprep.subr.bf16.mxu0 0
        %4167 = vmatpush1.bf16.msra.mxu0 0
        %4168 = vmatprep.subr.bf16.mxu0 0
        %4169 = vmatpush1.bf16.msra.mxu0 0
        %4170 = vmatprep.subr.bf16.mxu0 0
        %4171 = vmatpush1.bf16.msra.mxu0 %v4152
        %4172 = vmatprep.subr.bf16.mxu0 0
        %4173 = vmatpush1.bf16.msra.mxu0 %v4151
        %4174 = vmatprep.subr.bf16.mxu0 0
        %4175 = vmatpush2.bf16.msra.mxu0 0
        %4176 = vmatprep.subr.bf16.mxu0 0
        %4177 = vmatpush2.bf16.msra.mxu0 0
        %4178 = vmatprep.subr.bf16.mxu0 0
        %4179 = vmatpush2.bf16.msra.mxu0 0
        %4180 = vmatprep.subr.bf16.mxu0 0
        %4181 = vmatpush2.bf16.msra.mxu0 0
        %4182 = vmatprep.subr.bf16.mxu0 0
        %4183 = vmatpush2.bf16.msra.mxu0 0
        %4184 = vmatprep.subr.bf16.mxu0 0
        %4185 = vmatpush2.bf16.msra.mxu0 0
        %4186 = vmatprep.subr.bf16.mxu0 0
        %4187 = vmatpush2.bf16.msra.mxu0 0
        %4188 = vmatprep.subr.bf16.mxu0 0
        %4189 = vmatpush2.bf16.msra.mxu0 0
        %4190 = vmatprep.mubr.bf16.mxu0 0
        %4191 = vmatmul.mubr.bf16.gmra.mxu0 %v4156
        %v4192 = vpop.f32.mrf.mxu0
        %v4193 = vadd.f32 %v4138, %v4192
        %v4194 = vpop.f32.mrf.mxu0
        %v4195 = vpop.f32.mrf.mxu0
        %v4196 = vpop.f32.mrf.mxu0
        %4197 = vdwg.mxu0
        %s4198 = scalar_lea.vmem [#allocation17], 1
        %v4199 = vld [vmem:[%s4198] sm:$0x1]
        %v4201 = vlaneseq
        %v4202 = vshrl.u32 %v4201, 7
        %v4203 = vsub.s32 0, %v4202
        %v4204 = vrot.slane %v4199, %v4203
        %v4206 = vadd.f32 %v4193, %v4204
        %v4207 = vsub.f32 0.0, %v4206
        %v4208 = vmul.f32 %v4207, 1.442695
        %v4209 = vpow.pop %v4208
        %v4210 = vadd.f32 %v4209, 1.0
        %v4211 = vrcp.pop %v4210
        %v4212 = vmul.f32 %v4206, %v4211
        %s4213 = scalar_lea.vmem [#allocation19], 16
        %v4214 = vld [vmem:[%s4213] sm:$0xf]
        %v4215 = vld [vmem:[%s4213 + $0x4] sm:$0xf]
        %v4216 = vld [vmem:[%s4213 + $0x8] sm:$0xf]
        %v4217 = vld [vmem:[%s4213 + $0xc] sm:$0xf]
        %v4218 = vpack.c.bf16 %v4212, %v4212
        %v4223 = vunpack.c.l.b16 %v4214
        %v4224 = vunpack.c.l.b16 %v4215
        %v4225 = vunpack.c.l.b16 %v4216
        %v4226 = vunpack.c.l.b16 %v4217
        %v4227 = vpack.c.b16 %v4224, %v4223
        %v4228 = vpack.c.b16 %v4226, %v4225
        %v4232 = vsel %vm1191, %v4218, 0
        %4234 = vmatprep.subr.bf16.mxu0 0
        %4235 = vmatpush1.bf16.msra.mxu0 0
        %4236 = vmatprep.subr.bf16.mxu0 0
        %4237 = vmatpush1.bf16.msra.mxu0 0
        %4238 = vmatprep.subr.bf16.mxu0 0
        %4239 = vmatpush1.bf16.msra.mxu0 0
        %4240 = vmatprep.subr.bf16.mxu0 0
        %4241 = vmatpush1.bf16.msra.mxu0 0
        %4242 = vmatprep.subr.bf16.mxu0 0
        %4243 = vmatpush1.bf16.msra.mxu0 0
        %4244 = vmatprep.subr.bf16.mxu0 0
        %4245 = vmatpush1.bf16.msra.mxu0 0
        %4246 = vmatprep.subr.bf16.mxu0 0
        %4247 = vmatpush1.bf16.msra.mxu0 %v4228
        %4248 = vmatprep.subr.bf16.mxu0 0
        %4249 = vmatpush1.bf16.msra.mxu0 %v4227
        %4250 = vmatprep.subr.bf16.mxu0 0
        %4251 = vmatpush2.bf16.msra.mxu0 0
        %4252 = vmatprep.subr.bf16.mxu0 0
        %4253 = vmatpush2.bf16.msra.mxu0 0
        %4254 = vmatprep.subr.bf16.mxu0 0
        %4255 = vmatpush2.bf16.msra.mxu0 0
        %4256 = vmatprep.subr.bf16.mxu0 0
        %4257 = vmatpush2.bf16.msra.mxu0 0
        %4258 = vmatprep.subr.bf16.mxu0 0
        %4259 = vmatpush2.bf16.msra.mxu0 0
        %4260 = vmatprep.subr.bf16.mxu0 0
        %4261 = vmatpush2.bf16.msra.mxu0 0
        %4262 = vmatprep.subr.bf16.mxu0 0
        %4263 = vmatpush2.bf16.msra.mxu0 0
        %4264 = vmatprep.subr.bf16.mxu0 0
        %4265 = vmatpush2.bf16.msra.mxu0 0
        %4266 = vmatprep.mubr.bf16.mxu0 0
        %4267 = vmatmul.mubr.bf16.gmra.mxu0 %v4232
        %v4268 = vpop.f32.mrf.mxu0
        %v4269 = vadd.f32 0.0, %v4268
        %v4270 = vpop.f32.mrf.mxu0
        %v4271 = vpop.f32.mrf.mxu0
        %v4272 = vpop.f32.mrf.mxu0
        %4273 = vdwg.mxu0
        %v4274 = vadd.f32 %v2674, %v4269
        %s4275 = scalar_lea.vmem [#allocation20], 1
        %v4276 = vld [vmem:[%s4275] sm:$0x1]
        %v4278 = vlaneseq
        %v4279 = vshrl.u32 %v4278, 7
        %v4280 = vsub.s32 0, %v4279
        %v4281 = vrot.slane %v4276, %v4280
        %v4283 = vadd.f32 %v4274, %v4281
        %v4284 = vmul.f32 %v3957, %v3957
        %v4285 = vsel %vm1070, %v4284, 0.0
        %4286 = vadd.xlane.f32.xlu0 %v4285
        %v4287 = vpop.xlane.xlu0 %4286
        %v4289 = vsel %vm1070, %v3957, 0
        %4291 = vmatprep.subr.mxu0 0.0
        %4292 = vmatpush1.xpose.msra.mxu0 0.0
        %4293 = vmatprep.subr.mxu0 0.0
        %4294 = vmatpush1.xpose.msra.mxu0 0.0
        %4295 = vmatprep.subr.mxu0 0.0
        %4296 = vmatpush1.xpose.msra.mxu0 0.0
        %4297 = vmatprep.subr.mxu0 0.0
        %4298 = vmatpush1.xpose.msra.mxu0 0.0
        %4299 = vmatprep.subr.mxu0 0.0
        %4300 = vmatpush1.xpose.msra.mxu0 0.0
        %4301 = vmatprep.subr.mxu0 0.0
        %4302 = vmatpush1.xpose.msra.mxu0 0.0
        %4303 = vmatprep.subr.mxu0 0.0
        %4304 = vmatpush1.xpose.msra.mxu0 0.0
        %4305 = vmatprep.subr.mxu0 0.0
        %4306 = vmatpush1.xpose.msra.mxu0 0.0
        %4307 = vmatprep.subr.mxu0 0.0
        %4308 = vmatpush1.xpose.msra.mxu0 0.0
        %4309 = vmatprep.subr.mxu0 0.0
        %4310 = vmatpush1.xpose.msra.mxu0 0.0
        %4311 = vmatprep.subr.mxu0 0.0
        %4312 = vmatpush1.xpose.msra.mxu0 0.0
        %4313 = vmatprep.subr.mxu0 0.0
        %4314 = vmatpush1.xpose.msra.mxu0 0.0
        %4315 = vmatprep.subr.mxu0 0.0
        %4316 = vmatpush1.xpose.msra.mxu0 0.0
        %4317 = vmatprep.subr.mxu0 0.0
        %4318 = vmatpush1.xpose.msra.mxu0 0.0
        %4319 = vmatprep.subr.mxu0 0.0
        %4320 = vmatpush1.xpose.msra.mxu0 0.0
        %4321 = vmatprep.subr.mxu0 0.0
        %4322 = vmatpush1.xpose.msra.mxu0 %v4289
        %4323 = vmatprep.subr.mxu0 0.0
        %4324 = vmatpush2.xpose.msra.mxu0 0.0
        %4325 = vmatprep.subr.mxu0 0.0
        %4326 = vmatpush2.xpose.msra.mxu0 0.0
        %4327 = vmatprep.subr.mxu0 0.0
        %4328 = vmatpush2.xpose.msra.mxu0 0.0
        %4329 = vmatprep.subr.mxu0 0.0
        %4330 = vmatpush2.xpose.msra.mxu0 0.0
        %4331 = vmatprep.subr.mxu0 0.0
        %4332 = vmatpush2.xpose.msra.mxu0 0.0
        %4333 = vmatprep.subr.mxu0 0.0
        %4334 = vmatpush2.xpose.msra.mxu0 0.0
        %4335 = vmatprep.subr.mxu0 0.0
        %4336 = vmatpush2.xpose.msra.mxu0 0.0
        %4337 = vmatprep.subr.mxu0 0.0
        %4338 = vmatpush2.xpose.msra.mxu0 0.0
        %4339 = vmatprep.subr.mxu0 0.0
        %4340 = vmatpush2.xpose.msra.mxu0 0.0
        %4341 = vmatprep.subr.mxu0 0.0
        %4342 = vmatpush2.xpose.msra.mxu0 0.0
        %4343 = vmatprep.subr.mxu0 0.0
        %4344 = vmatpush2.xpose.msra.mxu0 0.0
        %4345 = vmatprep.subr.mxu0 0.0
        %4346 = vmatpush2.xpose.msra.mxu0 0.0
        %4347 = vmatprep.subr.mxu0 0.0
        %4348 = vmatpush2.xpose.msra.mxu0 0.0
        %4349 = vmatprep.subr.mxu0 0.0
        %4350 = vmatpush2.xpose.msra.mxu0 0.0
        %4351 = vmatprep.subr.mxu0 0.0
        %4352 = vmatpush2.xpose.msra.mxu0 0.0
        %4353 = vmatprep.subr.mxu0 0.0
        %4354 = vmatpush2.xpose.msra.mxu0 0.0
        %4355 = vmatprep.mubr.f32.mxu0 0.0
        %4356 = vmatmul.mubr.f32.gmra.mxu0 %v4289
        %v4357 = vpop.f32.mrf.mxu0
        %v4358 = vadd.f32 0.0, %v4357
        %v4359 = vpop.f32.mrf.mxu0
        %4360 = vdwg.mxu0
        %4361 = vxpose.xlu0.b32.start [1/16] %v4287, 128
        %4362 = vxpose.xlu0.b32.cont [2/16] 0.0, 128
        %4363 = vxpose.xlu0.b32.cont [3/16] 0.0, 128
        %4364 = vxpose.xlu0.b32.cont [4/16] 0.0, 128
        %4365 = vxpose.xlu0.b32.cont [5/16] 0.0, 128
        %4366 = vxpose.xlu0.b32.cont [6/16] 0.0, 128
        %4367 = vxpose.xlu0.b32.cont [7/16] 0.0, 128
        %4368 = vxpose.xlu0.b32.cont [8/16] 0.0, 128
        %4369 = vxpose.xlu0.b32.cont [9/16] 0.0, 128
        %4370 = vxpose.xlu0.b32.cont [10/16] 0.0, 128
        %4371 = vxpose.xlu0.b32.cont [11/16] 0.0, 128
        %4372 = vxpose.xlu0.b32.cont [12/16] 0.0, 128
        %4373 = vxpose.xlu0.b32.cont [13/16] 0.0, 128
        %4374 = vxpose.xlu0.b32.cont [14/16] 0.0, 128
        %4375 = vxpose.xlu0.b32.cont [15/16] 0.0, 128
        %4376 = vxpose.xlu0.b32.end [16/16] 0.0, 128
        %v4377 = vpop.trf.xlu0
        %v4378 = vpop.trf.xlu0
        %v4379 = vpop.trf.xlu0
        %v4380 = vpop.trf.xlu0
        %v4381 = vpop.trf.xlu0
        %v4382 = vpop.trf.xlu0
        %v4383 = vpop.trf.xlu0
        %v4384 = vpop.trf.xlu0
        %v4385 = vpop.trf.xlu0
        %v4386 = vpop.trf.xlu0
        %v4387 = vpop.trf.xlu0
        %v4388 = vpop.trf.xlu0
        %v4389 = vpop.trf.xlu0
        %v4390 = vpop.trf.xlu0
        %v4391 = vpop.trf.xlu0
        %v4392 = vpop.trf.xlu0
        %v4393 = vlaneseq
        %v4394 = vshrl.u32 %v4393, 7
        %v4395 = vsub.s32 0, %v4394
        %v4396 = vrot.slane %v4377, %v4395
        %v4397 = vadd.f32 %v4287, %v4396
        %v4398 = vmul.f32 %v4358, 2.0
        %v4399 = vsub.f32 %v4397, %v4398
        %v4400 = vmax.f32 %v4399, 0.0
        %s4401 = scalar_lea.vmem %s4, 64
        %v4402 = vld [vmem:[%s4401] sm:$0xff]
        %v4403 = vld [vmem:[%s4401 + $0x8] sm:$0xff]
        %v4404 = vld [vmem:[%s4401 + $0x10] sm:$0xff]
        %v4405 = vld [vmem:[%s4401 + $0x18] sm:$0xff]
        %v4407 = vsel %vm1191, %v4283, 0
        %4409 = vmatprep.subr.mxu0 0.0
        %4410 = vmatpush1.msra.mxu0 0.0
        %4411 = vmatprep.subr.mxu0 0.0
        %4412 = vmatpush1.msra.mxu0 0.0
        %4413 = vmatprep.subr.mxu0 0.0
        %4414 = vmatpush1.msra.mxu0 0.0
        %4415 = vmatprep.subr.mxu0 0.0
        %4416 = vmatpush1.msra.mxu0 0.0
        %4417 = vmatprep.subr.mxu0 0.0
        %4418 = vmatpush1.msra.mxu0 0.0
        %4419 = vmatprep.subr.mxu0 0.0
        %4420 = vmatpush1.msra.mxu0 0.0
        %4421 = vmatprep.subr.mxu0 0.0
        %4422 = vmatpush1.msra.mxu0 0.0
        %4423 = vmatprep.subr.mxu0 0.0
        %4424 = vmatpush1.msra.mxu0 0.0
        %4425 = vmatprep.subr.mxu0 0.0
        %4426 = vmatpush1.msra.mxu0 0.0
        %4427 = vmatprep.subr.mxu0 0.0
        %4428 = vmatpush1.msra.mxu0 0.0
        %4429 = vmatprep.subr.mxu0 0.0
        %4430 = vmatpush1.msra.mxu0 0.0
        %4431 = vmatprep.subr.mxu0 0.0
        %4432 = vmatpush1.msra.mxu0 0.0
        %4433 = vmatprep.subr.mxu0 0.0
        %4434 = vmatpush1.msra.mxu0 %v4405
        %4435 = vmatprep.subr.mxu0 0.0
        %4436 = vmatpush1.msra.mxu0 %v4404
        %4437 = vmatprep.subr.mxu0 0.0
        %4438 = vmatpush1.msra.mxu0 %v4403
        %4439 = vmatprep.subr.mxu0 0.0
        %4440 = vmatpush1.msra.mxu0 %v4402
        %4441 = vmatprep.subr.mxu0 0.0
        %4442 = vmatpush2.msra.mxu0 0.0
        %4443 = vmatprep.subr.mxu0 0.0
        %4444 = vmatpush2.msra.mxu0 0.0
        %4445 = vmatprep.subr.mxu0 0.0
        %4446 = vmatpush2.msra.mxu0 0.0
        %4447 = vmatprep.subr.mxu0 0.0
        %4448 = vmatpush2.msra.mxu0 0.0
        %4449 = vmatprep.subr.mxu0 0.0
        %4450 = vmatpush2.msra.mxu0 0.0
        %4451 = vmatprep.subr.mxu0 0.0
        %4452 = vmatpush2.msra.mxu0 0.0
        %4453 = vmatprep.subr.mxu0 0.0
        %4454 = vmatpush2.msra.mxu0 0.0
        %4455 = vmatprep.subr.mxu0 0.0
        %4456 = vmatpush2.msra.mxu0 0.0
        %4457 = vmatprep.subr.mxu0 0.0
        %4458 = vmatpush2.msra.mxu0 0.0
        %4459 = vmatprep.subr.mxu0 0.0
        %4460 = vmatpush2.msra.mxu0 0.0
        %4461 = vmatprep.subr.mxu0 0.0
        %4462 = vmatpush2.msra.mxu0 0.0
        %4463 = vmatprep.subr.mxu0 0.0
        %4464 = vmatpush2.msra.mxu0 0.0
        %4465 = vmatprep.subr.mxu0 0.0
        %4466 = vmatpush2.msra.mxu0 0.0
        %4467 = vmatprep.subr.mxu0 0.0
        %4468 = vmatpush2.msra.mxu0 0.0
        %4469 = vmatprep.subr.mxu0 0.0
        %4470 = vmatpush2.msra.mxu0 0.0
        %4471 = vmatprep.subr.mxu0 0.0
        %4472 = vmatpush2.msra.mxu0 0.0
        %4473 = vmatprep.mubr.f32.mxu0 0.0
        %4474 = vmatmul.mubr.f32.gmra.mxu0 %v4407
        %v4475 = vpop.f32.mrf.mxu0
        %v4476 = vadd.f32 0.0, %v4475
        %v4477 = vpop.f32.mrf.mxu0
        %4478 = vdwg.mxu0
        %s4479 = scalar_lea.vmem [#allocation8], 2
        %v4480 = vld [vmem:[%s4479] sm:$0x1]
        %s4481 = scalar_lea.vmem [#allocation10], 2
        %v4482 = vld [vmem:[%s4481] sm:$0x1]
        %v4484 = vcombine.high %v4476, %v4476
        %v4486 = vunpack.c.l.s4 1966171168
        %v4487 = vunpack.c.0.s8 %v4486
        %v4488 = vlaneseq
        %v4489 = vshrl.u32 %v4488, 7
        %v4490 = vsub.s32 %v4487, %v4489
        %v4491 = vrot.slane %v4476, %v4490
        %v4493 = vunpack.c.l.s4 1966171168
        %v4494 = vunpack.c.0.s8 %v4493
        %v4495 = vlaneseq
        %v4496 = vshrl.u32 %v4495, 7
        %v4497 = vsub.s32 %v4494, %v4496
        %v4498 = vrot.slane %v4484, %v4497
        %v4499 = vcombine.high %v4491, %v4491
        %v4500 = vcombine.high %v4498, %v4498
        %v4502 = vunpack.c.l.s4 1966171168
        %v4503 = vunpack.c.0.s8 %v4502
        %v4504 = vlaneseq
        %v4505 = vshrl.u32 %v4504, 7
        %v4506 = vsub.s32 %v4503, %v4505
        %v4507 = vrot.slane %v4491, %v4506
        %v4509 = vunpack.c.l.s4 1966171168
        %v4510 = vunpack.c.0.s8 %v4509
        %v4511 = vlaneseq
        %v4512 = vshrl.u32 %v4511, 7
        %v4513 = vsub.s32 %v4510, %v4512
        %v4514 = vrot.slane %v4498, %v4513
        %v4516 = vunpack.c.l.s4 1966171168
        %v4517 = vunpack.c.0.s8 %v4516
        %v4518 = vlaneseq
        %v4519 = vshrl.u32 %v4518, 7
        %v4520 = vsub.s32 %v4517, %v4519
        %v4521 = vrot.slane %v4499, %v4520
        %v4523 = vunpack.c.l.s4 1966171168
        %v4524 = vunpack.c.0.s8 %v4523
        %v4525 = vlaneseq
        %v4526 = vshrl.u32 %v4525, 7
        %v4527 = vsub.s32 %v4524, %v4526
        %v4528 = vrot.slane %v4500, %v4527
        %v4529 = vcombine.high %v4507, %v4507
        %v4530 = vcombine.high %v4514, %v4514
        %v4531 = vcombine.high %v4521, %v4521
        %v4532 = vcombine.high %v4528, %v4528
        %v4533 = vlaneseq
        %v4534 = vshrl.u32 %v4533, 7
        %v4535 = vsub.s32 0, %v4534
        %v4536 = vrot.slane %v4507, %v4535
        %v4537 = vlaneseq
        %v4538 = vshrl.u32 %v4537, 7
        %v4539 = vsub.s32 0, %v4538
        %v4540 = vrot.slane %v4521, %v4539
        %v4541 = vlaneseq
        %v4542 = vshrl.u32 %v4541, 7
        %v4543 = vsub.s32 0, %v4542
        %v4544 = vrot.slane %v4529, %v4543
        %v4545 = vlaneseq
        %v4546 = vshrl.u32 %v4545, 7
        %v4547 = vsub.s32 0, %v4546
        %v4548 = vrot.slane %v4531, %v4547
        %v4549 = vlaneseq
        %v4550 = vshrl.u32 %v4549, 7
        %v4551 = vsub.s32 0, %v4550
        %v4552 = vrot.slane %v4514, %v4551
        %v4553 = vlaneseq
        %v4554 = vshrl.u32 %v4553, 7
        %v4555 = vsub.s32 0, %v4554
        %v4556 = vrot.slane %v4528, %v4555
        %v4557 = vlaneseq
        %v4558 = vshrl.u32 %v4557, 7
        %v4559 = vsub.s32 0, %v4558
        %v4560 = vrot.slane %v4530, %v4559
        %v4561 = vlaneseq
        %v4562 = vshrl.u32 %v4561, 7
        %v4563 = vsub.s32 0, %v4562
        %v4564 = vrot.slane %v4532, %v4563
        %4573 = vrot.lane.b32.xlu0 %v4476, 96
        %v4574 = vpop.permute.xlu0 %4573
        %v4576 = vadd.f32 %v4536, %v4574
        %v4577 = vadd.f32 %v4540, %v4574
        %v4578 = vadd.f32 %v4544, %v4574
        %v4579 = vadd.f32 %v4548, %v4574
        %v4580 = vadd.f32 %v4552, %v4574
        %v4581 = vadd.f32 %v4556, %v4574
        %v4582 = vadd.f32 %v4560, %v4574
        %v4583 = vadd.f32 %v4564, %v4574
        %v4584 = vlaneseq
        %v4585 = vshrl.u32 %v4584, 7
        %v4586 = vsub.s32 0, %v4585
        %v4587 = vrot.slane %v4400, %v4586
        %4589 = vbcast.lane.b32.xlu0 %v4587, 256
        %v4590 = vpop.permute.xlu0 %4589
        %v4591 = vlaneseq
        %v4592 = vshrl.u32 %v4591, 7
        %v4593 = vsub.s32 1, %v4592
        %v4594 = vrot.slane %v4400, %v4593
        %4596 = vbcast.lane.b32.xlu0 %v4594, 256
        %v4597 = vpop.permute.xlu0 %4596
        %v4598 = vlaneseq
        %v4599 = vshrl.u32 %v4598, 7
        %v4600 = vsub.s32 2, %v4599
        %v4601 = vrot.slane %v4400, %v4600
        %4603 = vbcast.lane.b32.xlu0 %v4601, 256
        %v4604 = vpop.permute.xlu0 %4603
        %v4605 = vlaneseq
        %v4606 = vshrl.u32 %v4605, 7
        %v4607 = vsub.s32 3, %v4606
        %v4608 = vrot.slane %v4400, %v4607
        %4610 = vbcast.lane.b32.xlu0 %v4608, 256
        %v4611 = vpop.permute.xlu0 %4610
        %v4612 = vlaneseq
        %v4613 = vshrl.u32 %v4612, 7
        %v4614 = vsub.s32 4, %v4613
        %v4615 = vrot.slane %v4400, %v4614
        %4617 = vbcast.lane.b32.xlu0 %v4615, 256
        %v4618 = vpop.permute.xlu0 %4617
        %v4619 = vlaneseq
        %v4620 = vshrl.u32 %v4619, 7
        %v4621 = vsub.s32 5, %v4620
        %v4622 = vrot.slane %v4400, %v4621
        %4624 = vbcast.lane.b32.xlu0 %v4622, 256
        %v4625 = vpop.permute.xlu0 %4624
        %v4626 = vlaneseq
        %v4627 = vshrl.u32 %v4626, 7
        %v4628 = vsub.s32 6, %v4627
        %v4629 = vrot.slane %v4400, %v4628
        %4631 = vbcast.lane.b32.xlu0 %v4629, 256
        %v4632 = vpop.permute.xlu0 %4631
        %v4633 = vlaneseq
        %v4634 = vshrl.u32 %v4633, 7
        %v4635 = vsub.s32 7, %v4634
        %v4636 = vrot.slane %v4400, %v4635
        %4638 = vbcast.lane.b32.xlu0 %v4636, 256
        %v4639 = vpop.permute.xlu0 %4638
        %v4641 = vlaneseq
        %v4642 = vshrl.u32 %v4641, 7
        %v4643 = vsub.s32 0, %v4642
        %v4644 = vrot.slane %v4480, %v4643
        %v4646 = vmul.f32 %v4590, %v4644
        %v4647 = vmul.f32 %v4597, %v4644
        %v4648 = vmul.f32 %v4604, %v4644
        %v4649 = vmul.f32 %v4611, %v4644
        %v4650 = vmul.f32 %v4618, %v4644
        %v4651 = vmul.f32 %v4625, %v4644
        %v4652 = vmul.f32 %v4632, %v4644
        %v4653 = vmul.f32 %v4639, %v4644
        %v4654 = vadd.f32 %v4576, %v4646
        %v4655 = vadd.f32 %v4577, %v4647
        %v4656 = vadd.f32 %v4578, %v4648
        %v4657 = vadd.f32 %v4579, %v4649
        %v4658 = vadd.f32 %v4580, %v4650
        %v4659 = vadd.f32 %v4581, %v4651
        %v4660 = vadd.f32 %v4582, %v4652
        %v4661 = vadd.f32 %v4583, %v4653
        %v4663 = vlaneseq
        %v4664 = vshrl.u32 %v4663, 7
        %v4665 = vsub.s32 0, %v4664
        %v4666 = vrot.slane %v4482, %v4665
        %v4668 = vadd.f32 %v4654, %v4666
        %v4669 = vadd.f32 %v4655, %v4666
        %v4670 = vadd.f32 %v4656, %v4666
        %v4671 = vadd.f32 %v4657, %v4666
        %v4672 = vadd.f32 %v4658, %v4666
        %v4673 = vadd.f32 %v4659, %v4666
        %v4674 = vadd.f32 %v4660, %v4666
        %v4675 = vadd.f32 %v4661, %v4666
        %v4676 = vsub.f32 0.0, %v4668
        %v4677 = vsub.f32 0.0, %v4669
        %v4678 = vsub.f32 0.0, %v4670
        %v4679 = vsub.f32 0.0, %v4671
        %v4680 = vsub.f32 0.0, %v4672
        %v4681 = vsub.f32 0.0, %v4673
        %v4682 = vsub.f32 0.0, %v4674
        %v4683 = vsub.f32 0.0, %v4675
        %v4684 = vmul.f32 %v4676, 1.442695
        %v4685 = vpow.pop %v4684
        %v4686 = vmul.f32 %v4677, 1.442695
        %v4687 = vpow.pop %v4686
        %v4688 = vmul.f32 %v4678, 1.442695
        %v4689 = vpow.pop %v4688
        %v4690 = vmul.f32 %v4679, 1.442695
        %v4691 = vpow.pop %v4690
        %v4692 = vmul.f32 %v4680, 1.442695
        %v4693 = vpow.pop %v4692
        %v4694 = vmul.f32 %v4681, 1.442695
        %v4695 = vpow.pop %v4694
        %v4696 = vmul.f32 %v4682, 1.442695
        %v4697 = vpow.pop %v4696
        %v4698 = vmul.f32 %v4683, 1.442695
        %v4699 = vpow.pop %v4698
        %v4700 = vadd.f32 %v4685, 1.0
        %v4701 = vadd.f32 %v4687, 1.0
        %v4702 = vadd.f32 %v4689, 1.0
        %v4703 = vadd.f32 %v4691, 1.0
        %v4704 = vadd.f32 %v4693, 1.0
        %v4705 = vadd.f32 %v4695, 1.0
        %v4706 = vadd.f32 %v4697, 1.0
        %v4707 = vadd.f32 %v4699, 1.0
        %v4708 = vrcp.pop %v4700
        %v4709 = vrcp.pop %v4701
        %v4710 = vrcp.pop %v4702
        %v4711 = vrcp.pop %v4703
        %v4712 = vrcp.pop %v4704
        %v4713 = vrcp.pop %v4705
        %v4714 = vrcp.pop %v4706
        %v4715 = vrcp.pop %v4707
        %v4716 = vmul.f32 %v4668, %v4708
        %v4717 = vmul.f32 %v4669, %v4709
        %v4718 = vmul.f32 %v4670, %v4710
        %v4719 = vmul.f32 %v4671, %v4711
        %v4720 = vmul.f32 %v4672, %v4712
        %v4721 = vmul.f32 %v4673, %v4713
        %v4722 = vmul.f32 %v4674, %v4714
        %v4723 = vmul.f32 %v4675, %v4715
        %v4724 = vpack.c.bf16 %v4716, %v4716
        %v4725 = vpack.c.bf16 %v4717, %v4717
        %v4726 = vpack.c.bf16 %v4718, %v4718
        %v4727 = vpack.c.bf16 %v4719, %v4719
        %v4728 = vpack.c.bf16 %v4720, %v4720
        %v4729 = vpack.c.bf16 %v4721, %v4721
        %v4730 = vpack.c.bf16 %v4722, %v4722
        %v4731 = vpack.c.bf16 %v4723, %v4723
        %s4732 = scalar_lea.vmem %s7, 32
        %v4733 = vld [vmem:[%s4732] sm:$0xf]
        %v4734 = vld [vmem:[%s4732 + $0x4] sm:$0xf]
        %v4735 = vld [vmem:[%s4732 + $0x8] sm:$0xf]
        %v4736 = vld [vmem:[%s4732 + $0xc] sm:$0xf]
        %s4737 = scalar_lea.vmem [#allocation11], 2
        %v4738 = vld [vmem:[%s4737] sm:$0x1]
        %v4740 = vlaneseq
        %v4741 = vshrl.u32 %v4740, 7
        %v4742 = vsub.s32 0, %v4741
        %v4743 = vrot.slane %v4738, %v4742
        %v4753 = vunpack.c.l.b16 %v4724
        %v4754 = vunpack.c.l.b16 %v4725
        %v4755 = vunpack.c.l.b16 %v4726
        %v4756 = vunpack.c.l.b16 %v4727
        %v4757 = vunpack.c.l.b16 %v4728
        %v4758 = vunpack.c.l.b16 %v4729
        %v4759 = vunpack.c.l.b16 %v4730
        %v4760 = vunpack.c.l.b16 %v4731
        %v4761 = vpack.c.b16 %v4754, %v4753
        %v4762 = vpack.c.b16 %v4756, %v4755
        %v4763 = vpack.c.b16 %v4758, %v4757
        %v4764 = vpack.c.b16 %v4760, %v4759
        %v4769 = vunpack.c.l.b16 %v4733
        %v4770 = vunpack.c.l.b16 %v4734
        %v4771 = vunpack.c.l.b16 %v4735
        %v4772 = vunpack.c.l.b16 %v4736
        %v4773 = vpack.c.b16 %v4770, %v4769
        %v4774 = vpack.c.b16 %v4772, %v4771
        %v4778 = vsel %vm1191, %v4761, 0
        %v4781 = vsel %vm1191, %v4762, 0
        %v4784 = vsel %vm1191, %v4763, 0
        %v4787 = vsel %vm1191, %v4764, 0
        %4789 = vmatprep.subr.bf16.mxu0 0
        %4790 = vmatpush1.bf16.msra.mxu0 0
        %4791 = vmatprep.subr.bf16.mxu0 0
        %4792 = vmatpush1.bf16.msra.mxu0 0
        %4793 = vmatprep.subr.bf16.mxu0 0
        %4794 = vmatpush1.bf16.msra.mxu0 0
        %4795 = vmatprep.subr.bf16.mxu0 0
        %4796 = vmatpush1.bf16.msra.mxu0 0
        %4797 = vmatprep.subr.bf16.mxu0 0
        %4798 = vmatpush1.bf16.msra.mxu0 0
        %4799 = vmatprep.subr.bf16.mxu0 0
        %4800 = vmatpush1.bf16.msra.mxu0 0
        %4801 = vmatprep.subr.bf16.mxu0 0
        %4802 = vmatpush1.bf16.msra.mxu0 %v4774
        %4803 = vmatprep.subr.bf16.mxu0 0
        %4804 = vmatpush1.bf16.msra.mxu0 %v4773
        %4805 = vmatprep.subr.bf16.mxu0 0
        %4806 = vmatpush2.bf16.msra.mxu0 0
        %4807 = vmatprep.subr.bf16.mxu0 0
        %4808 = vmatpush2.bf16.msra.mxu0 0
        %4809 = vmatprep.subr.bf16.mxu0 0
        %4810 = vmatpush2.bf16.msra.mxu0 0
        %4811 = vmatprep.subr.bf16.mxu0 0
        %4812 = vmatpush2.bf16.msra.mxu0 0
        %4813 = vmatprep.subr.bf16.mxu0 0
        %4814 = vmatpush2.bf16.msra.mxu0 0
        %4815 = vmatprep.subr.bf16.mxu0 0
        %4816 = vmatpush2.bf16.msra.mxu0 0
        %4817 = vmatprep.subr.bf16.mxu0 0
        %4818 = vmatpush2.bf16.msra.mxu0 0
        %4819 = vmatprep.subr.bf16.mxu0 0
        %4820 = vmatpush2.bf16.msra.mxu0 0
        %4821 = vmatprep.mubr.bf16.mxu0 0
        %4822 = vmatmul.mubr.bf16.gmra.mxu0 %v4778
        %v4823 = vpop.f32.mrf.mxu0
        %v4824 = vadd.f32 %v4743, %v4823
        %v4825 = vpop.f32.mrf.mxu0
        %v4826 = vpop.f32.mrf.mxu0
        %v4827 = vadd.f32 %v4743, %v4826
        %v4828 = vpop.f32.mrf.mxu0
        %4829 = vmatprep.mubr.bf16.mxu0 0
        %4830 = vmatmul.mubr.bf16.gmra.mxu0 %v4781
        %v4831 = vpop.f32.mrf.mxu0
        %v4832 = vadd.f32 %v4743, %v4831
        %v4833 = vpop.f32.mrf.mxu0
        %v4834 = vpop.f32.mrf.mxu0
        %v4835 = vadd.f32 %v4743, %v4834
        %v4836 = vpop.f32.mrf.mxu0
        %4837 = vmatprep.mubr.bf16.mxu0 0
        %4838 = vmatmul.mubr.bf16.gmra.mxu0 %v4784
        %v4839 = vpop.f32.mrf.mxu0
        %v4840 = vadd.f32 %v4743, %v4839
        %v4841 = vpop.f32.mrf.mxu0
        %v4842 = vpop.f32.mrf.mxu0
        %v4843 = vadd.f32 %v4743, %v4842
        %v4844 = vpop.f32.mrf.mxu0
        %4845 = vmatprep.mubr.bf16.mxu0 0
        %4846 = vmatmul.mubr.bf16.gmra.mxu0 %v4787
        %v4847 = vpop.f32.mrf.mxu0
        %v4848 = vadd.f32 %v4743, %v4847
        %v4849 = vpop.f32.mrf.mxu0
        %v4850 = vpop.f32.mrf.mxu0
        %v4851 = vadd.f32 %v4743, %v4850
        %v4852 = vpop.f32.mrf.mxu0
        %4853 = vdwg.mxu0
        %v4854 = vsub.f32 0.0, %v4824
        %v4855 = vsub.f32 0.0, %v4827
        %v4856 = vsub.f32 0.0, %v4832
        %v4857 = vsub.f32 0.0, %v4835
        %v4858 = vsub.f32 0.0, %v4840
        %v4859 = vsub.f32 0.0, %v4843
        %v4860 = vsub.f32 0.0, %v4848
        %v4861 = vsub.f32 0.0, %v4851
        %v4862 = vmul.f32 %v4854, 1.442695
        %v4863 = vpow.pop %v4862
        %v4864 = vmul.f32 %v4855, 1.442695
        %v4865 = vpow.pop %v4864
        %v4866 = vmul.f32 %v4856, 1.442695
        %v4867 = vpow.pop %v4866
        %v4868 = vmul.f32 %v4857, 1.442695
        %v4869 = vpow.pop %v4868
        %v4870 = vmul.f32 %v4858, 1.442695
        %v4871 = vpow.pop %v4870
        %v4872 = vmul.f32 %v4859, 1.442695
        %v4873 = vpow.pop %v4872
        %v4874 = vmul.f32 %v4860, 1.442695
        %v4875 = vpow.pop %v4874
        %v4876 = vmul.f32 %v4861, 1.442695
        %v4877 = vpow.pop %v4876
        %v4878 = vadd.f32 %v4863, 1.0
        %v4879 = vadd.f32 %v4865, 1.0
        %v4880 = vadd.f32 %v4867, 1.0
        %v4881 = vadd.f32 %v4869, 1.0
        %v4882 = vadd.f32 %v4871, 1.0
        %v4883 = vadd.f32 %v4873, 1.0
        %v4884 = vadd.f32 %v4875, 1.0
        %v4885 = vadd.f32 %v4877, 1.0
        %v4886 = vrcp.pop %v4878
        %v4887 = vrcp.pop %v4879
        %v4888 = vrcp.pop %v4880
        %v4889 = vrcp.pop %v4881
        %v4890 = vrcp.pop %v4882
        %v4891 = vrcp.pop %v4883
        %v4892 = vrcp.pop %v4884
        %v4893 = vrcp.pop %v4885
        %v4894 = vmul.f32 %v4824, %v4886
        %v4895 = vmul.f32 %v4827, %v4887
        %v4896 = vmul.f32 %v4832, %v4888
        %v4897 = vmul.f32 %v4835, %v4889
        %v4898 = vmul.f32 %v4840, %v4890
        %v4899 = vmul.f32 %v4843, %v4891
        %v4900 = vmul.f32 %v4848, %v4892
        %v4901 = vmul.f32 %v4851, %v4893
        %v4902 = vpack.c.bf16 %v4895, %v4894
        %v4903 = vpack.c.bf16 %v4897, %v4896
        %v4904 = vpack.c.bf16 %v4899, %v4898
        %v4905 = vpack.c.bf16 %v4901, %v4900
        %s4906 = scalar_lea.vmem %s11, 32
        %v4907 = vld [vmem:[%s4906] sm:$0xf]
        %v4908 = vld [vmem:[%s4906 + $0x4] sm:$0xf]
        %v4909 = vld [vmem:[%s4906 + $0x8] sm:$0xf]
        %v4910 = vld [vmem:[%s4906 + $0xc] sm:$0xf]
        %v4915 = vunpack.c.l.b16 %v4907
        %v4916 = vunpack.c.l.b16 %v4908
        %v4917 = vunpack.c.l.b16 %v4909
        %v4918 = vunpack.c.l.b16 %v4910
        %v4919 = vpack.c.b16 %v4916, %v4915
        %v4920 = vpack.c.b16 %v4918, %v4917
        %v4924 = vsel %vm1191, %v4902, 0
        %v4927 = vsel %vm1191, %v4903, 0
        %v4930 = vsel %vm1191, %v4904, 0
        %v4933 = vsel %vm1191, %v4905, 0
        %4935 = vmatprep.subr.bf16.mxu0 0
        %4936 = vmatpush1.bf16.msra.mxu0 0
        %4937 = vmatprep.subr.bf16.mxu0 0
        %4938 = vmatpush1.bf16.msra.mxu0 0
        %4939 = vmatprep.subr.bf16.mxu0 0
        %4940 = vmatpush1.bf16.msra.mxu0 0
        %4941 = vmatprep.subr.bf16.mxu0 0
        %4942 = vmatpush1.bf16.msra.mxu0 0
        %4943 = vmatprep.subr.bf16.mxu0 0
        %4944 = vmatpush1.bf16.msra.mxu0 0
        %4945 = vmatprep.subr.bf16.mxu0 0
        %4946 = vmatpush1.bf16.msra.mxu0 0
        %4947 = vmatprep.subr.bf16.mxu0 0
        %4948 = vmatpush1.bf16.msra.mxu0 %v4920
        %4949 = vmatprep.subr.bf16.mxu0 0
        %4950 = vmatpush1.bf16.msra.mxu0 %v4919
        %4951 = vmatprep.subr.bf16.mxu0 0
        %4952 = vmatpush2.bf16.msra.mxu0 0
        %4953 = vmatprep.subr.bf16.mxu0 0
        %4954 = vmatpush2.bf16.msra.mxu0 0
        %4955 = vmatprep.subr.bf16.mxu0 0
        %4956 = vmatpush2.bf16.msra.mxu0 0
        %4957 = vmatprep.subr.bf16.mxu0 0
        %4958 = vmatpush2.bf16.msra.mxu0 0
        %4959 = vmatprep.subr.bf16.mxu0 0
        %4960 = vmatpush2.bf16.msra.mxu0 0
        %4961 = vmatprep.subr.bf16.mxu0 0
        %4962 = vmatpush2.bf16.msra.mxu0 0
        %4963 = vmatprep.subr.bf16.mxu0 0
        %4964 = vmatpush2.bf16.msra.mxu0 0
        %4965 = vmatprep.subr.bf16.mxu0 0
        %4966 = vmatpush2.bf16.msra.mxu0 0
        %4967 = vmatprep.mubr.bf16.mxu0 0
        %4968 = vmatmul.mubr.bf16.gmra.mxu0 %v4924
        %v4969 = vpop.f32.mrf.mxu0
        %v4970 = vadd.f32 0.0, %v4969
        %v4971 = vpop.f32.mrf.mxu0
        %v4972 = vpop.f32.mrf.mxu0
        %v4973 = vadd.f32 0.0, %v4972
        %v4974 = vpop.f32.mrf.mxu0
        %4975 = vmatprep.mubr.bf16.mxu0 0
        %4976 = vmatmul.mubr.bf16.gmra.mxu0 %v4927
        %v4977 = vpop.f32.mrf.mxu0
        %v4978 = vadd.f32 0.0, %v4977
        %v4979 = vpop.f32.mrf.mxu0
        %v4980 = vpop.f32.mrf.mxu0
        %v4981 = vadd.f32 0.0, %v4980
        %v4982 = vpop.f32.mrf.mxu0
        %4983 = vmatprep.mubr.bf16.mxu0 0
        %4984 = vmatmul.mubr.bf16.gmra.mxu0 %v4930
        %v4985 = vpop.f32.mrf.mxu0
        %v4986 = vadd.f32 0.0, %v4985
        %v4987 = vpop.f32.mrf.mxu0
        %v4988 = vpop.f32.mrf.mxu0
        %v4989 = vadd.f32 0.0, %v4988
        %v4990 = vpop.f32.mrf.mxu0
        %4991 = vmatprep.mubr.bf16.mxu0 0
        %4992 = vmatmul.mubr.bf16.gmra.mxu0 %v4933
        %v4993 = vpop.f32.mrf.mxu0
        %v4994 = vadd.f32 0.0, %v4993
        %v4995 = vpop.f32.mrf.mxu0
        %v4996 = vpop.f32.mrf.mxu0
        %v4997 = vadd.f32 0.0, %v4996
        %v4998 = vpop.f32.mrf.mxu0
        %4999 = vdwg.mxu0
        %s5000 = scalar_lea.vmem %s10, 2
        %v5001 = vld [vmem:[%s5000] sm:$0x1]
        %v5003 = vlaneseq
        %v5004 = vshrl.u32 %v5003, 7
        %v5005 = vsub.s32 0, %v5004
        %v5006 = vrot.slane %v5001, %v5005
        %5007 = vrot.lane.b32.xlu0 %v5006, 32
        %v5008 = vpop.permute.xlu0 %5007
        %v5010 = vadd.f32 %v4970, %v5008
        %v5011 = vadd.f32 %v4973, %v5008
        %v5012 = vadd.f32 %v4978, %v5008
        %v5013 = vadd.f32 %v4981, %v5008
        %v5014 = vadd.f32 %v4986, %v5008
        %v5015 = vadd.f32 %v4989, %v5008
        %v5016 = vadd.f32 %v4994, %v5008
        %v5017 = vadd.f32 %v4997, %v5008
        %v5018 = vsub.f32 0.0, %v5010
        %v5019 = vsub.f32 0.0, %v5011
        %v5020 = vsub.f32 0.0, %v5012
        %v5021 = vsub.f32 0.0, %v5013
        %v5022 = vsub.f32 0.0, %v5014
        %v5023 = vsub.f32 0.0, %v5015
        %v5024 = vsub.f32 0.0, %v5016
        %v5025 = vsub.f32 0.0, %v5017
        %v5026 = vmul.f32 %v5018, 1.442695
        %v5027 = vpow.pop %v5026
        %v5028 = vmul.f32 %v5019, 1.442695
        %v5029 = vpow.pop %v5028
        %v5030 = vmul.f32 %v5020, 1.442695
        %v5031 = vpow.pop %v5030
        %v5032 = vmul.f32 %v5021, 1.442695
        %v5033 = vpow.pop %v5032
        %v5034 = vmul.f32 %v5022, 1.442695
        %v5035 = vpow.pop %v5034
        %v5036 = vmul.f32 %v5023, 1.442695
        %v5037 = vpow.pop %v5036
        %v5038 = vmul.f32 %v5024, 1.442695
        %v5039 = vpow.pop %v5038
        %v5040 = vmul.f32 %v5025, 1.442695
        %v5041 = vpow.pop %v5040
        %v5042 = vadd.f32 %v5027, 1.0
        %v5043 = vadd.f32 %v5029, 1.0
        %v5044 = vadd.f32 %v5031, 1.0
        %v5045 = vadd.f32 %v5033, 1.0
        %v5046 = vadd.f32 %v5035, 1.0
        %v5047 = vadd.f32 %v5037, 1.0
        %v5048 = vadd.f32 %v5039, 1.0
        %v5049 = vadd.f32 %v5041, 1.0
        %v5050 = vrcp.pop %v5042
        %v5051 = vrcp.pop %v5043
        %v5052 = vrcp.pop %v5044
        %v5053 = vrcp.pop %v5045
        %v5054 = vrcp.pop %v5046
        %v5055 = vrcp.pop %v5047
        %v5056 = vrcp.pop %v5048
        %v5057 = vrcp.pop %v5049
        %v5058 = vunpack.c.l.bf16 %v4902
        %v5059 = vunpack.c.h.bf16 %v4902
        %v5060 = vunpack.c.l.bf16 %v4903
        %v5061 = vunpack.c.h.bf16 %v4903
        %v5062 = vunpack.c.l.bf16 %v4904
        %v5063 = vunpack.c.h.bf16 %v4904
        %v5064 = vunpack.c.l.bf16 %v4905
        %v5065 = vunpack.c.h.bf16 %v4905
        %5067 = vset.pattern.permute.xlu0 32
        %5068 = vperm.xlu0 %5067, %v5050
        %v5069 = vpop.permute.xlu0 %5068
        %5072 = vset.pattern.permute.xlu0 32
        %5073 = vperm.xlu0 %5072, %v5051
        %v5074 = vpop.permute.xlu0 %5073
        %5077 = vset.pattern.permute.xlu0 32
        %5078 = vperm.xlu0 %5077, %v5052
        %v5079 = vpop.permute.xlu0 %5078
        %5082 = vset.pattern.permute.xlu0 32
        %5083 = vperm.xlu0 %5082, %v5053
        %v5084 = vpop.permute.xlu0 %5083
        %5087 = vset.pattern.permute.xlu0 32
        %5088 = vperm.xlu0 %5087, %v5054
        %v5089 = vpop.permute.xlu0 %5088
        %5092 = vset.pattern.permute.xlu0 32
        %5093 = vperm.xlu0 %5092, %v5055
        %v5094 = vpop.permute.xlu0 %5093
        %5097 = vset.pattern.permute.xlu0 32
        %5098 = vperm.xlu0 %5097, %v5056
        %v5099 = vpop.permute.xlu0 %5098
        %5102 = vset.pattern.permute.xlu0 32
        %5103 = vperm.xlu0 %5102, %v5057
        %v5104 = vpop.permute.xlu0 %5103
        %v5106 = vmul.f32 %v5069, %v5058
        %v5107 = vmul.f32 %v5074, %v5059
        %v5108 = vmul.f32 %v5079, %v5060
        %v5109 = vmul.f32 %v5084, %v5061
        %v5110 = vmul.f32 %v5089, %v5062
        %v5111 = vmul.f32 %v5094, %v5063
        %v5112 = vmul.f32 %v5099, %v5064
        %v5113 = vmul.f32 %v5104, %v5065
        %v5114 = vadd.f32 %v4476, %v4574
        %v5115 = vadd.f32 %v5114, %v4666
        %v5116 = vsub.f32 0.0, %v5115
        %v5117 = vmul.f32 %v5116, 1.442695
        %v5118 = vpow.pop %v5117
        %v5119 = vadd.f32 %v5118, 1.0
        %v5120 = vrcp.pop %v5119
        %v5121 = vmul.f32 %v5115, %v5120
        %v5122 = vpack.c.bf16 %v5121, %v5121
        %v5124 = vsel %vm1191, %v5122, 0
        %5126 = vmatprep.subr.bf16.mxu0 0
        %5127 = vmatpush1.bf16.msra.mxu0 0
        %5128 = vmatprep.subr.bf16.mxu0 0
        %5129 = vmatpush1.bf16.msra.mxu0 0
        %5130 = vmatprep.subr.bf16.mxu0 0
        %5131 = vmatpush1.bf16.msra.mxu0 0
        %5132 = vmatprep.subr.bf16.mxu0 0
        %5133 = vmatpush1.bf16.msra.mxu0 0
        %5134 = vmatprep.subr.bf16.mxu0 0
        %5135 = vmatpush1.bf16.msra.mxu0 0
        %5136 = vmatprep.subr.bf16.mxu0 0
        %5137 = vmatpush1.bf16.msra.mxu0 0
        %5138 = vmatprep.subr.bf16.mxu0 0
        %5139 = vmatpush1.bf16.msra.mxu0 %v4774
        %5140 = vmatprep.subr.bf16.mxu0 0
        %5141 = vmatpush1.bf16.msra.mxu0 %v4773
        %5142 = vmatprep.subr.bf16.mxu0 0
        %5143 = vmatpush2.bf16.msra.mxu0 0
        %5144 = vmatprep.subr.bf16.mxu0 0
        %5145 = vmatpush2.bf16.msra.mxu0 0
        %5146 = vmatprep.subr.bf16.mxu0 0
        %5147 = vmatpush2.bf16.msra.mxu0 0
        %5148 = vmatprep.subr.bf16.mxu0 0
        %5149 = vmatpush2.bf16.msra.mxu0 0
        %5150 = vmatprep.subr.bf16.mxu0 0
        %5151 = vmatpush2.bf16.msra.mxu0 0
        %5152 = vmatprep.subr.bf16.mxu0 0
        %5153 = vmatpush2.bf16.msra.mxu0 0
        %5154 = vmatprep.subr.bf16.mxu0 0
        %5155 = vmatpush2.bf16.msra.mxu0 0
        %5156 = vmatprep.subr.bf16.mxu0 0
        %5157 = vmatpush2.bf16.msra.mxu0 0
        %5158 = vmatprep.mubr.bf16.mxu0 0
        %5159 = vmatmul.mubr.bf16.gmra.mxu0 %v5124
        %v5160 = vpop.f32.mrf.mxu0
        %v5161 = vadd.f32 %v4743, %v5160
        %v5162 = vpop.f32.mrf.mxu0
        %v5163 = vpop.f32.mrf.mxu0
        %v5164 = vpop.f32.mrf.mxu0
        %5165 = vdwg.mxu0
        %v5166 = vsub.f32 0.0, %v5161
        %v5167 = vmul.f32 %v5166, 1.442695
        %v5168 = vpow.pop %v5167
        %v5169 = vadd.f32 %v5168, 1.0
        %v5170 = vrcp.pop %v5169
        %v5171 = vmul.f32 %v5161, %v5170
        %v5172 = vpack.c.bf16 %v5171, %v5171
        %v5173 = vunpack.c.l.bf16 %v5172
        %s5174 = scalar_lea.vmem %s9, 32
        %v5175 = vld [vmem:[%s5174] sm:$0xf]
        %v5176 = vld [vmem:[%s5174 + $0x4] sm:$0xf]
        %v5177 = vld [vmem:[%s5174 + $0x8] sm:$0xf]
        %v5178 = vld [vmem:[%s5174 + $0xc] sm:$0xf]
        %v5184 = vunpack.c.l.b16 %v5175
        %v5185 = vunpack.c.l.b16 %v5176
        %v5186 = vunpack.c.l.b16 %v5177
        %v5187 = vunpack.c.l.b16 %v5178
        %v5188 = vpack.c.b16 %v5185, %v5184
        %v5189 = vpack.c.b16 %v5187, %v5186
        %v5193 = vsel %vm1191, %v5172, 0
        %5195 = vmatprep.subr.bf16.mxu0 0
        %5196 = vmatpush1.bf16.msra.mxu0 0
        %5197 = vmatprep.subr.bf16.mxu0 0
        %5198 = vmatpush1.bf16.msra.mxu0 0
        %5199 = vmatprep.subr.bf16.mxu0 0
        %5200 = vmatpush1.bf16.msra.mxu0 0
        %5201 = vmatprep.subr.bf16.mxu0 0
        %5202 = vmatpush1.bf16.msra.mxu0 0
        %5203 = vmatprep.subr.bf16.mxu0 0
        %5204 = vmatpush1.bf16.msra.mxu0 0
        %5205 = vmatprep.subr.bf16.mxu0 0
        %5206 = vmatpush1.bf16.msra.mxu0 0
        %5207 = vmatprep.subr.bf16.mxu0 0
        %5208 = vmatpush1.bf16.msra.mxu0 %v5189
        %5209 = vmatprep.subr.bf16.mxu0 0
        %5210 = vmatpush1.bf16.msra.mxu0 %v5188
        %5211 = vmatprep.subr.bf16.mxu0 0
        %5212 = vmatpush2.bf16.msra.mxu0 0
        %5213 = vmatprep.subr.bf16.mxu0 0
        %5214 = vmatpush2.bf16.msra.mxu0 0
        %5215 = vmatprep.subr.bf16.mxu0 0
        %5216 = vmatpush2.bf16.msra.mxu0 0
        %5217 = vmatprep.subr.bf16.mxu0 0
        %5218 = vmatpush2.bf16.msra.mxu0 0
        %5219 = vmatprep.subr.bf16.mxu0 0
        %5220 = vmatpush2.bf16.msra.mxu0 0
        %5221 = vmatprep.subr.bf16.mxu0 0
        %5222 = vmatpush2.bf16.msra.mxu0 0
        %5223 = vmatprep.subr.bf16.mxu0 0
        %5224 = vmatpush2.bf16.msra.mxu0 0
        %5225 = vmatprep.subr.bf16.mxu0 0
        %5226 = vmatpush2.bf16.msra.mxu0 0
        %5227 = vmatprep.mubr.bf16.mxu0 0
        %5228 = vmatmul.mubr.bf16.gmra.mxu0 %v5193
        %v5229 = vpop.f32.mrf.mxu0
        %v5230 = vadd.f32 %v5006, %v5229
        %v5231 = vpop.f32.mrf.mxu0
        %v5232 = vpop.f32.mrf.mxu0
        %v5233 = vpop.f32.mrf.mxu0
        %5234 = vdwg.mxu0
        %v5235 = vsub.f32 0.0, %v5230
        %v5236 = vmul.f32 %v5235, 1.442695
        %v5237 = vpow.pop %v5236
        %v5238 = vadd.f32 %v5237, 1.0
        %v5239 = vrcp.pop %v5238
        %5241 = vset.pattern.permute.xlu0 0
        %5242 = vperm.xlu0 %5241, %v5239
        %v5243 = vpop.permute.xlu0 %5242
        %v5245 = vmul.f32 %v5173, %v5243
        %v5246 = vsel %vm1191, %v5106, 0.0
        %v5247 = vrot.slane %v5246, 4
        %v5248 = vadd.f32 %v5246, %v5247
        %v5249 = vrot.slane %v5248, 2
        %v5250 = vadd.f32 %v5248, %v5249
        %v5251 = vrot.slane %v5250, 1
        %v5252 = vadd.f32 %v5250, %v5251
        %v5253 = vsel %vm1191, %v5107, 0.0
        %v5254 = vrot.slane %v5253, 4
        %v5255 = vadd.f32 %v5253, %v5254
        %v5256 = vrot.slane %v5255, 2
        %v5257 = vadd.f32 %v5255, %v5256
        %v5258 = vrot.slane %v5257, 1
        %v5259 = vadd.f32 %v5257, %v5258
        %v5260 = vsel %vm1191, %v5108, 0.0
        %v5261 = vrot.slane %v5260, 4
        %v5262 = vadd.f32 %v5260, %v5261
        %v5263 = vrot.slane %v5262, 2
        %v5264 = vadd.f32 %v5262, %v5263
        %v5265 = vrot.slane %v5264, 1
        %v5266 = vadd.f32 %v5264, %v5265
        %v5267 = vsel %vm1191, %v5109, 0.0
        %v5268 = vrot.slane %v5267, 4
        %v5269 = vadd.f32 %v5267, %v5268
        %v5270 = vrot.slane %v5269, 2
        %v5271 = vadd.f32 %v5269, %v5270
        %v5272 = vrot.slane %v5271, 1
        %v5273 = vadd.f32 %v5271, %v5272
        %v5274 = vsel %vm1191, %v5110, 0.0
        %v5275 = vrot.slane %v5274, 4
        %v5276 = vadd.f32 %v5274, %v5275
        %v5277 = vrot.slane %v5276, 2
        %v5278 = vadd.f32 %v5276, %v5277
        %v5279 = vrot.slane %v5278, 1
        %v5280 = vadd.f32 %v5278, %v5279
        %v5281 = vsel %vm1191, %v5111, 0.0
        %v5282 = vrot.slane %v5281, 4
        %v5283 = vadd.f32 %v5281, %v5282
        %v5284 = vrot.slane %v5283, 2
        %v5285 = vadd.f32 %v5283, %v5284
        %v5286 = vrot.slane %v5285, 1
        %v5287 = vadd.f32 %v5285, %v5286
        %v5288 = vsel %vm1191, %v5112, 0.0
        %v5289 = vrot.slane %v5288, 4
        %v5290 = vadd.f32 %v5288, %v5289
        %v5291 = vrot.slane %v5290, 2
        %v5292 = vadd.f32 %v5290, %v5291
        %v5293 = vrot.slane %v5292, 1
        %v5294 = vadd.f32 %v5292, %v5293
        %v5295 = vsel %vm1191, %v5113, 0.0
        %v5296 = vrot.slane %v5295, 4
        %v5297 = vadd.f32 %v5295, %v5296
        %v5298 = vrot.slane %v5297, 2
        %v5299 = vadd.f32 %v5297, %v5298
        %v5300 = vrot.slane %v5299, 1
        %v5301 = vadd.f32 %v5299, %v5300
        %v5303 = vrot.slane %v5245, 1
        %v5304 = vrot.slane %v5245, 2
        %v5305 = vrot.slane %v5245, 3
        %v5306 = vrot.slane %v5245, 4
        %v5307 = vrot.slane %v5245, 5
        %v5308 = vrot.slane %v5245, 6
        %v5309 = vrot.slane %v5245, 7
        %v5318 = vsub.f32 %v5252, %v5245
        %v5319 = vsub.f32 %v5259, %v5303
        %v5320 = vsub.f32 %v5266, %v5304
        %v5321 = vsub.f32 %v5273, %v5305
        %v5322 = vsub.f32 %v5280, %v5306
        %v5323 = vsub.f32 %v5287, %v5307
        %v5324 = vsub.f32 %v5294, %v5308
        %v5325 = vsub.f32 %v5301, %v5309
        %s5326 = scalar_lea.vmem [#allocation14], 32
        %v5327 = vld [vmem:[%s5326] sm:$0xf]
        %v5328 = vld [vmem:[%s5326 + $0x4] sm:$0xf]
        %v5329 = vld [vmem:[%s5326 + $0x8] sm:$0xf]
        %v5330 = vld [vmem:[%s5326 + $0xc] sm:$0xf]
        %v5331 = vpack.c.bf16 %v4283, %v4283
        %s5332 = scalar_lea.vmem [#allocation16], 32
        %v5333 = vld [vmem:[%s5332] sm:$0xf]
        %v5334 = vld [vmem:[%s5332 + $0x4] sm:$0xf]
        %v5335 = vld [vmem:[%s5332 + $0x8] sm:$0xf]
        %v5336 = vld [vmem:[%s5332 + $0xc] sm:$0xf]
        %v5337 = vpack.c.bf16 %v5318, %v5318
        %v5338 = vpack.c.bf16 %v5319, %v5319
        %v5339 = vpack.c.bf16 %v5320, %v5320
        %v5340 = vpack.c.bf16 %v5321, %v5321
        %v5341 = vpack.c.bf16 %v5322, %v5322
        %v5342 = vpack.c.bf16 %v5323, %v5323
        %v5343 = vpack.c.bf16 %v5324, %v5324
        %v5344 = vpack.c.bf16 %v5325, %v5325
        %v5353 = vunpack.c.l.b16 %v5337
        %v5354 = vunpack.c.l.b16 %v5338
        %v5355 = vunpack.c.l.b16 %v5339
        %v5356 = vunpack.c.l.b16 %v5340
        %v5357 = vunpack.c.l.b16 %v5341
        %v5358 = vunpack.c.l.b16 %v5342
        %v5359 = vunpack.c.l.b16 %v5343
        %v5360 = vunpack.c.l.b16 %v5344
        %v5361 = vrot.slane %v5354, 7
        %v5362 = vsel %vm2259, %v5361, %v5353
        %v5363 = vrot.slane %v5355, 6
        %v5364 = vsel %vm2261, %v5363, %v5362
        %v5365 = vrot.slane %v5356, 5
        %v5366 = vsel %vm2263, %v5365, %v5364
        %v5367 = vrot.slane %v5357, 4
        %v5368 = vsel %vm2265, %v5367, %v5366
        %v5369 = vrot.slane %v5358, 3
        %v5370 = vsel %vm2267, %v5369, %v5368
        %v5371 = vrot.slane %v5359, 2
        %v5372 = vsel %vm2269, %v5371, %v5370
        %v5373 = vrot.slane %v5360, 1
        %v5374 = vsel %vm2271, %v5373, %v5372
        %v5375 = vpack.c.b16 %v5374, %v5374
        %v5380 = vunpack.c.l.b16 %v5333
        %v5381 = vunpack.c.l.b16 %v5334
        %v5382 = vunpack.c.l.b16 %v5335
        %v5383 = vunpack.c.l.b16 %v5336
        %v5384 = vpack.c.b16 %v5381, %v5380
        %v5385 = vpack.c.b16 %v5383, %v5382
        %v5389 = vsel %vm1191, %v5375, 0
        %5391 = vmatprep.subr.bf16.mxu0 0
        %5392 = vmatpush1.bf16.msra.mxu0 0
        %5393 = vmatprep.subr.bf16.mxu0 0
        %5394 = vmatpush1.bf16.msra.mxu0 0
        %5395 = vmatprep.subr.bf16.mxu0 0
        %5396 = vmatpush1.bf16.msra.mxu0 0
        %5397 = vmatprep.subr.bf16.mxu0 0
        %5398 = vmatpush1.bf16.msra.mxu0 0
        %5399 = vmatprep.subr.bf16.mxu0 0
        %5400 = vmatpush1.bf16.msra.mxu0 0
        %5401 = vmatprep.subr.bf16.mxu0 0
        %5402 = vmatpush1.bf16.msra.mxu0 0
        %5403 = vmatprep.subr.bf16.mxu0 0
        %5404 = vmatpush1.bf16.msra.mxu0 %v5385
        %5405 = vmatprep.subr.bf16.mxu0 0
        %5406 = vmatpush1.bf16.msra.mxu0 %v5384
        %5407 = vmatprep.subr.bf16.mxu0 0
        %5408 = vmatpush2.bf16.msra.mxu0 0
        %5409 = vmatprep.subr.bf16.mxu0 0
        %5410 = vmatpush2.bf16.msra.mxu0 0
        %5411 = vmatprep.subr.bf16.mxu0 0
        %5412 = vmatpush2.bf16.msra.mxu0 0
        %5413 = vmatprep.subr.bf16.mxu0 0
        %5414 = vmatpush2.bf16.msra.mxu0 0
        %5415 = vmatprep.subr.bf16.mxu0 0
        %5416 = vmatpush2.bf16.msra.mxu0 0
        %5417 = vmatprep.subr.bf16.mxu0 0
        %5418 = vmatpush2.bf16.msra.mxu0 0
        %5419 = vmatprep.subr.bf16.mxu0 0
        %5420 = vmatpush2.bf16.msra.mxu0 0
        %5421 = vmatprep.subr.bf16.mxu0 0
        %5422 = vmatpush2.bf16.msra.mxu0 0
        %5423 = vmatprep.mubr.bf16.mxu0 0
        %5424 = vmatmul.mubr.bf16.gmra.mxu0 %v5389
        %v5425 = vpop.f32.mrf.mxu0
        %v5426 = vadd.f32 0.0, %v5425
        %v5427 = vpop.f32.mrf.mxu0
        %v5428 = vpop.f32.mrf.mxu0
        %v5429 = vpop.f32.mrf.mxu0
        %5430 = vdwg.mxu0
        %v5435 = vunpack.c.l.b16 %v5327
        %v5436 = vunpack.c.l.b16 %v5328
        %v5437 = vunpack.c.l.b16 %v5329
        %v5438 = vunpack.c.l.b16 %v5330
        %v5439 = vpack.c.b16 %v5436, %v5435
        %v5440 = vpack.c.b16 %v5438, %v5437
        %v5444 = vsel %vm1191, %v5331, 0
        %5446 = vmatprep.subr.bf16.mxu0 0
        %5447 = vmatpush1.bf16.msra.mxu0 0
        %5448 = vmatprep.subr.bf16.mxu0 0
        %5449 = vmatpush1.bf16.msra.mxu0 0
        %5450 = vmatprep.subr.bf16.mxu0 0
        %5451 = vmatpush1.bf16.msra.mxu0 0
        %5452 = vmatprep.subr.bf16.mxu0 0
        %5453 = vmatpush1.bf16.msra.mxu0 0
        %5454 = vmatprep.subr.bf16.mxu0 0
        %5455 = vmatpush1.bf16.msra.mxu0 0
        %5456 = vmatprep.subr.bf16.mxu0 0
        %5457 = vmatpush1.bf16.msra.mxu0 0
        %5458 = vmatprep.subr.bf16.mxu0 0
        %5459 = vmatpush1.bf16.msra.mxu0 %v5440
        %5460 = vmatprep.subr.bf16.mxu0 0
        %5461 = vmatpush1.bf16.msra.mxu0 %v5439
        %5462 = vmatprep.subr.bf16.mxu0 0
        %5463 = vmatpush2.bf16.msra.mxu0 0
        %5464 = vmatprep.subr.bf16.mxu0 0
        %5465 = vmatpush2.bf16.msra.mxu0 0
        %5466 = vmatprep.subr.bf16.mxu0 0
        %5467 = vmatpush2.bf16.msra.mxu0 0
        %5468 = vmatprep.subr.bf16.mxu0 0
        %5469 = vmatpush2.bf16.msra.mxu0 0
        %5470 = vmatprep.subr.bf16.mxu0 0
        %5471 = vmatpush2.bf16.msra.mxu0 0
        %5472 = vmatprep.subr.bf16.mxu0 0
        %5473 = vmatpush2.bf16.msra.mxu0 0
        %5474 = vmatprep.subr.bf16.mxu0 0
        %5475 = vmatpush2.bf16.msra.mxu0 0
        %5476 = vmatprep.subr.bf16.mxu0 0
        %5477 = vmatpush2.bf16.msra.mxu0 0
        %5478 = vmatprep.mubr.bf16.mxu0 0
        %5479 = vmatmul.mubr.bf16.gmra.mxu0 %v5444
        %v5480 = vpop.f32.mrf.mxu0
        %v5481 = vadd.f32 %v5426, %v5480
        %v5482 = vpop.f32.mrf.mxu0
        %v5483 = vpop.f32.mrf.mxu0
        %v5484 = vpop.f32.mrf.mxu0
        %5485 = vdwg.mxu0
        %s5486 = scalar_lea.vmem [#allocation17], 2
        %v5487 = vld [vmem:[%s5486] sm:$0x1]
        %v5489 = vlaneseq
        %v5490 = vshrl.u32 %v5489, 7
        %v5491 = vsub.s32 0, %v5490
        %v5492 = vrot.slane %v5487, %v5491
        %v5494 = vadd.f32 %v5481, %v5492
        %v5495 = vsub.f32 0.0, %v5494
        %v5496 = vmul.f32 %v5495, 1.442695
        %v5497 = vpow.pop %v5496
        %v5498 = vadd.f32 %v5497, 1.0
        %v5499 = vrcp.pop %v5498
        %v5500 = vmul.f32 %v5494, %v5499
        %s5501 = scalar_lea.vmem [#allocation19], 32
        %v5502 = vld [vmem:[%s5501] sm:$0xf]
        %v5503 = vld [vmem:[%s5501 + $0x4] sm:$0xf]
        %v5504 = vld [vmem:[%s5501 + $0x8] sm:$0xf]
        %v5505 = vld [vmem:[%s5501 + $0xc] sm:$0xf]
        %v5506 = vpack.c.bf16 %v5500, %v5500
        %v5511 = vunpack.c.l.b16 %v5502
        %v5512 = vunpack.c.l.b16 %v5503
        %v5513 = vunpack.c.l.b16 %v5504
        %v5514 = vunpack.c.l.b16 %v5505
        %v5515 = vpack.c.b16 %v5512, %v5511
        %v5516 = vpack.c.b16 %v5514, %v5513
        %v5520 = vsel %vm1191, %v5506, 0
        %5522 = vmatprep.subr.bf16.mxu0 0
        %5523 = vmatpush1.bf16.msra.mxu0 0
        %5524 = vmatprep.subr.bf16.mxu0 0
        %5525 = vmatpush1.bf16.msra.mxu0 0
        %5526 = vmatprep.subr.bf16.mxu0 0
        %5527 = vmatpush1.bf16.msra.mxu0 0
        %5528 = vmatprep.subr.bf16.mxu0 0
        %5529 = vmatpush1.bf16.msra.mxu0 0
        %5530 = vmatprep.subr.bf16.mxu0 0
        %5531 = vmatpush1.bf16.msra.mxu0 0
        %5532 = vmatprep.subr.bf16.mxu0 0
        %5533 = vmatpush1.bf16.msra.mxu0 0
        %5534 = vmatprep.subr.bf16.mxu0 0
        %5535 = vmatpush1.bf16.msra.mxu0 %v5516
        %5536 = vmatprep.subr.bf16.mxu0 0
        %5537 = vmatpush1.bf16.msra.mxu0 %v5515
        %5538 = vmatprep.subr.bf16.mxu0 0
        %5539 = vmatpush2.bf16.msra.mxu0 0
        %5540 = vmatprep.subr.bf16.mxu0 0
        %5541 = vmatpush2.bf16.msra.mxu0 0
        %5542 = vmatprep.subr.bf16.mxu0 0
        %5543 = vmatpush2.bf16.msra.mxu0 0
        %5544 = vmatprep.subr.bf16.mxu0 0
        %5545 = vmatpush2.bf16.msra.mxu0 0
        %5546 = vmatprep.subr.bf16.mxu0 0
        %5547 = vmatpush2.bf16.msra.mxu0 0
        %5548 = vmatprep.subr.bf16.mxu0 0
        %5549 = vmatpush2.bf16.msra.mxu0 0
        %5550 = vmatprep.subr.bf16.mxu0 0
        %5551 = vmatpush2.bf16.msra.mxu0 0
        %5552 = vmatprep.subr.bf16.mxu0 0
        %5553 = vmatpush2.bf16.msra.mxu0 0
        %5554 = vmatprep.mubr.bf16.mxu0 0
        %5555 = vmatmul.mubr.bf16.gmra.mxu0 %v5520
        %v5556 = vpop.f32.mrf.mxu0
        %v5557 = vadd.f32 0.0, %v5556
        %v5558 = vpop.f32.mrf.mxu0
        %v5559 = vpop.f32.mrf.mxu0
        %v5560 = vpop.f32.mrf.mxu0
        %5561 = vdwg.mxu0
        %v5562 = vadd.f32 %v4283, %v5557
        %s5563 = scalar_lea.vmem [#allocation20], 2
        %v5564 = vld [vmem:[%s5563] sm:$0x1]
        %v5566 = vlaneseq
        %v5567 = vshrl.u32 %v5566, 7
        %v5568 = vsub.s32 0, %v5567
        %v5569 = vrot.slane %v5564, %v5568
        %v5571 = vadd.f32 %v5562, %v5569
        %v5572 = vld [vmem:[#allocation22] sm:$0xff]
        %v5573 = vld [vmem:[#allocation22 + $0x8] sm:$0xff]
        %v5574 = vld [vmem:[#allocation22 + $0x10] sm:$0xff]
        %v5575 = vld [vmem:[#allocation22 + $0x18] sm:$0xff]
        %v5576 = vld [vmem:[%s20] sm:$0x1]
        %v5578 = vlaneseq
        %v5579 = vshrl.u32 %v5578, 7
        %v5580 = vsub.s32 0, %v5579
        %v5581 = vrot.slane %v5576, %v5580
        %v5584 = vsel %vm1191, %v5571, 0
        %5586 = vmatprep.subr.mxu0 0.0
        %5587 = vmatpush1.msra.mxu0 0.0
        %5588 = vmatprep.subr.mxu0 0.0
        %5589 = vmatpush1.msra.mxu0 0.0
        %5590 = vmatprep.subr.mxu0 0.0
        %5591 = vmatpush1.msra.mxu0 0.0
        %5592 = vmatprep.subr.mxu0 0.0
        %5593 = vmatpush1.msra.mxu0 0.0
        %5594 = vmatprep.subr.mxu0 0.0
        %5595 = vmatpush1.msra.mxu0 0.0
        %5596 = vmatprep.subr.mxu0 0.0
        %5597 = vmatpush1.msra.mxu0 0.0
        %5598 = vmatprep.subr.mxu0 0.0
        %5599 = vmatpush1.msra.mxu0 0.0
        %5600 = vmatprep.subr.mxu0 0.0
        %5601 = vmatpush1.msra.mxu0 0.0
        %5602 = vmatprep.subr.mxu0 0.0
        %5603 = vmatpush1.msra.mxu0 0.0
        %5604 = vmatprep.subr.mxu0 0.0
        %5605 = vmatpush1.msra.mxu0 0.0
        %5606 = vmatprep.subr.mxu0 0.0
        %5607 = vmatpush1.msra.mxu0 0.0
        %5608 = vmatprep.subr.mxu0 0.0
        %5609 = vmatpush1.msra.mxu0 0.0
        %5610 = vmatprep.subr.mxu0 0.0
        %5611 = vmatpush1.msra.mxu0 %v5575
        %5612 = vmatprep.subr.mxu0 0.0
        %5613 = vmatpush1.msra.mxu0 %v5574
        %5614 = vmatprep.subr.mxu0 0.0
        %5615 = vmatpush1.msra.mxu0 %v5573
        %5616 = vmatprep.subr.mxu0 0.0
        %5617 = vmatpush1.msra.mxu0 %v5572
        %5618 = vmatprep.subr.mxu0 0.0
        %5619 = vmatpush2.msra.mxu0 0.0
        %5620 = vmatprep.subr.mxu0 0.0
        %5621 = vmatpush2.msra.mxu0 0.0
        %5622 = vmatprep.subr.mxu0 0.0
        %5623 = vmatpush2.msra.mxu0 0.0
        %5624 = vmatprep.subr.mxu0 0.0
        %5625 = vmatpush2.msra.mxu0 0.0
        %5626 = vmatprep.subr.mxu0 0.0
        %5627 = vmatpush2.msra.mxu0 0.0
        %5628 = vmatprep.subr.mxu0 0.0
        %5629 = vmatpush2.msra.mxu0 0.0
        %5630 = vmatprep.subr.mxu0 0.0
        %5631 = vmatpush2.msra.mxu0 0.0
        %5632 = vmatprep.subr.mxu0 0.0
        %5633 = vmatpush2.msra.mxu0 0.0
        %5634 = vmatprep.subr.mxu0 0.0
        %5635 = vmatpush2.msra.mxu0 0.0
        %5636 = vmatprep.subr.mxu0 0.0
        %5637 = vmatpush2.msra.mxu0 0.0
        %5638 = vmatprep.subr.mxu0 0.0
        %5639 = vmatpush2.msra.mxu0 0.0
        %5640 = vmatprep.subr.mxu0 0.0
        %5641 = vmatpush2.msra.mxu0 0.0
        %5642 = vmatprep.subr.mxu0 0.0
        %5643 = vmatpush2.msra.mxu0 0.0
        %5644 = vmatprep.subr.mxu0 0.0
        %5645 = vmatpush2.msra.mxu0 0.0
        %5646 = vmatprep.subr.mxu0 0.0
        %5647 = vmatpush2.msra.mxu0 0.0
        %5648 = vmatprep.subr.mxu0 0.0
        %5649 = vmatpush2.msra.mxu0 0.0
        %5650 = vmatprep.mubr.f32.mxu0 0.0
        %5651 = vmatmul.mubr.f32.gmra.mxu0 %v5584
        %v5652 = vpop.f32.mrf.mxu0
        %v5653 = vadd.f32 %v5581, %v5652
        %v5654 = vpop.f32.mrf.mxu0
        %5655 = vdwg.mxu0
        %v5656 = vsel %vm1191, %v5653, 0.0
        %v5657 = vrot.slane %v5656, 4
        %v5658 = vadd.f32 %v5656, %v5657
        %v5659 = vrot.slane %v5658, 2
        %v5660 = vadd.f32 %v5658, %v5659
        %v5661 = vrot.slane %v5660, 1
        %v5662 = vadd.f32 %v5660, %v5661
        %v5663 = vrcp.pop 8.0
        %v5664 = vmul.f32 %v5662, %v5663
        %v5665 = vld [vmem:[#allocation23] sm:$0xff]
        %v5666 = vld [vmem:[#allocation23 + $0x8] sm:$0xff]
        %v5667 = vld [vmem:[#allocation23 + $0x10] sm:$0xff]
        %v5668 = vld [vmem:[#allocation23 + $0x18] sm:$0xff]
        %v5669 = vld [vmem:[%s22] sm:$0x1]
        %v5671 = vsel %vm1191, %v5664, 0
        %5673 = vmatprep.subr.mxu0 0.0
        %5674 = vmatpush1.msra.mxu0 0.0
        %5675 = vmatprep.subr.mxu0 0.0
        %5676 = vmatpush1.msra.mxu0 0.0
        %5677 = vmatprep.subr.mxu0 0.0
        %5678 = vmatpush1.msra.mxu0 0.0
        %5679 = vmatprep.subr.mxu0 0.0
        %5680 = vmatpush1.msra.mxu0 0.0
        %5681 = vmatprep.subr.mxu0 0.0
        %5682 = vmatpush1.msra.mxu0 0.0
        %5683 = vmatprep.subr.mxu0 0.0
        %5684 = vmatpush1.msra.mxu0 0.0
        %5685 = vmatprep.subr.mxu0 0.0
        %5686 = vmatpush1.msra.mxu0 0.0
        %5687 = vmatprep.subr.mxu0 0.0
        %5688 = vmatpush1.msra.mxu0 0.0
        %5689 = vmatprep.subr.mxu0 0.0
        %5690 = vmatpush1.msra.mxu0 0.0
        %5691 = vmatprep.subr.mxu0 0.0
        %5692 = vmatpush1.msra.mxu0 0.0
        %5693 = vmatprep.subr.mxu0 0.0
        %5694 = vmatpush1.msra.mxu0 0.0
        %5695 = vmatprep.subr.mxu0 0.0
        %5696 = vmatpush1.msra.mxu0 0.0
        %5697 = vmatprep.subr.mxu0 0.0
        %5698 = vmatpush1.msra.mxu0 %v5668
        %5699 = vmatprep.subr.mxu0 0.0
        %5700 = vmatpush1.msra.mxu0 %v5667
        %5701 = vmatprep.subr.mxu0 0.0
        %5702 = vmatpush1.msra.mxu0 %v5666
        %5703 = vmatprep.subr.mxu0 0.0
        %5704 = vmatpush1.msra.mxu0 %v5665
        %5705 = vmatprep.subr.mxu0 0.0
        %5706 = vmatpush2.msra.mxu0 0.0
        %5707 = vmatprep.subr.mxu0 0.0
        %5708 = vmatpush2.msra.mxu0 0.0
        %5709 = vmatprep.subr.mxu0 0.0
        %5710 = vmatpush2.msra.mxu0 0.0
        %5711 = vmatprep.subr.mxu0 0.0
        %5712 = vmatpush2.msra.mxu0 0.0
        %5713 = vmatprep.subr.mxu0 0.0
        %5714 = vmatpush2.msra.mxu0 0.0
        %5715 = vmatprep.subr.mxu0 0.0
        %5716 = vmatpush2.msra.mxu0 0.0
        %5717 = vmatprep.subr.mxu0 0.0
        %5718 = vmatpush2.msra.mxu0 0.0
        %5719 = vmatprep.subr.mxu0 0.0
        %5720 = vmatpush2.msra.mxu0 0.0
        %5721 = vmatprep.subr.mxu0 0.0
        %5722 = vmatpush2.msra.mxu0 0.0
        %5723 = vmatprep.subr.mxu0 0.0
        %5724 = vmatpush2.msra.mxu0 0.0
        %5725 = vmatprep.subr.mxu0 0.0
        %5726 = vmatpush2.msra.mxu0 0.0
        %5727 = vmatprep.subr.mxu0 0.0
        %5728 = vmatpush2.msra.mxu0 0.0
        %5729 = vmatprep.subr.mxu0 0.0
        %5730 = vmatpush2.msra.mxu0 0.0
        %5731 = vmatprep.subr.mxu0 0.0
        %5732 = vmatpush2.msra.mxu0 0.0
        %5733 = vmatprep.subr.mxu0 0.0
        %5734 = vmatpush2.msra.mxu0 0.0
        %5735 = vmatprep.subr.mxu0 0.0
        %5736 = vmatpush2.msra.mxu0 0.0
        %5737 = vmatprep.mubr.f32.mxu0 0.0
        %5738 = vmatmul.mubr.f32.gmra.mxu0 %v5671
        %v5739 = vpop.f32.mrf.mxu0
        %v5740 = vadd.f32 %v5669, %v5739
        %v5741 = vpop.f32.mrf.mxu0
        %5742 = vdwg.mxu0
        %v5743 = vmax.f32 %v5740, 0.0
        %v5744 = vld [vmem:[%s23] sm:$0xff]
        %v5745 = vld [vmem:[%s23 + $0x8] sm:$0xff]
        %v5746 = vld [vmem:[%s23 + $0x10] sm:$0xff]
        %v5747 = vld [vmem:[%s23 + $0x18] sm:$0xff]
        %v5748 = vld [vmem:[%s24] sm:$0x1]
        %v5750 = vsel %vm1191, %v5743, 0
        %5752 = vmatprep.subr.mxu0 0.0
        %5753 = vmatpush1.msra.mxu0 0.0
        %5754 = vmatprep.subr.mxu0 0.0
        %5755 = vmatpush1.msra.mxu0 0.0
        %5756 = vmatprep.subr.mxu0 0.0
        %5757 = vmatpush1.msra.mxu0 0.0
        %5758 = vmatprep.subr.mxu0 0.0
        %5759 = vmatpush1.msra.mxu0 0.0
        %5760 = vmatprep.subr.mxu0 0.0
        %5761 = vmatpush1.msra.mxu0 0.0
        %5762 = vmatprep.subr.mxu0 0.0
        %5763 = vmatpush1.msra.mxu0 0.0
        %5764 = vmatprep.subr.mxu0 0.0
        %5765 = vmatpush1.msra.mxu0 0.0
        %5766 = vmatprep.subr.mxu0 0.0
        %5767 = vmatpush1.msra.mxu0 0.0
        %5768 = vmatprep.subr.mxu0 0.0
        %5769 = vmatpush1.msra.mxu0 0.0
        %5770 = vmatprep.subr.mxu0 0.0
        %5771 = vmatpush1.msra.mxu0 0.0
        %5772 = vmatprep.subr.mxu0 0.0
        %5773 = vmatpush1.msra.mxu0 0.0
        %5774 = vmatprep.subr.mxu0 0.0
        %5775 = vmatpush1.msra.mxu0 0.0
        %5776 = vmatprep.subr.mxu0 0.0
        %5777 = vmatpush1.msra.mxu0 %v5747
        %5778 = vmatprep.subr.mxu0 0.0
        %5779 = vmatpush1.msra.mxu0 %v5746
        %5780 = vmatprep.subr.mxu0 0.0
        %5781 = vmatpush1.msra.mxu0 %v5745
        %5782 = vmatprep.subr.mxu0 0.0
        %5783 = vmatpush1.msra.mxu0 %v5744
        %5784 = vmatprep.subr.mxu0 0.0
        %5785 = vmatpush2.msra.mxu0 0.0
        %5786 = vmatprep.subr.mxu0 0.0
        %5787 = vmatpush2.msra.mxu0 0.0
        %5788 = vmatprep.subr.mxu0 0.0
        %5789 = vmatpush2.msra.mxu0 0.0
        %5790 = vmatprep.subr.mxu0 0.0
        %5791 = vmatpush2.msra.mxu0 0.0
        %5792 = vmatprep.subr.mxu0 0.0
        %5793 = vmatpush2.msra.mxu0 0.0
        %5794 = vmatprep.subr.mxu0 0.0
        %5795 = vmatpush2.msra.mxu0 0.0
        %5796 = vmatprep.subr.mxu0 0.0
        %5797 = vmatpush2.msra.mxu0 0.0
        %5798 = vmatprep.subr.mxu0 0.0
        %5799 = vmatpush2.msra.mxu0 0.0
        %5800 = vmatprep.subr.mxu0 0.0
        %5801 = vmatpush2.msra.mxu0 0.0
        %5802 = vmatprep.subr.mxu0 0.0
        %5803 = vmatpush2.msra.mxu0 0.0
        %5804 = vmatprep.subr.mxu0 0.0
        %5805 = vmatpush2.msra.mxu0 0.0
        %5806 = vmatprep.subr.mxu0 0.0
        %5807 = vmatpush2.msra.mxu0 0.0
        %5808 = vmatprep.subr.mxu0 0.0
        %5809 = vmatpush2.msra.mxu0 0.0
        %5810 = vmatprep.subr.mxu0 0.0
        %5811 = vmatpush2.msra.mxu0 0.0
        %5812 = vmatprep.subr.mxu0 0.0
        %5813 = vmatpush2.msra.mxu0 0.0
        %5814 = vmatprep.subr.mxu0 0.0
        %5815 = vmatpush2.msra.mxu0 0.0
        %5816 = vmatprep.mubr.f32.mxu0 0.0
        %5817 = vmatmul.mubr.f32.gmra.mxu0 %v5750
        %v5818 = vpop.f32.mrf.mxu0
        %v5819 = vadd.f32 %v5748, %v5818
        %v5820 = vpop.f32.mrf.mxu0
        %5821 = vdwg.mxu0
        %vm5822 = vcmask 155648
        %5823 = vst.msk [vmem:[%s978] sm:$0x1] %vm5822, %v5819
        %s5824 = sand.u32 %s592, 1
        %s5825 = scalar_lea.sflag [#allocation4], %s5824
        %s5826 = sand.u32 %s592, 1
        %s5827 = scalar_lea.vmem [#allocation25], %s5826
        // Predicated region
        $region177: #{tpu_custom_call.1} parent=119 // pred_check
          %p5828 = pneg %p602
        $region178: #{tpu_custom_call.1} parent=119 // pred_check_branch
          %5830 = sbr.rel (%p5828) target = $region180
        $region179: #{tpu_custom_call.1} parent=119 // pred_region
          %s5832 = ssub.s32 16, 16
          %5833 = vsyncadd %s5825, %s5832
          %s5834 = smul.addr %s49, 16
          %s5835 = scalar_lea.hbm %s25, %s5834
          %s5837 = sshll.u32 %s5827, 4
          %s5838 = int_to_ptr.vmem [resolvable:$true] %s5837
          %5840 = dma.vmem_to_hbm [thread:$0]  %s5838, 16, %s5835, %s5825
        $region180: #{tpu_custom_call.1} parent=119 // pred_fallthru
          _
      $region120: #{tpu_custom_call.1} parent=5 // pred_fallthru
        _
      %p5841 = scmp.le.s32.totalorder 2, %s44
      // Predicated region
      $region181: #{tpu_custom_call.1} parent=5 // pred_check
        %p5842 = pneg %p5841
      $region182: #{tpu_custom_call.1} parent=5 // pred_check_branch
        %5844 = sbr.rel (%p5842) target = $region184
      $region183: #{tpu_custom_call.1} parent=5 // pred_region
        %s5845 = ssub.s32 %s44, 2
        // Predicated region
        $region185: #{tpu_custom_call.1} parent=183 // pred_check
          %p5846 = pneg %p608
        $region186: #{tpu_custom_call.1} parent=183 // pred_check_branch
          %5848 = sbr.rel (%p5846) target = $region188
        $region187: #{tpu_custom_call.1} parent=183 // pred_region
          %s5849 = sand.u32 %s593, 1
          %s5850 = scalar_lea.sflag [#allocation4], %s5849
          %s5851 = sand.u32 %s593, 1
          %s5852 = scalar_lea.vmem [#allocation25], %s5851
          %5853 = dma.done %s5850, 16
        $region188: #{tpu_custom_call.1} parent=183 // pred_fallthru
          _
      $region184: #{tpu_custom_call.1} parent=5 // pred_fallthru
        _
    $region6: #{tpu_custom_call.1} parent=1 // loop_footer
      %s48 = sadd.s32 1, %s44
    $region7: #{tpu_custom_call.1} parent=1 // loop_footer_branch
      %43 = sbr.rel target = $region3
    $region8: #{tpu_custom_call.1} parent=1 // loop_exit
      _
    %5854 = vsyncpa [#allocation3], 1
    %s5855 = scalar_lea.sflag [#allocation3], 1
    %5856 = vsyncpa %s5855, 1
    %5857 = vsyncpa [#allocation6], 1
    %5858 = vsyncpa [#allocation9], 1
    %5859 = vsyncpa [#allocation12], 1
    %5860 = vsyncpa [#allocation15], 1
    %5861 = vsyncpa [#allocation18], 1
    %5862 = vsyncpa [#allocation21], 1
    %5863 = vsyncpa [#allocation24], 1
    %5864 = vsyncpa [#allocation4], 1
    %s5865 = scalar_lea.sflag [#allocation4], 1
    %5866 = vsyncpa %s5865, 1

</llo_original>
